<compile_context>
chip_gen: v5e
topology: v5e:2x2
jax: 0.10.0
libtpu: 0.0.40
codegen_flags: <defaults>
</compile_context>

<pallas_src>
import math
from functools import partial

import numpy as np
import jax
import jax.numpy as jnp
from jax.experimental import pallas as pl
from jax.experimental.pallas import tpu as pltpu

# ----------------------------- small config -----------------------------
IMG_SIZE = 32
PATCH_SIZE = 8
IN_CHANS = 3
EMBED_DIM = 64
DEPTH = 2
NUM_HEADS = 4
DEC_EMBED_DIM = 32
DEC_DEPTH = 1
DEC_NUM_HEADS = 4
MLP_RATIO = 4.0
MASK_RATIO = 0.75
POS_MASK_RATIO = 0.75
NUM_PATCHES = (IMG_SIZE // PATCH_SIZE) ** 2  # 16
LN_EPS = 1e-5


# --------------------- in-kernel math helpers (values) -------------------
# Exact-GELU erf via the Eigen/XLA float32 rational approximation (mul/add/div/clamp
# only, guaranteed to lower in Mosaic, matches XLA's own f32 erf closely).
_ERF_ALPHA = (-2.72614225801306e-10, 2.77068142495902e-08, -2.10102402082508e-06,
              -5.69250639462346e-05, -7.34990630326855e-04, -2.95459980854025e-03,
              -1.60960333262415e-02)
_ERF_BETA = (-1.45660718464996e-05, -2.13374055278905e-04, -1.68282697438203e-03,
             -7.37332916720468e-03, -1.42647390514189e-02)


def _erf(x):
    x = jnp.clip(x, -4.0, 4.0)
    z = x * x
    num = _ERF_ALPHA[0]
    for c in _ERF_ALPHA[1:]:
        num = num * z + c
    num = num * x
    den = _ERF_BETA[0]
    for c in _ERF_BETA[1:]:
        den = den * z + c
    return num / den


def _gelu(x):
    return 0.5 * x * (1.0 + _erf(x * (1.0 / math.sqrt(2.0))))


def _layernorm(x, g, b):
    mu = jnp.mean(x, axis=-1, keepdims=True)
    var = jnp.mean((x - mu) ** 2, axis=-1, keepdims=True)
    return (x - mu) * jax.lax.rsqrt(var + LN_EPS) * g + b


def _block(x, d, heads, vec, qkvw, qkvb, pw, f1w, f1b, f2w):
    """timm Block on a (S, D) token buffer for ONE batch element.

    vec : (depth, 6, 1, D) f32  -> [n1g, n1b, n2g, n2b, proj_b, fc2_b]
    qkvw: (depth, 3, H, D, dh) bf16, qkvb: (depth, 3, H, 1, dh) f32
    pw  : (depth, H, dh, D) bf16    (per-head rows of the proj weight)
    Head separation is pure leading-axis ref indexing (no lane-misaligned slices),
    and per-head outputs are accumulated straight through the projection (no concat).
    """
    D = x.shape[-1]
    dh = D // heads
    scale = np.float32(dh ** -0.5)

    n1g, n1b = vec[d, 0], vec[d, 1]
    n2g, n2b = vec[d, 2], vec[d, 3]
    proj_b, fc2_b = vec[d, 4], vec[d, 5]

    z = _layernorm(x, n1g, n1b)
    zb = z.astype(jnp.bfloat16)

    attn = None
    for h in range(heads):
        q = jnp.dot(zb, qkvw[d, 0, h], preferred_element_type=jnp.float32) + qkvb[d, 0, h]
        k = jnp.dot(zb, qkvw[d, 1, h], preferred_element_type=jnp.float32) + qkvb[d, 1, h]
        v = jnp.dot(zb, qkvw[d, 2, h], preferred_element_type=jnp.float32) + qkvb[d, 2, h]
        # q @ k^T (contract last dims), f32 scores + f32 softmax.
        s = jax.lax.dot_general(q, k, (((1,), (1,)), ((), ())),
                                preferred_element_type=jnp.float32) * scale
        s = s - jnp.max(s, axis=-1, keepdims=True)
        p = jnp.exp(s)
        p = p * pl.reciprocal(jnp.sum(p, axis=-1, keepdims=True), approx=True)
        o = jnp.dot(p.astype(jnp.bfloat16), v.astype(jnp.bfloat16),
                    preferred_element_type=jnp.float32)
        o = jnp.dot(o.astype(jnp.bfloat16), pw[d, h], preferred_element_type=jnp.float32)
        attn = o if attn is None else attn + o

    x = x + attn + proj_b

    z2 = _layernorm(x, n2g, n2b)
    f = jnp.dot(z2.astype(jnp.bfloat16), f1w[d], preferred_element_type=jnp.float32) + f1b[d]
    f = _gelu(f)
    return x + jnp.dot(f.astype(jnp.bfloat16), f2w[d],
                       preferred_element_type=jnp.float32) + fc2_b


# ----------------------------- the fused kernel --------------------------
def _droppos_kernel(
        # per-batch inputs
        patches_ref, keep_ref, pos_ref,
        # patch embed + additive-token table
        pe_w, pe_b, add_tab,
        # encoder block stacks + final norm
        e_vec, e_qkvw, e_qkvb, e_pw, e_f1w, e_f1b, e_f2w, e_norm,
        # decoder embed
        de_w, de_b,
        # decoder block stacks + norm
        d_vec, d_qkvw, d_qkvb, d_pw, d_f1w, d_f1b, d_f2w, d_norm,
        # decoder pred + label-smoothing map
        dp_w, dp_b, smooth_ref,
        # output: lane-packed partial sums [ce_sum, correct_sum, mask_sum, 0...]
        out_ref,
        *, num_patches, enc_heads, dec_heads, depth, dec_depth):
    L = num_patches
    T = add_tab.shape[0]                  # L + 2 rows (pos | cls+pos0 | mask_pos_token)

    # --- patch embed of all L patches of this batch element (bf16 MXU, f32 acc) ---
    emb = jnp.dot(patches_ref[0].astype(jnp.bfloat16), pe_w[...],
                  preferred_element_type=jnp.float32) + pe_b[...]          # (L, D)

    keep = keep_ref[0]                    # (S, 1) int32; row0 = L (cls sentinel)
    posi = pos_ref[0]                     # (S, 1) int32; L=cls row, L+1=masked pos
    S = keep.shape[0]

    # one-hot gathers (exact, f32) replace host-side take_along_axis / concat / tile
    oh_keep = (keep == jax.lax.broadcasted_iota(jnp.int32, (S, L), 1)).astype(jnp.float32)
    oh_pos = (posi == jax.lax.broadcasted_iota(jnp.int32, (S, T), 1)).astype(jnp.float32)

    # token = gathered patch embedding (zero on the cls row) + pos/cls/mask-token add
    x = (jnp.dot(oh_keep, emb, preferred_element_type=jnp.float32)
         + jnp.dot(oh_pos, add_tab[...], preferred_element_type=jnp.float32))   # (S, D)

    # --- encoder ---
    for d in range(depth):
        x = _block(x, d, enc_heads, e_vec, e_qkvw, e_qkvb, e_pw, e_f1w, e_f1b, e_f2w)
    x = _layernorm(x, e_norm[0], e_norm[1])

    # --- decoder ---
    y = jnp.dot(x.astype(jnp.bfloat16), de_w[...],
                preferred_element_type=jnp.float32) + de_b[...]
    for d in range(dec_depth):
        y = _block(y, d, dec_heads, d_vec, d_qkvw, d_qkvb, d_pw, d_f1w, d_f1b, d_f2w)
    y = _layernorm(y, d_norm[0], d_norm[1])
    pred = jnp.dot(y.astype(jnp.bfloat16), dp_w[...],
                   preferred_element_type=jnp.float32) + dp_b[...]               # (S, L)

    # --- drop-pos loss / acc partial sums (cls & pos-kept rows masked out) ---
    smooth_tok = jnp.dot(oh_keep, smooth_ref[...], preferred_element_type=jnp.float32)
    m = jnp.max(pred, axis=-1, keepdims=True)
    lse = jnp.log(jnp.sum(jnp.exp(pred - m), axis=-1, keepdims=True)) + m
    ce = jnp.sum(-smooth_tok * (pred - lse), axis=-1, keepdims=True)             # (S, 1)

    maskv = (posi == L + 1).astype(jnp.float32)                                  # (S, 1)
    col = jax.lax.broadcasted_iota(jnp.int32, pred.shape, 1)
    amax = jnp.min(jnp.where(pred == m, col, L), axis=-1, keepdims=True)         # (S, 1)
    correct = (amax == keep).astype(jnp.float32)

    ce_sum = jnp.sum(ce * maskv, axis=0, keepdims=True)                          # (1, 1)
    ok_sum = jnp.sum(correct * maskv, axis=0, keepdims=True)                     # (1, 1)
    m_sum = jnp.sum(maskv, axis=0, keepdims=True)                                # (1, 1)

    lane = jax.lax.broadcasted_iota(jnp.int32, (1, 128), 1)
    packed = jnp.where(lane == 0, ce_sum, jnp.zeros((1, 128), jnp.float32))
    packed = jnp.where(lane == 1, ok_sum, packed)
    packed = jnp.where(lane == 2, m_sum, packed)
    out_ref[0] = packed


# ----------------------------- plain-JAX glue -----------------------------
def get_1d_sincos_pos_embed_from_grid(embed_dim, pos):
    omega = np.arange(embed_dim // 2, dtype=np.float32)
    omega /= embed_dim / 2.0
    omega = 1.0 / 10000 ** omega
    pos = pos.reshape(-1)
    out = np.einsum("m,d->md", pos, omega)
    return np.concatenate([np.sin(out), np.cos(out)], axis=1)


def get_2d_sincos_pos_embed(embed_dim, grid_size, cls_token=False):
    grid_h = np.arange(grid_size, dtype=np.float32)
    grid_w = np.arange(grid_size, dtype=np.float32)
    grid = np.meshgrid(grid_w, grid_h)
    grid = np.stack(grid, axis=0).reshape([2, 1, grid_size, grid_size])
    emb_h = get_1d_sincos_pos_embed_from_grid(embed_dim // 2, grid[0])
    emb_w = get_1d_sincos_pos_embed_from_grid(embed_dim // 2, grid[1])
    pos_embed = np.concatenate([emb_h, emb_w], axis=1)
    if cls_token:
        pos_embed = np.concatenate([np.zeros([1, embed_dim]), pos_embed], axis=0)
    return pos_embed.astype(np.float32)


def label_smoothing_map(num_patches, sigma):
    if sigma == 0.0:
        return jnp.eye(num_patches, dtype=jnp.float32)
    w = int(math.sqrt(num_patches))
    coords = np.array([(i // w, i % w) for i in range(num_patches)], np.float32)
    dist = ((coords[:, None, :] - coords[None, :, :]) ** 2).sum(-1)
    weight = np.exp(-dist / sigma ** 2)
    # NOTE: mirrors the PyTorch reference bug-for-bug (sum(-1) broadcast, no keepdims).
    return jnp.asarray(weight / weight.sum(-1), dtype=jnp.float32)


def conv_patchify(imgs, p):
    """NCHW -> (N, L, C*p*p) with per-patch flatten order (c, ph, pw)."""
    N, C, H, W = imgs.shape
    h, w = H // p, W // p
    x = imgs.reshape(N, C, h, p, w, p)
    x = jnp.transpose(x, (0, 2, 4, 1, 3, 5))
    return x.reshape(N, h * w, C * p * p)


def xavier_uniform(key, shape, fan_in, fan_out):
    limit = math.sqrt(6.0 / (fan_in + fan_out))
    return jax.random.uniform(key, shape, jnp.float32, -limit, limit)


def _init_block_stack(key, depth, dim, heads, hidden):
    """Build per-head-packed weight stacks (matmul weights stored in bf16)."""
    dh = dim // heads
    keys = jax.random.split(key, depth)
    vecs, qkvw, qkvb, pw, f1w, f1b, f2w = [], [], [], [], [], [], []
    for d in range(depth):
        k = jax.random.split(keys[d], 4)
        w_qkv = xavier_uniform(k[0], (dim, 3 * dim), dim, 3 * dim)      # (D, 3D) torch col order
        w_qkv = w_qkv.reshape(dim, 3, heads, dh).transpose(1, 2, 0, 3)  # (3, H, D, dh)
        w_p = xavier_uniform(k[1], (dim, dim), dim, dim).reshape(heads, dh, dim)  # (H, dh, D)
        vecs.append(jnp.stack([jnp.ones((1, dim)), jnp.zeros((1, dim)),   # n1g, n1b
                               jnp.ones((1, dim)), jnp.zeros((1, dim)),   # n2g, n2b
                               jnp.zeros((1, dim)), jnp.zeros((1, dim))]))  # proj_b, fc2_b
        qkvw.append(w_qkv)
        qkvb.append(jnp.zeros((3, heads, 1, dh)))
        pw.append(w_p)
        f1w.append(xavier_uniform(k[2], (dim, hidden), dim, hidden))
        f1b.append(jnp.zeros((1, hidden)))
        f2w.append(xavier_uniform(k[3], (hidden, dim), hidden, dim))
    return dict(
        vec=jnp.stack(vecs).astype(jnp.float32),
        qkvw=jnp.stack(qkvw).astype(jnp.bfloat16),
        qkvb=jnp.stack(qkvb).astype(jnp.float32),
        pw=jnp.stack(pw).astype(jnp.bfloat16),
        f1w=jnp.stack(f1w).astype(jnp.bfloat16),
        f1b=jnp.stack(f1b).astype(jnp.float32),
        f2w=jnp.stack(f2w).astype(jnp.bfloat16),
    )


def init_params(key):
    keys = jax.random.split(key, 7)
    kpe = IN_CHANS * PATCH_SIZE * PATCH_SIZE
    hid_e = int(EMBED_DIM * MLP_RATIO)
    hid_d = int(DEC_EMBED_DIM * MLP_RATIO)
    p = {}
    p["pe_w"] = xavier_uniform(keys[0], (kpe, EMBED_DIM), kpe, EMBED_DIM).astype(jnp.bfloat16)
    p["pe_b"] = jnp.zeros((1, EMBED_DIM), jnp.float32)
    p["cls_token"] = (0.02 * jax.random.normal(keys[1], (1, 1, EMBED_DIM))).astype(jnp.float32)
    p["mask_pos_token"] = (0.02 * jax.random.normal(keys[2], (1, 1, EMBED_DIM))).astype(jnp.float32)
    p["pos_embed"] = jnp.asarray(
        get_2d_sincos_pos_embed(EMBED_DIM, int(NUM_PATCHES ** 0.5), cls_token=True))[None]
    p["enc"] = _init_block_stack(keys[3], DEPTH, EMBED_DIM, NUM_HEADS, hid_e)
    p["enc_norm"] = jnp.stack([jnp.ones((1, EMBED_DIM)),
                               jnp.zeros((1, EMBED_DIM))]).astype(jnp.float32)     # (2,1,D)
    p["de_w"] = xavier_uniform(keys[4], (EMBED_DIM, DEC_EMBED_DIM),
                               EMBED_DIM, DEC_EMBED_DIM).astype(jnp.bfloat16)
    p["de_b"] = jnp.zeros((1, DEC_EMBED_DIM), jnp.float32)
    p["dec"] = _init_block_stack(keys[5], DEC_DEPTH, DEC_EMBED_DIM, DEC_NUM_HEADS, hid_d)
    p["dec_norm"] = jnp.stack([jnp.ones((1, DEC_EMBED_DIM)),
                               jnp.zeros((1, DEC_EMBED_DIM))]).astype(jnp.float32)
    p["dp_w"] = xavier_uniform(keys[6], (DEC_EMBED_DIM, NUM_PATCHES),
                               DEC_EMBED_DIM, NUM_PATCHES).astype(jnp.bfloat16)
    p["dp_b"] = jnp.zeros((1, NUM_PATCHES), jnp.float32)
    return p


def _per_batch_spec(arr):
    zeros = (0,) * (arr.ndim - 1)
    return pl.BlockSpec((1,) + arr.shape[1:], lambda b: (b,) + zeros)


def _const_spec(arr):
    shape = arr.shape
    zeros = (0,) * arr.ndim
    return pl.BlockSpec(shape, lambda b: zeros)


def forward(params, imgs, rng, sigma=0.0):
    N = imgs.shape[0]
    L = NUM_PATCHES

    # ---- host glue with no Pallas equivalent: patchify reshape + argsort masking ----
    patches = conv_patchify(imgs, PATCH_SIZE)                                # (N, L, Kpe)
    k1, k2 = jax.random.split(rng)

    len_keep = int(L * (1 - MASK_RATIO))                                     # 4
    ids_keep = jnp.argsort(jax.random.uniform(k1, (N, L)),
                           axis=1)[:, :len_keep].astype(jnp.int32)           # (N, lk)
    lk = len_keep

    len_keep_pos = int(lk * (1 - POS_MASK_RATIO))                            # 1
    ids_shuffle_pos = jnp.argsort(jax.random.uniform(k2, (N, lk)), axis=1)
    ids_restore_pos = jnp.argsort(ids_shuffle_pos, axis=1)
    mask_pos = jnp.ones((N, lk), jnp.float32).at[:, :len_keep_pos].set(0.0)
    mask_pos = jnp.take_along_axis(mask_pos, ids_restore_pos, axis=1)        # 1 = pos dropped

    # gather indices driving the in-kernel one-hot gathers
    cls_col = jnp.full((N, 1), L, jnp.int32)
    keep_idx = jnp.concatenate([cls_col, ids_keep], axis=1)[..., None]       # (N, S, 1)
    pos_vis = jnp.where(mask_pos > 0.5, jnp.int32(L + 1), ids_keep)
    pos_idx = jnp.concatenate([cls_col, pos_vis], axis=1)[..., None]         # (N, S, 1)

    # additive-token table: rows [0..L-1]=pos_embed, [L]=cls+pos0, [L+1]=mask_pos_token
    add_tab = jnp.concatenate([
        params["pos_embed"][0, 1:, :],
        params["cls_token"][0] + params["pos_embed"][0, :1, :],
        params["mask_pos_token"][0]], axis=0).astype(jnp.float32)            # (L+2, D)

    smooth = label_smoothing_map(L, sigma)                                   # (L, L)

    enc, dec = params["enc"], params["dec"]
    operands = [
        patches, keep_idx, pos_idx,
        params["pe_w"], params["pe_b"], add_tab,
        enc["vec"], enc["qkvw"], enc["qkvb"], enc["pw"], enc["f1w"], enc["f1b"], enc["f2w"],
        params["enc_norm"],
        params["de_w"], params["de_b"],
        dec["vec"], dec["qkvw"], dec["qkvb"], dec["pw"], dec["f1w"], dec["f1b"], dec["f2w"],
        params["dec_norm"],
        params["dp_w"], params["dp_b"], smooth,
    ]
    in_specs = ([_per_batch_spec(a) for a in operands[:3]]
                + [_const_spec(a) for a in operands[3:]])

    kernel = partial(_droppos_kernel, num_patches=L, enc_heads=NUM_HEADS,
                     dec_heads=DEC_NUM_HEADS, depth=DEPTH, dec_depth=DEC_DEPTH)

    parts = pl.pallas_call(
        kernel,
        grid=(N,),
        in_specs=in_specs,
        out_specs=pl.BlockSpec((1, 1, 128), lambda b: (b, 0, 0)),
        out_shape=jax.ShapeDtypeStruct((N, 1, 128), jnp.float32),
        compiler_params=pltpu.CompilerParams(
            dimension_semantics=("parallel",),
            vmem_limit_bytes=8 * 1024 * 1024),
    )(*operands)

    # final combine of the per-batch partial sums (2 tiny XLA divisions)
    msum = jnp.sum(parts[:, 0, 2])
    loss = jnp.sum(parts[:, 0, 0]) / msum
    acc1 = jnp.sum(parts[:, 0, 1]) / msum
    return {"loss": loss, "acc1": acc1}


if __name__ == "__main__":
    key = jax.random.PRNGKey(0)
    pkey, ikey, mkey = jax.random.split(key, 3)
    params = init_params(pkey)
    imgs = jax.random.normal(ikey, (2, IN_CHANS, IMG_SIZE, IMG_SIZE), jnp.float32)
    fwd = jax.jit(partial(forward, sigma=0.0))
    out = fwd(params, imgs, mkey)
    jax.block_until_ready(out["loss"])
    jax.block_until_ready(out["acc1"])
    print("KERNEL_OK")
</pallas_src>

<mosaic_0001>
module attributes {stable_mosaic.version = 11 : i64} {
  func.func @_droppos_kernel(%arg0: i32, %arg1: memref<1x16x192xf32, #tpu.memory_space<vmem>>, %arg2: memref<1x5x1xi32, #tpu.memory_space<vmem>>, %arg3: memref<1x5x1xi32, #tpu.memory_space<vmem>>, %arg4: memref<192x64xbf16, #tpu.memory_space<vmem>>, %arg5: memref<1x64xf32, #tpu.memory_space<vmem>>, %arg6: memref<18x64xf32, #tpu.memory_space<vmem>>, %arg7: memref<2x6x1x64xf32, #tpu.memory_space<vmem>>, %arg8: memref<2x3x4x64x16xbf16, #tpu.memory_space<vmem>>, %arg9: memref<2x3x4x1x16xf32, #tpu.memory_space<vmem>>, %arg10: memref<2x4x16x64xbf16, #tpu.memory_space<vmem>>, %arg11: memref<2x64x256xbf16, #tpu.memory_space<vmem>>, %arg12: memref<2x1x256xf32, #tpu.memory_space<vmem>>, %arg13: memref<2x256x64xbf16, #tpu.memory_space<vmem>>, %arg14: memref<2x1x64xf32, #tpu.memory_space<vmem>>, %arg15: memref<64x32xbf16, #tpu.memory_space<vmem>>, %arg16: memref<1x32xf32, #tpu.memory_space<vmem>>, %arg17: memref<1x6x1x32xf32, #tpu.memory_space<vmem>>, %arg18: memref<1x3x4x32x8xbf16, #tpu.memory_space<vmem>>, %arg19: memref<1x3x4x1x8xf32, #tpu.memory_space<vmem>>, %arg20: memref<1x4x8x32xbf16, #tpu.memory_space<vmem>>, %arg21: memref<1x32x128xbf16, #tpu.memory_space<vmem>>, %arg22: memref<1x1x128xf32, #tpu.memory_space<vmem>>, %arg23: memref<1x128x32xbf16, #tpu.memory_space<vmem>>, %arg24: memref<2x1x32xf32, #tpu.memory_space<vmem>>, %arg25: memref<32x16xbf16, #tpu.memory_space<vmem>>, %arg26: memref<1x16xf32, #tpu.memory_space<vmem>>, %arg27: memref<16x16xf32, #tpu.memory_space<vmem>>, %arg28: memref<1x1x128xf32, #tpu.memory_space<vmem>>) attributes {dimension_semantics = [#tpu.dimension_semantics<parallel>], iteration_bounds = array<i64: 2>, scalar_prefetch = 0 : i64, scratch_operands = 0 : i64, tpu.core_type = #tpu.core_type<tc>, window_params = [{transform_indices = @transform_0, window_bounds = array<i64: 1, 16, 192>}, {transform_indices = @transform_1, window_bounds = array<i64: 1, 5, 1>}, {transform_indices = @transform_2, window_bounds = array<i64: 1, 5, 1>}, {pipeline_mode = #tpu.pipeline_mode<synchronous>, transform_indices = @transform_3, window_bounds = array<i64: 192, 64>}, {pipeline_mode = #tpu.pipeline_mode<synchronous>, transform_indices = @transform_4, window_bounds = array<i64: 1, 64>}, {pipeline_mode = #tpu.pipeline_mode<synchronous>, transform_indices = @transform_5, window_bounds = array<i64: 18, 64>}, {pipeline_mode = #tpu.pipeline_mode<synchronous>, transform_indices = @transform_6, window_bounds = array<i64: 2, 6, 1, 64>}, {pipeline_mode = #tpu.pipeline_mode<synchronous>, transform_indices = @transform_7, window_bounds = array<i64: 2, 3, 4, 64, 16>}, {pipeline_mode = #tpu.pipeline_mode<synchronous>, transform_indices = @transform_8, window_bounds = array<i64: 2, 3, 4, 1, 16>}, {pipeline_mode = #tpu.pipeline_mode<synchronous>, transform_indices = @transform_9, window_bounds = array<i64: 2, 4, 16, 64>}, {pipeline_mode = #tpu.pipeline_mode<synchronous>, transform_indices = @transform_10, window_bounds = array<i64: 2, 64, 256>}, {pipeline_mode = #tpu.pipeline_mode<synchronous>, transform_indices = @transform_11, window_bounds = array<i64: 2, 1, 256>}, {pipeline_mode = #tpu.pipeline_mode<synchronous>, transform_indices = @transform_12, window_bounds = array<i64: 2, 256, 64>}, {pipeline_mode = #tpu.pipeline_mode<synchronous>, transform_indices = @transform_13, window_bounds = array<i64: 2, 1, 64>}, {pipeline_mode = #tpu.pipeline_mode<synchronous>, transform_indices = @transform_14, window_bounds = array<i64: 64, 32>}, {pipeline_mode = #tpu.pipeline_mode<synchronous>, transform_indices = @transform_15, window_bounds = array<i64: 1, 32>}, {pipeline_mode = #tpu.pipeline_mode<synchronous>, transform_indices = @transform_16, window_bounds = array<i64: 1, 6, 1, 32>}, {pipeline_mode = #tpu.pipeline_mode<synchronous>, transform_indices = @transform_17, window_bounds = array<i64: 1, 3, 4, 32, 8>}, {pipeline_mode = #tpu.pipeline_mode<synchronous>, transform_indices = @transform_18, window_bounds = array<i64: 1, 3, 4, 1, 8>}, {pipeline_mode = #tpu.pipeline_mode<synchronous>, transform_indices = @transform_19, window_bounds = array<i64: 1, 4, 8, 32>}, {pipeline_mode = #tpu.pipeline_mode<synchronous>, transform_indices = @transform_20, window_bounds = array<i64: 1, 32, 128>}, {pipeline_mode = #tpu.pipeline_mode<synchronous>, transform_indices = @transform_21, window_bounds = array<i64: 1, 1, 128>}, {pipeline_mode = #tpu.pipeline_mode<synchronous>, transform_indices = @transform_22, window_bounds = array<i64: 1, 128, 32>}, {pipeline_mode = #tpu.pipeline_mode<synchronous>, transform_indices = @transform_23, window_bounds = array<i64: 2, 1, 32>}, {pipeline_mode = #tpu.pipeline_mode<synchronous>, transform_indices = @transform_24, window_bounds = array<i64: 32, 16>}, {pipeline_mode = #tpu.pipeline_mode<synchronous>, transform_indices = @transform_25, window_bounds = array<i64: 1, 16>}, {pipeline_mode = #tpu.pipeline_mode<synchronous>, transform_indices = @transform_26, window_bounds = array<i64: 16, 16>}, {transform_indices = @transform_27, window_bounds = array<i64: 1, 1, 128>}]} {
    %c0 = arith.constant 0 : index
    %c0_0 = arith.constant 0 : index
    %c0_1 = arith.constant 0 : index
    %0 = vector.load %arg1[%c0, %c0_0, %c0_1] : memref<1x16x192xf32, #tpu.memory_space<vmem>>, vector<1x16x192xf32>
    %1 = vector.shape_cast %0 : vector<1x16x192xf32> to vector<16x192xf32>
    %2 = arith.truncf %1 : vector<16x192xf32> to vector<16x192xbf16>
    %c0_2 = arith.constant 0 : index
    %c0_3 = arith.constant 0 : index
    %3 = vector.load %arg4[%c0_2, %c0_3] : memref<192x64xbf16, #tpu.memory_space<vmem>>, vector<192x64xbf16>
    %cst = arith.constant dense<0.000000e+00> : vector<16x64xf32>
    %4 = tpu.matmul %2, %3, %cst {dimension_numbers = #tpu.dot_dimension_numbers<[1], [0], [0], [1], [0, 0, 1, 1], [], []>} : vector<16x192xbf16>, vector<192x64xbf16>, vector<16x64xf32> -> vector<16x64xf32>
    %c0_4 = arith.constant 0 : index
    %c0_5 = arith.constant 0 : index
    %5 = vector.load %arg5[%c0_4, %c0_5] : memref<1x64xf32, #tpu.memory_space<vmem>>, vector<1x64xf32>
    %6 = vector.broadcast %5 : vector<1x64xf32> to vector<16x64xf32>
    %7 = arith.addf %4, %6 : vector<16x64xf32>
    %c0_6 = arith.constant 0 : index
    %c0_7 = arith.constant 0 : index
    %c0_8 = arith.constant 0 : index
    %8 = vector.load %arg2[%c0_6, %c0_7, %c0_8] : memref<1x5x1xi32, #tpu.memory_space<vmem>>, vector<1x5x1xi32>
    %9 = vector.shape_cast %8 : vector<1x5x1xi32> to vector<5x1xi32>
    %c0_9 = arith.constant 0 : index
    %c0_10 = arith.constant 0 : index
    %c0_11 = arith.constant 0 : index
    %10 = vector.load %arg3[%c0_9, %c0_10, %c0_11] : memref<1x5x1xi32, #tpu.memory_space<vmem>>, vector<1x5x1xi32>
    %11 = vector.shape_cast %10 : vector<1x5x1xi32> to vector<5x1xi32>
    %12 = tpu.iota {dimensions = array<i32: 1>} : vector<5x16xi32>
    %13 = vector.broadcast %9 : vector<5x1xi32> to vector<5x16xi32>
    %14 = arith.cmpi eq, %13, %12 : vector<5x16xi32>
    %15 = arith.extui %14 : vector<5x16xi1> to vector<5x16xi32>
    %16 = arith.sitofp %15 : vector<5x16xi32> to vector<5x16xf32>
    %17 = tpu.iota {dimensions = array<i32: 1>} : vector<5x18xi32>
    %18 = vector.broadcast %11 : vector<5x1xi32> to vector<5x18xi32>
    %19 = arith.cmpi eq, %18, %17 : vector<5x18xi32>
    %20 = arith.extui %19 : vector<5x18xi1> to vector<5x18xi32>
    %21 = arith.sitofp %20 : vector<5x18xi32> to vector<5x18xf32>
    %cst_12 = arith.constant dense<0.000000e+00> : vector<5x64xf32>
    %22 = tpu.matmul %16, %7, %cst_12 {dimension_numbers = #tpu.dot_dimension_numbers<[1], [0], [0], [1], [0, 0, 1, 1], [], []>} : vector<5x16xf32>, vector<16x64xf32>, vector<5x64xf32> -> vector<5x64xf32>
    %c0_13 = arith.constant 0 : index
    %c0_14 = arith.constant 0 : index
    %23 = vector.load %arg6[%c0_13, %c0_14] : memref<18x64xf32, #tpu.memory_space<vmem>>, vector<18x64xf32>
    %cst_15 = arith.constant dense<0.000000e+00> : vector<5x64xf32>
    %24 = tpu.matmul %21, %23, %cst_15 {dimension_numbers = #tpu.dot_dimension_numbers<[1], [0], [0], [1], [0, 0, 1, 1], [], []>} : vector<5x18xf32>, vector<18x64xf32>, vector<5x64xf32> -> vector<5x64xf32>
    %25 = arith.addf %22, %24 : vector<5x64xf32>
    %c0_16 = arith.constant 0 : index
    %c0_17 = arith.constant 0 : index
    %c0_18 = arith.constant 0 : index
    %c0_19 = arith.constant 0 : index
    %26 = vector.load %arg7[%c0_16, %c0_17, %c0_18, %c0_19] : memref<2x6x1x64xf32, #tpu.memory_space<vmem>>, vector<1x1x1x64xf32>
    %27 = vector.shape_cast %26 : vector<1x1x1x64xf32> to vector<1x64xf32>
    %c0_20 = arith.constant 0 : index
    %c1 = arith.constant 1 : index
    %c0_21 = arith.constant 0 : index
    %c0_22 = arith.constant 0 : index
    %28 = vector.load %arg7[%c0_20, %c1, %c0_21, %c0_22] : memref<2x6x1x64xf32, #tpu.memory_space<vmem>>, vector<1x1x1x64xf32>
    %29 = vector.shape_cast %28 : vector<1x1x1x64xf32> to vector<1x64xf32>
    %c0_23 = arith.constant 0 : index
    %c2 = arith.constant 2 : index
    %c0_24 = arith.constant 0 : index
    %c0_25 = arith.constant 0 : index
    %30 = vector.load %arg7[%c0_23, %c2, %c0_24, %c0_25] : memref<2x6x1x64xf32, #tpu.memory_space<vmem>>, vector<1x1x1x64xf32>
    %31 = vector.shape_cast %30 : vector<1x1x1x64xf32> to vector<1x64xf32>
    %c0_26 = arith.constant 0 : index
    %c3 = arith.constant 3 : index
    %c0_27 = arith.constant 0 : index
    %c0_28 = arith.constant 0 : index
    %32 = vector.load %arg7[%c0_26, %c3, %c0_27, %c0_28] : memref<2x6x1x64xf32, #tpu.memory_space<vmem>>, vector<1x1x1x64xf32>
    %33 = vector.shape_cast %32 : vector<1x1x1x64xf32> to vector<1x64xf32>
    %c0_29 = arith.constant 0 : index
    %c4 = arith.constant 4 : index
    %c0_30 = arith.constant 0 : index
    %c0_31 = arith.constant 0 : index
    %34 = vector.load %arg7[%c0_29, %c4, %c0_30, %c0_31] : memref<2x6x1x64xf32, #tpu.memory_space<vmem>>, vector<1x1x1x64xf32>
    %35 = vector.shape_cast %34 : vector<1x1x1x64xf32> to vector<1x64xf32>
    %c0_32 = arith.constant 0 : index
    %c5 = arith.constant 5 : index
    %c0_33 = arith.constant 0 : index
    %c0_34 = arith.constant 0 : index
    %36 = vector.load %arg7[%c0_32, %c5, %c0_33, %c0_34] : memref<2x6x1x64xf32, #tpu.memory_space<vmem>>, vector<1x1x1x64xf32>
    %37 = vector.shape_cast %36 : vector<1x1x1x64xf32> to vector<1x64xf32>
    %cst_35 = arith.constant dense<0.000000e+00> : vector<5xf32>
    %38 = vector.multi_reduction <add>, %25, %cst_35 [1] : vector<5x64xf32> to vector<5xf32>
    %39 = vector.shape_cast %38 : vector<5xf32> to vector<5x1xf32>
    %cst_36 = arith.constant 6.400000e+01 : f32
    %40 = vector.broadcast %cst_36 : f32 to vector<5x1xf32>
    %41 = arith.divf %39, %40 : vector<5x1xf32>
    %42 = vector.broadcast %41 : vector<5x1xf32> to vector<5x64xf32>
    %43 = arith.subf %25, %42 : vector<5x64xf32>
    %44 = arith.mulf %43, %43 : vector<5x64xf32>
    %cst_37 = arith.constant dense<0.000000e+00> : vector<5xf32>
    %45 = vector.multi_reduction <add>, %44, %cst_37 [1] : vector<5x64xf32> to vector<5xf32>
    %46 = vector.shape_cast %45 : vector<5xf32> to vector<5x1xf32>
    %cst_38 = arith.constant 6.400000e+01 : f32
    %47 = vector.broadcast %cst_38 : f32 to vector<5x1xf32>
    %48 = arith.divf %46, %47 : vector<5x1xf32>
    %49 = vector.broadcast %41 : vector<5x1xf32> to vector<5x64xf32>
    %50 = arith.subf %25, %49 : vector<5x64xf32>
    %cst_39 = arith.constant 9.99999974E-6 : f32
    %51 = vector.broadcast %cst_39 : f32 to vector<5x1xf32>
    %52 = arith.addf %48, %51 : vector<5x1xf32>
    %53 = math.rsqrt %52 : vector<5x1xf32>
    %54 = vector.broadcast %53 : vector<5x1xf32> to vector<5x64xf32>
    %55 = arith.mulf %50, %54 : vector<5x64xf32>
    %56 = vector.broadcast %27 : vector<1x64xf32> to vector<5x64xf32>
    %57 = arith.mulf %55, %56 : vector<5x64xf32>
    %58 = vector.broadcast %29 : vector<1x64xf32> to vector<5x64xf32>
    %59 = arith.addf %57, %58 : vector<5x64xf32>
    %60 = arith.truncf %59 : vector<5x64xf32> to vector<5x64xbf16>
    %c0_40 = arith.constant 0 : index
    %c0_41 = arith.constant 0 : index
    %c0_42 = arith.constant 0 : index
    %c0_43 = arith.constant 0 : index
    %c0_44 = arith.constant 0 : index
    %61 = vector.load %arg8[%c0_40, %c0_41, %c0_42, %c0_43, %c0_44] : memref<2x3x4x64x16xbf16, #tpu.memory_space<vmem>>, vector<1x1x1x64x16xbf16>
    %62 = vector.shape_cast %61 : vector<1x1x1x64x16xbf16> to vector<64x16xbf16>
    %cst_45 = arith.constant dense<0.000000e+00> : vector<5x16xf32>
    %63 = tpu.matmul %60, %62, %cst_45 {dimension_numbers = #tpu.dot_dimension_numbers<[1], [0], [0], [1], [0, 0, 1, 1], [], []>} : vector<5x64xbf16>, vector<64x16xbf16>, vector<5x16xf32> -> vector<5x16xf32>
    %c0_46 = arith.constant 0 : index
    %c0_47 = arith.constant 0 : index
    %c0_48 = arith.constant 0 : index
    %c0_49 = arith.constant 0 : index
    %c0_50 = arith.constant 0 : index
    %64 = vector.load %arg9[%c0_46, %c0_47, %c0_48, %c0_49, %c0_50] : memref<2x3x4x1x16xf32, #tpu.memory_space<vmem>>, vector<1x1x1x1x16xf32>
    %65 = vector.shape_cast %64 : vector<1x1x1x1x16xf32> to vector<1x16xf32>
    %66 = vector.broadcast %65 : vector<1x16xf32> to vector<5x16xf32>
    %67 = arith.addf %63, %66 : vector<5x16xf32>
    %c0_51 = arith.constant 0 : index
    %c1_52 = arith.constant 1 : index
    %c0_53 = arith.constant 0 : index
    %c0_54 = arith.constant 0 : index
    %c0_55 = arith.constant 0 : index
    %68 = vector.load %arg8[%c0_51, %c1_52, %c0_53, %c0_54, %c0_55] : memref<2x3x4x64x16xbf16, #tpu.memory_space<vmem>>, vector<1x1x1x64x16xbf16>
    %69 = vector.shape_cast %68 : vector<1x1x1x64x16xbf16> to vector<64x16xbf16>
    %cst_56 = arith.constant dense<0.000000e+00> : vector<5x16xf32>
    %70 = tpu.matmul %60, %69, %cst_56 {dimension_numbers = #tpu.dot_dimension_numbers<[1], [0], [0], [1], [0, 0, 1, 1], [], []>} : vector<5x64xbf16>, vector<64x16xbf16>, vector<5x16xf32> -> vector<5x16xf32>
    %c0_57 = arith.constant 0 : index
    %c1_58 = arith.constant 1 : index
    %c0_59 = arith.constant 0 : index
    %c0_60 = arith.constant 0 : index
    %c0_61 = arith.constant 0 : index
    %71 = vector.load %arg9[%c0_57, %c1_58, %c0_59, %c0_60, %c0_61] : memref<2x3x4x1x16xf32, #tpu.memory_space<vmem>>, vector<1x1x1x1x16xf32>
    %72 = vector.shape_cast %71 : vector<1x1x1x1x16xf32> to vector<1x16xf32>
    %73 = vector.broadcast %72 : vector<1x16xf32> to vector<5x16xf32>
    %74 = arith.addf %70, %73 : vector<5x16xf32>
    %c0_62 = arith.constant 0 : index
    %c2_63 = arith.constant 2 : index
    %c0_64 = arith.constant 0 : index
    %c0_65 = arith.constant 0 : index
    %c0_66 = arith.constant 0 : index
    %75 = vector.load %arg8[%c0_62, %c2_63, %c0_64, %c0_65, %c0_66] : memref<2x3x4x64x16xbf16, #tpu.memory_space<vmem>>, vector<1x1x1x64x16xbf16>
    %76 = vector.shape_cast %75 : vector<1x1x1x64x16xbf16> to vector<64x16xbf16>
    %cst_67 = arith.constant dense<0.000000e+00> : vector<5x16xf32>
    %77 = tpu.matmul %60, %76, %cst_67 {dimension_numbers = #tpu.dot_dimension_numbers<[1], [0], [0], [1], [0, 0, 1, 1], [], []>} : vector<5x64xbf16>, vector<64x16xbf16>, vector<5x16xf32> -> vector<5x16xf32>
    %c0_68 = arith.constant 0 : index
    %c2_69 = arith.constant 2 : index
    %c0_70 = arith.constant 0 : index
    %c0_71 = arith.constant 0 : index
    %c0_72 = arith.constant 0 : index
    %78 = vector.load %arg9[%c0_68, %c2_69, %c0_70, %c0_71, %c0_72] : memref<2x3x4x1x16xf32, #tpu.memory_space<vmem>>, vector<1x1x1x1x16xf32>
    %79 = vector.shape_cast %78 : vector<1x1x1x1x16xf32> to vector<1x16xf32>
    %80 = vector.broadcast %79 : vector<1x16xf32> to vector<5x16xf32>
    %81 = arith.addf %77, %80 : vector<5x16xf32>
    %cst_73 = arith.constant dense<0.000000e+00> : vector<5x5xf32>
    %82 = tpu.matmul %67, %74, %cst_73 {dimension_numbers = #tpu.dot_dimension_numbers<[1], [1], [0], [0], [0, 0, 1, 0], [], []>} : vector<5x16xf32>, vector<5x16xf32>, vector<5x5xf32> -> vector<5x5xf32>
    %cst_74 = arith.constant 2.500000e-01 : f32
    %83 = vector.broadcast %cst_74 : f32 to vector<5x5xf32>
    %84 = arith.mulf %82, %83 : vector<5x5xf32>
    %cst_75 = arith.constant dense<0xFF800000> : vector<5xf32>
    %85 = vector.multi_reduction <maximumf>, %84, %cst_75 [1] : vector<5x5xf32> to vector<5xf32>
    %86 = vector.shape_cast %85 : vector<5xf32> to vector<5x1xf32>
    %87 = vector.broadcast %86 : vector<5x1xf32> to vector<5x5xf32>
    %88 = arith.subf %84, %87 : vector<5x5xf32>
    %89 = math.exp %88 : vector<5x5xf32>
    %cst_76 = arith.constant dense<0.000000e+00> : vector<5xf32>
    %90 = vector.multi_reduction <add>, %89, %cst_76 [1] : vector<5x5xf32> to vector<5xf32>
    %91 = vector.shape_cast %90 : vector<5xf32> to vector<5x1xf32>
    %92 = tpu.reciprocal %91 {approx = true} : vector<5x1xf32> -> vector<5x1xf32>
    %93 = vector.broadcast %92 : vector<5x1xf32> to vector<5x5xf32>
    %94 = arith.mulf %89, %93 : vector<5x5xf32>
    %95 = arith.truncf %94 : vector<5x5xf32> to vector<5x5xbf16>
    %96 = arith.truncf %81 : vector<5x16xf32> to vector<5x16xbf16>
    %cst_77 = arith.constant dense<0.000000e+00> : vector<5x16xf32>
    %97 = tpu.matmul %95, %96, %cst_77 {dimension_numbers = #tpu.dot_dimension_numbers<[1], [0], [0], [1], [0, 0, 1, 1], [], []>} : vector<5x5xbf16>, vector<5x16xbf16>, vector<5x16xf32> -> vector<5x16xf32>
    %98 = arith.truncf %97 : vector<5x16xf32> to vector<5x16xbf16>
    %c0_78 = arith.constant 0 : index
    %c0_79 = arith.constant 0 : index
    %c0_80 = arith.constant 0 : index
    %c0_81 = arith.constant 0 : index
    %99 = vector.load %arg10[%c0_78, %c0_79, %c0_80, %c0_81] : memref<2x4x16x64xbf16, #tpu.memory_space<vmem>>, vector<1x1x16x64xbf16>
    %100 = vector.shape_cast %99 : vector<1x1x16x64xbf16> to vector<16x64xbf16>
    %cst_82 = arith.constant dense<0.000000e+00> : vector<5x64xf32>
    %101 = tpu.matmul %98, %100, %cst_82 {dimension_numbers = #tpu.dot_dimension_numbers<[1], [0], [0], [1], [0, 0, 1, 1], [], []>} : vector<5x16xbf16>, vector<16x64xbf16>, vector<5x64xf32> -> vector<5x64xf32>
    %c0_83 = arith.constant 0 : index
    %c0_84 = arith.constant 0 : index
    %c1_85 = arith.constant 1 : index
    %c0_86 = arith.constant 0 : index
    %c0_87 = arith.constant 0 : index
    %102 = vector.load %arg8[%c0_83, %c0_84, %c1_85, %c0_86, %c0_87] : memref<2x3x4x64x16xbf16, #tpu.memory_space<vmem>>, vector<1x1x1x64x16xbf16>
    %103 = vector.shape_cast %102 : vector<1x1x1x64x16xbf16> to vector<64x16xbf16>
    %cst_88 = arith.constant dense<0.000000e+00> : vector<5x16xf32>
    %104 = tpu.matmul %60, %103, %cst_88 {dimension_numbers = #tpu.dot_dimension_numbers<[1], [0], [0], [1], [0, 0, 1, 1], [], []>} : vector<5x64xbf16>, vector<64x16xbf16>, vector<5x16xf32> -> vector<5x16xf32>
    %c0_89 = arith.constant 0 : index
    %c0_90 = arith.constant 0 : index
    %c1_91 = arith.constant 1 : index
    %c0_92 = arith.constant 0 : index
    %c0_93 = arith.constant 0 : index
    %105 = vector.load %arg9[%c0_89, %c0_90, %c1_91, %c0_92, %c0_93] : memref<2x3x4x1x16xf32, #tpu.memory_space<vmem>>, vector<1x1x1x1x16xf32>
    %106 = vector.shape_cast %105 : vector<1x1x1x1x16xf32> to vector<1x16xf32>
    %107 = vector.broadcast %106 : vector<1x16xf32> to vector<5x16xf32>
    %108 = arith.addf %104, %107 : vector<5x16xf32>
    %c0_94 = arith.constant 0 : index
    %c1_95 = arith.constant 1 : index
    %c1_96 = arith.constant 1 : index
    %c0_97 = arith.constant 0 : index
    %c0_98 = arith.constant 0 : index
    %109 = vector.load %arg8[%c0_94, %c1_95, %c1_96, %c0_97, %c0_98] : memref<2x3x4x64x16xbf16, #tpu.memory_space<vmem>>, vector<1x1x1x64x16xbf16>
    %110 = vector.shape_cast %109 : vector<1x1x1x64x16xbf16> to vector<64x16xbf16>
    %cst_99 = arith.constant dense<0.000000e+00> : vector<5x16xf32>
    %111 = tpu.matmul %60, %110, %cst_99 {dimension_numbers = #tpu.dot_dimension_numbers<[1], [0], [0], [1], [0, 0, 1, 1], [], []>} : vector<5x64xbf16>, vector<64x16xbf16>, vector<5x16xf32> -> vector<5x16xf32>
    %c0_100 = arith.constant 0 : index
    %c1_101 = arith.constant 1 : index
    %c1_102 = arith.constant 1 : index
    %c0_103 = arith.constant 0 : index
    %c0_104 = arith.constant 0 : index
    %112 = vector.load %arg9[%c0_100, %c1_101, %c1_102, %c0_103, %c0_104] : memref<2x3x4x1x16xf32, #tpu.memory_space<vmem>>, vector<1x1x1x1x16xf32>
    %113 = vector.shape_cast %112 : vector<1x1x1x1x16xf32> to vector<1x16xf32>
    %114 = vector.broadcast %113 : vector<1x16xf32> to vector<5x16xf32>
    %115 = arith.addf %111, %114 : vector<5x16xf32>
    %c0_105 = arith.constant 0 : index
    %c2_106 = arith.constant 2 : index
    %c1_107 = arith.constant 1 : index
    %c0_108 = arith.constant 0 : index
    %c0_109 = arith.constant 0 : index
    %116 = vector.load %arg8[%c0_105, %c2_106, %c1_107, %c0_108, %c0_109] : memref<2x3x4x64x16xbf16, #tpu.memory_space<vmem>>, vector<1x1x1x64x16xbf16>
    %117 = vector.shape_cast %116 : vector<1x1x1x64x16xbf16> to vector<64x16xbf16>
    %cst_110 = arith.constant dense<0.000000e+00> : vector<5x16xf32>
    %118 = tpu.matmul %60, %117, %cst_110 {dimension_numbers = #tpu.dot_dimension_numbers<[1], [0], [0], [1], [0, 0, 1, 1], [], []>} : vector<5x64xbf16>, vector<64x16xbf16>, vector<5x16xf32> -> vector<5x16xf32>
    %c0_111 = arith.constant 0 : index
    %c2_112 = arith.constant 2 : index
    %c1_113 = arith.constant 1 : index
    %c0_114 = arith.constant 0 : index
    %c0_115 = arith.constant 0 : index
    %119 = vector.load %arg9[%c0_111, %c2_112, %c1_113, %c0_114, %c0_115] : memref<2x3x4x1x16xf32, #tpu.memory_space<vmem>>, vector<1x1x1x1x16xf32>
    %120 = vector.shape_cast %119 : vector<1x1x1x1x16xf32> to vector<1x16xf32>
    %121 = vector.broadcast %120 : vector<1x16xf32> to vector<5x16xf32>
    %122 = arith.addf %118, %121 : vector<5x16xf32>
    %cst_116 = arith.constant dense<0.000000e+00> : vector<5x5xf32>
    %123 = tpu.matmul %108, %115, %cst_116 {dimension_numbers = #tpu.dot_dimension_numbers<[1], [1], [0], [0], [0, 0, 1, 0], [], []>} : vector<5x16xf32>, vector<5x16xf32>, vector<5x5xf32> -> vector<5x5xf32>
    %cst_117 = arith.constant 2.500000e-01 : f32
    %124 = vector.broadcast %cst_117 : f32 to vector<5x5xf32>
    %125 = arith.mulf %123, %124 : vector<5x5xf32>
    %cst_118 = arith.constant dense<0xFF800000> : vector<5xf32>
    %126 = vector.multi_reduction <maximumf>, %125, %cst_118 [1] : vector<5x5xf32> to vector<5xf32>
    %127 = vector.shape_cast %126 : vector<5xf32> to vector<5x1xf32>
    %128 = vector.broadcast %127 : vector<5x1xf32> to vector<5x5xf32>
    %129 = arith.subf %125, %128 : vector<5x5xf32>
    %130 = math.exp %129 : vector<5x5xf32>
    %cst_119 = arith.constant dense<0.000000e+00> : vector<5xf32>
    %131 = vector.multi_reduction <add>, %130, %cst_119 [1] : vector<5x5xf32> to vector<5xf32>
    %132 = vector.shape_cast %131 : vector<5xf32> to vector<5x1xf32>
    %133 = tpu.reciprocal %132 {approx = true} : vector<5x1xf32> -> vector<5x1xf32>
    %134 = vector.broadcast %133 : vector<5x1xf32> to vector<5x5xf32>
    %135 = arith.mulf %130, %134 : vector<5x5xf32>
    %136 = arith.truncf %135 : vector<5x5xf32> to vector<5x5xbf16>
    %137 = arith.truncf %122 : vector<5x16xf32> to vector<5x16xbf16>
    %cst_120 = arith.constant dense<0.000000e+00> : vector<5x16xf32>
    %138 = tpu.matmul %136, %137, %cst_120 {dimension_numbers = #tpu.dot_dimension_numbers<[1], [0], [0], [1], [0, 0, 1, 1], [], []>} : vector<5x5xbf16>, vector<5x16xbf16>, vector<5x16xf32> -> vector<5x16xf32>
    %139 = arith.truncf %138 : vector<5x16xf32> to vector<5x16xbf16>
    %c0_121 = arith.constant 0 : index
    %c1_122 = arith.constant 1 : index
    %c0_123 = arith.constant 0 : index
    %c0_124 = arith.constant 0 : index
    %140 = vector.load %arg10[%c0_121, %c1_122, %c0_123, %c0_124] : memref<2x4x16x64xbf16, #tpu.memory_space<vmem>>, vector<1x1x16x64xbf16>
    %141 = vector.shape_cast %140 : vector<1x1x16x64xbf16> to vector<16x64xbf16>
    %cst_125 = arith.constant dense<0.000000e+00> : vector<5x64xf32>
    %142 = tpu.matmul %139, %141, %cst_125 {dimension_numbers = #tpu.dot_dimension_numbers<[1], [0], [0], [1], [0, 0, 1, 1], [], []>} : vector<5x16xbf16>, vector<16x64xbf16>, vector<5x64xf32> -> vector<5x64xf32>
    %143 = arith.addf %101, %142 : vector<5x64xf32>
    %c0_126 = arith.constant 0 : index
    %c0_127 = arith.constant 0 : index
    %c2_128 = arith.constant 2 : index
    %c0_129 = arith.constant 0 : index
    %c0_130 = arith.constant 0 : index
    %144 = vector.load %arg8[%c0_126, %c0_127, %c2_128, %c0_129, %c0_130] : memref<2x3x4x64x16xbf16, #tpu.memory_space<vmem>>, vector<1x1x1x64x16xbf16>
    %145 = vector.shape_cast %144 : vector<1x1x1x64x16xbf16> to vector<64x16xbf16>
    %cst_131 = arith.constant dense<0.000000e+00> : vector<5x16xf32>
    %146 = tpu.matmul %60, %145, %cst_131 {dimension_numbers = #tpu.dot_dimension_numbers<[1], [0], [0], [1], [0, 0, 1, 1], [], []>} : vector<5x64xbf16>, vector<64x16xbf16>, vector<5x16xf32> -> vector<5x16xf32>
    %c0_132 = arith.constant 0 : index
    %c0_133 = arith.constant 0 : index
    %c2_134 = arith.constant 2 : index
    %c0_135 = arith.constant 0 : index
    %c0_136 = arith.constant 0 : index
    %147 = vector.load %arg9[%c0_132, %c0_133, %c2_134, %c0_135, %c0_136] : memref<2x3x4x1x16xf32, #tpu.memory_space<vmem>>, vector<1x1x1x1x16xf32>
    %148 = vector.shape_cast %147 : vector<1x1x1x1x16xf32> to vector<1x16xf32>
    %149 = vector.broadcast %148 : vector<1x16xf32> to vector<5x16xf32>
    %150 = arith.addf %146, %149 : vector<5x16xf32>
    %c0_137 = arith.constant 0 : index
    %c1_138 = arith.constant 1 : index
    %c2_139 = arith.constant 2 : index
    %c0_140 = arith.constant 0 : index
    %c0_141 = arith.constant 0 : index
    %151 = vector.load %arg8[%c0_137, %c1_138, %c2_139, %c0_140, %c0_141] : memref<2x3x4x64x16xbf16, #tpu.memory_space<vmem>>, vector<1x1x1x64x16xbf16>
    %152 = vector.shape_cast %151 : vector<1x1x1x64x16xbf16> to vector<64x16xbf16>
    %cst_142 = arith.constant dense<0.000000e+00> : vector<5x16xf32>
    %153 = tpu.matmul %60, %152, %cst_142 {dimension_numbers = #tpu.dot_dimension_numbers<[1], [0], [0], [1], [0, 0, 1, 1], [], []>} : vector<5x64xbf16>, vector<64x16xbf16>, vector<5x16xf32> -> vector<5x16xf32>
    %c0_143 = arith.constant 0 : index
    %c1_144 = arith.constant 1 : index
    %c2_145 = arith.constant 2 : index
    %c0_146 = arith.constant 0 : index
    %c0_147 = arith.constant 0 : index
    %154 = vector.load %arg9[%c0_143, %c1_144, %c2_145, %c0_146, %c0_147] : memref<2x3x4x1x16xf32, #tpu.memory_space<vmem>>, vector<1x1x1x1x16xf32>
    %155 = vector.shape_cast %154 : vector<1x1x1x1x16xf32> to vector<1x16xf32>
    %156 = vector.broadcast %155 : vector<1x16xf32> to vector<5x16xf32>
    %157 = arith.addf %153, %156 : vector<5x16xf32>
    %c0_148 = arith.constant 0 : index
    %c2_149 = arith.constant 2 : index
    %c2_150 = arith.constant 2 : index
    %c0_151 = arith.constant 0 : index
    %c0_152 = arith.constant 0 : index
    %158 = vector.load %arg8[%c0_148, %c2_149, %c2_150, %c0_151, %c0_152] : memref<2x3x4x64x16xbf16, #tpu.memory_space<vmem>>, vector<1x1x1x64x16xbf16>
    %159 = vector.shape_cast %158 : vector<1x1x1x64x16xbf16> to vector<64x16xbf16>
    %cst_153 = arith.constant dense<0.000000e+00> : vector<5x16xf32>
    %160 = tpu.matmul %60, %159, %cst_153 {dimension_numbers = #tpu.dot_dimension_numbers<[1], [0], [0], [1], [0, 0, 1, 1], [], []>} : vector<5x64xbf16>, vector<64x16xbf16>, vector<5x16xf32> -> vector<5x16xf32>
    %c0_154 = arith.constant 0 : index
    %c2_155 = arith.constant 2 : index
    %c2_156 = arith.constant 2 : index
    %c0_157 = arith.constant 0 : index
    %c0_158 = arith.constant 0 : index
    %161 = vector.load %arg9[%c0_154, %c2_155, %c2_156, %c0_157, %c0_158] : memref<2x3x4x1x16xf32, #tpu.memory_space<vmem>>, vector<1x1x1x1x16xf32>
    %162 = vector.shape_cast %161 : vector<1x1x1x1x16xf32> to vector<1x16xf32>
    %163 = vector.broadcast %162 : vector<1x16xf32> to vector<5x16xf32>
    %164 = arith.addf %160, %163 : vector<5x16xf32>
    %cst_159 = arith.constant dense<0.000000e+00> : vector<5x5xf32>
    %165 = tpu.matmul %150, %157, %cst_159 {dimension_numbers = #tpu.dot_dimension_numbers<[1], [1], [0], [0], [0, 0, 1, 0], [], []>} : vector<5x16xf32>, vector<5x16xf32>, vector<5x5xf32> -> vector<5x5xf32>
    %cst_160 = arith.constant 2.500000e-01 : f32
    %166 = vector.broadcast %cst_160 : f32 to vector<5x5xf32>
    %167 = arith.mulf %165, %166 : vector<5x5xf32>
    %cst_161 = arith.constant dense<0xFF800000> : vector<5xf32>
    %168 = vector.multi_reduction <maximumf>, %167, %cst_161 [1] : vector<5x5xf32> to vector<5xf32>
    %169 = vector.shape_cast %168 : vector<5xf32> to vector<5x1xf32>
    %170 = vector.broadcast %169 : vector<5x1xf32> to vector<5x5xf32>
    %171 = arith.subf %167, %170 : vector<5x5xf32>
    %172 = math.exp %171 : vector<5x5xf32>
    %cst_162 = arith.constant dense<0.000000e+00> : vector<5xf32>
    %173 = vector.multi_reduction <add>, %172, %cst_162 [1] : vector<5x5xf32> to vector<5xf32>
    %174 = vector.shape_cast %173 : vector<5xf32> to vector<5x1xf32>
    %175 = tpu.reciprocal %174 {approx = true} : vector<5x1xf32> -> vector<5x1xf32>
    %176 = vector.broadcast %175 : vector<5x1xf32> to vector<5x5xf32>
    %177 = arith.mulf %172, %176 : vector<5x5xf32>
    %178 = arith.truncf %177 : vector<5x5xf32> to vector<5x5xbf16>
    %179 = arith.truncf %164 : vector<5x16xf32> to vector<5x16xbf16>
    %cst_163 = arith.constant dense<0.000000e+00> : vector<5x16xf32>
    %180 = tpu.matmul %178, %179, %cst_163 {dimension_numbers = #tpu.dot_dimension_numbers<[1], [0], [0], [1], [0, 0, 1, 1], [], []>} : vector<5x5xbf16>, vector<5x16xbf16>, vector<5x16xf32> -> vector<5x16xf32>
    %181 = arith.truncf %180 : vector<5x16xf32> to vector<5x16xbf16>
    %c0_164 = arith.constant 0 : index
    %c2_165 = arith.constant 2 : index
    %c0_166 = arith.constant 0 : index
    %c0_167 = arith.constant 0 : index
    %182 = vector.load %arg10[%c0_164, %c2_165, %c0_166, %c0_167] : memref<2x4x16x64xbf16, #tpu.memory_space<vmem>>, vector<1x1x16x64xbf16>
    %183 = vector.shape_cast %182 : vector<1x1x16x64xbf16> to vector<16x64xbf16>
    %cst_168 = arith.constant dense<0.000000e+00> : vector<5x64xf32>
    %184 = tpu.matmul %181, %183, %cst_168 {dimension_numbers = #tpu.dot_dimension_numbers<[1], [0], [0], [1], [0, 0, 1, 1], [], []>} : vector<5x16xbf16>, vector<16x64xbf16>, vector<5x64xf32> -> vector<5x64xf32>
    %185 = arith.addf %143, %184 : vector<5x64xf32>
    %c0_169 = arith.constant 0 : index
    %c0_170 = arith.constant 0 : index
    %c3_171 = arith.constant 3 : index
    %c0_172 = arith.constant 0 : index
    %c0_173 = arith.constant 0 : index
    %186 = vector.load %arg8[%c0_169, %c0_170, %c3_171, %c0_172, %c0_173] : memref<2x3x4x64x16xbf16, #tpu.memory_space<vmem>>, vector<1x1x1x64x16xbf16>
    %187 = vector.shape_cast %186 : vector<1x1x1x64x16xbf16> to vector<64x16xbf16>
    %cst_174 = arith.constant dense<0.000000e+00> : vector<5x16xf32>
    %188 = tpu.matmul %60, %187, %cst_174 {dimension_numbers = #tpu.dot_dimension_numbers<[1], [0], [0], [1], [0, 0, 1, 1], [], []>} : vector<5x64xbf16>, vector<64x16xbf16>, vector<5x16xf32> -> vector<5x16xf32>
    %c0_175 = arith.constant 0 : index
    %c0_176 = arith.constant 0 : index
    %c3_177 = arith.constant 3 : index
    %c0_178 = arith.constant 0 : index
    %c0_179 = arith.constant 0 : index
    %189 = vector.load %arg9[%c0_175, %c0_176, %c3_177, %c0_178, %c0_179] : memref<2x3x4x1x16xf32, #tpu.memory_space<vmem>>, vector<1x1x1x1x16xf32>
    %190 = vector.shape_cast %189 : vector<1x1x1x1x16xf32> to vector<1x16xf32>
    %191 = vector.broadcast %190 : vector<1x16xf32> to vector<5x16xf32>
    %192 = arith.addf %188, %191 : vector<5x16xf32>
    %c0_180 = arith.constant 0 : index
    %c1_181 = arith.constant 1 : index
    %c3_182 = arith.constant 3 : index
    %c0_183 = arith.constant 0 : index
    %c0_184 = arith.constant 0 : index
    %193 = vector.load %arg8[%c0_180, %c1_181, %c3_182, %c0_183, %c0_184] : memref<2x3x4x64x16xbf16, #tpu.memory_space<vmem>>, vector<1x1x1x64x16xbf16>
    %194 = vector.shape_cast %193 : vector<1x1x1x64x16xbf16> to vector<64x16xbf16>
    %cst_185 = arith.constant dense<0.000000e+00> : vector<5x16xf32>
    %195 = tpu.matmul %60, %194, %cst_185 {dimension_numbers = #tpu.dot_dimension_numbers<[1], [0], [0], [1], [0, 0, 1, 1], [], []>} : vector<5x64xbf16>, vector<64x16xbf16>, vector<5x16xf32> -> vector<5x16xf32>
    %c0_186 = arith.constant 0 : index
    %c1_187 = arith.constant 1 : index
    %c3_188 = arith.constant 3 : index
    %c0_189 = arith.constant 0 : index
    %c0_190 = arith.constant 0 : index
    %196 = vector.load %arg9[%c0_186, %c1_187, %c3_188, %c0_189, %c0_190] : memref<2x3x4x1x16xf32, #tpu.memory_space<vmem>>, vector<1x1x1x1x16xf32>
    %197 = vector.shape_cast %196 : vector<1x1x1x1x16xf32> to vector<1x16xf32>
    %198 = vector.broadcast %197 : vector<1x16xf32> to vector<5x16xf32>
    %199 = arith.addf %195, %198 : vector<5x16xf32>
    %c0_191 = arith.constant 0 : index
    %c2_192 = arith.constant 2 : index
    %c3_193 = arith.constant 3 : index
    %c0_194 = arith.constant 0 : index
    %c0_195 = arith.constant 0 : index
    %200 = vector.load %arg8[%c0_191, %c2_192, %c3_193, %c0_194, %c0_195] : memref<2x3x4x64x16xbf16, #tpu.memory_space<vmem>>, vector<1x1x1x64x16xbf16>
    %201 = vector.shape_cast %200 : vector<1x1x1x64x16xbf16> to vector<64x16xbf16>
    %cst_196 = arith.constant dense<0.000000e+00> : vector<5x16xf32>
    %202 = tpu.matmul %60, %201, %cst_196 {dimension_numbers = #tpu.dot_dimension_numbers<[1], [0], [0], [1], [0, 0, 1, 1], [], []>} : vector<5x64xbf16>, vector<64x16xbf16>, vector<5x16xf32> -> vector<5x16xf32>
    %c0_197 = arith.constant 0 : index
    %c2_198 = arith.constant 2 : index
    %c3_199 = arith.constant 3 : index
    %c0_200 = arith.constant 0 : index
    %c0_201 = arith.constant 0 : index
    %203 = vector.load %arg9[%c0_197, %c2_198, %c3_199, %c0_200, %c0_201] : memref<2x3x4x1x16xf32, #tpu.memory_space<vmem>>, vector<1x1x1x1x16xf32>
    %204 = vector.shape_cast %203 : vector<1x1x1x1x16xf32> to vector<1x16xf32>
    %205 = vector.broadcast %204 : vector<1x16xf32> to vector<5x16xf32>
    %206 = arith.addf %202, %205 : vector<5x16xf32>
    %cst_202 = arith.constant dense<0.000000e+00> : vector<5x5xf32>
    %207 = tpu.matmul %192, %199, %cst_202 {dimension_numbers = #tpu.dot_dimension_numbers<[1], [1], [0], [0], [0, 0, 1, 0], [], []>} : vector<5x16xf32>, vector<5x16xf32>, vector<5x5xf32> -> vector<5x5xf32>
    %cst_203 = arith.constant 2.500000e-01 : f32
    %208 = vector.broadcast %cst_203 : f32 to vector<5x5xf32>
    %209 = arith.mulf %207, %208 : vector<5x5xf32>
    %cst_204 = arith.constant dense<0xFF800000> : vector<5xf32>
    %210 = vector.multi_reduction <maximumf>, %209, %cst_204 [1] : vector<5x5xf32> to vector<5xf32>
    %211 = vector.shape_cast %210 : vector<5xf32> to vector<5x1xf32>
    %212 = vector.broadcast %211 : vector<5x1xf32> to vector<5x5xf32>
    %213 = arith.subf %209, %212 : vector<5x5xf32>
    %214 = math.exp %213 : vector<5x5xf32>
    %cst_205 = arith.constant dense<0.000000e+00> : vector<5xf32>
    %215 = vector.multi_reduction <add>, %214, %cst_205 [1] : vector<5x5xf32> to vector<5xf32>
    %216 = vector.shape_cast %215 : vector<5xf32> to vector<5x1xf32>
    %217 = tpu.reciprocal %216 {approx = true} : vector<5x1xf32> -> vector<5x1xf32>
    %218 = vector.broadcast %217 : vector<5x1xf32> to vector<5x5xf32>
    %219 = arith.mulf %214, %218 : vector<5x5xf32>
    %220 = arith.truncf %219 : vector<5x5xf32> to vector<5x5xbf16>
    %221 = arith.truncf %206 : vector<5x16xf32> to vector<5x16xbf16>
    %cst_206 = arith.constant dense<0.000000e+00> : vector<5x16xf32>
    %222 = tpu.matmul %220, %221, %cst_206 {dimension_numbers = #tpu.dot_dimension_numbers<[1], [0], [0], [1], [0, 0, 1, 1], [], []>} : vector<5x5xbf16>, vector<5x16xbf16>, vector<5x16xf32> -> vector<5x16xf32>
    %223 = arith.truncf %222 : vector<5x16xf32> to vector<5x16xbf16>
    %c0_207 = arith.constant 0 : index
    %c3_208 = arith.constant 3 : index
    %c0_209 = arith.constant 0 : index
    %c0_210 = arith.constant 0 : index
    %224 = vector.load %arg10[%c0_207, %c3_208, %c0_209, %c0_210] : memref<2x4x16x64xbf16, #tpu.memory_space<vmem>>, vector<1x1x16x64xbf16>
    %225 = vector.shape_cast %224 : vector<1x1x16x64xbf16> to vector<16x64xbf16>
    %cst_211 = arith.constant dense<0.000000e+00> : vector<5x64xf32>
    %226 = tpu.matmul %223, %225, %cst_211 {dimension_numbers = #tpu.dot_dimension_numbers<[1], [0], [0], [1], [0, 0, 1, 1], [], []>} : vector<5x16xbf16>, vector<16x64xbf16>, vector<5x64xf32> -> vector<5x64xf32>
    %227 = arith.addf %185, %226 : vector<5x64xf32>
    %228 = arith.addf %25, %227 : vector<5x64xf32>
    %229 = vector.broadcast %35 : vector<1x64xf32> to vector<5x64xf32>
    %230 = arith.addf %228, %229 : vector<5x64xf32>
    %cst_212 = arith.constant dense<0.000000e+00> : vector<5xf32>
    %231 = vector.multi_reduction <add>, %230, %cst_212 [1] : vector<5x64xf32> to vector<5xf32>
    %232 = vector.shape_cast %231 : vector<5xf32> to vector<5x1xf32>
    %cst_213 = arith.constant 6.400000e+01 : f32
    %233 = vector.broadcast %cst_213 : f32 to vector<5x1xf32>
    %234 = arith.divf %232, %233 : vector<5x1xf32>
    %235 = vector.broadcast %234 : vector<5x1xf32> to vector<5x64xf32>
    %236 = arith.subf %230, %235 : vector<5x64xf32>
    %237 = arith.mulf %236, %236 : vector<5x64xf32>
    %cst_214 = arith.constant dense<0.000000e+00> : vector<5xf32>
    %238 = vector.multi_reduction <add>, %237, %cst_214 [1] : vector<5x64xf32> to vector<5xf32>
    %239 = vector.shape_cast %238 : vector<5xf32> to vector<5x1xf32>
    %cst_215 = arith.constant 6.400000e+01 : f32
    %240 = vector.broadcast %cst_215 : f32 to vector<5x1xf32>
    %241 = arith.divf %239, %240 : vector<5x1xf32>
    %242 = vector.broadcast %234 : vector<5x1xf32> to vector<5x64xf32>
    %243 = arith.subf %230, %242 : vector<5x64xf32>
    %cst_216 = arith.constant 9.99999974E-6 : f32
    %244 = vector.broadcast %cst_216 : f32 to vector<5x1xf32>
    %245 = arith.addf %241, %244 : vector<5x1xf32>
    %246 = math.rsqrt %245 : vector<5x1xf32>
    %247 = vector.broadcast %246 : vector<5x1xf32> to vector<5x64xf32>
    %248 = arith.mulf %243, %247 : vector<5x64xf32>
    %249 = vector.broadcast %31 : vector<1x64xf32> to vector<5x64xf32>
    %250 = arith.mulf %248, %249 : vector<5x64xf32>
    %251 = vector.broadcast %33 : vector<1x64xf32> to vector<5x64xf32>
    %252 = arith.addf %250, %251 : vector<5x64xf32>
    %253 = arith.truncf %252 : vector<5x64xf32> to vector<5x64xbf16>
    %c0_217 = arith.constant 0 : index
    %c0_218 = arith.constant 0 : index
    %c0_219 = arith.constant 0 : index
    %254 = vector.load %arg11[%c0_217, %c0_218, %c0_219] : memref<2x64x256xbf16, #tpu.memory_space<vmem>>, vector<1x64x256xbf16>
    %255 = vector.shape_cast %254 : vector<1x64x256xbf16> to vector<64x256xbf16>
    %cst_220 = arith.constant dense<0.000000e+00> : vector<5x256xf32>
    %256 = tpu.matmul %253, %255, %cst_220 {dimension_numbers = #tpu.dot_dimension_numbers<[1], [0], [0], [1], [0, 0, 1, 1], [], []>} : vector<5x64xbf16>, vector<64x256xbf16>, vector<5x256xf32> -> vector<5x256xf32>
    %c0_221 = arith.constant 0 : index
    %c0_222 = arith.constant 0 : index
    %c0_223 = arith.constant 0 : index
    %257 = vector.load %arg12[%c0_221, %c0_222, %c0_223] : memref<2x1x256xf32, #tpu.memory_space<vmem>>, vector<1x1x256xf32>
    %258 = vector.shape_cast %257 : vector<1x1x256xf32> to vector<1x256xf32>
    %259 = vector.broadcast %258 : vector<1x256xf32> to vector<5x256xf32>
    %260 = arith.addf %256, %259 : vector<5x256xf32>
    %cst_224 = arith.constant 5.000000e-01 : f32
    %261 = vector.broadcast %cst_224 : f32 to vector<5x256xf32>
    %262 = arith.mulf %261, %260 : vector<5x256xf32>
    %cst_225 = arith.constant 0.707106769 : f32
    %263 = vector.broadcast %cst_225 : f32 to vector<5x256xf32>
    %264 = arith.mulf %260, %263 : vector<5x256xf32>
    %cst_226 = arith.constant -4.000000e+00 : f32
    %cst_227 = arith.constant 4.000000e+00 : f32
    %265 = vector.broadcast %cst_226 : f32 to vector<5x256xf32>
    %266 = arith.maximumf %265, %264 : vector<5x256xf32>
    %267 = vector.broadcast %cst_227 : f32 to vector<5x256xf32>
    %268 = arith.minimumf %267, %266 : vector<5x256xf32>
    %269 = arith.mulf %268, %268 : vector<5x256xf32>
    %cst_228 = arith.constant -2.72614237E-10 : f32
    %270 = vector.broadcast %cst_228 : f32 to vector<5x256xf32>
    %271 = arith.mulf %270, %269 : vector<5x256xf32>
    %cst_229 = arith.constant 2.77068146E-8 : f32
    %272 = vector.broadcast %cst_229 : f32 to vector<5x256xf32>
    %273 = arith.addf %271, %272 : vector<5x256xf32>
    %274 = arith.mulf %273, %269 : vector<5x256xf32>
    %cst_230 = arith.constant -2.10102394E-6 : f32
    %275 = vector.broadcast %cst_230 : f32 to vector<5x256xf32>
    %276 = arith.addf %274, %275 : vector<5x256xf32>
    %277 = arith.mulf %276, %269 : vector<5x256xf32>
    %cst_231 = arith.constant -5.69250624E-5 : f32
    %278 = vector.broadcast %cst_231 : f32 to vector<5x256xf32>
    %279 = arith.addf %277, %278 : vector<5x256xf32>
    %280 = arith.mulf %279, %269 : vector<5x256xf32>
    %cst_232 = arith.constant -7.34990637E-4 : f32
    %281 = vector.broadcast %cst_232 : f32 to vector<5x256xf32>
    %282 = arith.addf %280, %281 : vector<5x256xf32>
    %283 = arith.mulf %282, %269 : vector<5x256xf32>
    %cst_233 = arith.constant -2.954600e-03 : f32
    %284 = vector.broadcast %cst_233 : f32 to vector<5x256xf32>
    %285 = arith.addf %283, %284 : vector<5x256xf32>
    %286 = arith.mulf %285, %269 : vector<5x256xf32>
    %cst_234 = arith.constant -0.0160960332 : f32
    %287 = vector.broadcast %cst_234 : f32 to vector<5x256xf32>
    %288 = arith.addf %286, %287 : vector<5x256xf32>
    %289 = arith.mulf %288, %268 : vector<5x256xf32>
    %cst_235 = arith.constant -1.45660715E-5 : f32
    %290 = vector.broadcast %cst_235 : f32 to vector<5x256xf32>
    %291 = arith.mulf %290, %269 : vector<5x256xf32>
    %cst_236 = arith.constant -2.13374049E-4 : f32
    %292 = vector.broadcast %cst_236 : f32 to vector<5x256xf32>
    %293 = arith.addf %291, %292 : vector<5x256xf32>
    %294 = arith.mulf %293, %269 : vector<5x256xf32>
    %cst_237 = arith.constant -0.00168282702 : f32
    %295 = vector.broadcast %cst_237 : f32 to vector<5x256xf32>
    %296 = arith.addf %294, %295 : vector<5x256xf32>
    %297 = arith.mulf %296, %269 : vector<5x256xf32>
    %cst_238 = arith.constant -0.00737332925 : f32
    %298 = vector.broadcast %cst_238 : f32 to vector<5x256xf32>
    %299 = arith.addf %297, %298 : vector<5x256xf32>
    %300 = arith.mulf %299, %269 : vector<5x256xf32>
    %cst_239 = arith.constant -0.0142647391 : f32
    %301 = vector.broadcast %cst_239 : f32 to vector<5x256xf32>
    %302 = arith.addf %300, %301 : vector<5x256xf32>
    %303 = arith.divf %289, %302 : vector<5x256xf32>
    %cst_240 = arith.constant 1.000000e+00 : f32
    %304 = vector.broadcast %cst_240 : f32 to vector<5x256xf32>
    %305 = arith.addf %304, %303 : vector<5x256xf32>
    %306 = arith.mulf %262, %305 : vector<5x256xf32>
    %307 = arith.truncf %306 : vector<5x256xf32> to vector<5x256xbf16>
    %c0_241 = arith.constant 0 : index
    %c0_242 = arith.constant 0 : index
    %c0_243 = arith.constant 0 : index
    %308 = vector.load %arg13[%c0_241, %c0_242, %c0_243] : memref<2x256x64xbf16, #tpu.memory_space<vmem>>, vector<1x256x64xbf16>
    %309 = vector.shape_cast %308 : vector<1x256x64xbf16> to vector<256x64xbf16>
    %cst_244 = arith.constant dense<0.000000e+00> : vector<5x64xf32>
    %310 = tpu.matmul %307, %309, %cst_244 {dimension_numbers = #tpu.dot_dimension_numbers<[1], [0], [0], [1], [0, 0, 1, 1], [], []>} : vector<5x256xbf16>, vector<256x64xbf16>, vector<5x64xf32> -> vector<5x64xf32>
    %311 = arith.addf %230, %310 : vector<5x64xf32>
    %312 = vector.broadcast %37 : vector<1x64xf32> to vector<5x64xf32>
    %313 = arith.addf %311, %312 : vector<5x64xf32>
    %c1_245 = arith.constant 1 : index
    %c0_246 = arith.constant 0 : index
    %c0_247 = arith.constant 0 : index
    %c0_248 = arith.constant 0 : index
    %314 = vector.load %arg7[%c1_245, %c0_246, %c0_247, %c0_248] : memref<2x6x1x64xf32, #tpu.memory_space<vmem>>, vector<1x1x1x64xf32>
    %315 = vector.shape_cast %314 : vector<1x1x1x64xf32> to vector<1x64xf32>
    %c1_249 = arith.constant 1 : index
    %c1_250 = arith.constant 1 : index
    %c0_251 = arith.constant 0 : index
    %c0_252 = arith.constant 0 : index
    %316 = vector.load %arg7[%c1_249, %c1_250, %c0_251, %c0_252] : memref<2x6x1x64xf32, #tpu.memory_space<vmem>>, vector<1x1x1x64xf32>
    %317 = vector.shape_cast %316 : vector<1x1x1x64xf32> to vector<1x64xf32>
    %c1_253 = arith.constant 1 : index
    %c2_254 = arith.constant 2 : index
    %c0_255 = arith.constant 0 : index
    %c0_256 = arith.constant 0 : index
    %318 = vector.load %arg7[%c1_253, %c2_254, %c0_255, %c0_256] : memref<2x6x1x64xf32, #tpu.memory_space<vmem>>, vector<1x1x1x64xf32>
    %319 = vector.shape_cast %318 : vector<1x1x1x64xf32> to vector<1x64xf32>
    %c1_257 = arith.constant 1 : index
    %c3_258 = arith.constant 3 : index
    %c0_259 = arith.constant 0 : index
    %c0_260 = arith.constant 0 : index
    %320 = vector.load %arg7[%c1_257, %c3_258, %c0_259, %c0_260] : memref<2x6x1x64xf32, #tpu.memory_space<vmem>>, vector<1x1x1x64xf32>
    %321 = vector.shape_cast %320 : vector<1x1x1x64xf32> to vector<1x64xf32>
    %c1_261 = arith.constant 1 : index
    %c4_262 = arith.constant 4 : index
    %c0_263 = arith.constant 0 : index
    %c0_264 = arith.constant 0 : index
    %322 = vector.load %arg7[%c1_261, %c4_262, %c0_263, %c0_264] : memref<2x6x1x64xf32, #tpu.memory_space<vmem>>, vector<1x1x1x64xf32>
    %323 = vector.shape_cast %322 : vector<1x1x1x64xf32> to vector<1x64xf32>
    %c1_265 = arith.constant 1 : index
    %c5_266 = arith.constant 5 : index
    %c0_267 = arith.constant 0 : index
    %c0_268 = arith.constant 0 : index
    %324 = vector.load %arg7[%c1_265, %c5_266, %c0_267, %c0_268] : memref<2x6x1x64xf32, #tpu.memory_space<vmem>>, vector<1x1x1x64xf32>
    %325 = vector.shape_cast %324 : vector<1x1x1x64xf32> to vector<1x64xf32>
    %cst_269 = arith.constant dense<0.000000e+00> : vector<5xf32>
    %326 = vector.multi_reduction <add>, %313, %cst_269 [1] : vector<5x64xf32> to vector<5xf32>
    %327 = vector.shape_cast %326 : vector<5xf32> to vector<5x1xf32>
    %cst_270 = arith.constant 6.400000e+01 : f32
    %328 = vector.broadcast %cst_270 : f32 to vector<5x1xf32>
    %329 = arith.divf %327, %328 : vector<5x1xf32>
    %330 = vector.broadcast %329 : vector<5x1xf32> to vector<5x64xf32>
    %331 = arith.subf %313, %330 : vector<5x64xf32>
    %332 = arith.mulf %331, %331 : vector<5x64xf32>
    %cst_271 = arith.constant dense<0.000000e+00> : vector<5xf32>
    %333 = vector.multi_reduction <add>, %332, %cst_271 [1] : vector<5x64xf32> to vector<5xf32>
    %334 = vector.shape_cast %333 : vector<5xf32> to vector<5x1xf32>
    %cst_272 = arith.constant 6.400000e+01 : f32
    %335 = vector.broadcast %cst_272 : f32 to vector<5x1xf32>
    %336 = arith.divf %334, %335 : vector<5x1xf32>
    %337 = vector.broadcast %329 : vector<5x1xf32> to vector<5x64xf32>
    %338 = arith.subf %313, %337 : vector<5x64xf32>
    %cst_273 = arith.constant 9.99999974E-6 : f32
    %339 = vector.broadcast %cst_273 : f32 to vector<5x1xf32>
    %340 = arith.addf %336, %339 : vector<5x1xf32>
    %341 = math.rsqrt %340 : vector<5x1xf32>
    %342 = vector.broadcast %341 : vector<5x1xf32> to vector<5x64xf32>
    %343 = arith.mulf %338, %342 : vector<5x64xf32>
    %344 = vector.broadcast %315 : vector<1x64xf32> to vector<5x64xf32>
    %345 = arith.mulf %343, %344 : vector<5x64xf32>
    %346 = vector.broadcast %317 : vector<1x64xf32> to vector<5x64xf32>
    %347 = arith.addf %345, %346 : vector<5x64xf32>
    %348 = arith.truncf %347 : vector<5x64xf32> to vector<5x64xbf16>
    %c1_274 = arith.constant 1 : index
    %c0_275 = arith.constant 0 : index
    %c0_276 = arith.constant 0 : index
    %c0_277 = arith.constant 0 : index
    %c0_278 = arith.constant 0 : index
    %349 = vector.load %arg8[%c1_274, %c0_275, %c0_276, %c0_277, %c0_278] : memref<2x3x4x64x16xbf16, #tpu.memory_space<vmem>>, vector<1x1x1x64x16xbf16>
    %350 = vector.shape_cast %349 : vector<1x1x1x64x16xbf16> to vector<64x16xbf16>
    %cst_279 = arith.constant dense<0.000000e+00> : vector<5x16xf32>
    %351 = tpu.matmul %348, %350, %cst_279 {dimension_numbers = #tpu.dot_dimension_numbers<[1], [0], [0], [1], [0, 0, 1, 1], [], []>} : vector<5x64xbf16>, vector<64x16xbf16>, vector<5x16xf32> -> vector<5x16xf32>
    %c1_280 = arith.constant 1 : index
    %c0_281 = arith.constant 0 : index
    %c0_282 = arith.constant 0 : index
    %c0_283 = arith.constant 0 : index
    %c0_284 = arith.constant 0 : index
    %352 = vector.load %arg9[%c1_280, %c0_281, %c0_282, %c0_283, %c0_284] : memref<2x3x4x1x16xf32, #tpu.memory_space<vmem>>, vector<1x1x1x1x16xf32>
    %353 = vector.shape_cast %352 : vector<1x1x1x1x16xf32> to vector<1x16xf32>
    %354 = vector.broadcast %353 : vector<1x16xf32> to vector<5x16xf32>
    %355 = arith.addf %351, %354 : vector<5x16xf32>
    %c1_285 = arith.constant 1 : index
    %c1_286 = arith.constant 1 : index
    %c0_287 = arith.constant 0 : index
    %c0_288 = arith.constant 0 : index
    %c0_289 = arith.constant 0 : index
    %356 = vector.load %arg8[%c1_285, %c1_286, %c0_287, %c0_288, %c0_289] : memref<2x3x4x64x16xbf16, #tpu.memory_space<vmem>>, vector<1x1x1x64x16xbf16>
    %357 = vector.shape_cast %356 : vector<1x1x1x64x16xbf16> to vector<64x16xbf16>
    %cst_290 = arith.constant dense<0.000000e+00> : vector<5x16xf32>
    %358 = tpu.matmul %348, %357, %cst_290 {dimension_numbers = #tpu.dot_dimension_numbers<[1], [0], [0], [1], [0, 0, 1, 1], [], []>} : vector<5x64xbf16>, vector<64x16xbf16>, vector<5x16xf32> -> vector<5x16xf32>
    %c1_291 = arith.constant 1 : index
    %c1_292 = arith.constant 1 : index
    %c0_293 = arith.constant 0 : index
    %c0_294 = arith.constant 0 : index
    %c0_295 = arith.constant 0 : index
    %359 = vector.load %arg9[%c1_291, %c1_292, %c0_293, %c0_294, %c0_295] : memref<2x3x4x1x16xf32, #tpu.memory_space<vmem>>, vector<1x1x1x1x16xf32>
    %360 = vector.shape_cast %359 : vector<1x1x1x1x16xf32> to vector<1x16xf32>
    %361 = vector.broadcast %360 : vector<1x16xf32> to vector<5x16xf32>
    %362 = arith.addf %358, %361 : vector<5x16xf32>
    %c1_296 = arith.constant 1 : index
    %c2_297 = arith.constant 2 : index
    %c0_298 = arith.constant 0 : index
    %c0_299 = arith.constant 0 : index
    %c0_300 = arith.constant 0 : index
    %363 = vector.load %arg8[%c1_296, %c2_297, %c0_298, %c0_299, %c0_300] : memref<2x3x4x64x16xbf16, #tpu.memory_space<vmem>>, vector<1x1x1x64x16xbf16>
    %364 = vector.shape_cast %363 : vector<1x1x1x64x16xbf16> to vector<64x16xbf16>
    %cst_301 = arith.constant dense<0.000000e+00> : vector<5x16xf32>
    %365 = tpu.matmul %348, %364, %cst_301 {dimension_numbers = #tpu.dot_dimension_numbers<[1], [0], [0], [1], [0, 0, 1, 1], [], []>} : vector<5x64xbf16>, vector<64x16xbf16>, vector<5x16xf32> -> vector<5x16xf32>
    %c1_302 = arith.constant 1 : index
    %c2_303 = arith.constant 2 : index
    %c0_304 = arith.constant 0 : index
    %c0_305 = arith.constant 0 : index
    %c0_306 = arith.constant 0 : index
    %366 = vector.load %arg9[%c1_302, %c2_303, %c0_304, %c0_305, %c0_306] : memref<2x3x4x1x16xf32, #tpu.memory_space<vmem>>, vector<1x1x1x1x16xf32>
    %367 = vector.shape_cast %366 : vector<1x1x1x1x16xf32> to vector<1x16xf32>
    %368 = vector.broadcast %367 : vector<1x16xf32> to vector<5x16xf32>
    %369 = arith.addf %365, %368 : vector<5x16xf32>
    %cst_307 = arith.constant dense<0.000000e+00> : vector<5x5xf32>
    %370 = tpu.matmul %355, %362, %cst_307 {dimension_numbers = #tpu.dot_dimension_numbers<[1], [1], [0], [0], [0, 0, 1, 0], [], []>} : vector<5x16xf32>, vector<5x16xf32>, vector<5x5xf32> -> vector<5x5xf32>
    %cst_308 = arith.constant 2.500000e-01 : f32
    %371 = vector.broadcast %cst_308 : f32 to vector<5x5xf32>
    %372 = arith.mulf %370, %371 : vector<5x5xf32>
    %cst_309 = arith.constant dense<0xFF800000> : vector<5xf32>
    %373 = vector.multi_reduction <maximumf>, %372, %cst_309 [1] : vector<5x5xf32> to vector<5xf32>
    %374 = vector.shape_cast %373 : vector<5xf32> to vector<5x1xf32>
    %375 = vector.broadcast %374 : vector<5x1xf32> to vector<5x5xf32>
    %376 = arith.subf %372, %375 : vector<5x5xf32>
    %377 = math.exp %376 : vector<5x5xf32>
    %cst_310 = arith.constant dense<0.000000e+00> : vector<5xf32>
    %378 = vector.multi_reduction <add>, %377, %cst_310 [1] : vector<5x5xf32> to vector<5xf32>
    %379 = vector.shape_cast %378 : vector<5xf32> to vector<5x1xf32>
    %380 = tpu.reciprocal %379 {approx = true} : vector<5x1xf32> -> vector<5x1xf32>
    %381 = vector.broadcast %380 : vector<5x1xf32> to vector<5x5xf32>
    %382 = arith.mulf %377, %381 : vector<5x5xf32>
    %383 = arith.truncf %382 : vector<5x5xf32> to vector<5x5xbf16>
    %384 = arith.truncf %369 : vector<5x16xf32> to vector<5x16xbf16>
    %cst_311 = arith.constant dense<0.000000e+00> : vector<5x16xf32>
    %385 = tpu.matmul %383, %384, %cst_311 {dimension_numbers = #tpu.dot_dimension_numbers<[1], [0], [0], [1], [0, 0, 1, 1], [], []>} : vector<5x5xbf16>, vector<5x16xbf16>, vector<5x16xf32> -> vector<5x16xf32>
    %386 = arith.truncf %385 : vector<5x16xf32> to vector<5x16xbf16>
    %c1_312 = arith.constant 1 : index
    %c0_313 = arith.constant 0 : index
    %c0_314 = arith.constant 0 : index
    %c0_315 = arith.constant 0 : index
    %387 = vector.load %arg10[%c1_312, %c0_313, %c0_314, %c0_315] : memref<2x4x16x64xbf16, #tpu.memory_space<vmem>>, vector<1x1x16x64xbf16>
    %388 = vector.shape_cast %387 : vector<1x1x16x64xbf16> to vector<16x64xbf16>
    %cst_316 = arith.constant dense<0.000000e+00> : vector<5x64xf32>
    %389 = tpu.matmul %386, %388, %cst_316 {dimension_numbers = #tpu.dot_dimension_numbers<[1], [0], [0], [1], [0, 0, 1, 1], [], []>} : vector<5x16xbf16>, vector<16x64xbf16>, vector<5x64xf32> -> vector<5x64xf32>
    %c1_317 = arith.constant 1 : index
    %c0_318 = arith.constant 0 : index
    %c1_319 = arith.constant 1 : index
    %c0_320 = arith.constant 0 : index
    %c0_321 = arith.constant 0 : index
    %390 = vector.load %arg8[%c1_317, %c0_318, %c1_319, %c0_320, %c0_321] : memref<2x3x4x64x16xbf16, #tpu.memory_space<vmem>>, vector<1x1x1x64x16xbf16>
    %391 = vector.shape_cast %390 : vector<1x1x1x64x16xbf16> to vector<64x16xbf16>
    %cst_322 = arith.constant dense<0.000000e+00> : vector<5x16xf32>
    %392 = tpu.matmul %348, %391, %cst_322 {dimension_numbers = #tpu.dot_dimension_numbers<[1], [0], [0], [1], [0, 0, 1, 1], [], []>} : vector<5x64xbf16>, vector<64x16xbf16>, vector<5x16xf32> -> vector<5x16xf32>
    %c1_323 = arith.constant 1 : index
    %c0_324 = arith.constant 0 : index
    %c1_325 = arith.constant 1 : index
    %c0_326 = arith.constant 0 : index
    %c0_327 = arith.constant 0 : index
    %393 = vector.load %arg9[%c1_323, %c0_324, %c1_325, %c0_326, %c0_327] : memref<2x3x4x1x16xf32, #tpu.memory_space<vmem>>, vector<1x1x1x1x16xf32>
    %394 = vector.shape_cast %393 : vector<1x1x1x1x16xf32> to vector<1x16xf32>
    %395 = vector.broadcast %394 : vector<1x16xf32> to vector<5x16xf32>
    %396 = arith.addf %392, %395 : vector<5x16xf32>
    %c1_328 = arith.constant 1 : index
    %c1_329 = arith.constant 1 : index
    %c1_330 = arith.constant 1 : index
    %c0_331 = arith.constant 0 : index
    %c0_332 = arith.constant 0 : index
    %397 = vector.load %arg8[%c1_328, %c1_329, %c1_330, %c0_331, %c0_332] : memref<2x3x4x64x16xbf16, #tpu.memory_space<vmem>>, vector<1x1x1x64x16xbf16>
    %398 = vector.shape_cast %397 : vector<1x1x1x64x16xbf16> to vector<64x16xbf16>
    %cst_333 = arith.constant dense<0.000000e+00> : vector<5x16xf32>
    %399 = tpu.matmul %348, %398, %cst_333 {dimension_numbers = #tpu.dot_dimension_numbers<[1], [0], [0], [1], [0, 0, 1, 1], [], []>} : vector<5x64xbf16>, vector<64x16xbf16>, vector<5x16xf32> -> vector<5x16xf32>
    %c1_334 = arith.constant 1 : index
    %c1_335 = arith.constant 1 : index
    %c1_336 = arith.constant 1 : index
    %c0_337 = arith.constant 0 : index
    %c0_338 = arith.constant 0 : index
    %400 = vector.load %arg9[%c1_334, %c1_335, %c1_336, %c0_337, %c0_338] : memref<2x3x4x1x16xf32, #tpu.memory_space<vmem>>, vector<1x1x1x1x16xf32>
    %401 = vector.shape_cast %400 : vector<1x1x1x1x16xf32> to vector<1x16xf32>
    %402 = vector.broadcast %401 : vector<1x16xf32> to vector<5x16xf32>
    %403 = arith.addf %399, %402 : vector<5x16xf32>
    %c1_339 = arith.constant 1 : index
    %c2_340 = arith.constant 2 : index
    %c1_341 = arith.constant 1 : index
    %c0_342 = arith.constant 0 : index
    %c0_343 = arith.constant 0 : index
    %404 = vector.load %arg8[%c1_339, %c2_340, %c1_341, %c0_342, %c0_343] : memref<2x3x4x64x16xbf16, #tpu.memory_space<vmem>>, vector<1x1x1x64x16xbf16>
    %405 = vector.shape_cast %404 : vector<1x1x1x64x16xbf16> to vector<64x16xbf16>
    %cst_344 = arith.constant dense<0.000000e+00> : vector<5x16xf32>
    %406 = tpu.matmul %348, %405, %cst_344 {dimension_numbers = #tpu.dot_dimension_numbers<[1], [0], [0], [1], [0, 0, 1, 1], [], []>} : vector<5x64xbf16>, vector<64x16xbf16>, vector<5x16xf32> -> vector<5x16xf32>
    %c1_345 = arith.constant 1 : index
    %c2_346 = arith.constant 2 : index
    %c1_347 = arith.constant 1 : index
    %c0_348 = arith.constant 0 : index
    %c0_349 = arith.constant 0 : index
    %407 = vector.load %arg9[%c1_345, %c2_346, %c1_347, %c0_348, %c0_349] : memref<2x3x4x1x16xf32, #tpu.memory_space<vmem>>, vector<1x1x1x1x16xf32>
    %408 = vector.shape_cast %407 : vector<1x1x1x1x16xf32> to vector<1x16xf32>
    %409 = vector.broadcast %408 : vector<1x16xf32> to vector<5x16xf32>
    %410 = arith.addf %406, %409 : vector<5x16xf32>
    %cst_350 = arith.constant dense<0.000000e+00> : vector<5x5xf32>
    %411 = tpu.matmul %396, %403, %cst_350 {dimension_numbers = #tpu.dot_dimension_numbers<[1], [1], [0], [0], [0, 0, 1, 0], [], []>} : vector<5x16xf32>, vector<5x16xf32>, vector<5x5xf32> -> vector<5x5xf32>
    %cst_351 = arith.constant 2.500000e-01 : f32
    %412 = vector.broadcast %cst_351 : f32 to vector<5x5xf32>
    %413 = arith.mulf %411, %412 : vector<5x5xf32>
    %cst_352 = arith.constant dense<0xFF800000> : vector<5xf32>
    %414 = vector.multi_reduction <maximumf>, %413, %cst_352 [1] : vector<5x5xf32> to vector<5xf32>
    %415 = vector.shape_cast %414 : vector<5xf32> to vector<5x1xf32>
    %416 = vector.broadcast %415 : vector<5x1xf32> to vector<5x5xf32>
    %417 = arith.subf %413, %416 : vector<5x5xf32>
    %418 = math.exp %417 : vector<5x5xf32>
    %cst_353 = arith.constant dense<0.000000e+00> : vector<5xf32>
    %419 = vector.multi_reduction <add>, %418, %cst_353 [1] : vector<5x5xf32> to vector<5xf32>
    %420 = vector.shape_cast %419 : vector<5xf32> to vector<5x1xf32>
    %421 = tpu.reciprocal %420 {approx = true} : vector<5x1xf32> -> vector<5x1xf32>
    %422 = vector.broadcast %421 : vector<5x1xf32> to vector<5x5xf32>
    %423 = arith.mulf %418, %422 : vector<5x5xf32>
    %424 = arith.truncf %423 : vector<5x5xf32> to vector<5x5xbf16>
    %425 = arith.truncf %410 : vector<5x16xf32> to vector<5x16xbf16>
    %cst_354 = arith.constant dense<0.000000e+00> : vector<5x16xf32>
    %426 = tpu.matmul %424, %425, %cst_354 {dimension_numbers = #tpu.dot_dimension_numbers<[1], [0], [0], [1], [0, 0, 1, 1], [], []>} : vector<5x5xbf16>, vector<5x16xbf16>, vector<5x16xf32> -> vector<5x16xf32>
    %427 = arith.truncf %426 : vector<5x16xf32> to vector<5x16xbf16>
    %c1_355 = arith.constant 1 : index
    %c1_356 = arith.constant 1 : index
    %c0_357 = arith.constant 0 : index
    %c0_358 = arith.constant 0 : index
    %428 = vector.load %arg10[%c1_355, %c1_356, %c0_357, %c0_358] : memref<2x4x16x64xbf16, #tpu.memory_space<vmem>>, vector<1x1x16x64xbf16>
    %429 = vector.shape_cast %428 : vector<1x1x16x64xbf16> to vector<16x64xbf16>
    %cst_359 = arith.constant dense<0.000000e+00> : vector<5x64xf32>
    %430 = tpu.matmul %427, %429, %cst_359 {dimension_numbers = #tpu.dot_dimension_numbers<[1], [0], [0], [1], [0, 0, 1, 1], [], []>} : vector<5x16xbf16>, vector<16x64xbf16>, vector<5x64xf32> -> vector<5x64xf32>
    %431 = arith.addf %389, %430 : vector<5x64xf32>
    %c1_360 = arith.constant 1 : index
    %c0_361 = arith.constant 0 : index
    %c2_362 = arith.constant 2 : index
    %c0_363 = arith.constant 0 : index
    %c0_364 = arith.constant 0 : index
    %432 = vector.load %arg8[%c1_360, %c0_361, %c2_362, %c0_363, %c0_364] : memref<2x3x4x64x16xbf16, #tpu.memory_space<vmem>>, vector<1x1x1x64x16xbf16>
    %433 = vector.shape_cast %432 : vector<1x1x1x64x16xbf16> to vector<64x16xbf16>
    %cst_365 = arith.constant dense<0.000000e+00> : vector<5x16xf32>
    %434 = tpu.matmul %348, %433, %cst_365 {dimension_numbers = #tpu.dot_dimension_numbers<[1], [0], [0], [1], [0, 0, 1, 1], [], []>} : vector<5x64xbf16>, vector<64x16xbf16>, vector<5x16xf32> -> vector<5x16xf32>
    %c1_366 = arith.constant 1 : index
    %c0_367 = arith.constant 0 : index
    %c2_368 = arith.constant 2 : index
    %c0_369 = arith.constant 0 : index
    %c0_370 = arith.constant 0 : index
    %435 = vector.load %arg9[%c1_366, %c0_367, %c2_368, %c0_369, %c0_370] : memref<2x3x4x1x16xf32, #tpu.memory_space<vmem>>, vector<1x1x1x1x16xf32>
    %436 = vector.shape_cast %435 : vector<1x1x1x1x16xf32> to vector<1x16xf32>
    %437 = vector.broadcast %436 : vector<1x16xf32> to vector<5x16xf32>
    %438 = arith.addf %434, %437 : vector<5x16xf32>
    %c1_371 = arith.constant 1 : index
    %c1_372 = arith.constant 1 : index
    %c2_373 = arith.constant 2 : index
    %c0_374 = arith.constant 0 : index
    %c0_375 = arith.constant 0 : index
    %439 = vector.load %arg8[%c1_371, %c1_372, %c2_373, %c0_374, %c0_375] : memref<2x3x4x64x16xbf16, #tpu.memory_space<vmem>>, vector<1x1x1x64x16xbf16>
    %440 = vector.shape_cast %439 : vector<1x1x1x64x16xbf16> to vector<64x16xbf16>
    %cst_376 = arith.constant dense<0.000000e+00> : vector<5x16xf32>
    %441 = tpu.matmul %348, %440, %cst_376 {dimension_numbers = #tpu.dot_dimension_numbers<[1], [0], [0], [1], [0, 0, 1, 1], [], []>} : vector<5x64xbf16>, vector<64x16xbf16>, vector<5x16xf32> -> vector<5x16xf32>
    %c1_377 = arith.constant 1 : index
    %c1_378 = arith.constant 1 : index
    %c2_379 = arith.constant 2 : index
    %c0_380 = arith.constant 0 : index
    %c0_381 = arith.constant 0 : index
    %442 = vector.load %arg9[%c1_377, %c1_378, %c2_379, %c0_380, %c0_381] : memref<2x3x4x1x16xf32, #tpu.memory_space<vmem>>, vector<1x1x1x1x16xf32>
    %443 = vector.shape_cast %442 : vector<1x1x1x1x16xf32> to vector<1x16xf32>
    %444 = vector.broadcast %443 : vector<1x16xf32> to vector<5x16xf32>
    %445 = arith.addf %441, %444 : vector<5x16xf32>
    %c1_382 = arith.constant 1 : index
    %c2_383 = arith.constant 2 : index
    %c2_384 = arith.constant 2 : index
    %c0_385 = arith.constant 0 : index
    %c0_386 = arith.constant 0 : index
    %446 = vector.load %arg8[%c1_382, %c2_383, %c2_384, %c0_385, %c0_386] : memref<2x3x4x64x16xbf16, #tpu.memory_space<vmem>>, vector<1x1x1x64x16xbf16>
    %447 = vector.shape_cast %446 : vector<1x1x1x64x16xbf16> to vector<64x16xbf16>
    %cst_387 = arith.constant dense<0.000000e+00> : vector<5x16xf32>
    %448 = tpu.matmul %348, %447, %cst_387 {dimension_numbers = #tpu.dot_dimension_numbers<[1], [0], [0], [1], [0, 0, 1, 1], [], []>} : vector<5x64xbf16>, vector<64x16xbf16>, vector<5x16xf32> -> vector<5x16xf32>
    %c1_388 = arith.constant 1 : index
    %c2_389 = arith.constant 2 : index
    %c2_390 = arith.constant 2 : index
    %c0_391 = arith.constant 0 : index
    %c0_392 = arith.constant 0 : index
    %449 = vector.load %arg9[%c1_388, %c2_389, %c2_390, %c0_391, %c0_392] : memref<2x3x4x1x16xf32, #tpu.memory_space<vmem>>, vector<1x1x1x1x16xf32>
    %450 = vector.shape_cast %449 : vector<1x1x1x1x16xf32> to vector<1x16xf32>
    %451 = vector.broadcast %450 : vector<1x16xf32> to vector<5x16xf32>
    %452 = arith.addf %448, %451 : vector<5x16xf32>
    %cst_393 = arith.constant dense<0.000000e+00> : vector<5x5xf32>
    %453 = tpu.matmul %438, %445, %cst_393 {dimension_numbers = #tpu.dot_dimension_numbers<[1], [1], [0], [0], [0, 0, 1, 0], [], []>} : vector<5x16xf32>, vector<5x16xf32>, vector<5x5xf32> -> vector<5x5xf32>
    %cst_394 = arith.constant 2.500000e-01 : f32
    %454 = vector.broadcast %cst_394 : f32 to vector<5x5xf32>
    %455 = arith.mulf %453, %454 : vector<5x5xf32>
    %cst_395 = arith.constant dense<0xFF800000> : vector<5xf32>
    %456 = vector.multi_reduction <maximumf>, %455, %cst_395 [1] : vector<5x5xf32> to vector<5xf32>
    %457 = vector.shape_cast %456 : vector<5xf32> to vector<5x1xf32>
    %458 = vector.broadcast %457 : vector<5x1xf32> to vector<5x5xf32>
    %459 = arith.subf %455, %458 : vector<5x5xf32>
    %460 = math.exp %459 : vector<5x5xf32>
    %cst_396 = arith.constant dense<0.000000e+00> : vector<5xf32>
    %461 = vector.multi_reduction <add>, %460, %cst_396 [1] : vector<5x5xf32> to vector<5xf32>
    %462 = vector.shape_cast %461 : vector<5xf32> to vector<5x1xf32>
    %463 = tpu.reciprocal %462 {approx = true} : vector<5x1xf32> -> vector<5x1xf32>
    %464 = vector.broadcast %463 : vector<5x1xf32> to vector<5x5xf32>
    %465 = arith.mulf %460, %464 : vector<5x5xf32>
    %466 = arith.truncf %465 : vector<5x5xf32> to vector<5x5xbf16>
    %467 = arith.truncf %452 : vector<5x16xf32> to vector<5x16xbf16>
    %cst_397 = arith.constant dense<0.000000e+00> : vector<5x16xf32>
    %468 = tpu.matmul %466, %467, %cst_397 {dimension_numbers = #tpu.dot_dimension_numbers<[1], [0], [0], [1], [0, 0, 1, 1], [], []>} : vector<5x5xbf16>, vector<5x16xbf16>, vector<5x16xf32> -> vector<5x16xf32>
    %469 = arith.truncf %468 : vector<5x16xf32> to vector<5x16xbf16>
    %c1_398 = arith.constant 1 : index
    %c2_399 = arith.constant 2 : index
    %c0_400 = arith.constant 0 : index
    %c0_401 = arith.constant 0 : index
    %470 = vector.load %arg10[%c1_398, %c2_399, %c0_400, %c0_401] : memref<2x4x16x64xbf16, #tpu.memory_space<vmem>>, vector<1x1x16x64xbf16>
    %471 = vector.shape_cast %470 : vector<1x1x16x64xbf16> to vector<16x64xbf16>
    %cst_402 = arith.constant dense<0.000000e+00> : vector<5x64xf32>
    %472 = tpu.matmul %469, %471, %cst_402 {dimension_numbers = #tpu.dot_dimension_numbers<[1], [0], [0], [1], [0, 0, 1, 1], [], []>} : vector<5x16xbf16>, vector<16x64xbf16>, vector<5x64xf32> -> vector<5x64xf32>
    %473 = arith.addf %431, %472 : vector<5x64xf32>
    %c1_403 = arith.constant 1 : index
    %c0_404 = arith.constant 0 : index
    %c3_405 = arith.constant 3 : index
    %c0_406 = arith.constant 0 : index
    %c0_407 = arith.constant 0 : index
    %474 = vector.load %arg8[%c1_403, %c0_404, %c3_405, %c0_406, %c0_407] : memref<2x3x4x64x16xbf16, #tpu.memory_space<vmem>>, vector<1x1x1x64x16xbf16>
    %475 = vector.shape_cast %474 : vector<1x1x1x64x16xbf16> to vector<64x16xbf16>
    %cst_408 = arith.constant dense<0.000000e+00> : vector<5x16xf32>
    %476 = tpu.matmul %348, %475, %cst_408 {dimension_numbers = #tpu.dot_dimension_numbers<[1], [0], [0], [1], [0, 0, 1, 1], [], []>} : vector<5x64xbf16>, vector<64x16xbf16>, vector<5x16xf32> -> vector<5x16xf32>
    %c1_409 = arith.constant 1 : index
    %c0_410 = arith.constant 0 : index
    %c3_411 = arith.constant 3 : index
    %c0_412 = arith.constant 0 : index
    %c0_413 = arith.constant 0 : index
    %477 = vector.load %arg9[%c1_409, %c0_410, %c3_411, %c0_412, %c0_413] : memref<2x3x4x1x16xf32, #tpu.memory_space<vmem>>, vector<1x1x1x1x16xf32>
    %478 = vector.shape_cast %477 : vector<1x1x1x1x16xf32> to vector<1x16xf32>
    %479 = vector.broadcast %478 : vector<1x16xf32> to vector<5x16xf32>
    %480 = arith.addf %476, %479 : vector<5x16xf32>
    %c1_414 = arith.constant 1 : index
    %c1_415 = arith.constant 1 : index
    %c3_416 = arith.constant 3 : index
    %c0_417 = arith.constant 0 : index
    %c0_418 = arith.constant 0 : index
    %481 = vector.load %arg8[%c1_414, %c1_415, %c3_416, %c0_417, %c0_418] : memref<2x3x4x64x16xbf16, #tpu.memory_space<vmem>>, vector<1x1x1x64x16xbf16>
    %482 = vector.shape_cast %481 : vector<1x1x1x64x16xbf16> to vector<64x16xbf16>
    %cst_419 = arith.constant dense<0.000000e+00> : vector<5x16xf32>
    %483 = tpu.matmul %348, %482, %cst_419 {dimension_numbers = #tpu.dot_dimension_numbers<[1], [0], [0], [1], [0, 0, 1, 1], [], []>} : vector<5x64xbf16>, vector<64x16xbf16>, vector<5x16xf32> -> vector<5x16xf32>
    %c1_420 = arith.constant 1 : index
    %c1_421 = arith.constant 1 : index
    %c3_422 = arith.constant 3 : index
    %c0_423 = arith.constant 0 : index
    %c0_424 = arith.constant 0 : index
    %484 = vector.load %arg9[%c1_420, %c1_421, %c3_422, %c0_423, %c0_424] : memref<2x3x4x1x16xf32, #tpu.memory_space<vmem>>, vector<1x1x1x1x16xf32>
    %485 = vector.shape_cast %484 : vector<1x1x1x1x16xf32> to vector<1x16xf32>
    %486 = vector.broadcast %485 : vector<1x16xf32> to vector<5x16xf32>
    %487 = arith.addf %483, %486 : vector<5x16xf32>
    %c1_425 = arith.constant 1 : index
    %c2_426 = arith.constant 2 : index
    %c3_427 = arith.constant 3 : index
    %c0_428 = arith.constant 0 : index
    %c0_429 = arith.constant 0 : index
    %488 = vector.load %arg8[%c1_425, %c2_426, %c3_427, %c0_428, %c0_429] : memref<2x3x4x64x16xbf16, #tpu.memory_space<vmem>>, vector<1x1x1x64x16xbf16>
    %489 = vector.shape_cast %488 : vector<1x1x1x64x16xbf16> to vector<64x16xbf16>
    %cst_430 = arith.constant dense<0.000000e+00> : vector<5x16xf32>
    %490 = tpu.matmul %348, %489, %cst_430 {dimension_numbers = #tpu.dot_dimension_numbers<[1], [0], [0], [1], [0, 0, 1, 1], [], []>} : vector<5x64xbf16>, vector<64x16xbf16>, vector<5x16xf32> -> vector<5x16xf32>
    %c1_431 = arith.constant 1 : index
    %c2_432 = arith.constant 2 : index
    %c3_433 = arith.constant 3 : index
    %c0_434 = arith.constant 0 : index
    %c0_435 = arith.constant 0 : index
    %491 = vector.load %arg9[%c1_431, %c2_432, %c3_433, %c0_434, %c0_435] : memref<2x3x4x1x16xf32, #tpu.memory_space<vmem>>, vector<1x1x1x1x16xf32>
    %492 = vector.shape_cast %491 : vector<1x1x1x1x16xf32> to vector<1x16xf32>
    %493 = vector.broadcast %492 : vector<1x16xf32> to vector<5x16xf32>
    %494 = arith.addf %490, %493 : vector<5x16xf32>
    %cst_436 = arith.constant dense<0.000000e+00> : vector<5x5xf32>
    %495 = tpu.matmul %480, %487, %cst_436 {dimension_numbers = #tpu.dot_dimension_numbers<[1], [1], [0], [0], [0, 0, 1, 0], [], []>} : vector<5x16xf32>, vector<5x16xf32>, vector<5x5xf32> -> vector<5x5xf32>
    %cst_437 = arith.constant 2.500000e-01 : f32
    %496 = vector.broadcast %cst_437 : f32 to vector<5x5xf32>
    %497 = arith.mulf %495, %496 : vector<5x5xf32>
    %cst_438 = arith.constant dense<0xFF800000> : vector<5xf32>
    %498 = vector.multi_reduction <maximumf>, %497, %cst_438 [1] : vector<5x5xf32> to vector<5xf32>
    %499 = vector.shape_cast %498 : vector<5xf32> to vector<5x1xf32>
    %500 = vector.broadcast %499 : vector<5x1xf32> to vector<5x5xf32>
    %501 = arith.subf %497, %500 : vector<5x5xf32>
    %502 = math.exp %501 : vector<5x5xf32>
    %cst_439 = arith.constant dense<0.000000e+00> : vector<5xf32>
    %503 = vector.multi_reduction <add>, %502, %cst_439 [1] : vector<5x5xf32> to vector<5xf32>
    %504 = vector.shape_cast %503 : vector<5xf32> to vector<5x1xf32>
    %505 = tpu.reciprocal %504 {approx = true} : vector<5x1xf32> -> vector<5x1xf32>
    %506 = vector.broadcast %505 : vector<5x1xf32> to vector<5x5xf32>
    %507 = arith.mulf %502, %506 : vector<5x5xf32>
    %508 = arith.truncf %507 : vector<5x5xf32> to vector<5x5xbf16>
    %509 = arith.truncf %494 : vector<5x16xf32> to vector<5x16xbf16>
    %cst_440 = arith.constant dense<0.000000e+00> : vector<5x16xf32>
    %510 = tpu.matmul %508, %509, %cst_440 {dimension_numbers = #tpu.dot_dimension_numbers<[1], [0], [0], [1], [0, 0, 1, 1], [], []>} : vector<5x5xbf16>, vector<5x16xbf16>, vector<5x16xf32> -> vector<5x16xf32>
    %511 = arith.truncf %510 : vector<5x16xf32> to vector<5x16xbf16>
    %c1_441 = arith.constant 1 : index
    %c3_442 = arith.constant 3 : index
    %c0_443 = arith.constant 0 : index
    %c0_444 = arith.constant 0 : index
    %512 = vector.load %arg10[%c1_441, %c3_442, %c0_443, %c0_444] : memref<2x4x16x64xbf16, #tpu.memory_space<vmem>>, vector<1x1x16x64xbf16>
    %513 = vector.shape_cast %512 : vector<1x1x16x64xbf16> to vector<16x64xbf16>
    %cst_445 = arith.constant dense<0.000000e+00> : vector<5x64xf32>
    %514 = tpu.matmul %511, %513, %cst_445 {dimension_numbers = #tpu.dot_dimension_numbers<[1], [0], [0], [1], [0, 0, 1, 1], [], []>} : vector<5x16xbf16>, vector<16x64xbf16>, vector<5x64xf32> -> vector<5x64xf32>
    %515 = arith.addf %473, %514 : vector<5x64xf32>
    %516 = arith.addf %313, %515 : vector<5x64xf32>
    %517 = vector.broadcast %323 : vector<1x64xf32> to vector<5x64xf32>
    %518 = arith.addf %516, %517 : vector<5x64xf32>
    %cst_446 = arith.constant dense<0.000000e+00> : vector<5xf32>
    %519 = vector.multi_reduction <add>, %518, %cst_446 [1] : vector<5x64xf32> to vector<5xf32>
    %520 = vector.shape_cast %519 : vector<5xf32> to vector<5x1xf32>
    %cst_447 = arith.constant 6.400000e+01 : f32
    %521 = vector.broadcast %cst_447 : f32 to vector<5x1xf32>
    %522 = arith.divf %520, %521 : vector<5x1xf32>
    %523 = vector.broadcast %522 : vector<5x1xf32> to vector<5x64xf32>
    %524 = arith.subf %518, %523 : vector<5x64xf32>
    %525 = arith.mulf %524, %524 : vector<5x64xf32>
    %cst_448 = arith.constant dense<0.000000e+00> : vector<5xf32>
    %526 = vector.multi_reduction <add>, %525, %cst_448 [1] : vector<5x64xf32> to vector<5xf32>
    %527 = vector.shape_cast %526 : vector<5xf32> to vector<5x1xf32>
    %cst_449 = arith.constant 6.400000e+01 : f32
    %528 = vector.broadcast %cst_449 : f32 to vector<5x1xf32>
    %529 = arith.divf %527, %528 : vector<5x1xf32>
    %530 = vector.broadcast %522 : vector<5x1xf32> to vector<5x64xf32>
    %531 = arith.subf %518, %530 : vector<5x64xf32>
    %cst_450 = arith.constant 9.99999974E-6 : f32
    %532 = vector.broadcast %cst_450 : f32 to vector<5x1xf32>
    %533 = arith.addf %529, %532 : vector<5x1xf32>
    %534 = math.rsqrt %533 : vector<5x1xf32>
    %535 = vector.broadcast %534 : vector<5x1xf32> to vector<5x64xf32>
    %536 = arith.mulf %531, %535 : vector<5x64xf32>
    %537 = vector.broadcast %319 : vector<1x64xf32> to vector<5x64xf32>
    %538 = arith.mulf %536, %537 : vector<5x64xf32>
    %539 = vector.broadcast %321 : vector<1x64xf32> to vector<5x64xf32>
    %540 = arith.addf %538, %539 : vector<5x64xf32>
    %541 = arith.truncf %540 : vector<5x64xf32> to vector<5x64xbf16>
    %c1_451 = arith.constant 1 : index
    %c0_452 = arith.constant 0 : index
    %c0_453 = arith.constant 0 : index
    %542 = vector.load %arg11[%c1_451, %c0_452, %c0_453] : memref<2x64x256xbf16, #tpu.memory_space<vmem>>, vector<1x64x256xbf16>
    %543 = vector.shape_cast %542 : vector<1x64x256xbf16> to vector<64x256xbf16>
    %cst_454 = arith.constant dense<0.000000e+00> : vector<5x256xf32>
    %544 = tpu.matmul %541, %543, %cst_454 {dimension_numbers = #tpu.dot_dimension_numbers<[1], [0], [0], [1], [0, 0, 1, 1], [], []>} : vector<5x64xbf16>, vector<64x256xbf16>, vector<5x256xf32> -> vector<5x256xf32>
    %c1_455 = arith.constant 1 : index
    %c0_456 = arith.constant 0 : index
    %c0_457 = arith.constant 0 : index
    %545 = vector.load %arg12[%c1_455, %c0_456, %c0_457] : memref<2x1x256xf32, #tpu.memory_space<vmem>>, vector<1x1x256xf32>
    %546 = vector.shape_cast %545 : vector<1x1x256xf32> to vector<1x256xf32>
    %547 = vector.broadcast %546 : vector<1x256xf32> to vector<5x256xf32>
    %548 = arith.addf %544, %547 : vector<5x256xf32>
    %cst_458 = arith.constant 5.000000e-01 : f32
    %549 = vector.broadcast %cst_458 : f32 to vector<5x256xf32>
    %550 = arith.mulf %549, %548 : vector<5x256xf32>
    %cst_459 = arith.constant 0.707106769 : f32
    %551 = vector.broadcast %cst_459 : f32 to vector<5x256xf32>
    %552 = arith.mulf %548, %551 : vector<5x256xf32>
    %cst_460 = arith.constant -4.000000e+00 : f32
    %cst_461 = arith.constant 4.000000e+00 : f32
    %553 = vector.broadcast %cst_460 : f32 to vector<5x256xf32>
    %554 = arith.maximumf %553, %552 : vector<5x256xf32>
    %555 = vector.broadcast %cst_461 : f32 to vector<5x256xf32>
    %556 = arith.minimumf %555, %554 : vector<5x256xf32>
    %557 = arith.mulf %556, %556 : vector<5x256xf32>
    %cst_462 = arith.constant -2.72614237E-10 : f32
    %558 = vector.broadcast %cst_462 : f32 to vector<5x256xf32>
    %559 = arith.mulf %558, %557 : vector<5x256xf32>
    %cst_463 = arith.constant 2.77068146E-8 : f32
    %560 = vector.broadcast %cst_463 : f32 to vector<5x256xf32>
    %561 = arith.addf %559, %560 : vector<5x256xf32>
    %562 = arith.mulf %561, %557 : vector<5x256xf32>
    %cst_464 = arith.constant -2.10102394E-6 : f32
    %563 = vector.broadcast %cst_464 : f32 to vector<5x256xf32>
    %564 = arith.addf %562, %563 : vector<5x256xf32>
    %565 = arith.mulf %564, %557 : vector<5x256xf32>
    %cst_465 = arith.constant -5.69250624E-5 : f32
    %566 = vector.broadcast %cst_465 : f32 to vector<5x256xf32>
    %567 = arith.addf %565, %566 : vector<5x256xf32>
    %568 = arith.mulf %567, %557 : vector<5x256xf32>
    %cst_466 = arith.constant -7.34990637E-4 : f32
    %569 = vector.broadcast %cst_466 : f32 to vector<5x256xf32>
    %570 = arith.addf %568, %569 : vector<5x256xf32>
    %571 = arith.mulf %570, %557 : vector<5x256xf32>
    %cst_467 = arith.constant -2.954600e-03 : f32
    %572 = vector.broadcast %cst_467 : f32 to vector<5x256xf32>
    %573 = arith.addf %571, %572 : vector<5x256xf32>
    %574 = arith.mulf %573, %557 : vector<5x256xf32>
    %cst_468 = arith.constant -0.0160960332 : f32
    %575 = vector.broadcast %cst_468 : f32 to vector<5x256xf32>
    %576 = arith.addf %574, %575 : vector<5x256xf32>
    %577 = arith.mulf %576, %556 : vector<5x256xf32>
    %cst_469 = arith.constant -1.45660715E-5 : f32
    %578 = vector.broadcast %cst_469 : f32 to vector<5x256xf32>
    %579 = arith.mulf %578, %557 : vector<5x256xf32>
    %cst_470 = arith.constant -2.13374049E-4 : f32
    %580 = vector.broadcast %cst_470 : f32 to vector<5x256xf32>
    %581 = arith.addf %579, %580 : vector<5x256xf32>
    %582 = arith.mulf %581, %557 : vector<5x256xf32>
    %cst_471 = arith.constant -0.00168282702 : f32
    %583 = vector.broadcast %cst_471 : f32 to vector<5x256xf32>
    %584 = arith.addf %582, %583 : vector<5x256xf32>
    %585 = arith.mulf %584, %557 : vector<5x256xf32>
    %cst_472 = arith.constant -0.00737332925 : f32
    %586 = vector.broadcast %cst_472 : f32 to vector<5x256xf32>
    %587 = arith.addf %585, %586 : vector<5x256xf32>
    %588 = arith.mulf %587, %557 : vector<5x256xf32>
    %cst_473 = arith.constant -0.0142647391 : f32
    %589 = vector.broadcast %cst_473 : f32 to vector<5x256xf32>
    %590 = arith.addf %588, %589 : vector<5x256xf32>
    %591 = arith.divf %577, %590 : vector<5x256xf32>
    %cst_474 = arith.constant 1.000000e+00 : f32
    %592 = vector.broadcast %cst_474 : f32 to vector<5x256xf32>
    %593 = arith.addf %592, %591 : vector<5x256xf32>
    %594 = arith.mulf %550, %593 : vector<5x256xf32>
    %595 = arith.truncf %594 : vector<5x256xf32> to vector<5x256xbf16>
    %c1_475 = arith.constant 1 : index
    %c0_476 = arith.constant 0 : index
    %c0_477 = arith.constant 0 : index
    %596 = vector.load %arg13[%c1_475, %c0_476, %c0_477] : memref<2x256x64xbf16, #tpu.memory_space<vmem>>, vector<1x256x64xbf16>
    %597 = vector.shape_cast %596 : vector<1x256x64xbf16> to vector<256x64xbf16>
    %cst_478 = arith.constant dense<0.000000e+00> : vector<5x64xf32>
    %598 = tpu.matmul %595, %597, %cst_478 {dimension_numbers = #tpu.dot_dimension_numbers<[1], [0], [0], [1], [0, 0, 1, 1], [], []>} : vector<5x256xbf16>, vector<256x64xbf16>, vector<5x64xf32> -> vector<5x64xf32>
    %599 = arith.addf %518, %598 : vector<5x64xf32>
    %600 = vector.broadcast %325 : vector<1x64xf32> to vector<5x64xf32>
    %601 = arith.addf %599, %600 : vector<5x64xf32>
    %c0_479 = arith.constant 0 : index
    %c0_480 = arith.constant 0 : index
    %c0_481 = arith.constant 0 : index
    %602 = vector.load %arg14[%c0_479, %c0_480, %c0_481] : memref<2x1x64xf32, #tpu.memory_space<vmem>>, vector<1x1x64xf32>
    %603 = vector.shape_cast %602 : vector<1x1x64xf32> to vector<1x64xf32>
    %c1_482 = arith.constant 1 : index
    %c0_483 = arith.constant 0 : index
    %c0_484 = arith.constant 0 : index
    %604 = vector.load %arg14[%c1_482, %c0_483, %c0_484] : memref<2x1x64xf32, #tpu.memory_space<vmem>>, vector<1x1x64xf32>
    %605 = vector.shape_cast %604 : vector<1x1x64xf32> to vector<1x64xf32>
    %cst_485 = arith.constant dense<0.000000e+00> : vector<5xf32>
    %606 = vector.multi_reduction <add>, %601, %cst_485 [1] : vector<5x64xf32> to vector<5xf32>
    %607 = vector.shape_cast %606 : vector<5xf32> to vector<5x1xf32>
    %cst_486 = arith.constant 6.400000e+01 : f32
    %608 = vector.broadcast %cst_486 : f32 to vector<5x1xf32>
    %609 = arith.divf %607, %608 : vector<5x1xf32>
    %610 = vector.broadcast %609 : vector<5x1xf32> to vector<5x64xf32>
    %611 = arith.subf %601, %610 : vector<5x64xf32>
    %612 = arith.mulf %611, %611 : vector<5x64xf32>
    %cst_487 = arith.constant dense<0.000000e+00> : vector<5xf32>
    %613 = vector.multi_reduction <add>, %612, %cst_487 [1] : vector<5x64xf32> to vector<5xf32>
    %614 = vector.shape_cast %613 : vector<5xf32> to vector<5x1xf32>
    %cst_488 = arith.constant 6.400000e+01 : f32
    %615 = vector.broadcast %cst_488 : f32 to vector<5x1xf32>
    %616 = arith.divf %614, %615 : vector<5x1xf32>
    %617 = vector.broadcast %609 : vector<5x1xf32> to vector<5x64xf32>
    %618 = arith.subf %601, %617 : vector<5x64xf32>
    %cst_489 = arith.constant 9.99999974E-6 : f32
    %619 = vector.broadcast %cst_489 : f32 to vector<5x1xf32>
    %620 = arith.addf %616, %619 : vector<5x1xf32>
    %621 = math.rsqrt %620 : vector<5x1xf32>
    %622 = vector.broadcast %621 : vector<5x1xf32> to vector<5x64xf32>
    %623 = arith.mulf %618, %622 : vector<5x64xf32>
    %624 = vector.broadcast %603 : vector<1x64xf32> to vector<5x64xf32>
    %625 = arith.mulf %623, %624 : vector<5x64xf32>
    %626 = vector.broadcast %605 : vector<1x64xf32> to vector<5x64xf32>
    %627 = arith.addf %625, %626 : vector<5x64xf32>
    %628 = arith.truncf %627 : vector<5x64xf32> to vector<5x64xbf16>
    %c0_490 = arith.constant 0 : index
    %c0_491 = arith.constant 0 : index
    %629 = vector.load %arg15[%c0_490, %c0_491] : memref<64x32xbf16, #tpu.memory_space<vmem>>, vector<64x32xbf16>
    %cst_492 = arith.constant dense<0.000000e+00> : vector<5x32xf32>
    %630 = tpu.matmul %628, %629, %cst_492 {dimension_numbers = #tpu.dot_dimension_numbers<[1], [0], [0], [1], [0, 0, 1, 1], [], []>} : vector<5x64xbf16>, vector<64x32xbf16>, vector<5x32xf32> -> vector<5x32xf32>
    %c0_493 = arith.constant 0 : index
    %c0_494 = arith.constant 0 : index
    %631 = vector.load %arg16[%c0_493, %c0_494] : memref<1x32xf32, #tpu.memory_space<vmem>>, vector<1x32xf32>
    %632 = vector.broadcast %631 : vector<1x32xf32> to vector<5x32xf32>
    %633 = arith.addf %630, %632 : vector<5x32xf32>
    %c0_495 = arith.constant 0 : index
    %c0_496 = arith.constant 0 : index
    %c0_497 = arith.constant 0 : index
    %c0_498 = arith.constant 0 : index
    %634 = vector.load %arg17[%c0_495, %c0_496, %c0_497, %c0_498] : memref<1x6x1x32xf32, #tpu.memory_space<vmem>>, vector<1x1x1x32xf32>
    %635 = vector.shape_cast %634 : vector<1x1x1x32xf32> to vector<1x32xf32>
    %c0_499 = arith.constant 0 : index
    %c1_500 = arith.constant 1 : index
    %c0_501 = arith.constant 0 : index
    %c0_502 = arith.constant 0 : index
    %636 = vector.load %arg17[%c0_499, %c1_500, %c0_501, %c0_502] : memref<1x6x1x32xf32, #tpu.memory_space<vmem>>, vector<1x1x1x32xf32>
    %637 = vector.shape_cast %636 : vector<1x1x1x32xf32> to vector<1x32xf32>
    %c0_503 = arith.constant 0 : index
    %c2_504 = arith.constant 2 : index
    %c0_505 = arith.constant 0 : index
    %c0_506 = arith.constant 0 : index
    %638 = vector.load %arg17[%c0_503, %c2_504, %c0_505, %c0_506] : memref<1x6x1x32xf32, #tpu.memory_space<vmem>>, vector<1x1x1x32xf32>
    %639 = vector.shape_cast %638 : vector<1x1x1x32xf32> to vector<1x32xf32>
    %c0_507 = arith.constant 0 : index
    %c3_508 = arith.constant 3 : index
    %c0_509 = arith.constant 0 : index
    %c0_510 = arith.constant 0 : index
    %640 = vector.load %arg17[%c0_507, %c3_508, %c0_509, %c0_510] : memref<1x6x1x32xf32, #tpu.memory_space<vmem>>, vector<1x1x1x32xf32>
    %641 = vector.shape_cast %640 : vector<1x1x1x32xf32> to vector<1x32xf32>
    %c0_511 = arith.constant 0 : index
    %c4_512 = arith.constant 4 : index
    %c0_513 = arith.constant 0 : index
    %c0_514 = arith.constant 0 : index
    %642 = vector.load %arg17[%c0_511, %c4_512, %c0_513, %c0_514] : memref<1x6x1x32xf32, #tpu.memory_space<vmem>>, vector<1x1x1x32xf32>
    %643 = vector.shape_cast %642 : vector<1x1x1x32xf32> to vector<1x32xf32>
    %c0_515 = arith.constant 0 : index
    %c5_516 = arith.constant 5 : index
    %c0_517 = arith.constant 0 : index
    %c0_518 = arith.constant 0 : index
    %644 = vector.load %arg17[%c0_515, %c5_516, %c0_517, %c0_518] : memref<1x6x1x32xf32, #tpu.memory_space<vmem>>, vector<1x1x1x32xf32>
    %645 = vector.shape_cast %644 : vector<1x1x1x32xf32> to vector<1x32xf32>
    %cst_519 = arith.constant dense<0.000000e+00> : vector<5xf32>
    %646 = vector.multi_reduction <add>, %633, %cst_519 [1] : vector<5x32xf32> to vector<5xf32>
    %647 = vector.shape_cast %646 : vector<5xf32> to vector<5x1xf32>
    %cst_520 = arith.constant 3.200000e+01 : f32
    %648 = vector.broadcast %cst_520 : f32 to vector<5x1xf32>
    %649 = arith.divf %647, %648 : vector<5x1xf32>
    %650 = vector.broadcast %649 : vector<5x1xf32> to vector<5x32xf32>
    %651 = arith.subf %633, %650 : vector<5x32xf32>
    %652 = arith.mulf %651, %651 : vector<5x32xf32>
    %cst_521 = arith.constant dense<0.000000e+00> : vector<5xf32>
    %653 = vector.multi_reduction <add>, %652, %cst_521 [1] : vector<5x32xf32> to vector<5xf32>
    %654 = vector.shape_cast %653 : vector<5xf32> to vector<5x1xf32>
    %cst_522 = arith.constant 3.200000e+01 : f32
    %655 = vector.broadcast %cst_522 : f32 to vector<5x1xf32>
    %656 = arith.divf %654, %655 : vector<5x1xf32>
    %657 = vector.broadcast %649 : vector<5x1xf32> to vector<5x32xf32>
    %658 = arith.subf %633, %657 : vector<5x32xf32>
    %cst_523 = arith.constant 9.99999974E-6 : f32
    %659 = vector.broadcast %cst_523 : f32 to vector<5x1xf32>
    %660 = arith.addf %656, %659 : vector<5x1xf32>
    %661 = math.rsqrt %660 : vector<5x1xf32>
    %662 = vector.broadcast %661 : vector<5x1xf32> to vector<5x32xf32>
    %663 = arith.mulf %658, %662 : vector<5x32xf32>
    %664 = vector.broadcast %635 : vector<1x32xf32> to vector<5x32xf32>
    %665 = arith.mulf %663, %664 : vector<5x32xf32>
    %666 = vector.broadcast %637 : vector<1x32xf32> to vector<5x32xf32>
    %667 = arith.addf %665, %666 : vector<5x32xf32>
    %668 = arith.truncf %667 : vector<5x32xf32> to vector<5x32xbf16>
    %c0_524 = arith.constant 0 : index
    %c0_525 = arith.constant 0 : index
    %c0_526 = arith.constant 0 : index
    %c0_527 = arith.constant 0 : index
    %c0_528 = arith.constant 0 : index
    %669 = vector.load %arg18[%c0_524, %c0_525, %c0_526, %c0_527, %c0_528] : memref<1x3x4x32x8xbf16, #tpu.memory_space<vmem>>, vector<1x1x1x32x8xbf16>
    %670 = vector.shape_cast %669 : vector<1x1x1x32x8xbf16> to vector<32x8xbf16>
    %cst_529 = arith.constant dense<0.000000e+00> : vector<5x8xf32>
    %671 = tpu.matmul %668, %670, %cst_529 {dimension_numbers = #tpu.dot_dimension_numbers<[1], [0], [0], [1], [0, 0, 1, 1], [], []>} : vector<5x32xbf16>, vector<32x8xbf16>, vector<5x8xf32> -> vector<5x8xf32>
    %c0_530 = arith.constant 0 : index
    %c0_531 = arith.constant 0 : index
    %c0_532 = arith.constant 0 : index
    %c0_533 = arith.constant 0 : index
    %c0_534 = arith.constant 0 : index
    %672 = vector.load %arg19[%c0_530, %c0_531, %c0_532, %c0_533, %c0_534] : memref<1x3x4x1x8xf32, #tpu.memory_space<vmem>>, vector<1x1x1x1x8xf32>
    %673 = vector.shape_cast %672 : vector<1x1x1x1x8xf32> to vector<1x8xf32>
    %674 = vector.broadcast %673 : vector<1x8xf32> to vector<5x8xf32>
    %675 = arith.addf %671, %674 : vector<5x8xf32>
    %c0_535 = arith.constant 0 : index
    %c1_536 = arith.constant 1 : index
    %c0_537 = arith.constant 0 : index
    %c0_538 = arith.constant 0 : index
    %c0_539 = arith.constant 0 : index
    %676 = vector.load %arg18[%c0_535, %c1_536, %c0_537, %c0_538, %c0_539] : memref<1x3x4x32x8xbf16, #tpu.memory_space<vmem>>, vector<1x1x1x32x8xbf16>
    %677 = vector.shape_cast %676 : vector<1x1x1x32x8xbf16> to vector<32x8xbf16>
    %cst_540 = arith.constant dense<0.000000e+00> : vector<5x8xf32>
    %678 = tpu.matmul %668, %677, %cst_540 {dimension_numbers = #tpu.dot_dimension_numbers<[1], [0], [0], [1], [0, 0, 1, 1], [], []>} : vector<5x32xbf16>, vector<32x8xbf16>, vector<5x8xf32> -> vector<5x8xf32>
    %c0_541 = arith.constant 0 : index
    %c1_542 = arith.constant 1 : index
    %c0_543 = arith.constant 0 : index
    %c0_544 = arith.constant 0 : index
    %c0_545 = arith.constant 0 : index
    %679 = vector.load %arg19[%c0_541, %c1_542, %c0_543, %c0_544, %c0_545] : memref<1x3x4x1x8xf32, #tpu.memory_space<vmem>>, vector<1x1x1x1x8xf32>
    %680 = vector.shape_cast %679 : vector<1x1x1x1x8xf32> to vector<1x8xf32>
    %681 = vector.broadcast %680 : vector<1x8xf32> to vector<5x8xf32>
    %682 = arith.addf %678, %681 : vector<5x8xf32>
    %c0_546 = arith.constant 0 : index
    %c2_547 = arith.constant 2 : index
    %c0_548 = arith.constant 0 : index
    %c0_549 = arith.constant 0 : index
    %c0_550 = arith.constant 0 : index
    %683 = vector.load %arg18[%c0_546, %c2_547, %c0_548, %c0_549, %c0_550] : memref<1x3x4x32x8xbf16, #tpu.memory_space<vmem>>, vector<1x1x1x32x8xbf16>
    %684 = vector.shape_cast %683 : vector<1x1x1x32x8xbf16> to vector<32x8xbf16>
    %cst_551 = arith.constant dense<0.000000e+00> : vector<5x8xf32>
    %685 = tpu.matmul %668, %684, %cst_551 {dimension_numbers = #tpu.dot_dimension_numbers<[1], [0], [0], [1], [0, 0, 1, 1], [], []>} : vector<5x32xbf16>, vector<32x8xbf16>, vector<5x8xf32> -> vector<5x8xf32>
    %c0_552 = arith.constant 0 : index
    %c2_553 = arith.constant 2 : index
    %c0_554 = arith.constant 0 : index
    %c0_555 = arith.constant 0 : index
    %c0_556 = arith.constant 0 : index
    %686 = vector.load %arg19[%c0_552, %c2_553, %c0_554, %c0_555, %c0_556] : memref<1x3x4x1x8xf32, #tpu.memory_space<vmem>>, vector<1x1x1x1x8xf32>
    %687 = vector.shape_cast %686 : vector<1x1x1x1x8xf32> to vector<1x8xf32>
    %688 = vector.broadcast %687 : vector<1x8xf32> to vector<5x8xf32>
    %689 = arith.addf %685, %688 : vector<5x8xf32>
    %cst_557 = arith.constant dense<0.000000e+00> : vector<5x5xf32>
    %690 = tpu.matmul %675, %682, %cst_557 {dimension_numbers = #tpu.dot_dimension_numbers<[1], [1], [0], [0], [0, 0, 1, 0], [], []>} : vector<5x8xf32>, vector<5x8xf32>, vector<5x5xf32> -> vector<5x5xf32>
    %cst_558 = arith.constant 0.353553385 : f32
    %691 = vector.broadcast %cst_558 : f32 to vector<5x5xf32>
    %692 = arith.mulf %690, %691 : vector<5x5xf32>
    %cst_559 = arith.constant dense<0xFF800000> : vector<5xf32>
    %693 = vector.multi_reduction <maximumf>, %692, %cst_559 [1] : vector<5x5xf32> to vector<5xf32>
    %694 = vector.shape_cast %693 : vector<5xf32> to vector<5x1xf32>
    %695 = vector.broadcast %694 : vector<5x1xf32> to vector<5x5xf32>
    %696 = arith.subf %692, %695 : vector<5x5xf32>
    %697 = math.exp %696 : vector<5x5xf32>
    %cst_560 = arith.constant dense<0.000000e+00> : vector<5xf32>
    %698 = vector.multi_reduction <add>, %697, %cst_560 [1] : vector<5x5xf32> to vector<5xf32>
    %699 = vector.shape_cast %698 : vector<5xf32> to vector<5x1xf32>
    %700 = tpu.reciprocal %699 {approx = true} : vector<5x1xf32> -> vector<5x1xf32>
    %701 = vector.broadcast %700 : vector<5x1xf32> to vector<5x5xf32>
    %702 = arith.mulf %697, %701 : vector<5x5xf32>
    %703 = arith.truncf %702 : vector<5x5xf32> to vector<5x5xbf16>
    %704 = arith.truncf %689 : vector<5x8xf32> to vector<5x8xbf16>
    %cst_561 = arith.constant dense<0.000000e+00> : vector<5x8xf32>
    %705 = tpu.matmul %703, %704, %cst_561 {dimension_numbers = #tpu.dot_dimension_numbers<[1], [0], [0], [1], [0, 0, 1, 1], [], []>} : vector<5x5xbf16>, vector<5x8xbf16>, vector<5x8xf32> -> vector<5x8xf32>
    %706 = arith.truncf %705 : vector<5x8xf32> to vector<5x8xbf16>
    %c0_562 = arith.constant 0 : index
    %c0_563 = arith.constant 0 : index
    %c0_564 = arith.constant 0 : index
    %c0_565 = arith.constant 0 : index
    %707 = vector.load %arg20[%c0_562, %c0_563, %c0_564, %c0_565] : memref<1x4x8x32xbf16, #tpu.memory_space<vmem>>, vector<1x1x8x32xbf16>
    %708 = vector.shape_cast %707 : vector<1x1x8x32xbf16> to vector<8x32xbf16>
    %cst_566 = arith.constant dense<0.000000e+00> : vector<5x32xf32>
    %709 = tpu.matmul %706, %708, %cst_566 {dimension_numbers = #tpu.dot_dimension_numbers<[1], [0], [0], [1], [0, 0, 1, 1], [], []>} : vector<5x8xbf16>, vector<8x32xbf16>, vector<5x32xf32> -> vector<5x32xf32>
    %c0_567 = arith.constant 0 : index
    %c0_568 = arith.constant 0 : index
    %c1_569 = arith.constant 1 : index
    %c0_570 = arith.constant 0 : index
    %c0_571 = arith.constant 0 : index
    %710 = vector.load %arg18[%c0_567, %c0_568, %c1_569, %c0_570, %c0_571] : memref<1x3x4x32x8xbf16, #tpu.memory_space<vmem>>, vector<1x1x1x32x8xbf16>
    %711 = vector.shape_cast %710 : vector<1x1x1x32x8xbf16> to vector<32x8xbf16>
    %cst_572 = arith.constant dense<0.000000e+00> : vector<5x8xf32>
    %712 = tpu.matmul %668, %711, %cst_572 {dimension_numbers = #tpu.dot_dimension_numbers<[1], [0], [0], [1], [0, 0, 1, 1], [], []>} : vector<5x32xbf16>, vector<32x8xbf16>, vector<5x8xf32> -> vector<5x8xf32>
    %c0_573 = arith.constant 0 : index
    %c0_574 = arith.constant 0 : index
    %c1_575 = arith.constant 1 : index
    %c0_576 = arith.constant 0 : index
    %c0_577 = arith.constant 0 : index
    %713 = vector.load %arg19[%c0_573, %c0_574, %c1_575, %c0_576, %c0_577] : memref<1x3x4x1x8xf32, #tpu.memory_space<vmem>>, vector<1x1x1x1x8xf32>
    %714 = vector.shape_cast %713 : vector<1x1x1x1x8xf32> to vector<1x8xf32>
    %715 = vector.broadcast %714 : vector<1x8xf32> to vector<5x8xf32>
    %716 = arith.addf %712, %715 : vector<5x8xf32>
    %c0_578 = arith.constant 0 : index
    %c1_579 = arith.constant 1 : index
    %c1_580 = arith.constant 1 : index
    %c0_581 = arith.constant 0 : index
    %c0_582 = arith.constant 0 : index
    %717 = vector.load %arg18[%c0_578, %c1_579, %c1_580, %c0_581, %c0_582] : memref<1x3x4x32x8xbf16, #tpu.memory_space<vmem>>, vector<1x1x1x32x8xbf16>
    %718 = vector.shape_cast %717 : vector<1x1x1x32x8xbf16> to vector<32x8xbf16>
    %cst_583 = arith.constant dense<0.000000e+00> : vector<5x8xf32>
    %719 = tpu.matmul %668, %718, %cst_583 {dimension_numbers = #tpu.dot_dimension_numbers<[1], [0], [0], [1], [0, 0, 1, 1], [], []>} : vector<5x32xbf16>, vector<32x8xbf16>, vector<5x8xf32> -> vector<5x8xf32>
    %c0_584 = arith.constant 0 : index
    %c1_585 = arith.constant 1 : index
    %c1_586 = arith.constant 1 : index
    %c0_587 = arith.constant 0 : index
    %c0_588 = arith.constant 0 : index
    %720 = vector.load %arg19[%c0_584, %c1_585, %c1_586, %c0_587, %c0_588] : memref<1x3x4x1x8xf32, #tpu.memory_space<vmem>>, vector<1x1x1x1x8xf32>
    %721 = vector.shape_cast %720 : vector<1x1x1x1x8xf32> to vector<1x8xf32>
    %722 = vector.broadcast %721 : vector<1x8xf32> to vector<5x8xf32>
    %723 = arith.addf %719, %722 : vector<5x8xf32>
    %c0_589 = arith.constant 0 : index
    %c2_590 = arith.constant 2 : index
    %c1_591 = arith.constant 1 : index
    %c0_592 = arith.constant 0 : index
    %c0_593 = arith.constant 0 : index
    %724 = vector.load %arg18[%c0_589, %c2_590, %c1_591, %c0_592, %c0_593] : memref<1x3x4x32x8xbf16, #tpu.memory_space<vmem>>, vector<1x1x1x32x8xbf16>
    %725 = vector.shape_cast %724 : vector<1x1x1x32x8xbf16> to vector<32x8xbf16>
    %cst_594 = arith.constant dense<0.000000e+00> : vector<5x8xf32>
    %726 = tpu.matmul %668, %725, %cst_594 {dimension_numbers = #tpu.dot_dimension_numbers<[1], [0], [0], [1], [0, 0, 1, 1], [], []>} : vector<5x32xbf16>, vector<32x8xbf16>, vector<5x8xf32> -> vector<5x8xf32>
    %c0_595 = arith.constant 0 : index
    %c2_596 = arith.constant 2 : index
    %c1_597 = arith.constant 1 : index
    %c0_598 = arith.constant 0 : index
    %c0_599 = arith.constant 0 : index
    %727 = vector.load %arg19[%c0_595, %c2_596, %c1_597, %c0_598, %c0_599] : memref<1x3x4x1x8xf32, #tpu.memory_space<vmem>>, vector<1x1x1x1x8xf32>
    %728 = vector.shape_cast %727 : vector<1x1x1x1x8xf32> to vector<1x8xf32>
    %729 = vector.broadcast %728 : vector<1x8xf32> to vector<5x8xf32>
    %730 = arith.addf %726, %729 : vector<5x8xf32>
    %cst_600 = arith.constant dense<0.000000e+00> : vector<5x5xf32>
    %731 = tpu.matmul %716, %723, %cst_600 {dimension_numbers = #tpu.dot_dimension_numbers<[1], [1], [0], [0], [0, 0, 1, 0], [], []>} : vector<5x8xf32>, vector<5x8xf32>, vector<5x5xf32> -> vector<5x5xf32>
    %cst_601 = arith.constant 0.353553385 : f32
    %732 = vector.broadcast %cst_601 : f32 to vector<5x5xf32>
    %733 = arith.mulf %731, %732 : vector<5x5xf32>
    %cst_602 = arith.constant dense<0xFF800000> : vector<5xf32>
    %734 = vector.multi_reduction <maximumf>, %733, %cst_602 [1] : vector<5x5xf32> to vector<5xf32>
    %735 = vector.shape_cast %734 : vector<5xf32> to vector<5x1xf32>
    %736 = vector.broadcast %735 : vector<5x1xf32> to vector<5x5xf32>
    %737 = arith.subf %733, %736 : vector<5x5xf32>
    %738 = math.exp %737 : vector<5x5xf32>
    %cst_603 = arith.constant dense<0.000000e+00> : vector<5xf32>
    %739 = vector.multi_reduction <add>, %738, %cst_603 [1] : vector<5x5xf32> to vector<5xf32>
    %740 = vector.shape_cast %739 : vector<5xf32> to vector<5x1xf32>
    %741 = tpu.reciprocal %740 {approx = true} : vector<5x1xf32> -> vector<5x1xf32>
    %742 = vector.broadcast %741 : vector<5x1xf32> to vector<5x5xf32>
    %743 = arith.mulf %738, %742 : vector<5x5xf32>
    %744 = arith.truncf %743 : vector<5x5xf32> to vector<5x5xbf16>
    %745 = arith.truncf %730 : vector<5x8xf32> to vector<5x8xbf16>
    %cst_604 = arith.constant dense<0.000000e+00> : vector<5x8xf32>
    %746 = tpu.matmul %744, %745, %cst_604 {dimension_numbers = #tpu.dot_dimension_numbers<[1], [0], [0], [1], [0, 0, 1, 1], [], []>} : vector<5x5xbf16>, vector<5x8xbf16>, vector<5x8xf32> -> vector<5x8xf32>
    %747 = arith.truncf %746 : vector<5x8xf32> to vector<5x8xbf16>
    %c0_605 = arith.constant 0 : index
    %c1_606 = arith.constant 1 : index
    %c0_607 = arith.constant 0 : index
    %c0_608 = arith.constant 0 : index
    %748 = vector.load %arg20[%c0_605, %c1_606, %c0_607, %c0_608] : memref<1x4x8x32xbf16, #tpu.memory_space<vmem>>, vector<1x1x8x32xbf16>
    %749 = vector.shape_cast %748 : vector<1x1x8x32xbf16> to vector<8x32xbf16>
    %cst_609 = arith.constant dense<0.000000e+00> : vector<5x32xf32>
    %750 = tpu.matmul %747, %749, %cst_609 {dimension_numbers = #tpu.dot_dimension_numbers<[1], [0], [0], [1], [0, 0, 1, 1], [], []>} : vector<5x8xbf16>, vector<8x32xbf16>, vector<5x32xf32> -> vector<5x32xf32>
    %751 = arith.addf %709, %750 : vector<5x32xf32>
    %c0_610 = arith.constant 0 : index
    %c0_611 = arith.constant 0 : index
    %c2_612 = arith.constant 2 : index
    %c0_613 = arith.constant 0 : index
    %c0_614 = arith.constant 0 : index
    %752 = vector.load %arg18[%c0_610, %c0_611, %c2_612, %c0_613, %c0_614] : memref<1x3x4x32x8xbf16, #tpu.memory_space<vmem>>, vector<1x1x1x32x8xbf16>
    %753 = vector.shape_cast %752 : vector<1x1x1x32x8xbf16> to vector<32x8xbf16>
    %cst_615 = arith.constant dense<0.000000e+00> : vector<5x8xf32>
    %754 = tpu.matmul %668, %753, %cst_615 {dimension_numbers = #tpu.dot_dimension_numbers<[1], [0], [0], [1], [0, 0, 1, 1], [], []>} : vector<5x32xbf16>, vector<32x8xbf16>, vector<5x8xf32> -> vector<5x8xf32>
    %c0_616 = arith.constant 0 : index
    %c0_617 = arith.constant 0 : index
    %c2_618 = arith.constant 2 : index
    %c0_619 = arith.constant 0 : index
    %c0_620 = arith.constant 0 : index
    %755 = vector.load %arg19[%c0_616, %c0_617, %c2_618, %c0_619, %c0_620] : memref<1x3x4x1x8xf32, #tpu.memory_space<vmem>>, vector<1x1x1x1x8xf32>
    %756 = vector.shape_cast %755 : vector<1x1x1x1x8xf32> to vector<1x8xf32>
    %757 = vector.broadcast %756 : vector<1x8xf32> to vector<5x8xf32>
    %758 = arith.addf %754, %757 : vector<5x8xf32>
    %c0_621 = arith.constant 0 : index
    %c1_622 = arith.constant 1 : index
    %c2_623 = arith.constant 2 : index
    %c0_624 = arith.constant 0 : index
    %c0_625 = arith.constant 0 : index
    %759 = vector.load %arg18[%c0_621, %c1_622, %c2_623, %c0_624, %c0_625] : memref<1x3x4x32x8xbf16, #tpu.memory_space<vmem>>, vector<1x1x1x32x8xbf16>
    %760 = vector.shape_cast %759 : vector<1x1x1x32x8xbf16> to vector<32x8xbf16>
    %cst_626 = arith.constant dense<0.000000e+00> : vector<5x8xf32>
    %761 = tpu.matmul %668, %760, %cst_626 {dimension_numbers = #tpu.dot_dimension_numbers<[1], [0], [0], [1], [0, 0, 1, 1], [], []>} : vector<5x32xbf16>, vector<32x8xbf16>, vector<5x8xf32> -> vector<5x8xf32>
    %c0_627 = arith.constant 0 : index
    %c1_628 = arith.constant 1 : index
    %c2_629 = arith.constant 2 : index
    %c0_630 = arith.constant 0 : index
    %c0_631 = arith.constant 0 : index
    %762 = vector.load %arg19[%c0_627, %c1_628, %c2_629, %c0_630, %c0_631] : memref<1x3x4x1x8xf32, #tpu.memory_space<vmem>>, vector<1x1x1x1x8xf32>
    %763 = vector.shape_cast %762 : vector<1x1x1x1x8xf32> to vector<1x8xf32>
    %764 = vector.broadcast %763 : vector<1x8xf32> to vector<5x8xf32>
    %765 = arith.addf %761, %764 : vector<5x8xf32>
    %c0_632 = arith.constant 0 : index
    %c2_633 = arith.constant 2 : index
    %c2_634 = arith.constant 2 : index
    %c0_635 = arith.constant 0 : index
    %c0_636 = arith.constant 0 : index
    %766 = vector.load %arg18[%c0_632, %c2_633, %c2_634, %c0_635, %c0_636] : memref<1x3x4x32x8xbf16, #tpu.memory_space<vmem>>, vector<1x1x1x32x8xbf16>
    %767 = vector.shape_cast %766 : vector<1x1x1x32x8xbf16> to vector<32x8xbf16>
    %cst_637 = arith.constant dense<0.000000e+00> : vector<5x8xf32>
    %768 = tpu.matmul %668, %767, %cst_637 {dimension_numbers = #tpu.dot_dimension_numbers<[1], [0], [0], [1], [0, 0, 1, 1], [], []>} : vector<5x32xbf16>, vector<32x8xbf16>, vector<5x8xf32> -> vector<5x8xf32>
    %c0_638 = arith.constant 0 : index
    %c2_639 = arith.constant 2 : index
    %c2_640 = arith.constant 2 : index
    %c0_641 = arith.constant 0 : index
    %c0_642 = arith.constant 0 : index
    %769 = vector.load %arg19[%c0_638, %c2_639, %c2_640, %c0_641, %c0_642] : memref<1x3x4x1x8xf32, #tpu.memory_space<vmem>>, vector<1x1x1x1x8xf32>
    %770 = vector.shape_cast %769 : vector<1x1x1x1x8xf32> to vector<1x8xf32>
    %771 = vector.broadcast %770 : vector<1x8xf32> to vector<5x8xf32>
    %772 = arith.addf %768, %771 : vector<5x8xf32>
    %cst_643 = arith.constant dense<0.000000e+00> : vector<5x5xf32>
    %773 = tpu.matmul %758, %765, %cst_643 {dimension_numbers = #tpu.dot_dimension_numbers<[1], [1], [0], [0], [0, 0, 1, 0], [], []>} : vector<5x8xf32>, vector<5x8xf32>, vector<5x5xf32> -> vector<5x5xf32>
    %cst_644 = arith.constant 0.353553385 : f32
    %774 = vector.broadcast %cst_644 : f32 to vector<5x5xf32>
    %775 = arith.mulf %773, %774 : vector<5x5xf32>
    %cst_645 = arith.constant dense<0xFF800000> : vector<5xf32>
    %776 = vector.multi_reduction <maximumf>, %775, %cst_645 [1] : vector<5x5xf32> to vector<5xf32>
    %777 = vector.shape_cast %776 : vector<5xf32> to vector<5x1xf32>
    %778 = vector.broadcast %777 : vector<5x1xf32> to vector<5x5xf32>
    %779 = arith.subf %775, %778 : vector<5x5xf32>
    %780 = math.exp %779 : vector<5x5xf32>
    %cst_646 = arith.constant dense<0.000000e+00> : vector<5xf32>
    %781 = vector.multi_reduction <add>, %780, %cst_646 [1] : vector<5x5xf32> to vector<5xf32>
    %782 = vector.shape_cast %781 : vector<5xf32> to vector<5x1xf32>
    %783 = tpu.reciprocal %782 {approx = true} : vector<5x1xf32> -> vector<5x1xf32>
    %784 = vector.broadcast %783 : vector<5x1xf32> to vector<5x5xf32>
    %785 = arith.mulf %780, %784 : vector<5x5xf32>
    %786 = arith.truncf %785 : vector<5x5xf32> to vector<5x5xbf16>
    %787 = arith.truncf %772 : vector<5x8xf32> to vector<5x8xbf16>
    %cst_647 = arith.constant dense<0.000000e+00> : vector<5x8xf32>
    %788 = tpu.matmul %786, %787, %cst_647 {dimension_numbers = #tpu.dot_dimension_numbers<[1], [0], [0], [1], [0, 0, 1, 1], [], []>} : vector<5x5xbf16>, vector<5x8xbf16>, vector<5x8xf32> -> vector<5x8xf32>
    %789 = arith.truncf %788 : vector<5x8xf32> to vector<5x8xbf16>
    %c0_648 = arith.constant 0 : index
    %c2_649 = arith.constant 2 : index
    %c0_650 = arith.constant 0 : index
    %c0_651 = arith.constant 0 : index
    %790 = vector.load %arg20[%c0_648, %c2_649, %c0_650, %c0_651] : memref<1x4x8x32xbf16, #tpu.memory_space<vmem>>, vector<1x1x8x32xbf16>
    %791 = vector.shape_cast %790 : vector<1x1x8x32xbf16> to vector<8x32xbf16>
    %cst_652 = arith.constant dense<0.000000e+00> : vector<5x32xf32>
    %792 = tpu.matmul %789, %791, %cst_652 {dimension_numbers = #tpu.dot_dimension_numbers<[1], [0], [0], [1], [0, 0, 1, 1], [], []>} : vector<5x8xbf16>, vector<8x32xbf16>, vector<5x32xf32> -> vector<5x32xf32>
    %793 = arith.addf %751, %792 : vector<5x32xf32>
    %c0_653 = arith.constant 0 : index
    %c0_654 = arith.constant 0 : index
    %c3_655 = arith.constant 3 : index
    %c0_656 = arith.constant 0 : index
    %c0_657 = arith.constant 0 : index
    %794 = vector.load %arg18[%c0_653, %c0_654, %c3_655, %c0_656, %c0_657] : memref<1x3x4x32x8xbf16, #tpu.memory_space<vmem>>, vector<1x1x1x32x8xbf16>
    %795 = vector.shape_cast %794 : vector<1x1x1x32x8xbf16> to vector<32x8xbf16>
    %cst_658 = arith.constant dense<0.000000e+00> : vector<5x8xf32>
    %796 = tpu.matmul %668, %795, %cst_658 {dimension_numbers = #tpu.dot_dimension_numbers<[1], [0], [0], [1], [0, 0, 1, 1], [], []>} : vector<5x32xbf16>, vector<32x8xbf16>, vector<5x8xf32> -> vector<5x8xf32>
    %c0_659 = arith.constant 0 : index
    %c0_660 = arith.constant 0 : index
    %c3_661 = arith.constant 3 : index
    %c0_662 = arith.constant 0 : index
    %c0_663 = arith.constant 0 : index
    %797 = vector.load %arg19[%c0_659, %c0_660, %c3_661, %c0_662, %c0_663] : memref<1x3x4x1x8xf32, #tpu.memory_space<vmem>>, vector<1x1x1x1x8xf32>
    %798 = vector.shape_cast %797 : vector<1x1x1x1x8xf32> to vector<1x8xf32>
    %799 = vector.broadcast %798 : vector<1x8xf32> to vector<5x8xf32>
    %800 = arith.addf %796, %799 : vector<5x8xf32>
    %c0_664 = arith.constant 0 : index
    %c1_665 = arith.constant 1 : index
    %c3_666 = arith.constant 3 : index
    %c0_667 = arith.constant 0 : index
    %c0_668 = arith.constant 0 : index
    %801 = vector.load %arg18[%c0_664, %c1_665, %c3_666, %c0_667, %c0_668] : memref<1x3x4x32x8xbf16, #tpu.memory_space<vmem>>, vector<1x1x1x32x8xbf16>
    %802 = vector.shape_cast %801 : vector<1x1x1x32x8xbf16> to vector<32x8xbf16>
    %cst_669 = arith.constant dense<0.000000e+00> : vector<5x8xf32>
    %803 = tpu.matmul %668, %802, %cst_669 {dimension_numbers = #tpu.dot_dimension_numbers<[1], [0], [0], [1], [0, 0, 1, 1], [], []>} : vector<5x32xbf16>, vector<32x8xbf16>, vector<5x8xf32> -> vector<5x8xf32>
    %c0_670 = arith.constant 0 : index
    %c1_671 = arith.constant 1 : index
    %c3_672 = arith.constant 3 : index
    %c0_673 = arith.constant 0 : index
    %c0_674 = arith.constant 0 : index
    %804 = vector.load %arg19[%c0_670, %c1_671, %c3_672, %c0_673, %c0_674] : memref<1x3x4x1x8xf32, #tpu.memory_space<vmem>>, vector<1x1x1x1x8xf32>
    %805 = vector.shape_cast %804 : vector<1x1x1x1x8xf32> to vector<1x8xf32>
    %806 = vector.broadcast %805 : vector<1x8xf32> to vector<5x8xf32>
    %807 = arith.addf %803, %806 : vector<5x8xf32>
    %c0_675 = arith.constant 0 : index
    %c2_676 = arith.constant 2 : index
    %c3_677 = arith.constant 3 : index
    %c0_678 = arith.constant 0 : index
    %c0_679 = arith.constant 0 : index
    %808 = vector.load %arg18[%c0_675, %c2_676, %c3_677, %c0_678, %c0_679] : memref<1x3x4x32x8xbf16, #tpu.memory_space<vmem>>, vector<1x1x1x32x8xbf16>
    %809 = vector.shape_cast %808 : vector<1x1x1x32x8xbf16> to vector<32x8xbf16>
    %cst_680 = arith.constant dense<0.000000e+00> : vector<5x8xf32>
    %810 = tpu.matmul %668, %809, %cst_680 {dimension_numbers = #tpu.dot_dimension_numbers<[1], [0], [0], [1], [0, 0, 1, 1], [], []>} : vector<5x32xbf16>, vector<32x8xbf16>, vector<5x8xf32> -> vector<5x8xf32>
    %c0_681 = arith.constant 0 : index
    %c2_682 = arith.constant 2 : index
    %c3_683 = arith.constant 3 : index
    %c0_684 = arith.constant 0 : index
    %c0_685 = arith.constant 0 : index
    %811 = vector.load %arg19[%c0_681, %c2_682, %c3_683, %c0_684, %c0_685] : memref<1x3x4x1x8xf32, #tpu.memory_space<vmem>>, vector<1x1x1x1x8xf32>
    %812 = vector.shape_cast %811 : vector<1x1x1x1x8xf32> to vector<1x8xf32>
    %813 = vector.broadcast %812 : vector<1x8xf32> to vector<5x8xf32>
    %814 = arith.addf %810, %813 : vector<5x8xf32>
    %cst_686 = arith.constant dense<0.000000e+00> : vector<5x5xf32>
    %815 = tpu.matmul %800, %807, %cst_686 {dimension_numbers = #tpu.dot_dimension_numbers<[1], [1], [0], [0], [0, 0, 1, 0], [], []>} : vector<5x8xf32>, vector<5x8xf32>, vector<5x5xf32> -> vector<5x5xf32>
    %cst_687 = arith.constant 0.353553385 : f32
    %816 = vector.broadcast %cst_687 : f32 to vector<5x5xf32>
    %817 = arith.mulf %815, %816 : vector<5x5xf32>
    %cst_688 = arith.constant dense<0xFF800000> : vector<5xf32>
    %818 = vector.multi_reduction <maximumf>, %817, %cst_688 [1] : vector<5x5xf32> to vector<5xf32>
    %819 = vector.shape_cast %818 : vector<5xf32> to vector<5x1xf32>
    %820 = vector.broadcast %819 : vector<5x1xf32> to vector<5x5xf32>
    %821 = arith.subf %817, %820 : vector<5x5xf32>
    %822 = math.exp %821 : vector<5x5xf32>
    %cst_689 = arith.constant dense<0.000000e+00> : vector<5xf32>
    %823 = vector.multi_reduction <add>, %822, %cst_689 [1] : vector<5x5xf32> to vector<5xf32>
    %824 = vector.shape_cast %823 : vector<5xf32> to vector<5x1xf32>
    %825 = tpu.reciprocal %824 {approx = true} : vector<5x1xf32> -> vector<5x1xf32>
    %826 = vector.broadcast %825 : vector<5x1xf32> to vector<5x5xf32>
    %827 = arith.mulf %822, %826 : vector<5x5xf32>
    %828 = arith.truncf %827 : vector<5x5xf32> to vector<5x5xbf16>
    %829 = arith.truncf %814 : vector<5x8xf32> to vector<5x8xbf16>
    %cst_690 = arith.constant dense<0.000000e+00> : vector<5x8xf32>
    %830 = tpu.matmul %828, %829, %cst_690 {dimension_numbers = #tpu.dot_dimension_numbers<[1], [0], [0], [1], [0, 0, 1, 1], [], []>} : vector<5x5xbf16>, vector<5x8xbf16>, vector<5x8xf32> -> vector<5x8xf32>
    %831 = arith.truncf %830 : vector<5x8xf32> to vector<5x8xbf16>
    %c0_691 = arith.constant 0 : index
    %c3_692 = arith.constant 3 : index
    %c0_693 = arith.constant 0 : index
    %c0_694 = arith.constant 0 : index
    %832 = vector.load %arg20[%c0_691, %c3_692, %c0_693, %c0_694] : memref<1x4x8x32xbf16, #tpu.memory_space<vmem>>, vector<1x1x8x32xbf16>
    %833 = vector.shape_cast %832 : vector<1x1x8x32xbf16> to vector<8x32xbf16>
    %cst_695 = arith.constant dense<0.000000e+00> : vector<5x32xf32>
    %834 = tpu.matmul %831, %833, %cst_695 {dimension_numbers = #tpu.dot_dimension_numbers<[1], [0], [0], [1], [0, 0, 1, 1], [], []>} : vector<5x8xbf16>, vector<8x32xbf16>, vector<5x32xf32> -> vector<5x32xf32>
    %835 = arith.addf %793, %834 : vector<5x32xf32>
    %836 = arith.addf %633, %835 : vector<5x32xf32>
    %837 = vector.broadcast %643 : vector<1x32xf32> to vector<5x32xf32>
    %838 = arith.addf %836, %837 : vector<5x32xf32>
    %cst_696 = arith.constant dense<0.000000e+00> : vector<5xf32>
    %839 = vector.multi_reduction <add>, %838, %cst_696 [1] : vector<5x32xf32> to vector<5xf32>
    %840 = vector.shape_cast %839 : vector<5xf32> to vector<5x1xf32>
    %cst_697 = arith.constant 3.200000e+01 : f32
    %841 = vector.broadcast %cst_697 : f32 to vector<5x1xf32>
    %842 = arith.divf %840, %841 : vector<5x1xf32>
    %843 = vector.broadcast %842 : vector<5x1xf32> to vector<5x32xf32>
    %844 = arith.subf %838, %843 : vector<5x32xf32>
    %845 = arith.mulf %844, %844 : vector<5x32xf32>
    %cst_698 = arith.constant dense<0.000000e+00> : vector<5xf32>
    %846 = vector.multi_reduction <add>, %845, %cst_698 [1] : vector<5x32xf32> to vector<5xf32>
    %847 = vector.shape_cast %846 : vector<5xf32> to vector<5x1xf32>
    %cst_699 = arith.constant 3.200000e+01 : f32
    %848 = vector.broadcast %cst_699 : f32 to vector<5x1xf32>
    %849 = arith.divf %847, %848 : vector<5x1xf32>
    %850 = vector.broadcast %842 : vector<5x1xf32> to vector<5x32xf32>
    %851 = arith.subf %838, %850 : vector<5x32xf32>
    %cst_700 = arith.constant 9.99999974E-6 : f32
    %852 = vector.broadcast %cst_700 : f32 to vector<5x1xf32>
    %853 = arith.addf %849, %852 : vector<5x1xf32>
    %854 = math.rsqrt %853 : vector<5x1xf32>
    %855 = vector.broadcast %854 : vector<5x1xf32> to vector<5x32xf32>
    %856 = arith.mulf %851, %855 : vector<5x32xf32>
    %857 = vector.broadcast %639 : vector<1x32xf32> to vector<5x32xf32>
    %858 = arith.mulf %856, %857 : vector<5x32xf32>
    %859 = vector.broadcast %641 : vector<1x32xf32> to vector<5x32xf32>
    %860 = arith.addf %858, %859 : vector<5x32xf32>
    %861 = arith.truncf %860 : vector<5x32xf32> to vector<5x32xbf16>
    %c0_701 = arith.constant 0 : index
    %c0_702 = arith.constant 0 : index
    %c0_703 = arith.constant 0 : index
    %862 = vector.load %arg21[%c0_701, %c0_702, %c0_703] : memref<1x32x128xbf16, #tpu.memory_space<vmem>>, vector<1x32x128xbf16>
    %863 = vector.shape_cast %862 : vector<1x32x128xbf16> to vector<32x128xbf16>
    %cst_704 = arith.constant dense<0.000000e+00> : vector<5x128xf32>
    %864 = tpu.matmul %861, %863, %cst_704 {dimension_numbers = #tpu.dot_dimension_numbers<[1], [0], [0], [1], [0, 0, 1, 1], [], []>} : vector<5x32xbf16>, vector<32x128xbf16>, vector<5x128xf32> -> vector<5x128xf32>
    %c0_705 = arith.constant 0 : index
    %c0_706 = arith.constant 0 : index
    %c0_707 = arith.constant 0 : index
    %865 = vector.load %arg22[%c0_705, %c0_706, %c0_707] : memref<1x1x128xf32, #tpu.memory_space<vmem>>, vector<1x1x128xf32>
    %866 = vector.shape_cast %865 : vector<1x1x128xf32> to vector<1x128xf32>
    %867 = vector.broadcast %866 : vector<1x128xf32> to vector<5x128xf32>
    %868 = arith.addf %864, %867 : vector<5x128xf32>
    %cst_708 = arith.constant 5.000000e-01 : f32
    %869 = vector.broadcast %cst_708 : f32 to vector<5x128xf32>
    %870 = arith.mulf %869, %868 : vector<5x128xf32>
    %cst_709 = arith.constant 0.707106769 : f32
    %871 = vector.broadcast %cst_709 : f32 to vector<5x128xf32>
    %872 = arith.mulf %868, %871 : vector<5x128xf32>
    %cst_710 = arith.constant -4.000000e+00 : f32
    %cst_711 = arith.constant 4.000000e+00 : f32
    %873 = vector.broadcast %cst_710 : f32 to vector<5x128xf32>
    %874 = arith.maximumf %873, %872 : vector<5x128xf32>
    %875 = vector.broadcast %cst_711 : f32 to vector<5x128xf32>
    %876 = arith.minimumf %875, %874 : vector<5x128xf32>
    %877 = arith.mulf %876, %876 : vector<5x128xf32>
    %cst_712 = arith.constant -2.72614237E-10 : f32
    %878 = vector.broadcast %cst_712 : f32 to vector<5x128xf32>
    %879 = arith.mulf %878, %877 : vector<5x128xf32>
    %cst_713 = arith.constant 2.77068146E-8 : f32
    %880 = vector.broadcast %cst_713 : f32 to vector<5x128xf32>
    %881 = arith.addf %879, %880 : vector<5x128xf32>
    %882 = arith.mulf %881, %877 : vector<5x128xf32>
    %cst_714 = arith.constant -2.10102394E-6 : f32
    %883 = vector.broadcast %cst_714 : f32 to vector<5x128xf32>
    %884 = arith.addf %882, %883 : vector<5x128xf32>
    %885 = arith.mulf %884, %877 : vector<5x128xf32>
    %cst_715 = arith.constant -5.69250624E-5 : f32
    %886 = vector.broadcast %cst_715 : f32 to vector<5x128xf32>
    %887 = arith.addf %885, %886 : vector<5x128xf32>
    %888 = arith.mulf %887, %877 : vector<5x128xf32>
    %cst_716 = arith.constant -7.34990637E-4 : f32
    %889 = vector.broadcast %cst_716 : f32 to vector<5x128xf32>
    %890 = arith.addf %888, %889 : vector<5x128xf32>
    %891 = arith.mulf %890, %877 : vector<5x128xf32>
    %cst_717 = arith.constant -2.954600e-03 : f32
    %892 = vector.broadcast %cst_717 : f32 to vector<5x128xf32>
    %893 = arith.addf %891, %892 : vector<5x128xf32>
    %894 = arith.mulf %893, %877 : vector<5x128xf32>
    %cst_718 = arith.constant -0.0160960332 : f32
    %895 = vector.broadcast %cst_718 : f32 to vector<5x128xf32>
    %896 = arith.addf %894, %895 : vector<5x128xf32>
    %897 = arith.mulf %896, %876 : vector<5x128xf32>
    %cst_719 = arith.constant -1.45660715E-5 : f32
    %898 = vector.broadcast %cst_719 : f32 to vector<5x128xf32>
    %899 = arith.mulf %898, %877 : vector<5x128xf32>
    %cst_720 = arith.constant -2.13374049E-4 : f32
    %900 = vector.broadcast %cst_720 : f32 to vector<5x128xf32>
    %901 = arith.addf %899, %900 : vector<5x128xf32>
    %902 = arith.mulf %901, %877 : vector<5x128xf32>
    %cst_721 = arith.constant -0.00168282702 : f32
    %903 = vector.broadcast %cst_721 : f32 to vector<5x128xf32>
    %904 = arith.addf %902, %903 : vector<5x128xf32>
    %905 = arith.mulf %904, %877 : vector<5x128xf32>
    %cst_722 = arith.constant -0.00737332925 : f32
    %906 = vector.broadcast %cst_722 : f32 to vector<5x128xf32>
    %907 = arith.addf %905, %906 : vector<5x128xf32>
    %908 = arith.mulf %907, %877 : vector<5x128xf32>
    %cst_723 = arith.constant -0.0142647391 : f32
    %909 = vector.broadcast %cst_723 : f32 to vector<5x128xf32>
    %910 = arith.addf %908, %909 : vector<5x128xf32>
    %911 = arith.divf %897, %910 : vector<5x128xf32>
    %cst_724 = arith.constant 1.000000e+00 : f32
    %912 = vector.broadcast %cst_724 : f32 to vector<5x128xf32>
    %913 = arith.addf %912, %911 : vector<5x128xf32>
    %914 = arith.mulf %870, %913 : vector<5x128xf32>
    %915 = arith.truncf %914 : vector<5x128xf32> to vector<5x128xbf16>
    %c0_725 = arith.constant 0 : index
    %c0_726 = arith.constant 0 : index
    %c0_727 = arith.constant 0 : index
    %916 = vector.load %arg23[%c0_725, %c0_726, %c0_727] : memref<1x128x32xbf16, #tpu.memory_space<vmem>>, vector<1x128x32xbf16>
    %917 = vector.shape_cast %916 : vector<1x128x32xbf16> to vector<128x32xbf16>
    %cst_728 = arith.constant dense<0.000000e+00> : vector<5x32xf32>
    %918 = tpu.matmul %915, %917, %cst_728 {dimension_numbers = #tpu.dot_dimension_numbers<[1], [0], [0], [1], [0, 0, 1, 1], [], []>} : vector<5x128xbf16>, vector<128x32xbf16>, vector<5x32xf32> -> vector<5x32xf32>
    %919 = arith.addf %838, %918 : vector<5x32xf32>
    %920 = vector.broadcast %645 : vector<1x32xf32> to vector<5x32xf32>
    %921 = arith.addf %919, %920 : vector<5x32xf32>
    %c0_729 = arith.constant 0 : index
    %c0_730 = arith.constant 0 : index
    %c0_731 = arith.constant 0 : index
    %922 = vector.load %arg24[%c0_729, %c0_730, %c0_731] : memref<2x1x32xf32, #tpu.memory_space<vmem>>, vector<1x1x32xf32>
    %923 = vector.shape_cast %922 : vector<1x1x32xf32> to vector<1x32xf32>
    %c1_732 = arith.constant 1 : index
    %c0_733 = arith.constant 0 : index
    %c0_734 = arith.constant 0 : index
    %924 = vector.load %arg24[%c1_732, %c0_733, %c0_734] : memref<2x1x32xf32, #tpu.memory_space<vmem>>, vector<1x1x32xf32>
    %925 = vector.shape_cast %924 : vector<1x1x32xf32> to vector<1x32xf32>
    %cst_735 = arith.constant dense<0.000000e+00> : vector<5xf32>
    %926 = vector.multi_reduction <add>, %921, %cst_735 [1] : vector<5x32xf32> to vector<5xf32>
    %927 = vector.shape_cast %926 : vector<5xf32> to vector<5x1xf32>
    %cst_736 = arith.constant 3.200000e+01 : f32
    %928 = vector.broadcast %cst_736 : f32 to vector<5x1xf32>
    %929 = arith.divf %927, %928 : vector<5x1xf32>
    %930 = vector.broadcast %929 : vector<5x1xf32> to vector<5x32xf32>
    %931 = arith.subf %921, %930 : vector<5x32xf32>
    %932 = arith.mulf %931, %931 : vector<5x32xf32>
    %cst_737 = arith.constant dense<0.000000e+00> : vector<5xf32>
    %933 = vector.multi_reduction <add>, %932, %cst_737 [1] : vector<5x32xf32> to vector<5xf32>
    %934 = vector.shape_cast %933 : vector<5xf32> to vector<5x1xf32>
    %cst_738 = arith.constant 3.200000e+01 : f32
    %935 = vector.broadcast %cst_738 : f32 to vector<5x1xf32>
    %936 = arith.divf %934, %935 : vector<5x1xf32>
    %937 = vector.broadcast %929 : vector<5x1xf32> to vector<5x32xf32>
    %938 = arith.subf %921, %937 : vector<5x32xf32>
    %cst_739 = arith.constant 9.99999974E-6 : f32
    %939 = vector.broadcast %cst_739 : f32 to vector<5x1xf32>
    %940 = arith.addf %936, %939 : vector<5x1xf32>
    %941 = math.rsqrt %940 : vector<5x1xf32>
    %942 = vector.broadcast %941 : vector<5x1xf32> to vector<5x32xf32>
    %943 = arith.mulf %938, %942 : vector<5x32xf32>
    %944 = vector.broadcast %923 : vector<1x32xf32> to vector<5x32xf32>
    %945 = arith.mulf %943, %944 : vector<5x32xf32>
    %946 = vector.broadcast %925 : vector<1x32xf32> to vector<5x32xf32>
    %947 = arith.addf %945, %946 : vector<5x32xf32>
    %948 = arith.truncf %947 : vector<5x32xf32> to vector<5x32xbf16>
    %c0_740 = arith.constant 0 : index
    %c0_741 = arith.constant 0 : index
    %949 = vector.load %arg25[%c0_740, %c0_741] : memref<32x16xbf16, #tpu.memory_space<vmem>>, vector<32x16xbf16>
    %cst_742 = arith.constant dense<0.000000e+00> : vector<5x16xf32>
    %950 = tpu.matmul %948, %949, %cst_742 {dimension_numbers = #tpu.dot_dimension_numbers<[1], [0], [0], [1], [0, 0, 1, 1], [], []>} : vector<5x32xbf16>, vector<32x16xbf16>, vector<5x16xf32> -> vector<5x16xf32>
    %c0_743 = arith.constant 0 : index
    %c0_744 = arith.constant 0 : index
    %951 = vector.load %arg26[%c0_743, %c0_744] : memref<1x16xf32, #tpu.memory_space<vmem>>, vector<1x16xf32>
    %952 = vector.broadcast %951 : vector<1x16xf32> to vector<5x16xf32>
    %953 = arith.addf %950, %952 : vector<5x16xf32>
    %c0_745 = arith.constant 0 : index
    %c0_746 = arith.constant 0 : index
    %954 = vector.load %arg27[%c0_745, %c0_746] : memref<16x16xf32, #tpu.memory_space<vmem>>, vector<16x16xf32>
    %cst_747 = arith.constant dense<0.000000e+00> : vector<5x16xf32>
    %955 = tpu.matmul %16, %954, %cst_747 {dimension_numbers = #tpu.dot_dimension_numbers<[1], [0], [0], [1], [0, 0, 1, 1], [], []>} : vector<5x16xf32>, vector<16x16xf32>, vector<5x16xf32> -> vector<5x16xf32>
    %cst_748 = arith.constant dense<0xFF800000> : vector<5xf32>
    %956 = vector.multi_reduction <maximumf>, %953, %cst_748 [1] : vector<5x16xf32> to vector<5xf32>
    %957 = vector.shape_cast %956 : vector<5xf32> to vector<5x1xf32>
    %958 = vector.broadcast %957 : vector<5x1xf32> to vector<5x16xf32>
    %959 = arith.subf %953, %958 : vector<5x16xf32>
    %960 = math.exp %959 : vector<5x16xf32>
    %cst_749 = arith.constant dense<0.000000e+00> : vector<5xf32>
    %961 = vector.multi_reduction <add>, %960, %cst_749 [1] : vector<5x16xf32> to vector<5xf32>
    %962 = vector.shape_cast %961 : vector<5xf32> to vector<5x1xf32>
    %963 = math.log %962 : vector<5x1xf32>
    %964 = arith.addf %963, %957 : vector<5x1xf32>
    %cst_750 = arith.constant 0.000000e+00 : f32
    %965 = vector.broadcast %cst_750 : f32 to vector<5x16xf32>
    %966 = arith.subf %965, %955 : vector<5x16xf32>
    %967 = vector.broadcast %964 : vector<5x1xf32> to vector<5x16xf32>
    %968 = arith.subf %953, %967 : vector<5x16xf32>
    %969 = arith.mulf %966, %968 : vector<5x16xf32>
    %cst_751 = arith.constant dense<0.000000e+00> : vector<5xf32>
    %970 = vector.multi_reduction <add>, %969, %cst_751 [1] : vector<5x16xf32> to vector<5xf32>
    %971 = vector.shape_cast %970 : vector<5xf32> to vector<5x1xf32>
    %c17_i32 = arith.constant 17 : i32
    %972 = vector.broadcast %c17_i32 : i32 to vector<5x1xi32>
    %973 = arith.cmpi eq, %11, %972 : vector<5x1xi32>
    %974 = arith.extui %973 : vector<5x1xi1> to vector<5x1xi32>
    %975 = arith.sitofp %974 : vector<5x1xi32> to vector<5x1xf32>
    %976 = tpu.iota {dimensions = array<i32: 1>} : vector<5x16xi32>
    %977 = vector.broadcast %957 : vector<5x1xf32> to vector<5x16xf32>
    %978 = arith.cmpf oeq, %953, %977 : vector<5x16xf32>
    %c16_i32 = arith.constant 16 : i32
    %979 = vector.broadcast %c16_i32 : i32 to vector<5x16xi32>
    %980 = arith.select %978, %976, %979 : vector<5x16xi1>, vector<5x16xi32>
    %cst_752 = arith.constant dense<2147483647> : vector<5xi32>
    %981 = vector.multi_reduction <minsi>, %980, %cst_752 [1] : vector<5x16xi32> to vector<5xi32>
    %982 = vector.shape_cast %981 : vector<5xi32> to vector<5x1xi32>
    %983 = arith.cmpi eq, %982, %9 : vector<5x1xi32>
    %984 = arith.extui %983 : vector<5x1xi1> to vector<5x1xi32>
    %985 = arith.sitofp %984 : vector<5x1xi32> to vector<5x1xf32>
    %986 = arith.mulf %971, %975 : vector<5x1xf32>
    %cst_753 = arith.constant dense<0.000000e+00> : vector<1xf32>
    %987 = vector.multi_reduction <add>, %986, %cst_753 [0] : vector<5x1xf32> to vector<1xf32>
    %988 = vector.shape_cast %987 : vector<1xf32> to vector<1x1xf32>
    %989 = arith.mulf %985, %975 : vector<5x1xf32>
    %cst_754 = arith.constant dense<0.000000e+00> : vector<1xf32>
    %990 = vector.multi_reduction <add>, %989, %cst_754 [0] : vector<5x1xf32> to vector<1xf32>
    %991 = vector.shape_cast %990 : vector<1xf32> to vector<1x1xf32>
    %cst_755 = arith.constant dense<0.000000e+00> : vector<1xf32>
    %992 = vector.multi_reduction <add>, %975, %cst_755 [0] : vector<5x1xf32> to vector<1xf32>
    %993 = vector.shape_cast %992 : vector<1xf32> to vector<1x1xf32>
    %994 = tpu.iota {dimensions = array<i32: 1>} : vector<1x128xi32>
    %c0_i32 = arith.constant 0 : i32
    %995 = vector.broadcast %c0_i32 : i32 to vector<1x128xi32>
    %996 = arith.cmpi eq, %994, %995 : vector<1x128xi32>
    %cst_756 = arith.constant 0.000000e+00 : f32
    %997 = vector.broadcast %cst_756 : f32 to vector<1x128xf32>
    %998 = vector.shape_cast %988 : vector<1x1xf32> to vector<1x1xf32>
    %999 = vector.broadcast %998 : vector<1x1xf32> to vector<1x128xf32>
    %1000 = arith.select %996, %999, %997 : vector<1x128xi1>, vector<1x128xf32>
    %c1_i32 = arith.constant 1 : i32
    %1001 = vector.broadcast %c1_i32 : i32 to vector<1x128xi32>
    %1002 = arith.cmpi eq, %994, %1001 : vector<1x128xi32>
    %1003 = vector.shape_cast %991 : vector<1x1xf32> to vector<1x1xf32>
    %1004 = vector.broadcast %1003 : vector<1x1xf32> to vector<1x128xf32>
    %1005 = arith.select %1002, %1004, %1000 : vector<1x128xi1>, vector<1x128xf32>
    %c2_i32 = arith.constant 2 : i32
    %1006 = vector.broadcast %c2_i32 : i32 to vector<1x128xi32>
    %1007 = arith.cmpi eq, %994, %1006 : vector<1x128xi32>
    %1008 = vector.shape_cast %993 : vector<1x1xf32> to vector<1x1xf32>
    %1009 = vector.broadcast %1008 : vector<1x1xf32> to vector<1x128xf32>
    %1010 = arith.select %1007, %1009, %1005 : vector<1x128xi1>, vector<1x128xf32>
    %c0_757 = arith.constant 0 : index
    %c0_758 = arith.constant 0 : index
    %c0_759 = arith.constant 0 : index
    %1011 = vector.load %arg28[%c0_757, %c0_758, %c0_759] : memref<1x1x128xf32, #tpu.memory_space<vmem>>, vector<1x1x128xf32>
    %1012 = vector.shape_cast %1011 : vector<1x1x128xf32> to vector<1x128xf32>
    %1013 = vector.shape_cast %1010 : vector<1x128xf32> to vector<1x1x128xf32>
    tpu.vector_store %arg28[%c0_757, %c0_758, %c0_759], %1013 {strides = array<i32>} : memref<1x1x128xf32, #tpu.memory_space<vmem>>, vector<1x1x128xf32>,
    return
  }
  func.func @transform_0(%arg0: i32) -> (i32, i32, i32) {
    %c0_i32 = arith.constant 0 : i32
    %c0_i32_0 = arith.constant 0 : i32
    %c0_i32_1 = arith.constant 0 : i32
    return %arg0, %c0_i32, %c0_i32_0 : i32, i32, i32
  }
  func.func @transform_1(%arg0: i32) -> (i32, i32, i32) {
    %c0_i32 = arith.constant 0 : i32
    %c0_i32_0 = arith.constant 0 : i32
    %c0_i32_1 = arith.constant 0 : i32
    return %arg0, %c0_i32, %c0_i32_0 : i32, i32, i32
  }
  func.func @transform_2(%arg0: i32) -> (i32, i32, i32) {
    %c0_i32 = arith.constant 0 : i32
    %c0_i32_0 = arith.constant 0 : i32
    %c0_i32_1 = arith.constant 0 : i32
    return %arg0, %c0_i32, %c0_i32_0 : i32, i32, i32
  }
  func.func @transform_3(%arg0: i32) -> (i32, i32) {
    %c0_i32 = arith.constant 0 : i32
    %c0_i32_0 = arith.constant 0 : i32
    %c0_i32_1 = arith.constant 0 : i32
    return %c0_i32, %c0_i32_0 : i32, i32
  }
  func.func @transform_4(%arg0: i32) -> (i32, i32) {
    %c0_i32 = arith.constant 0 : i32
    %c0_i32_0 = arith.constant 0 : i32
    %c0_i32_1 = arith.constant 0 : i32
    return %c0_i32, %c0_i32_0 : i32, i32
  }
  func.func @transform_5(%arg0: i32) -> (i32, i32) {
    %c0_i32 = arith.constant 0 : i32
    %c0_i32_0 = arith.constant 0 : i32
    %c0_i32_1 = arith.constant 0 : i32
    return %c0_i32, %c0_i32_0 : i32, i32
  }
  func.func @transform_6(%arg0: i32) -> (i32, i32, i32, i32) {
    %c0_i32 = arith.constant 0 : i32
    %c0_i32_0 = arith.constant 0 : i32
    %c0_i32_1 = arith.constant 0 : i32
    %c0_i32_2 = arith.constant 0 : i32
    %c0_i32_3 = arith.constant 0 : i32
    return %c0_i32, %c0_i32_0, %c0_i32_1, %c0_i32_2 : i32, i32, i32, i32
  }
  func.func @transform_7(%arg0: i32) -> (i32, i32, i32, i32, i32) {
    %c0_i32 = arith.constant 0 : i32
    %c0_i32_0 = arith.constant 0 : i32
    %c0_i32_1 = arith.constant 0 : i32
    %c0_i32_2 = arith.constant 0 : i32
    %c0_i32_3 = arith.constant 0 : i32
    %c0_i32_4 = arith.constant 0 : i32
    return %c0_i32, %c0_i32_0, %c0_i32_1, %c0_i32_2, %c0_i32_3 : i32, i32, i32, i32, i32
  }
  func.func @transform_8(%arg0: i32) -> (i32, i32, i32, i32, i32) {
    %c0_i32 = arith.constant 0 : i32
    %c0_i32_0 = arith.constant 0 : i32
    %c0_i32_1 = arith.constant 0 : i32
    %c0_i32_2 = arith.constant 0 : i32
    %c0_i32_3 = arith.constant 0 : i32
    %c0_i32_4 = arith.constant 0 : i32
    return %c0_i32, %c0_i32_0, %c0_i32_1, %c0_i32_2, %c0_i32_3 : i32, i32, i32, i32, i32
  }
  func.func @transform_9(%arg0: i32) -> (i32, i32, i32, i32) {
    %c0_i32 = arith.constant 0 : i32
    %c0_i32_0 = arith.constant 0 : i32
    %c0_i32_1 = arith.constant 0 : i32
    %c0_i32_2 = arith.constant 0 : i32
    %c0_i32_3 = arith.constant 0 : i32
    return %c0_i32, %c0_i32_0, %c0_i32_1, %c0_i32_2 : i32, i32, i32, i32
  }
  func.func @transform_10(%arg0: i32) -> (i32, i32, i32) {
    %c0_i32 = arith.constant 0 : i32
    %c0_i32_0 = arith.constant 0 : i32
    %c0_i32_1 = arith.constant 0 : i32
    %c0_i32_2 = arith.constant 0 : i32
    return %c0_i32, %c0_i32_0, %c0_i32_1 : i32, i32, i32
  }
  func.func @transform_11(%arg0: i32) -> (i32, i32, i32) {
    %c0_i32 = arith.constant 0 : i32
    %c0_i32_0 = arith.constant 0 : i32
    %c0_i32_1 = arith.constant 0 : i32
    %c0_i32_2 = arith.constant 0 : i32
    return %c0_i32, %c0_i32_0, %c0_i32_1 : i32, i32, i32
  }
  func.func @transform_12(%arg0: i32) -> (i32, i32, i32) {
    %c0_i32 = arith.constant 0 : i32
    %c0_i32_0 = arith.constant 0 : i32
    %c0_i32_1 = arith.constant 0 : i32
    %c0_i32_2 = arith.constant 0 : i32
    return %c0_i32, %c0_i32_0, %c0_i32_1 : i32, i32, i32
  }
  func.func @transform_13(%arg0: i32) -> (i32, i32, i32) {
    %c0_i32 = arith.constant 0 : i32
    %c0_i32_0 = arith.constant 0 : i32
    %c0_i32_1 = arith.constant 0 : i32
    %c0_i32_2 = arith.constant 0 : i32
    return %c0_i32, %c0_i32_0, %c0_i32_1 : i32, i32, i32
  }
  func.func @transform_14(%arg0: i32) -> (i32, i32) {
    %c0_i32 = arith.constant 0 : i32
    %c0_i32_0 = arith.constant 0 : i32
    %c0_i32_1 = arith.constant 0 : i32
    return %c0_i32, %c0_i32_0 : i32, i32
  }
  func.func @transform_15(%arg0: i32) -> (i32, i32) {
    %c0_i32 = arith.constant 0 : i32
    %c0_i32_0 = arith.constant 0 : i32
    %c0_i32_1 = arith.constant 0 : i32
    return %c0_i32, %c0_i32_0 : i32, i32
  }
  func.func @transform_16(%arg0: i32) -> (i32, i32, i32, i32) {
    %c0_i32 = arith.constant 0 : i32
    %c0_i32_0 = arith.constant 0 : i32
    %c0_i32_1 = arith.constant 0 : i32
    %c0_i32_2 = arith.constant 0 : i32
    %c0_i32_3 = arith.constant 0 : i32
    return %c0_i32, %c0_i32_0, %c0_i32_1, %c0_i32_2 : i32, i32, i32, i32
  }
  func.func @transform_17(%arg0: i32) -> (i32, i32, i32, i32, i32) {
    %c0_i32 = arith.constant 0 : i32
    %c0_i32_0 = arith.constant 0 : i32
    %c0_i32_1 = arith.constant 0 : i32
    %c0_i32_2 = arith.constant 0 : i32
    %c0_i32_3 = arith.constant 0 : i32
    %c0_i32_4 = arith.constant 0 : i32
    return %c0_i32, %c0_i32_0, %c0_i32_1, %c0_i32_2, %c0_i32_3 : i32, i32, i32, i32, i32
  }
  func.func @transform_18(%arg0: i32) -> (i32, i32, i32, i32, i32) {
    %c0_i32 = arith.constant 0 : i32
    %c0_i32_0 = arith.constant 0 : i32
    %c0_i32_1 = arith.constant 0 : i32
    %c0_i32_2 = arith.constant 0 : i32
    %c0_i32_3 = arith.constant 0 : i32
    %c0_i32_4 = arith.constant 0 : i32
    return %c0_i32, %c0_i32_0, %c0_i32_1, %c0_i32_2, %c0_i32_3 : i32, i32, i32, i32, i32
  }
  func.func @transform_19(%arg0: i32) -> (i32, i32, i32, i32) {
    %c0_i32 = arith.constant 0 : i32
    %c0_i32_0 = arith.constant 0 : i32
    %c0_i32_1 = arith.constant 0 : i32
    %c0_i32_2 = arith.constant 0 : i32
    %c0_i32_3 = arith.constant 0 : i32
    return %c0_i32, %c0_i32_0, %c0_i32_1, %c0_i32_2 : i32, i32, i32, i32
  }
  func.func @transform_20(%arg0: i32) -> (i32, i32, i32) {
    %c0_i32 = arith.constant 0 : i32
    %c0_i32_0 = arith.constant 0 : i32
    %c0_i32_1 = arith.constant 0 : i32
    %c0_i32_2 = arith.constant 0 : i32
    return %c0_i32, %c0_i32_0, %c0_i32_1 : i32, i32, i32
  }
  func.func @transform_21(%arg0: i32) -> (i32, i32, i32) {
    %c0_i32 = arith.constant 0 : i32
    %c0_i32_0 = arith.constant 0 : i32
    %c0_i32_1 = arith.constant 0 : i32
    %c0_i32_2 = arith.constant 0 : i32
    return %c0_i32, %c0_i32_0, %c0_i32_1 : i32, i32, i32
  }
  func.func @transform_22(%arg0: i32) -> (i32, i32, i32) {
    %c0_i32 = arith.constant 0 : i32
    %c0_i32_0 = arith.constant 0 : i32
    %c0_i32_1 = arith.constant 0 : i32
    %c0_i32_2 = arith.constant 0 : i32
    return %c0_i32, %c0_i32_0, %c0_i32_1 : i32, i32, i32
  }
  func.func @transform_23(%arg0: i32) -> (i32, i32, i32) {
    %c0_i32 = arith.constant 0 : i32
    %c0_i32_0 = arith.constant 0 : i32
    %c0_i32_1 = arith.constant 0 : i32
    %c0_i32_2 = arith.constant 0 : i32
    return %c0_i32, %c0_i32_0, %c0_i32_1 : i32, i32, i32
  }
  func.func @transform_24(%arg0: i32) -> (i32, i32) {
    %c0_i32 = arith.constant 0 : i32
    %c0_i32_0 = arith.constant 0 : i32
    %c0_i32_1 = arith.constant 0 : i32
    return %c0_i32, %c0_i32_0 : i32, i32
  }
  func.func @transform_25(%arg0: i32) -> (i32, i32) {
    %c0_i32 = arith.constant 0 : i32
    %c0_i32_0 = arith.constant 0 : i32
    %c0_i32_1 = arith.constant 0 : i32
    return %c0_i32, %c0_i32_0 : i32, i32
  }
  func.func @transform_26(%arg0: i32) -> (i32, i32) {
    %c0_i32 = arith.constant 0 : i32
    %c0_i32_0 = arith.constant 0 : i32
    %c0_i32_1 = arith.constant 0 : i32
    return %c0_i32, %c0_i32_0 : i32, i32
  }
  func.func @transform_27(%arg0: i32) -> (i32, i32, i32) {
    %c0_i32 = arith.constant 0 : i32
    %c0_i32_0 = arith.constant 0 : i32
    %c0_i32_1 = arith.constant 0 : i32
    return %arg0, %c0_i32, %c0_i32_0 : i32, i32, i32
  }
}

</mosaic_0001>

<llo_original>
// kernel: forward.3
$region0: #{forward.3}
  #allocation0 [shape = 'u32[]', space=smem, size = 0x4, offset = 0x4, fixed_abs, tag = 'smem constant byte address 0x4 - core index']
  #allocation1 [shape = 'u32[72,128]{1,0:T(1,128)}', space=vmem, size = 0x9000, scoped, tag = 'internal scratch']
  %s0 = inlined_call_operand.vmem [shape: f32[2,16,192], index: 0, kind: input, shape index: {}]
  %s1 = inlined_call_operand.vmem [shape: s32[2,5,1], index: 1, kind: input, shape index: {}]
  %s2 = inlined_call_operand.vmem [shape: s32[2,5,1], index: 2, kind: input, shape index: {}]
  %s3 = inlined_call_operand.vmem [shape: bf16[192,64], index: 3, kind: input, shape index: {}]
  %s4 = inlined_call_operand.vmem [shape: f32[1,64], index: 4, kind: input, shape index: {}]
  %s5 = inlined_call_operand.vmem [shape: f32[18,64], index: 5, kind: input, shape index: {}]
  %s6 = inlined_call_operand.vmem [shape: f32[2,6,1,64], index: 6, kind: input, shape index: {}]
  %s7 = inlined_call_operand.vmem [shape: bf16[2,3,4,64,16], index: 7, kind: input, shape index: {}]
  %s8 = inlined_call_operand.vmem [shape: f32[2,3,4,1,16], index: 8, kind: input, shape index: {}]
  %s9 = inlined_call_operand.vmem [shape: bf16[2,4,16,64], index: 9, kind: input, shape index: {}]
  %s10 = inlined_call_operand.vmem [shape: bf16[2,64,256], index: 10, kind: input, shape index: {}]
  %s11 = inlined_call_operand.vmem [shape: f32[2,1,256], index: 11, kind: input, shape index: {}]
  %s12 = inlined_call_operand.vmem [shape: bf16[2,256,64], index: 12, kind: input, shape index: {}]
  %s13 = inlined_call_operand.vmem [shape: f32[2,1,64], index: 13, kind: input, shape index: {}]
  %s14 = inlined_call_operand.vmem [shape: bf16[64,32], index: 14, kind: input, shape index: {}]
  %s15 = inlined_call_operand.vmem [shape: f32[1,32], index: 15, kind: input, shape index: {}]
  %s16 = inlined_call_operand.vmem [shape: f32[1,6,1,32], index: 16, kind: input, shape index: {}]
  %s17 = inlined_call_operand.vmem [shape: bf16[1,3,4,32,8], index: 17, kind: input, shape index: {}]
  %s18 = inlined_call_operand.vmem [shape: f32[1,3,4,1,8], index: 18, kind: input, shape index: {}]
  %s19 = inlined_call_operand.vmem [shape: bf16[1,4,8,32], index: 19, kind: input, shape index: {}]
  %s20 = inlined_call_operand.vmem [shape: bf16[1,32,128], index: 20, kind: input, shape index: {}]
  %s21 = inlined_call_operand.vmem [shape: f32[1,1,128], index: 21, kind: input, shape index: {}]
  %s22 = inlined_call_operand.vmem [shape: bf16[1,128,32], index: 22, kind: input, shape index: {}]
  %s23 = inlined_call_operand.vmem [shape: f32[2,1,32], index: 23, kind: input, shape index: {}]
  %s24 = inlined_call_operand.vmem [shape: bf16[32,16], index: 24, kind: input, shape index: {}]
  %s25 = inlined_call_operand.vmem [shape: f32[1,16], index: 25, kind: input, shape index: {}]
  %s26 = inlined_call_operand.vmem [shape: f32[16,16], index: 26, kind: input, shape index: {}]
  %s27 = inlined_call_operand.vmem [shape: f32[2,1,128], index: 27, kind: output, shape index: {}]
  %s28 = sld [smem:[#allocation0]]
  $region141: #{forward.3} parent=0
    _
  %s30 = ssub.s32 1, %s28
  %s31 = scalar_select 0, %s30, %s28
  loop: start=0, step=1, limit=4
  $region2: #{forward.3} parent=0 // loop_pre_header
    _
  $region3: #{forward.3} parent=0 // loop_header
    %s33 = sphi 0, %s37
    %p34 = scmp.ge.s32.totalorder %s33, 4
    %s43 = sphi 0, %s45
    %s46 = sphi 0, %s43
    %s47 = sphi 0, %s46
    %s63 = sphi 0, %s47
    %s69 = sphi 0, %s71
    %s72 = sphi 0, %s69
    %s73 = sphi 0, %s72
    %s89 = sphi 0, %s73
    %s95 = sphi 0, %s97
    %s98 = sphi 0, %s95
    %s99 = sphi 0, %s98
    %s115 = sphi 0, %s99
    %s119 = sphi 0, %s119
    %s121 = sphi 0, %s119
    %s122 = sphi 0, %s121
    %s136 = sphi 0, %s122
    %s140 = sphi 0, %s140
    %s142 = sphi 0, %s140
    %s143 = sphi 0, %s142
    %s157 = sphi 0, %s143
    %s161 = sphi 0, %s161
    %s163 = sphi 0, %s161
    %s164 = sphi 0, %s163
    %s178 = sphi 0, %s164
    %s182 = sphi 0, %s182
    %s184 = sphi 0, %s182
    %s185 = sphi 0, %s184
    %s199 = sphi 0, %s185
    %s203 = sphi 0, %s203
    %s205 = sphi 0, %s203
    %s206 = sphi 0, %s205
    %s220 = sphi 0, %s206
    %s224 = sphi 0, %s224
    %s226 = sphi 0, %s224
    %s227 = sphi 0, %s226
    %s241 = sphi 0, %s227
    %s245 = sphi 0, %s245
    %s247 = sphi 0, %s245
    %s248 = sphi 0, %s247
    %s262 = sphi 0, %s248
    %s266 = sphi 0, %s266
    %s268 = sphi 0, %s266
    %s269 = sphi 0, %s268
    %s283 = sphi 0, %s269
    %s287 = sphi 0, %s287
    %s289 = sphi 0, %s287
    %s290 = sphi 0, %s289
    %s304 = sphi 0, %s290
    %s308 = sphi 0, %s308
    %s310 = sphi 0, %s308
    %s311 = sphi 0, %s310
    %s325 = sphi 0, %s311
    %s329 = sphi 0, %s329
    %s331 = sphi 0, %s329
    %s332 = sphi 0, %s331
    %s346 = sphi 0, %s332
    %s350 = sphi 0, %s350
    %s352 = sphi 0, %s350
    %s353 = sphi 0, %s352
    %s367 = sphi 0, %s353
    %s371 = sphi 0, %s371
    %s373 = sphi 0, %s371
    %s374 = sphi 0, %s373
    %s388 = sphi 0, %s374
    %s392 = sphi 0, %s392
    %s394 = sphi 0, %s392
    %s395 = sphi 0, %s394
    %s409 = sphi 0, %s395
    %s413 = sphi 0, %s413
    %s415 = sphi 0, %s413
    %s416 = sphi 0, %s415
    %s430 = sphi 0, %s416
    %s434 = sphi 0, %s434
    %s436 = sphi 0, %s434
    %s437 = sphi 0, %s436
    %s451 = sphi 0, %s437
    %s455 = sphi 0, %s455
    %s457 = sphi 0, %s455
    %s458 = sphi 0, %s457
    %s472 = sphi 0, %s458
    %s476 = sphi 0, %s476
    %s478 = sphi 0, %s476
    %s479 = sphi 0, %s478
    %s493 = sphi 0, %s479
    %s497 = sphi 0, %s497
    %s499 = sphi 0, %s497
    %s500 = sphi 0, %s499
    %s514 = sphi 0, %s500
    %s518 = sphi 0, %s518
    %s520 = sphi 0, %s518
    %s521 = sphi 0, %s520
    %s535 = sphi 0, %s521
    %s539 = sphi 0, %s539
    %s541 = sphi 0, %s539
    %s542 = sphi 0, %s541
    %s556 = sphi 0, %s542
    %s560 = sphi 0, %s560
    %s562 = sphi 0, %s560
    %s563 = sphi 0, %s562
    %s577 = sphi 0, %s563
    %s581 = sphi 0, %s581
    %s583 = sphi 0, %s581
    %s584 = sphi 0, %s583
    %s598 = sphi 0, %s584
    %s602 = sphi 0, %s602
    %s604 = sphi 0, %s602
    %s605 = sphi 0, %s604
    %s619 = sphi 0, %s605
    %s625 = sphi 0, %s627
    %s628 = sphi 0, %s625
    %s629 = sphi 0, %s628
    %s645 = sphi 0, %s629
  $region4: #{forward.3} parent=0 // loop_header_branch
    %36 = sbr.rel (%p34) target = $region8
  $region5: #{forward.3} parent=0 // loop_body
    %s38 = ssub.s32 %s33, 1
    %s39 = ssub.s32 %s33, 2
    %s40 = sadd.s32 %s33, 1
    %s41 = ssub.s32 %s33, %s40
    %p42 = scmp.eq.s32.totalorder %s41, 0
    %s44 = sadd.s32 %s43, 1
    %s45 = scalar_select %p42, %s43, %s44
    %p48 = pneg %p42
    %p49 = scmp.eq.s32.totalorder %s33, 1
    %p50 = por %p48, %p49
    %p51 = scmp.ne.s32.totalorder %s43, %s46
    %p52 = scmp.eq.s32.totalorder %s33, 0
    %p53 = por %p51, %p52
    %p54 = scmp.ne.s32.totalorder %s43, %s46
    %p55 = scmp.eq.s32.totalorder %s38, 1
    %p56 = por %p54, %p55
    %p57 = scmp.ne.s32.totalorder %s46, %s47
    %p58 = scmp.eq.s32.totalorder %s38, 0
    %p59 = por %p57, %p58
    %p60 = scmp.ne.s32.totalorder %s46, %s47
    %p61 = scmp.eq.s32.totalorder %s39, 1
    %p62 = por %p60, %p61
    %p64 = scmp.ne.s32.totalorder %s47, %s63
    %p65 = scmp.eq.s32.totalorder %s39, 0
    %p66 = por %p64, %p65
    %s67 = ssub.s32 %s33, %s40
    %p68 = scmp.eq.s32.totalorder %s67, 0
    %s70 = sadd.s32 %s69, 1
    %s71 = scalar_select %p68, %s69, %s70
    %p74 = pneg %p68
    %p75 = scmp.eq.s32.totalorder %s33, 1
    %p76 = por %p74, %p75
    %p77 = scmp.ne.s32.totalorder %s69, %s72
    %p78 = scmp.eq.s32.totalorder %s33, 0
    %p79 = por %p77, %p78
    %p80 = scmp.ne.s32.totalorder %s69, %s72
    %p81 = scmp.eq.s32.totalorder %s38, 1
    %p82 = por %p80, %p81
    %p83 = scmp.ne.s32.totalorder %s72, %s73
    %p84 = scmp.eq.s32.totalorder %s38, 0
    %p85 = por %p83, %p84
    %p86 = scmp.ne.s32.totalorder %s72, %s73
    %p87 = scmp.eq.s32.totalorder %s39, 1
    %p88 = por %p86, %p87
    %p90 = scmp.ne.s32.totalorder %s73, %s89
    %p91 = scmp.eq.s32.totalorder %s39, 0
    %p92 = por %p90, %p91
    %s93 = ssub.s32 %s33, %s40
    %p94 = scmp.eq.s32.totalorder %s93, 0
    %s96 = sadd.s32 %s95, 1
    %s97 = scalar_select %p94, %s95, %s96
    %p100 = pneg %p94
    %p101 = scmp.eq.s32.totalorder %s33, 1
    %p102 = por %p100, %p101
    %p103 = scmp.ne.s32.totalorder %s95, %s98
    %p104 = scmp.eq.s32.totalorder %s33, 0
    %p105 = por %p103, %p104
    %p106 = scmp.ne.s32.totalorder %s95, %s98
    %p107 = scmp.eq.s32.totalorder %s38, 1
    %p108 = por %p106, %p107
    %p109 = scmp.ne.s32.totalorder %s98, %s99
    %p110 = scmp.eq.s32.totalorder %s38, 0
    %p111 = por %p109, %p110
    %p112 = scmp.ne.s32.totalorder %s98, %s99
    %p113 = scmp.eq.s32.totalorder %s39, 1
    %p114 = por %p112, %p113
    %p116 = scmp.ne.s32.totalorder %s99, %s115
    %p117 = scmp.eq.s32.totalorder %s39, 0
    %p118 = por %p116, %p117
    %s120 = sadd.s32 %s119, 1
    %p123 = scmp.eq.s32.totalorder %s33, 1
    %p124 = scmp.ne.s32.totalorder %s119, %s121
    %p125 = scmp.eq.s32.totalorder %s33, 0
    %p126 = por %p124, %p125
    %p127 = scmp.ne.s32.totalorder %s119, %s121
    %p128 = scmp.eq.s32.totalorder %s38, 1
    %p129 = por %p127, %p128
    %p130 = scmp.ne.s32.totalorder %s121, %s122
    %p131 = scmp.eq.s32.totalorder %s38, 0
    %p132 = por %p130, %p131
    %p133 = scmp.ne.s32.totalorder %s121, %s122
    %p134 = scmp.eq.s32.totalorder %s39, 1
    %p135 = por %p133, %p134
    %p137 = scmp.ne.s32.totalorder %s122, %s136
    %p138 = scmp.eq.s32.totalorder %s39, 0
    %p139 = por %p137, %p138
    %s141 = sadd.s32 %s140, 1
    %p144 = scmp.eq.s32.totalorder %s33, 1
    %p145 = scmp.ne.s32.totalorder %s140, %s142
    %p146 = scmp.eq.s32.totalorder %s33, 0
    %p147 = por %p145, %p146
    %p148 = scmp.ne.s32.totalorder %s140, %s142
    %p149 = scmp.eq.s32.totalorder %s38, 1
    %p150 = por %p148, %p149
    %p151 = scmp.ne.s32.totalorder %s142, %s143
    %p152 = scmp.eq.s32.totalorder %s38, 0
    %p153 = por %p151, %p152
    %p154 = scmp.ne.s32.totalorder %s142, %s143
    %p155 = scmp.eq.s32.totalorder %s39, 1
    %p156 = por %p154, %p155
    %p158 = scmp.ne.s32.totalorder %s143, %s157
    %p159 = scmp.eq.s32.totalorder %s39, 0
    %p160 = por %p158, %p159
    %s162 = sadd.s32 %s161, 1
    %p165 = scmp.eq.s32.totalorder %s33, 1
    %p166 = scmp.ne.s32.totalorder %s161, %s163
    %p167 = scmp.eq.s32.totalorder %s33, 0
    %p168 = por %p166, %p167
    %p169 = scmp.ne.s32.totalorder %s161, %s163
    %p170 = scmp.eq.s32.totalorder %s38, 1
    %p171 = por %p169, %p170
    %p172 = scmp.ne.s32.totalorder %s163, %s164
    %p173 = scmp.eq.s32.totalorder %s38, 0
    %p174 = por %p172, %p173
    %p175 = scmp.ne.s32.totalorder %s163, %s164
    %p176 = scmp.eq.s32.totalorder %s39, 1
    %p177 = por %p175, %p176
    %p179 = scmp.ne.s32.totalorder %s164, %s178
    %p180 = scmp.eq.s32.totalorder %s39, 0
    %p181 = por %p179, %p180
    %s183 = sadd.s32 %s182, 1
    %p186 = scmp.eq.s32.totalorder %s33, 1
    %p187 = scmp.ne.s32.totalorder %s182, %s184
    %p188 = scmp.eq.s32.totalorder %s33, 0
    %p189 = por %p187, %p188
    %p190 = scmp.ne.s32.totalorder %s182, %s184
    %p191 = scmp.eq.s32.totalorder %s38, 1
    %p192 = por %p190, %p191
    %p193 = scmp.ne.s32.totalorder %s184, %s185
    %p194 = scmp.eq.s32.totalorder %s38, 0
    %p195 = por %p193, %p194
    %p196 = scmp.ne.s32.totalorder %s184, %s185
    %p197 = scmp.eq.s32.totalorder %s39, 1
    %p198 = por %p196, %p197
    %p200 = scmp.ne.s32.totalorder %s185, %s199
    %p201 = scmp.eq.s32.totalorder %s39, 0
    %p202 = por %p200, %p201
    %s204 = sadd.s32 %s203, 1
    %p207 = scmp.eq.s32.totalorder %s33, 1
    %p208 = scmp.ne.s32.totalorder %s203, %s205
    %p209 = scmp.eq.s32.totalorder %s33, 0
    %p210 = por %p208, %p209
    %p211 = scmp.ne.s32.totalorder %s203, %s205
    %p212 = scmp.eq.s32.totalorder %s38, 1
    %p213 = por %p211, %p212
    %p214 = scmp.ne.s32.totalorder %s205, %s206
    %p215 = scmp.eq.s32.totalorder %s38, 0
    %p216 = por %p214, %p215
    %p217 = scmp.ne.s32.totalorder %s205, %s206
    %p218 = scmp.eq.s32.totalorder %s39, 1
    %p219 = por %p217, %p218
    %p221 = scmp.ne.s32.totalorder %s206, %s220
    %p222 = scmp.eq.s32.totalorder %s39, 0
    %p223 = por %p221, %p222
    %s225 = sadd.s32 %s224, 1
    %p228 = scmp.eq.s32.totalorder %s33, 1
    %p229 = scmp.ne.s32.totalorder %s224, %s226
    %p230 = scmp.eq.s32.totalorder %s33, 0
    %p231 = por %p229, %p230
    %p232 = scmp.ne.s32.totalorder %s224, %s226
    %p233 = scmp.eq.s32.totalorder %s38, 1
    %p234 = por %p232, %p233
    %p235 = scmp.ne.s32.totalorder %s226, %s227
    %p236 = scmp.eq.s32.totalorder %s38, 0
    %p237 = por %p235, %p236
    %p238 = scmp.ne.s32.totalorder %s226, %s227
    %p239 = scmp.eq.s32.totalorder %s39, 1
    %p240 = por %p238, %p239
    %p242 = scmp.ne.s32.totalorder %s227, %s241
    %p243 = scmp.eq.s32.totalorder %s39, 0
    %p244 = por %p242, %p243
    %s246 = sadd.s32 %s245, 1
    %p249 = scmp.eq.s32.totalorder %s33, 1
    %p250 = scmp.ne.s32.totalorder %s245, %s247
    %p251 = scmp.eq.s32.totalorder %s33, 0
    %p252 = por %p250, %p251
    %p253 = scmp.ne.s32.totalorder %s245, %s247
    %p254 = scmp.eq.s32.totalorder %s38, 1
    %p255 = por %p253, %p254
    %p256 = scmp.ne.s32.totalorder %s247, %s248
    %p257 = scmp.eq.s32.totalorder %s38, 0
    %p258 = por %p256, %p257
    %p259 = scmp.ne.s32.totalorder %s247, %s248
    %p260 = scmp.eq.s32.totalorder %s39, 1
    %p261 = por %p259, %p260
    %p263 = scmp.ne.s32.totalorder %s248, %s262
    %p264 = scmp.eq.s32.totalorder %s39, 0
    %p265 = por %p263, %p264
    %s267 = sadd.s32 %s266, 1
    %p270 = scmp.eq.s32.totalorder %s33, 1
    %p271 = scmp.ne.s32.totalorder %s266, %s268
    %p272 = scmp.eq.s32.totalorder %s33, 0
    %p273 = por %p271, %p272
    %p274 = scmp.ne.s32.totalorder %s266, %s268
    %p275 = scmp.eq.s32.totalorder %s38, 1
    %p276 = por %p274, %p275
    %p277 = scmp.ne.s32.totalorder %s268, %s269
    %p278 = scmp.eq.s32.totalorder %s38, 0
    %p279 = por %p277, %p278
    %p280 = scmp.ne.s32.totalorder %s268, %s269
    %p281 = scmp.eq.s32.totalorder %s39, 1
    %p282 = por %p280, %p281
    %p284 = scmp.ne.s32.totalorder %s269, %s283
    %p285 = scmp.eq.s32.totalorder %s39, 0
    %p286 = por %p284, %p285
    %s288 = sadd.s32 %s287, 1
    %p291 = scmp.eq.s32.totalorder %s33, 1
    %p292 = scmp.ne.s32.totalorder %s287, %s289
    %p293 = scmp.eq.s32.totalorder %s33, 0
    %p294 = por %p292, %p293
    %p295 = scmp.ne.s32.totalorder %s287, %s289
    %p296 = scmp.eq.s32.totalorder %s38, 1
    %p297 = por %p295, %p296
    %p298 = scmp.ne.s32.totalorder %s289, %s290
    %p299 = scmp.eq.s32.totalorder %s38, 0
    %p300 = por %p298, %p299
    %p301 = scmp.ne.s32.totalorder %s289, %s290
    %p302 = scmp.eq.s32.totalorder %s39, 1
    %p303 = por %p301, %p302
    %p305 = scmp.ne.s32.totalorder %s290, %s304
    %p306 = scmp.eq.s32.totalorder %s39, 0
    %p307 = por %p305, %p306
    %s309 = sadd.s32 %s308, 1
    %p312 = scmp.eq.s32.totalorder %s33, 1
    %p313 = scmp.ne.s32.totalorder %s308, %s310
    %p314 = scmp.eq.s32.totalorder %s33, 0
    %p315 = por %p313, %p314
    %p316 = scmp.ne.s32.totalorder %s308, %s310
    %p317 = scmp.eq.s32.totalorder %s38, 1
    %p318 = por %p316, %p317
    %p319 = scmp.ne.s32.totalorder %s310, %s311
    %p320 = scmp.eq.s32.totalorder %s38, 0
    %p321 = por %p319, %p320
    %p322 = scmp.ne.s32.totalorder %s310, %s311
    %p323 = scmp.eq.s32.totalorder %s39, 1
    %p324 = por %p322, %p323
    %p326 = scmp.ne.s32.totalorder %s311, %s325
    %p327 = scmp.eq.s32.totalorder %s39, 0
    %p328 = por %p326, %p327
    %s330 = sadd.s32 %s329, 1
    %p333 = scmp.eq.s32.totalorder %s33, 1
    %p334 = scmp.ne.s32.totalorder %s329, %s331
    %p335 = scmp.eq.s32.totalorder %s33, 0
    %p336 = por %p334, %p335
    %p337 = scmp.ne.s32.totalorder %s329, %s331
    %p338 = scmp.eq.s32.totalorder %s38, 1
    %p339 = por %p337, %p338
    %p340 = scmp.ne.s32.totalorder %s331, %s332
    %p341 = scmp.eq.s32.totalorder %s38, 0
    %p342 = por %p340, %p341
    %p343 = scmp.ne.s32.totalorder %s331, %s332
    %p344 = scmp.eq.s32.totalorder %s39, 1
    %p345 = por %p343, %p344
    %p347 = scmp.ne.s32.totalorder %s332, %s346
    %p348 = scmp.eq.s32.totalorder %s39, 0
    %p349 = por %p347, %p348
    %s351 = sadd.s32 %s350, 1
    %p354 = scmp.eq.s32.totalorder %s33, 1
    %p355 = scmp.ne.s32.totalorder %s350, %s352
    %p356 = scmp.eq.s32.totalorder %s33, 0
    %p357 = por %p355, %p356
    %p358 = scmp.ne.s32.totalorder %s350, %s352
    %p359 = scmp.eq.s32.totalorder %s38, 1
    %p360 = por %p358, %p359
    %p361 = scmp.ne.s32.totalorder %s352, %s353
    %p362 = scmp.eq.s32.totalorder %s38, 0
    %p363 = por %p361, %p362
    %p364 = scmp.ne.s32.totalorder %s352, %s353
    %p365 = scmp.eq.s32.totalorder %s39, 1
    %p366 = por %p364, %p365
    %p368 = scmp.ne.s32.totalorder %s353, %s367
    %p369 = scmp.eq.s32.totalorder %s39, 0
    %p370 = por %p368, %p369
    %s372 = sadd.s32 %s371, 1
    %p375 = scmp.eq.s32.totalorder %s33, 1
    %p376 = scmp.ne.s32.totalorder %s371, %s373
    %p377 = scmp.eq.s32.totalorder %s33, 0
    %p378 = por %p376, %p377
    %p379 = scmp.ne.s32.totalorder %s371, %s373
    %p380 = scmp.eq.s32.totalorder %s38, 1
    %p381 = por %p379, %p380
    %p382 = scmp.ne.s32.totalorder %s373, %s374
    %p383 = scmp.eq.s32.totalorder %s38, 0
    %p384 = por %p382, %p383
    %p385 = scmp.ne.s32.totalorder %s373, %s374
    %p386 = scmp.eq.s32.totalorder %s39, 1
    %p387 = por %p385, %p386
    %p389 = scmp.ne.s32.totalorder %s374, %s388
    %p390 = scmp.eq.s32.totalorder %s39, 0
    %p391 = por %p389, %p390
    %s393 = sadd.s32 %s392, 1
    %p396 = scmp.eq.s32.totalorder %s33, 1
    %p397 = scmp.ne.s32.totalorder %s392, %s394
    %p398 = scmp.eq.s32.totalorder %s33, 0
    %p399 = por %p397, %p398
    %p400 = scmp.ne.s32.totalorder %s392, %s394
    %p401 = scmp.eq.s32.totalorder %s38, 1
    %p402 = por %p400, %p401
    %p403 = scmp.ne.s32.totalorder %s394, %s395
    %p404 = scmp.eq.s32.totalorder %s38, 0
    %p405 = por %p403, %p404
    %p406 = scmp.ne.s32.totalorder %s394, %s395
    %p407 = scmp.eq.s32.totalorder %s39, 1
    %p408 = por %p406, %p407
    %p410 = scmp.ne.s32.totalorder %s395, %s409
    %p411 = scmp.eq.s32.totalorder %s39, 0
    %p412 = por %p410, %p411
    %s414 = sadd.s32 %s413, 1
    %p417 = scmp.eq.s32.totalorder %s33, 1
    %p418 = scmp.ne.s32.totalorder %s413, %s415
    %p419 = scmp.eq.s32.totalorder %s33, 0
    %p420 = por %p418, %p419
    %p421 = scmp.ne.s32.totalorder %s413, %s415
    %p422 = scmp.eq.s32.totalorder %s38, 1
    %p423 = por %p421, %p422
    %p424 = scmp.ne.s32.totalorder %s415, %s416
    %p425 = scmp.eq.s32.totalorder %s38, 0
    %p426 = por %p424, %p425
    %p427 = scmp.ne.s32.totalorder %s415, %s416
    %p428 = scmp.eq.s32.totalorder %s39, 1
    %p429 = por %p427, %p428
    %p431 = scmp.ne.s32.totalorder %s416, %s430
    %p432 = scmp.eq.s32.totalorder %s39, 0
    %p433 = por %p431, %p432
    %s435 = sadd.s32 %s434, 1
    %p438 = scmp.eq.s32.totalorder %s33, 1
    %p439 = scmp.ne.s32.totalorder %s434, %s436
    %p440 = scmp.eq.s32.totalorder %s33, 0
    %p441 = por %p439, %p440
    %p442 = scmp.ne.s32.totalorder %s434, %s436
    %p443 = scmp.eq.s32.totalorder %s38, 1
    %p444 = por %p442, %p443
    %p445 = scmp.ne.s32.totalorder %s436, %s437
    %p446 = scmp.eq.s32.totalorder %s38, 0
    %p447 = por %p445, %p446
    %p448 = scmp.ne.s32.totalorder %s436, %s437
    %p449 = scmp.eq.s32.totalorder %s39, 1
    %p450 = por %p448, %p449
    %p452 = scmp.ne.s32.totalorder %s437, %s451
    %p453 = scmp.eq.s32.totalorder %s39, 0
    %p454 = por %p452, %p453
    %s456 = sadd.s32 %s455, 1
    %p459 = scmp.eq.s32.totalorder %s33, 1
    %p460 = scmp.ne.s32.totalorder %s455, %s457
    %p461 = scmp.eq.s32.totalorder %s33, 0
    %p462 = por %p460, %p461
    %p463 = scmp.ne.s32.totalorder %s455, %s457
    %p464 = scmp.eq.s32.totalorder %s38, 1
    %p465 = por %p463, %p464
    %p466 = scmp.ne.s32.totalorder %s457, %s458
    %p467 = scmp.eq.s32.totalorder %s38, 0
    %p468 = por %p466, %p467
    %p469 = scmp.ne.s32.totalorder %s457, %s458
    %p470 = scmp.eq.s32.totalorder %s39, 1
    %p471 = por %p469, %p470
    %p473 = scmp.ne.s32.totalorder %s458, %s472
    %p474 = scmp.eq.s32.totalorder %s39, 0
    %p475 = por %p473, %p474
    %s477 = sadd.s32 %s476, 1
    %p480 = scmp.eq.s32.totalorder %s33, 1
    %p481 = scmp.ne.s32.totalorder %s476, %s478
    %p482 = scmp.eq.s32.totalorder %s33, 0
    %p483 = por %p481, %p482
    %p484 = scmp.ne.s32.totalorder %s476, %s478
    %p485 = scmp.eq.s32.totalorder %s38, 1
    %p486 = por %p484, %p485
    %p487 = scmp.ne.s32.totalorder %s478, %s479
    %p488 = scmp.eq.s32.totalorder %s38, 0
    %p489 = por %p487, %p488
    %p490 = scmp.ne.s32.totalorder %s478, %s479
    %p491 = scmp.eq.s32.totalorder %s39, 1
    %p492 = por %p490, %p491
    %p494 = scmp.ne.s32.totalorder %s479, %s493
    %p495 = scmp.eq.s32.totalorder %s39, 0
    %p496 = por %p494, %p495
    %s498 = sadd.s32 %s497, 1
    %p501 = scmp.eq.s32.totalorder %s33, 1
    %p502 = scmp.ne.s32.totalorder %s497, %s499
    %p503 = scmp.eq.s32.totalorder %s33, 0
    %p504 = por %p502, %p503
    %p505 = scmp.ne.s32.totalorder %s497, %s499
    %p506 = scmp.eq.s32.totalorder %s38, 1
    %p507 = por %p505, %p506
    %p508 = scmp.ne.s32.totalorder %s499, %s500
    %p509 = scmp.eq.s32.totalorder %s38, 0
    %p510 = por %p508, %p509
    %p511 = scmp.ne.s32.totalorder %s499, %s500
    %p512 = scmp.eq.s32.totalorder %s39, 1
    %p513 = por %p511, %p512
    %p515 = scmp.ne.s32.totalorder %s500, %s514
    %p516 = scmp.eq.s32.totalorder %s39, 0
    %p517 = por %p515, %p516
    %s519 = sadd.s32 %s518, 1
    %p522 = scmp.eq.s32.totalorder %s33, 1
    %p523 = scmp.ne.s32.totalorder %s518, %s520
    %p524 = scmp.eq.s32.totalorder %s33, 0
    %p525 = por %p523, %p524
    %p526 = scmp.ne.s32.totalorder %s518, %s520
    %p527 = scmp.eq.s32.totalorder %s38, 1
    %p528 = por %p526, %p527
    %p529 = scmp.ne.s32.totalorder %s520, %s521
    %p530 = scmp.eq.s32.totalorder %s38, 0
    %p531 = por %p529, %p530
    %p532 = scmp.ne.s32.totalorder %s520, %s521
    %p533 = scmp.eq.s32.totalorder %s39, 1
    %p534 = por %p532, %p533
    %p536 = scmp.ne.s32.totalorder %s521, %s535
    %p537 = scmp.eq.s32.totalorder %s39, 0
    %p538 = por %p536, %p537
    %s540 = sadd.s32 %s539, 1
    %p543 = scmp.eq.s32.totalorder %s33, 1
    %p544 = scmp.ne.s32.totalorder %s539, %s541
    %p545 = scmp.eq.s32.totalorder %s33, 0
    %p546 = por %p544, %p545
    %p547 = scmp.ne.s32.totalorder %s539, %s541
    %p548 = scmp.eq.s32.totalorder %s38, 1
    %p549 = por %p547, %p548
    %p550 = scmp.ne.s32.totalorder %s541, %s542
    %p551 = scmp.eq.s32.totalorder %s38, 0
    %p552 = por %p550, %p551
    %p553 = scmp.ne.s32.totalorder %s541, %s542
    %p554 = scmp.eq.s32.totalorder %s39, 1
    %p555 = por %p553, %p554
    %p557 = scmp.ne.s32.totalorder %s542, %s556
    %p558 = scmp.eq.s32.totalorder %s39, 0
    %p559 = por %p557, %p558
    %s561 = sadd.s32 %s560, 1
    %p564 = scmp.eq.s32.totalorder %s33, 1
    %p565 = scmp.ne.s32.totalorder %s560, %s562
    %p566 = scmp.eq.s32.totalorder %s33, 0
    %p567 = por %p565, %p566
    %p568 = scmp.ne.s32.totalorder %s560, %s562
    %p569 = scmp.eq.s32.totalorder %s38, 1
    %p570 = por %p568, %p569
    %p571 = scmp.ne.s32.totalorder %s562, %s563
    %p572 = scmp.eq.s32.totalorder %s38, 0
    %p573 = por %p571, %p572
    %p574 = scmp.ne.s32.totalorder %s562, %s563
    %p575 = scmp.eq.s32.totalorder %s39, 1
    %p576 = por %p574, %p575
    %p578 = scmp.ne.s32.totalorder %s563, %s577
    %p579 = scmp.eq.s32.totalorder %s39, 0
    %p580 = por %p578, %p579
    %s582 = sadd.s32 %s581, 1
    %p585 = scmp.eq.s32.totalorder %s33, 1
    %p586 = scmp.ne.s32.totalorder %s581, %s583
    %p587 = scmp.eq.s32.totalorder %s33, 0
    %p588 = por %p586, %p587
    %p589 = scmp.ne.s32.totalorder %s581, %s583
    %p590 = scmp.eq.s32.totalorder %s38, 1
    %p591 = por %p589, %p590
    %p592 = scmp.ne.s32.totalorder %s583, %s584
    %p593 = scmp.eq.s32.totalorder %s38, 0
    %p594 = por %p592, %p593
    %p595 = scmp.ne.s32.totalorder %s583, %s584
    %p596 = scmp.eq.s32.totalorder %s39, 1
    %p597 = por %p595, %p596
    %p599 = scmp.ne.s32.totalorder %s584, %s598
    %p600 = scmp.eq.s32.totalorder %s39, 0
    %p601 = por %p599, %p600
    %s603 = sadd.s32 %s602, 1
    %p606 = scmp.eq.s32.totalorder %s33, 1
    %p607 = scmp.ne.s32.totalorder %s602, %s604
    %p608 = scmp.eq.s32.totalorder %s33, 0
    %p609 = por %p607, %p608
    %p610 = scmp.ne.s32.totalorder %s602, %s604
    %p611 = scmp.eq.s32.totalorder %s38, 1
    %p612 = por %p610, %p611
    %p613 = scmp.ne.s32.totalorder %s604, %s605
    %p614 = scmp.eq.s32.totalorder %s38, 0
    %p615 = por %p613, %p614
    %p616 = scmp.ne.s32.totalorder %s604, %s605
    %p617 = scmp.eq.s32.totalorder %s39, 1
    %p618 = por %p616, %p617
    %p620 = scmp.ne.s32.totalorder %s605, %s619
    %p621 = scmp.eq.s32.totalorder %s39, 0
    %p622 = por %p620, %p621
    %s623 = ssub.s32 %s33, %s40
    %p624 = scmp.eq.s32.totalorder %s623, 0
    %s626 = sadd.s32 %s625, 1
    %s627 = scalar_select %p624, %s625, %s626
    %p630 = pneg %p624
    %p631 = scmp.eq.s32.totalorder %s33, 1
    %p632 = por %p630, %p631
    %p633 = scmp.ne.s32.totalorder %s625, %s628
    %p634 = scmp.eq.s32.totalorder %s33, 0
    %p635 = por %p633, %p634
    %p636 = scmp.ne.s32.totalorder %s625, %s628
    %p637 = scmp.eq.s32.totalorder %s38, 1
    %p638 = por %p636, %p637
    %p639 = scmp.ne.s32.totalorder %s628, %s629
    %p640 = scmp.eq.s32.totalorder %s38, 0
    %p641 = por %p639, %p640
    %p642 = scmp.ne.s32.totalorder %s628, %s629
    %p643 = scmp.eq.s32.totalorder %s39, 1
    %p644 = por %p642, %p643
    %p646 = scmp.ne.s32.totalorder %s629, %s645
    %p647 = scmp.eq.s32.totalorder %s39, 0
    %p648 = por %p646, %p647
    %p649 = scmp.le.s32.totalorder 1, %s33
    %p650 = scmp.lt.s32.totalorder %s33, 3
    %p651 = pnand %p649, %p650
    %p652 = pneg %p651
    // Predicated region
    $region9: #{forward.3} parent=5 // pred_check
      _
    $region10: #{forward.3} parent=5 // pred_check_branch
      %654 = sbr.rel (%p651) target = $region12
    $region11: #{forward.3} parent=5 // pred_region
      %s655 = ssub.s32 %s33, 1
      // Predicated region
      $region13: #{forward.3} parent=11 // pred_check
        %p656 = pneg %p132
      $region14: #{forward.3} parent=11 // pred_check_branch
        %658 = sbr.rel (%p656) target = $region16
      $region15: #{forward.3} parent=11 // pred_region
        _
      $region16: #{forward.3} parent=11 // pred_fallthru
        _
      // Predicated region
      $region17: #{forward.3} parent=11 // pred_check
        %p659 = pneg %p153
      $region18: #{forward.3} parent=11 // pred_check_branch
        %661 = sbr.rel (%p659) target = $region20
      $region19: #{forward.3} parent=11 // pred_region
        _
      $region20: #{forward.3} parent=11 // pred_fallthru
        _
      // Predicated region
      $region21: #{forward.3} parent=11 // pred_check
        %p662 = pneg %p174
      $region22: #{forward.3} parent=11 // pred_check_branch
        %664 = sbr.rel (%p662) target = $region24
      $region23: #{forward.3} parent=11 // pred_region
        _
      $region24: #{forward.3} parent=11 // pred_fallthru
        _
      // Predicated region
      $region25: #{forward.3} parent=11 // pred_check
        %p665 = pneg %p195
      $region26: #{forward.3} parent=11 // pred_check_branch
        %667 = sbr.rel (%p665) target = $region28
      $region27: #{forward.3} parent=11 // pred_region
        _
      $region28: #{forward.3} parent=11 // pred_fallthru
        _
      // Predicated region
      $region29: #{forward.3} parent=11 // pred_check
        %p668 = pneg %p216
      $region30: #{forward.3} parent=11 // pred_check_branch
        %670 = sbr.rel (%p668) target = $region32
      $region31: #{forward.3} parent=11 // pred_region
        _
      $region32: #{forward.3} parent=11 // pred_fallthru
        _
      // Predicated region
      $region33: #{forward.3} parent=11 // pred_check
        %p671 = pneg %p237
      $region34: #{forward.3} parent=11 // pred_check_branch
        %673 = sbr.rel (%p671) target = $region36
      $region35: #{forward.3} parent=11 // pred_region
        _
      $region36: #{forward.3} parent=11 // pred_fallthru
        _
      // Predicated region
      $region37: #{forward.3} parent=11 // pred_check
        %p674 = pneg %p258
      $region38: #{forward.3} parent=11 // pred_check_branch
        %676 = sbr.rel (%p674) target = $region40
      $region39: #{forward.3} parent=11 // pred_region
        _
      $region40: #{forward.3} parent=11 // pred_fallthru
        _
      // Predicated region
      $region41: #{forward.3} parent=11 // pred_check
        %p677 = pneg %p279
      $region42: #{forward.3} parent=11 // pred_check_branch
        %679 = sbr.rel (%p677) target = $region44
      $region43: #{forward.3} parent=11 // pred_region
        _
      $region44: #{forward.3} parent=11 // pred_fallthru
        _
      // Predicated region
      $region45: #{forward.3} parent=11 // pred_check
        %p680 = pneg %p300
      $region46: #{forward.3} parent=11 // pred_check_branch
        %682 = sbr.rel (%p680) target = $region48
      $region47: #{forward.3} parent=11 // pred_region
        _
      $region48: #{forward.3} parent=11 // pred_fallthru
        _
      // Predicated region
      $region49: #{forward.3} parent=11 // pred_check
        %p683 = pneg %p321
      $region50: #{forward.3} parent=11 // pred_check_branch
        %685 = sbr.rel (%p683) target = $region52
      $region51: #{forward.3} parent=11 // pred_region
        _
      $region52: #{forward.3} parent=11 // pred_fallthru
        _
      // Predicated region
      $region53: #{forward.3} parent=11 // pred_check
        %p686 = pneg %p342
      $region54: #{forward.3} parent=11 // pred_check_branch
        %688 = sbr.rel (%p686) target = $region56
      $region55: #{forward.3} parent=11 // pred_region
        _
      $region56: #{forward.3} parent=11 // pred_fallthru
        _
      // Predicated region
      $region57: #{forward.3} parent=11 // pred_check
        %p689 = pneg %p363
      $region58: #{forward.3} parent=11 // pred_check_branch
        %691 = sbr.rel (%p689) target = $region60
      $region59: #{forward.3} parent=11 // pred_region
        _
      $region60: #{forward.3} parent=11 // pred_fallthru
        _
      // Predicated region
      $region61: #{forward.3} parent=11 // pred_check
        %p692 = pneg %p384
      $region62: #{forward.3} parent=11 // pred_check_branch
        %694 = sbr.rel (%p692) target = $region64
      $region63: #{forward.3} parent=11 // pred_region
        _
      $region64: #{forward.3} parent=11 // pred_fallthru
        _
      // Predicated region
      $region65: #{forward.3} parent=11 // pred_check
        %p695 = pneg %p405
      $region66: #{forward.3} parent=11 // pred_check_branch
        %697 = sbr.rel (%p695) target = $region68
      $region67: #{forward.3} parent=11 // pred_region
        _
      $region68: #{forward.3} parent=11 // pred_fallthru
        _
      // Predicated region
      $region69: #{forward.3} parent=11 // pred_check
        %p698 = pneg %p426
      $region70: #{forward.3} parent=11 // pred_check_branch
        %700 = sbr.rel (%p698) target = $region72
      $region71: #{forward.3} parent=11 // pred_region
        _
      $region72: #{forward.3} parent=11 // pred_fallthru
        _
      // Predicated region
      $region73: #{forward.3} parent=11 // pred_check
        %p701 = pneg %p447
      $region74: #{forward.3} parent=11 // pred_check_branch
        %703 = sbr.rel (%p701) target = $region76
      $region75: #{forward.3} parent=11 // pred_region
        _
      $region76: #{forward.3} parent=11 // pred_fallthru
        _
      // Predicated region
      $region77: #{forward.3} parent=11 // pred_check
        %p704 = pneg %p468
      $region78: #{forward.3} parent=11 // pred_check_branch
        %706 = sbr.rel (%p704) target = $region80
      $region79: #{forward.3} parent=11 // pred_region
        _
      $region80: #{forward.3} parent=11 // pred_fallthru
        _
      // Predicated region
      $region81: #{forward.3} parent=11 // pred_check
        %p707 = pneg %p489
      $region82: #{forward.3} parent=11 // pred_check_branch
        %709 = sbr.rel (%p707) target = $region84
      $region83: #{forward.3} parent=11 // pred_region
        _
      $region84: #{forward.3} parent=11 // pred_fallthru
        _
      // Predicated region
      $region85: #{forward.3} parent=11 // pred_check
        %p710 = pneg %p510
      $region86: #{forward.3} parent=11 // pred_check_branch
        %712 = sbr.rel (%p710) target = $region88
      $region87: #{forward.3} parent=11 // pred_region
        _
      $region88: #{forward.3} parent=11 // pred_fallthru
        _
      // Predicated region
      $region89: #{forward.3} parent=11 // pred_check
        %p713 = pneg %p531
      $region90: #{forward.3} parent=11 // pred_check_branch
        %715 = sbr.rel (%p713) target = $region92
      $region91: #{forward.3} parent=11 // pred_region
        _
      $region92: #{forward.3} parent=11 // pred_fallthru
        _
      // Predicated region
      $region93: #{forward.3} parent=11 // pred_check
        %p716 = pneg %p552
      $region94: #{forward.3} parent=11 // pred_check_branch
        %718 = sbr.rel (%p716) target = $region96
      $region95: #{forward.3} parent=11 // pred_region
        _
      $region96: #{forward.3} parent=11 // pred_fallthru
        _
      // Predicated region
      $region97: #{forward.3} parent=11 // pred_check
        %p719 = pneg %p573
      $region98: #{forward.3} parent=11 // pred_check_branch
        %721 = sbr.rel (%p719) target = $region100
      $region99: #{forward.3} parent=11 // pred_region
        _
      $region100: #{forward.3} parent=11 // pred_fallthru
        _
      // Predicated region
      $region101: #{forward.3} parent=11 // pred_check
        %p722 = pneg %p594
      $region102: #{forward.3} parent=11 // pred_check_branch
        %724 = sbr.rel (%p722) target = $region104
      $region103: #{forward.3} parent=11 // pred_region
        _
      $region104: #{forward.3} parent=11 // pred_fallthru
        _
      // Predicated region
      $region105: #{forward.3} parent=11 // pred_check
        %p725 = pneg %p615
      $region106: #{forward.3} parent=11 // pred_check_branch
        %727 = sbr.rel (%p725) target = $region108
      $region107: #{forward.3} parent=11 // pred_region
        _
      $region108: #{forward.3} parent=11 // pred_fallthru
        _
    $region12: #{forward.3} parent=5 // pred_fallthru
      _
    %p728 = scmp.lt.s32.totalorder %s33, 2
    // Predicated region
    $region109: #{forward.3} parent=5 // pred_check
      %p729 = pneg %p728
    $region110: #{forward.3} parent=5 // pred_check_branch
      %731 = sbr.rel (%p729) target = $region112
    $region111: #{forward.3} parent=5 // pred_region
      // Predicated region
      $region113: #{forward.3} parent=111 // pred_check
        %p732 = pneg %p53
      $region114: #{forward.3} parent=111 // pred_check_branch
        %734 = sbr.rel (%p732) target = $region116
      $region115: #{forward.3} parent=111 // pred_region
        %p735 = scmp.lt.s32.totalorder %s33, 1
        %s736 = scalar_select %p735, %s33, 1
        %s737 = smul.addr %s736, 4
        %s738 = smul.addr %s737, 8
        %s739 = scalar_lea.vmem %s0, %s738
      $region116: #{forward.3} parent=111 // pred_fallthru
        _
      // Predicated region
      $region117: #{forward.3} parent=111 // pred_check
        %p740 = pneg %p79
      $region118: #{forward.3} parent=111 // pred_check_branch
        %742 = sbr.rel (%p740) target = $region120
      $region119: #{forward.3} parent=111 // pred_region
        %p743 = scmp.lt.s32.totalorder %s33, 1
        %s744 = scalar_select %p743, %s33, 1
        %s745 = smul.addr %s744, 8
        %s746 = scalar_lea.vmem %s1, %s745
      $region120: #{forward.3} parent=111 // pred_fallthru
        _
      // Predicated region
      $region121: #{forward.3} parent=111 // pred_check
        %p747 = pneg %p105
      $region122: #{forward.3} parent=111 // pred_check_branch
        %749 = sbr.rel (%p747) target = $region124
      $region123: #{forward.3} parent=111 // pred_region
        %p750 = scmp.lt.s32.totalorder %s33, 1
        %s751 = scalar_select %p750, %s33, 1
        %s752 = smul.addr %s751, 8
        %s753 = scalar_lea.vmem %s2, %s752
      $region124: #{forward.3} parent=111 // pred_fallthru
        _
    $region112: #{forward.3} parent=5 // pred_fallthru
      _
    %p754 = scmp.le.s32.totalorder 1, %s33
    %p755 = scmp.lt.s32.totalorder %s33, 3
    %p756 = pnand %p754, %p755
    %p757 = pneg %p756
    // Predicated region
    $region125: #{forward.3} parent=5 // pred_check
      _
    $region126: #{forward.3} parent=5 // pred_check_branch
      %759 = sbr.rel (%p756) target = $region128
    $region127: #{forward.3} parent=5 // pred_region
      %s760 = ssub.s32 %s33, 1
      %p761 = scmp.lt.s32.totalorder %s38, 1
      %s762 = scalar_select %p761, %s38, 1
      %s763 = smul.addr %s762, 4
      %s764 = smul.addr %s763, 8
      %s765 = scalar_lea.vmem %s0, %s764
      %p766 = pneg %p59
      %p767 = pneg %p56
      %p768 = scmp.lt.s32.totalorder %s38, 1
      %s769 = scalar_select %p768, %s38, 1
      %s770 = smul.addr %s769, 8
      %s771 = scalar_lea.vmem %s1, %s770
      %p772 = pneg %p85
      %p773 = pneg %p82
      %p774 = scmp.lt.s32.totalorder %s38, 1
      %s775 = scalar_select %p774, %s38, 1
      %s776 = smul.addr %s775, 8
      %s777 = scalar_lea.vmem %s2, %s776
      %p778 = pneg %p111
      %p779 = pneg %p108
      %p780 = pneg %p132
      %p781 = pneg %p129
      %p782 = pneg %p153
      %p783 = pneg %p150
      %p784 = pneg %p174
      %p785 = pneg %p171
      %p786 = pneg %p195
      %p787 = pneg %p192
      %p788 = pneg %p216
      %p789 = pneg %p213
      %p790 = pneg %p237
      %p791 = pneg %p234
      %p792 = pneg %p258
      %p793 = pneg %p255
      %p794 = pneg %p279
      %p795 = pneg %p276
      %p796 = pneg %p300
      %p797 = pneg %p297
      %p798 = pneg %p321
      %p799 = pneg %p318
      %p800 = pneg %p342
      %p801 = pneg %p339
      %p802 = pneg %p363
      %p803 = pneg %p360
      %p804 = pneg %p384
      %p805 = pneg %p381
      %p806 = pneg %p405
      %p807 = pneg %p402
      %p808 = pneg %p426
      %p809 = pneg %p423
      %p810 = pneg %p447
      %p811 = pneg %p444
      %p812 = pneg %p468
      %p813 = pneg %p465
      %p814 = pneg %p489
      %p815 = pneg %p486
      %p816 = pneg %p510
      %p817 = pneg %p507
      %p818 = pneg %p531
      %p819 = pneg %p528
      %p820 = pneg %p552
      %p821 = pneg %p549
      %p822 = pneg %p573
      %p823 = pneg %p570
      %p824 = pneg %p594
      %p825 = pneg %p591
      %p826 = pneg %p615
      %p827 = pneg %p612
      %p828 = pneg %p641
      %p829 = pneg %p638
      %p830 = scmp.lt.s32.totalorder %s38, 1
      %s831 = scalar_select %p830, %s38, 1
      %s832 = scalar_lea.vmem %s27, %s831
      %p833 = scmp.lt.s32.totalorder %s38, 1
      %s834 = scalar_select %p833, %s38, 1
      %s835 = smul.addr %s834, 4
      %s836 = smul.addr %s835, 8
      %s837 = scalar_lea.vmem %s0, %s836
      %p838 = scmp.lt.s32.totalorder %s38, 1
      %s839 = scalar_select %p838, %s38, 1
      %s840 = smul.addr %s839, 8
      %s841 = scalar_lea.vmem %s1, %s840
      %p842 = scmp.lt.s32.totalorder %s38, 1
      %s843 = scalar_select %p842, %s38, 1
      %s844 = smul.addr %s843, 8
      %s845 = scalar_lea.vmem %s2, %s844
      %p846 = scmp.lt.s32.totalorder %s38, 1
      %s847 = scalar_select %p846, %s38, 1
      %s848 = scalar_lea.vmem %s27, %s847
      %v850 = vld [vmem:[%s837] sm:$0xff]
      %v851 = vld [vmem:[%s837 + $0x8] sm:$0xff]
      %v852 = vld [vmem:[%s837 + $0x10] sm:$0xff]
      %v853 = vld [vmem:[%s837 + $0x18] sm:$0xff]
      %v854 = vpack.c.bf16 %v852, %v850
      %v855 = vpack.c.bf16 %v853, %v851
      %v856 = vld [vmem:[%s3] sm:$0xf]
      %v857 = vld [vmem:[%s3 + $0x4] sm:$0xf]
      %v858 = vld [vmem:[%s3 + $0x8] sm:$0xf]
      %v859 = vld [vmem:[%s3 + $0xc] sm:$0xf]
      %v860 = vld [vmem:[%s3 + $0x10] sm:$0xf]
      %v861 = vld [vmem:[%s3 + $0x14] sm:$0xf]
      %v862 = vld [vmem:[%s3 + $0x18] sm:$0xf]
      %v863 = vld [vmem:[%s3 + $0x1c] sm:$0xf]
      %v864 = vld [vmem:[%s3 + $0x20] sm:$0xf]
      %v865 = vld [vmem:[%s3 + $0x24] sm:$0xf]
      %v866 = vld [vmem:[%s3 + $0x28] sm:$0xf]
      %v867 = vld [vmem:[%s3 + $0x2c] sm:$0xf]
      %v868 = vld [vmem:[%s3 + $0x30] sm:$0xf]
      %v869 = vld [vmem:[%s3 + $0x34] sm:$0xf]
      %v870 = vld [vmem:[%s3 + $0x38] sm:$0xf]
      %v871 = vld [vmem:[%s3 + $0x3c] sm:$0xf]
      %v872 = vld [vmem:[%s3 + $0x40] sm:$0xf]
      %v873 = vld [vmem:[%s3 + $0x44] sm:$0xf]
      %v874 = vld [vmem:[%s3 + $0x48] sm:$0xf]
      %v875 = vld [vmem:[%s3 + $0x4c] sm:$0xf]
      %v876 = vld [vmem:[%s3 + $0x50] sm:$0xf]
      %v877 = vld [vmem:[%s3 + $0x54] sm:$0xf]
      %v878 = vld [vmem:[%s3 + $0x58] sm:$0xf]
      %v879 = vld [vmem:[%s3 + $0x5c] sm:$0xf]
      %v880 = vld [vmem:[%s4] sm:$0x1]
      %v882 = vperm.slane %v880, 0
      %v908 = vunpack.c.l.b16 %v856
      %v909 = vunpack.c.l.b16 %v857
      %v910 = vunpack.c.l.b16 %v858
      %v911 = vunpack.c.l.b16 %v859
      %v912 = vunpack.c.l.b16 %v860
      %v913 = vunpack.c.l.b16 %v861
      %v914 = vunpack.c.l.b16 %v862
      %v915 = vunpack.c.l.b16 %v863
      %v916 = vunpack.c.l.b16 %v864
      %v917 = vunpack.c.l.b16 %v865
      %v918 = vunpack.c.l.b16 %v866
      %v919 = vunpack.c.l.b16 %v867
      %v920 = vunpack.c.l.b16 %v868
      %v921 = vunpack.c.l.b16 %v869
      %v922 = vunpack.c.l.b16 %v870
      %v923 = vunpack.c.l.b16 %v871
      %v924 = vunpack.c.l.b16 %v872
      %v925 = vunpack.c.l.b16 %v873
      %v926 = vunpack.c.l.b16 %v874
      %v927 = vunpack.c.l.b16 %v875
      %v928 = vunpack.c.l.b16 %v876
      %v929 = vunpack.c.l.b16 %v877
      %v930 = vunpack.c.l.b16 %v878
      %v931 = vunpack.c.l.b16 %v879
      %v932 = vpack.c.b16 %v909, %v908
      %v933 = vpack.c.b16 %v911, %v910
      %v934 = vpack.c.b16 %v913, %v912
      %v935 = vpack.c.b16 %v915, %v914
      %v936 = vpack.c.b16 %v917, %v916
      %v937 = vpack.c.b16 %v919, %v918
      %v938 = vpack.c.b16 %v921, %v920
      %v939 = vpack.c.b16 %v923, %v922
      %v940 = vpack.c.b16 %v925, %v924
      %v941 = vpack.c.b16 %v927, %v926
      %v942 = vpack.c.b16 %v929, %v928
      %v943 = vpack.c.b16 %v931, %v930
      %vm956 = vcmask 523264
      %v958 = vsel %vm956, %v855, 0
      %960 = vmatpush.bf16.msra.mxu0 %v939
      %961 = vmatpush.bf16.msra.mxu0 %v938
      %962 = vmatpush.bf16.msra.mxu0 %v937
      %963 = vmatpush.bf16.msra.mxu0 %v936
      %964 = vmatpush.bf16.msra.mxu0 %v935
      %965 = vmatpush.bf16.msra.mxu0 %v934
      %966 = vmatpush.bf16.msra.mxu0 %v933
      %967 = vmatpush.bf16.msra.mxu0 %v932
      %968 = vmatmul.bf16.gmra.mxu0 %v854
      %v969 = vpop.f32.mrf.mxu0
      %v970 = vadd.f32 %v882, %v969
      %v971 = vpop.f32.mrf.mxu0
      %v972 = vadd.f32 %v882, %v971
      %973 = vdwg.mxu0
      %974 = vmatpush.bf16.msra.mxu0 0
      %975 = vmatpush.bf16.msra.mxu0 0
      %976 = vmatpush.bf16.msra.mxu0 0
      %977 = vmatpush.bf16.msra.mxu0 0
      %978 = vmatpush.bf16.msra.mxu0 %v943
      %979 = vmatpush.bf16.msra.mxu0 %v942
      %980 = vmatpush.bf16.msra.mxu0 %v941
      %981 = vmatpush.bf16.msra.mxu0 %v940
      %982 = vmatmul.bf16.gmra.mxu0 %v958
      %v983 = vpop.f32.mrf.mxu0
      %v984 = vadd.f32 %v970, %v983
      %v985 = vpop.f32.mrf.mxu0
      %v986 = vadd.f32 %v972, %v985
      %987 = vdwg.mxu0
      %v988 = vld [vmem:[%s841] sm:$0x1f]
      %v989 = vld [vmem:[%s845] sm:$0x1f]
      %v990 = vlaneseq
      %v991 = vand.u32 %v990, 127
      %992 = vset.pattern.permute.xlu0 0
      %993 = vperm.xlu0 %992, %v988
      %v994 = vpop.permute.xlu0 %993
      %vm995 = vcmp.eq.s32.totalorder %v994, %v991
      %v996 = vsel %vm995, 1, 0
      %v997 = vcvt.s32.f32 %v996
      %998 = vset.pattern.permute.xlu0 0
      %999 = vperm.xlu0 %998, %v989
      %v1000 = vpop.permute.xlu0 %999
      %vm1001 = vcmp.eq.s32.totalorder %v1000, %v991
      %v1002 = vsel %vm1001, 1, 0
      %v1003 = vcvt.s32.f32 %v1002
      %v1004 = vld [vmem:[%s5] sm:$0xff]
      %v1005 = vld [vmem:[%s5 + $0x8] sm:$0xff]
      %v1006 = vld [vmem:[%s5 + $0x10] sm:$0x3]
      %vm1007 = vcmask 146432
      %v1009 = vsel %vm1007, %v1003, 0
      %vm1011 = vcmask 1041408
      %v1013 = vsel %vm1011, %v1006, 0
      %1015 = vmatpush.msra.mxu0 0.0
      %1016 = vmatpush.msra.mxu0 0.0
      %1017 = vmatpush.msra.mxu0 0.0
      %1018 = vmatpush.msra.mxu0 0.0
      %1019 = vmatpush.msra.mxu0 0.0
      %1020 = vmatpush.msra.mxu0 0.0
      %1021 = vmatpush.msra.mxu0 0.0
      %1022 = vmatpush.msra.mxu0 0.0
      %1023 = vmatpush.msra.mxu0 0.0
      %1024 = vmatpush.msra.mxu0 0.0
      %1025 = vmatpush.msra.mxu0 0.0
      %1026 = vmatpush.msra.mxu0 0.0
      %1027 = vmatpush.msra.mxu0 0.0
      %1028 = vmatpush.msra.mxu0 %v1013
      %1029 = vmatpush.msra.mxu0 %v1005
      %1030 = vmatpush.msra.mxu0 %v1004
      %1031 = vmatmul.f32.gmra.mxu0 %v1009
      %v1032 = vpop.f32.mrf.mxu0
      %v1033 = vadd.f32 0.0, %v1032
      %1034 = vdwg.mxu0
      %vm1035 = vcmask 130048
      %v1037 = vsel %vm1035, %v997, 0
      %1039 = vmatpush.msra.mxu0 0.0
      %1040 = vmatpush.msra.mxu0 0.0
      %1041 = vmatpush.msra.mxu0 0.0
      %1042 = vmatpush.msra.mxu0 0.0
      %1043 = vmatpush.msra.mxu0 0.0
      %1044 = vmatpush.msra.mxu0 0.0
      %1045 = vmatpush.msra.mxu0 0.0
      %1046 = vmatpush.msra.mxu0 0.0
      %1047 = vmatpush.msra.mxu0 0.0
      %1048 = vmatpush.msra.mxu0 0.0
      %1049 = vmatpush.msra.mxu0 0.0
      %1050 = vmatpush.msra.mxu0 0.0
      %1051 = vmatpush.msra.mxu0 0.0
      %1052 = vmatpush.msra.mxu0 0.0
      %1053 = vmatpush.msra.mxu0 %v986
      %1054 = vmatpush.msra.mxu0 %v984
      %1055 = vmatmul.f32.gmra.mxu0 %v1037
      %v1056 = vpop.f32.mrf.mxu0
      %v1057 = vadd.f32 %v1033, %v1056
      %1058 = vdwg.mxu0
      %v1059 = vld [vmem:[%s6] sm:$0x1]
      %s1060 = scalar_lea.vmem %s6, 1
      %v1061 = vld [vmem:[%s1060] sm:$0x1]
      %s1062 = scalar_lea.vmem %s6, 2
      %v1063 = vld [vmem:[%s1062] sm:$0x1]
      %s1064 = scalar_lea.vmem %s6, 3
      %v1065 = vld [vmem:[%s1064] sm:$0x1]
      %s1066 = scalar_lea.vmem %s6, 4
      %v1067 = vld [vmem:[%s1066] sm:$0x1]
      %s1068 = scalar_lea.vmem %s6, 5
      %v1069 = vld [vmem:[%s1068] sm:$0x1]
      %vm1070 = vcmask 520192
      %v1071 = vsel %vm1070, %v1057, 0.0
      %1072 = vadd.xlane.f32.xlu0 %v1071
      %v1073 = vpop.xlane.xlu0 %1072
      %v1074 = vrcp.pop 64.0
      %v1075 = vmul.f32 64.0, %v1074
      %v1076 = vsub.f32 1.0, %v1075
      %v1077 = vmul.f32 %v1074, %v1076
      %v1078 = vadd.f32 %v1074, %v1077
      %vm1079 = vweird.f32 %v1074
      %v1080 = vsel %vm1079, %v1074, %v1078
      %v1081 = vmul.f32 %v1073, %v1080
      %v1082 = vsub.f32 %v1057, %v1081
      %v1083 = vmul.f32 %v1082, %v1082
      %v1084 = vsel %vm1070, %v1083, 0.0
      %1085 = vadd.xlane.f32.xlu0 %v1084
      %v1086 = vpop.xlane.xlu0 %1085
      %v1087 = vmul.f32 %v1086, %v1080
      %v1088 = vadd.f32 %v1087, 1e-05
      %v1089 = vrsqrt.pop %v1088
      %v1090 = vmul.f32 %v1089, %v1088
      %v1091 = vmul.f32 %v1090, %v1089
      %v1092 = vmul.f32 0.5, %v1091
      %v1093 = vsub.f32 1.5, %v1092
      %v1094 = vmul.f32 %v1089, %v1093
      %vm1095 = vweird.f32 %v1088
      %vm1096 = vweird.f32 %v1089
      %vm1097 = vmor %vm1095, %vm1096
      %v1098 = vsel %vm1097, %v1089, %v1094
      %v1099 = vmul.f32 %v1082, %v1098
      %v1101 = vperm.slane %v1059, 0
      %v1103 = vmul.f32 %v1099, %v1101
      %v1105 = vperm.slane %v1061, 0
      %v1107 = vadd.f32 %v1103, %v1105
      %v1108 = vpack.c.bf16 %v1107, %v1107
      %v1109 = vld [vmem:[%s7] sm:$0xf]
      %v1110 = vld [vmem:[%s7 + $0x4] sm:$0xf]
      %v1111 = vld [vmem:[%s7 + $0x8] sm:$0xf]
      %v1112 = vld [vmem:[%s7 + $0xc] sm:$0xf]
      %v1113 = vld [vmem:[%s7 + $0x10] sm:$0xf]
      %v1114 = vld [vmem:[%s7 + $0x14] sm:$0xf]
      %v1115 = vld [vmem:[%s7 + $0x18] sm:$0xf]
      %v1116 = vld [vmem:[%s7 + $0x1c] sm:$0xf]
      %v1117 = vld [vmem:[%s8] sm:$0x1]
      %v1119 = vperm.slane %v1117, 0
      %v1129 = vunpack.c.l.b16 %v1109
      %v1130 = vunpack.c.l.b16 %v1110
      %v1131 = vunpack.c.l.b16 %v1111
      %v1132 = vunpack.c.l.b16 %v1112
      %v1133 = vunpack.c.l.b16 %v1113
      %v1134 = vunpack.c.l.b16 %v1114
      %v1135 = vunpack.c.l.b16 %v1115
      %v1136 = vunpack.c.l.b16 %v1116
      %v1137 = vpack.c.b16 %v1130, %v1129
      %v1138 = vpack.c.b16 %v1132, %v1131
      %v1139 = vpack.c.b16 %v1134, %v1133
      %v1140 = vpack.c.b16 %v1136, %v1135
      %v1146 = vsel %vm956, %v1108, 0
      %1148 = vmatpush.bf16.msra.mxu0 0
      %1149 = vmatpush.bf16.msra.mxu0 0
      %1150 = vmatpush.bf16.msra.mxu0 0
      %1151 = vmatpush.bf16.msra.mxu0 0
      %1152 = vmatpush.bf16.msra.mxu0 %v1140
      %1153 = vmatpush.bf16.msra.mxu0 %v1139
      %1154 = vmatpush.bf16.msra.mxu0 %v1138
      %1155 = vmatpush.bf16.msra.mxu0 %v1137
      %1156 = vmatmul.bf16.gmra.mxu0 %v1146
      %v1157 = vpop.f32.mrf.mxu0
      %v1158 = vadd.f32 %v1119, %v1157
      %v1159 = vpop.f32.mrf.mxu0
      %1160 = vdwg.mxu0
      %s1161 = scalar_lea.vmem %s7, 128
      %v1162 = vld [vmem:[%s1161] sm:$0xf]
      %v1163 = vld [vmem:[%s1161 + $0x4] sm:$0xf]
      %v1164 = vld [vmem:[%s1161 + $0x8] sm:$0xf]
      %v1165 = vld [vmem:[%s1161 + $0xc] sm:$0xf]
      %v1166 = vld [vmem:[%s1161 + $0x10] sm:$0xf]
      %v1167 = vld [vmem:[%s1161 + $0x14] sm:$0xf]
      %v1168 = vld [vmem:[%s1161 + $0x18] sm:$0xf]
      %v1169 = vld [vmem:[%s1161 + $0x1c] sm:$0xf]
      %s1170 = scalar_lea.vmem %s8, 4
      %v1171 = vld [vmem:[%s1170] sm:$0x1]
      %v1173 = vperm.slane %v1171, 0
      %v1183 = vunpack.c.l.b16 %v1162
      %v1184 = vunpack.c.l.b16 %v1163
      %v1185 = vunpack.c.l.b16 %v1164
      %v1186 = vunpack.c.l.b16 %v1165
      %v1187 = vunpack.c.l.b16 %v1166
      %v1188 = vunpack.c.l.b16 %v1167
      %v1189 = vunpack.c.l.b16 %v1168
      %v1190 = vunpack.c.l.b16 %v1169
      %v1191 = vpack.c.b16 %v1184, %v1183
      %v1192 = vpack.c.b16 %v1186, %v1185
      %v1193 = vpack.c.b16 %v1188, %v1187
      %v1194 = vpack.c.b16 %v1190, %v1189
      %1199 = vmatpush.bf16.msra.mxu0 0
      %1200 = vmatpush.bf16.msra.mxu0 0
      %1201 = vmatpush.bf16.msra.mxu0 0
      %1202 = vmatpush.bf16.msra.mxu0 0
      %1203 = vmatpush.bf16.msra.mxu0 %v1194
      %1204 = vmatpush.bf16.msra.mxu0 %v1193
      %1205 = vmatpush.bf16.msra.mxu0 %v1192
      %1206 = vmatpush.bf16.msra.mxu0 %v1191
      %1207 = vmatmul.bf16.gmra.mxu0 %v1146
      %v1208 = vpop.f32.mrf.mxu0
      %v1209 = vadd.f32 %v1173, %v1208
      %v1210 = vpop.f32.mrf.mxu0
      %1211 = vdwg.mxu0
      %s1212 = scalar_lea.vmem %s7, 256
      %v1213 = vld [vmem:[%s1212] sm:$0xf]
      %v1214 = vld [vmem:[%s1212 + $0x4] sm:$0xf]
      %v1215 = vld [vmem:[%s1212 + $0x8] sm:$0xf]
      %v1216 = vld [vmem:[%s1212 + $0xc] sm:$0xf]
      %v1217 = vld [vmem:[%s1212 + $0x10] sm:$0xf]
      %v1218 = vld [vmem:[%s1212 + $0x14] sm:$0xf]
      %v1219 = vld [vmem:[%s1212 + $0x18] sm:$0xf]
      %v1220 = vld [vmem:[%s1212 + $0x1c] sm:$0xf]
      %s1221 = scalar_lea.vmem %s8, 8
      %v1222 = vld [vmem:[%s1221] sm:$0x1]
      %v1224 = vperm.slane %v1222, 0
      %v1234 = vunpack.c.l.b16 %v1213
      %v1235 = vunpack.c.l.b16 %v1214
      %v1236 = vunpack.c.l.b16 %v1215
      %v1237 = vunpack.c.l.b16 %v1216
      %v1238 = vunpack.c.l.b16 %v1217
      %v1239 = vunpack.c.l.b16 %v1218
      %v1240 = vunpack.c.l.b16 %v1219
      %v1241 = vunpack.c.l.b16 %v1220
      %v1242 = vpack.c.b16 %v1235, %v1234
      %v1243 = vpack.c.b16 %v1237, %v1236
      %v1244 = vpack.c.b16 %v1239, %v1238
      %v1245 = vpack.c.b16 %v1241, %v1240
      %1250 = vmatpush.bf16.msra.mxu0 0
      %1251 = vmatpush.bf16.msra.mxu0 0
      %1252 = vmatpush.bf16.msra.mxu0 0
      %1253 = vmatpush.bf16.msra.mxu0 0
      %1254 = vmatpush.bf16.msra.mxu0 %v1245
      %1255 = vmatpush.bf16.msra.mxu0 %v1244
      %1256 = vmatpush.bf16.msra.mxu0 %v1243
      %1257 = vmatpush.bf16.msra.mxu0 %v1242
      %1258 = vmatmul.bf16.gmra.mxu0 %v1146
      %v1259 = vpop.f32.mrf.mxu0
      %v1260 = vadd.f32 %v1224, %v1259
      %v1261 = vpop.f32.mrf.mxu0
      %1262 = vdwg.mxu0
      %v1264 = vsel %vm1035, %v1158, 0
      %v1267 = vsel %vm1035, %v1209, 0
      %1269 = vmatpush.xpose.msra.mxu0 0.0
      %1270 = vmatpush.xpose.msra.mxu0 0.0
      %1271 = vmatpush.xpose.msra.mxu0 0.0
      %1272 = vmatpush.xpose.msra.mxu0 0.0
      %1273 = vmatpush.xpose.msra.mxu0 0.0
      %1274 = vmatpush.xpose.msra.mxu0 0.0
      %1275 = vmatpush.xpose.msra.mxu0 0.0
      %1276 = vmatpush.xpose.msra.mxu0 0.0
      %1277 = vmatpush.xpose.msra.mxu0 0.0
      %1278 = vmatpush.xpose.msra.mxu0 0.0
      %1279 = vmatpush.xpose.msra.mxu0 0.0
      %1280 = vmatpush.xpose.msra.mxu0 0.0
      %1281 = vmatpush.xpose.msra.mxu0 0.0
      %1282 = vmatpush.xpose.msra.mxu0 0.0
      %1283 = vmatpush.xpose.msra.mxu0 0.0
      %1284 = vmatpush.xpose.msra.mxu0 %v1267
      %1285 = vmatmul.f32.gmra.mxu0 %v1264
      %v1286 = vpop.f32.mrf.mxu0
      %v1287 = vadd.f32 0.0, %v1286
      %1288 = vdwg.mxu0
      %v1289 = vmul.f32 %v1287, 0.25
      %vm1290 = vcmask 36864
      %v1291 = vsel %vm1290, %v1289, -inf
      %1292 = vmax.xlane.f32.xlu0 %v1291
      %v1293 = vpop.xlane.xlu0 %1292
      %v1294 = vsub.f32 %v1289, %v1293
      %v1295 = vmul.f32 %v1294, 1.442695
      %v1296 = vpow.pop %v1295
      %v1297 = vsel %vm1290, %v1296, 0.0
      %1298 = vadd.xlane.f32.xlu0 %v1297
      %v1299 = vpop.xlane.xlu0 %1298
      %v1300 = vrcp.pop %v1299
      %v1301 = vmul.f32 %v1296, %v1300
      %v1302 = vpack.c.bf16 %v1301, %v1301
      %v1303 = vpack.c.bf16 %v1260, %v1260
      %vm1304 = vcmask 39936
      %v1306 = vsel %vm1304, %v1302, 0
      %vm1308 = vcmask 1042432
      %v1309 = vsel %vm1011, 4294967295, 65535
      %v1310 = vsel %vm1308, %v1309, 0
      %v1312 = vand.u32 %v1303, %v1310
      %1314 = vmatpush.bf16.msra.mxu0 0
      %1315 = vmatpush.bf16.msra.mxu0 0
      %1316 = vmatpush.bf16.msra.mxu0 0
      %1317 = vmatpush.bf16.msra.mxu0 0
      %1318 = vmatpush.bf16.msra.mxu0 0
      %1319 = vmatpush.bf16.msra.mxu0 0
      %1320 = vmatpush.bf16.msra.mxu0 0
      %1321 = vmatpush.bf16.msra.mxu0 %v1312
      %1322 = vmatmul.bf16.gmra.mxu0 %v1306
      %v1323 = vpop.f32.mrf.mxu0
      %v1324 = vadd.f32 0.0, %v1323
      %v1325 = vpop.f32.mrf.mxu0
      %1326 = vdwg.mxu0
      %v1327 = vpack.c.bf16 %v1324, %v1324
      %v1328 = vld [vmem:[%s9] sm:$0xf]
      %v1329 = vld [vmem:[%s9 + $0x4] sm:$0xf]
      %s1330 = scalar_lea.vmem %s7, 32
      %v1331 = vld [vmem:[%s1330] sm:$0xf]
      %v1332 = vld [vmem:[%s1330 + $0x4] sm:$0xf]
      %v1333 = vld [vmem:[%s1330 + $0x8] sm:$0xf]
      %v1334 = vld [vmem:[%s1330 + $0xc] sm:$0xf]
      %v1335 = vld [vmem:[%s1330 + $0x10] sm:$0xf]
      %v1336 = vld [vmem:[%s1330 + $0x14] sm:$0xf]
      %v1337 = vld [vmem:[%s1330 + $0x18] sm:$0xf]
      %v1338 = vld [vmem:[%s1330 + $0x1c] sm:$0xf]
      %s1339 = scalar_lea.vmem %s8, 1
      %v1340 = vld [vmem:[%s1339] sm:$0x1]
      %v1342 = vperm.slane %v1340, 0
      %v1352 = vunpack.c.l.b16 %v1331
      %v1353 = vunpack.c.l.b16 %v1332
      %v1354 = vunpack.c.l.b16 %v1333
      %v1355 = vunpack.c.l.b16 %v1334
      %v1356 = vunpack.c.l.b16 %v1335
      %v1357 = vunpack.c.l.b16 %v1336
      %v1358 = vunpack.c.l.b16 %v1337
      %v1359 = vunpack.c.l.b16 %v1338
      %v1360 = vpack.c.b16 %v1353, %v1352
      %v1361 = vpack.c.b16 %v1355, %v1354
      %v1362 = vpack.c.b16 %v1357, %v1356
      %v1363 = vpack.c.b16 %v1359, %v1358
      %1368 = vmatpush.bf16.msra.mxu0 0
      %1369 = vmatpush.bf16.msra.mxu0 0
      %1370 = vmatpush.bf16.msra.mxu0 0
      %1371 = vmatpush.bf16.msra.mxu0 0
      %1372 = vmatpush.bf16.msra.mxu0 %v1363
      %1373 = vmatpush.bf16.msra.mxu0 %v1362
      %1374 = vmatpush.bf16.msra.mxu0 %v1361
      %1375 = vmatpush.bf16.msra.mxu0 %v1360
      %1376 = vmatmul.bf16.gmra.mxu0 %v1146
      %v1377 = vpop.f32.mrf.mxu0
      %v1378 = vadd.f32 %v1342, %v1377
      %v1379 = vpop.f32.mrf.mxu0
      %1380 = vdwg.mxu0
      %s1381 = scalar_lea.vmem %s7, 160
      %v1382 = vld [vmem:[%s1381] sm:$0xf]
      %v1383 = vld [vmem:[%s1381 + $0x4] sm:$0xf]
      %v1384 = vld [vmem:[%s1381 + $0x8] sm:$0xf]
      %v1385 = vld [vmem:[%s1381 + $0xc] sm:$0xf]
      %v1386 = vld [vmem:[%s1381 + $0x10] sm:$0xf]
      %v1387 = vld [vmem:[%s1381 + $0x14] sm:$0xf]
      %v1388 = vld [vmem:[%s1381 + $0x18] sm:$0xf]
      %v1389 = vld [vmem:[%s1381 + $0x1c] sm:$0xf]
      %s1390 = scalar_lea.vmem %s8, 5
      %v1391 = vld [vmem:[%s1390] sm:$0x1]
      %v1393 = vperm.slane %v1391, 0
      %v1403 = vunpack.c.l.b16 %v1382
      %v1404 = vunpack.c.l.b16 %v1383
      %v1405 = vunpack.c.l.b16 %v1384
      %v1406 = vunpack.c.l.b16 %v1385
      %v1407 = vunpack.c.l.b16 %v1386
      %v1408 = vunpack.c.l.b16 %v1387
      %v1409 = vunpack.c.l.b16 %v1388
      %v1410 = vunpack.c.l.b16 %v1389
      %v1411 = vpack.c.b16 %v1404, %v1403
      %v1412 = vpack.c.b16 %v1406, %v1405
      %v1413 = vpack.c.b16 %v1408, %v1407
      %v1414 = vpack.c.b16 %v1410, %v1409
      %1419 = vmatpush.bf16.msra.mxu0 0
      %1420 = vmatpush.bf16.msra.mxu0 0
      %1421 = vmatpush.bf16.msra.mxu0 0
      %1422 = vmatpush.bf16.msra.mxu0 0
      %1423 = vmatpush.bf16.msra.mxu0 %v1414
      %1424 = vmatpush.bf16.msra.mxu0 %v1413
      %1425 = vmatpush.bf16.msra.mxu0 %v1412
      %1426 = vmatpush.bf16.msra.mxu0 %v1411
      %1427 = vmatmul.bf16.gmra.mxu0 %v1146
      %v1428 = vpop.f32.mrf.mxu0
      %v1429 = vadd.f32 %v1393, %v1428
      %v1430 = vpop.f32.mrf.mxu0
      %1431 = vdwg.mxu0
      %s1432 = scalar_lea.vmem %s7, 288
      %v1433 = vld [vmem:[%s1432] sm:$0xf]
      %v1434 = vld [vmem:[%s1432 + $0x4] sm:$0xf]
      %v1435 = vld [vmem:[%s1432 + $0x8] sm:$0xf]
      %v1436 = vld [vmem:[%s1432 + $0xc] sm:$0xf]
      %v1437 = vld [vmem:[%s1432 + $0x10] sm:$0xf]
      %v1438 = vld [vmem:[%s1432 + $0x14] sm:$0xf]
      %v1439 = vld [vmem:[%s1432 + $0x18] sm:$0xf]
      %v1440 = vld [vmem:[%s1432 + $0x1c] sm:$0xf]
      %s1441 = scalar_lea.vmem %s8, 9
      %v1442 = vld [vmem:[%s1441] sm:$0x1]
      %v1444 = vperm.slane %v1442, 0
      %v1454 = vunpack.c.l.b16 %v1433
      %v1455 = vunpack.c.l.b16 %v1434
      %v1456 = vunpack.c.l.b16 %v1435
      %v1457 = vunpack.c.l.b16 %v1436
      %v1458 = vunpack.c.l.b16 %v1437
      %v1459 = vunpack.c.l.b16 %v1438
      %v1460 = vunpack.c.l.b16 %v1439
      %v1461 = vunpack.c.l.b16 %v1440
      %v1462 = vpack.c.b16 %v1455, %v1454
      %v1463 = vpack.c.b16 %v1457, %v1456
      %v1464 = vpack.c.b16 %v1459, %v1458
      %v1465 = vpack.c.b16 %v1461, %v1460
      %1470 = vmatpush.bf16.msra.mxu0 0
      %1471 = vmatpush.bf16.msra.mxu0 0
      %1472 = vmatpush.bf16.msra.mxu0 0
      %1473 = vmatpush.bf16.msra.mxu0 0
      %1474 = vmatpush.bf16.msra.mxu0 %v1465
      %1475 = vmatpush.bf16.msra.mxu0 %v1464
      %1476 = vmatpush.bf16.msra.mxu0 %v1463
      %1477 = vmatpush.bf16.msra.mxu0 %v1462
      %1478 = vmatmul.bf16.gmra.mxu0 %v1146
      %v1479 = vpop.f32.mrf.mxu0
      %v1480 = vadd.f32 %v1444, %v1479
      %v1481 = vpop.f32.mrf.mxu0
      %1482 = vdwg.mxu0
      %v1484 = vsel %vm1035, %v1378, 0
      %v1487 = vsel %vm1035, %v1429, 0
      %1489 = vmatpush.xpose.msra.mxu0 0.0
      %1490 = vmatpush.xpose.msra.mxu0 0.0
      %1491 = vmatpush.xpose.msra.mxu0 0.0
      %1492 = vmatpush.xpose.msra.mxu0 0.0
      %1493 = vmatpush.xpose.msra.mxu0 0.0
      %1494 = vmatpush.xpose.msra.mxu0 0.0
      %1495 = vmatpush.xpose.msra.mxu0 0.0
      %1496 = vmatpush.xpose.msra.mxu0 0.0
      %1497 = vmatpush.xpose.msra.mxu0 0.0
      %1498 = vmatpush.xpose.msra.mxu0 0.0
      %1499 = vmatpush.xpose.msra.mxu0 0.0
      %1500 = vmatpush.xpose.msra.mxu0 0.0
      %1501 = vmatpush.xpose.msra.mxu0 0.0
      %1502 = vmatpush.xpose.msra.mxu0 0.0
      %1503 = vmatpush.xpose.msra.mxu0 0.0
      %1504 = vmatpush.xpose.msra.mxu0 %v1487
      %1505 = vmatmul.f32.gmra.mxu0 %v1484
      %v1506 = vpop.f32.mrf.mxu0
      %v1507 = vadd.f32 0.0, %v1506
      %1508 = vdwg.mxu0
      %v1509 = vmul.f32 %v1507, 0.25
      %v1510 = vsel %vm1290, %v1509, -inf
      %1511 = vmax.xlane.f32.xlu0 %v1510
      %v1512 = vpop.xlane.xlu0 %1511
      %v1513 = vsub.f32 %v1509, %v1512
      %v1514 = vmul.f32 %v1513, 1.442695
      %v1515 = vpow.pop %v1514
      %v1516 = vsel %vm1290, %v1515, 0.0
      %1517 = vadd.xlane.f32.xlu0 %v1516
      %v1518 = vpop.xlane.xlu0 %1517
      %v1519 = vrcp.pop %v1518
      %v1520 = vmul.f32 %v1515, %v1519
      %v1521 = vpack.c.bf16 %v1520, %v1520
      %v1522 = vpack.c.bf16 %v1480, %v1480
      %v1524 = vsel %vm1304, %v1521, 0
      %v1527 = vand.u32 %v1522, %v1310
      %1529 = vmatpush.bf16.msra.mxu0 0
      %1530 = vmatpush.bf16.msra.mxu0 0
      %1531 = vmatpush.bf16.msra.mxu0 0
      %1532 = vmatpush.bf16.msra.mxu0 0
      %1533 = vmatpush.bf16.msra.mxu0 0
      %1534 = vmatpush.bf16.msra.mxu0 0
      %1535 = vmatpush.bf16.msra.mxu0 0
      %1536 = vmatpush.bf16.msra.mxu0 %v1527
      %1537 = vmatmul.bf16.gmra.mxu0 %v1524
      %v1538 = vpop.f32.mrf.mxu0
      %v1539 = vadd.f32 0.0, %v1538
      %v1540 = vpop.f32.mrf.mxu0
      %1541 = vdwg.mxu0
      %v1542 = vpack.c.bf16 %v1539, %v1539
      %s1543 = scalar_lea.vmem %s9, 8
      %v1544 = vld [vmem:[%s1543] sm:$0xf]
      %v1545 = vld [vmem:[%s1543 + $0x4] sm:$0xf]
      %v1548 = vunpack.c.l.b16 %v1544
      %v1549 = vunpack.c.l.b16 %v1545
      %v1550 = vpack.c.b16 %v1549, %v1548
      %v1553 = vsel %vm1035, %v1542, 0
      %1555 = vmatpush.bf16.msra.mxu0 0
      %1556 = vmatpush.bf16.msra.mxu0 0
      %1557 = vmatpush.bf16.msra.mxu0 0
      %1558 = vmatpush.bf16.msra.mxu0 0
      %1559 = vmatpush.bf16.msra.mxu0 0
      %1560 = vmatpush.bf16.msra.mxu0 0
      %1561 = vmatpush.bf16.msra.mxu0 0
      %1562 = vmatpush.bf16.msra.mxu0 %v1550
      %1563 = vmatmul.bf16.gmra.mxu0 %v1553
      %v1564 = vpop.f32.mrf.mxu0
      %v1565 = vadd.f32 0.0, %v1564
      %v1566 = vpop.f32.mrf.mxu0
      %1567 = vdwg.mxu0
      %v1570 = vunpack.c.l.b16 %v1328
      %v1571 = vunpack.c.l.b16 %v1329
      %v1572 = vpack.c.b16 %v1571, %v1570
      %v1575 = vsel %vm1035, %v1327, 0
      %1577 = vmatpush.bf16.msra.mxu0 0
      %1578 = vmatpush.bf16.msra.mxu0 0
      %1579 = vmatpush.bf16.msra.mxu0 0
      %1580 = vmatpush.bf16.msra.mxu0 0
      %1581 = vmatpush.bf16.msra.mxu0 0
      %1582 = vmatpush.bf16.msra.mxu0 0
      %1583 = vmatpush.bf16.msra.mxu0 0
      %1584 = vmatpush.bf16.msra.mxu0 %v1572
      %1585 = vmatmul.bf16.gmra.mxu0 %v1575
      %v1586 = vpop.f32.mrf.mxu0
      %v1587 = vadd.f32 %v1565, %v1586
      %v1588 = vpop.f32.mrf.mxu0
      %1589 = vdwg.mxu0
      %s1590 = scalar_lea.vmem %s7, 64
      %v1591 = vld [vmem:[%s1590] sm:$0xf]
      %v1592 = vld [vmem:[%s1590 + $0x4] sm:$0xf]
      %v1593 = vld [vmem:[%s1590 + $0x8] sm:$0xf]
      %v1594 = vld [vmem:[%s1590 + $0xc] sm:$0xf]
      %v1595 = vld [vmem:[%s1590 + $0x10] sm:$0xf]
      %v1596 = vld [vmem:[%s1590 + $0x14] sm:$0xf]
      %v1597 = vld [vmem:[%s1590 + $0x18] sm:$0xf]
      %v1598 = vld [vmem:[%s1590 + $0x1c] sm:$0xf]
      %s1599 = scalar_lea.vmem %s8, 2
      %v1600 = vld [vmem:[%s1599] sm:$0x1]
      %v1602 = vperm.slane %v1600, 0
      %v1612 = vunpack.c.l.b16 %v1591
      %v1613 = vunpack.c.l.b16 %v1592
      %v1614 = vunpack.c.l.b16 %v1593
      %v1615 = vunpack.c.l.b16 %v1594
      %v1616 = vunpack.c.l.b16 %v1595
      %v1617 = vunpack.c.l.b16 %v1596
      %v1618 = vunpack.c.l.b16 %v1597
      %v1619 = vunpack.c.l.b16 %v1598
      %v1620 = vpack.c.b16 %v1613, %v1612
      %v1621 = vpack.c.b16 %v1615, %v1614
      %v1622 = vpack.c.b16 %v1617, %v1616
      %v1623 = vpack.c.b16 %v1619, %v1618
      %1628 = vmatpush.bf16.msra.mxu0 0
      %1629 = vmatpush.bf16.msra.mxu0 0
      %1630 = vmatpush.bf16.msra.mxu0 0
      %1631 = vmatpush.bf16.msra.mxu0 0
      %1632 = vmatpush.bf16.msra.mxu0 %v1623
      %1633 = vmatpush.bf16.msra.mxu0 %v1622
      %1634 = vmatpush.bf16.msra.mxu0 %v1621
      %1635 = vmatpush.bf16.msra.mxu0 %v1620
      %1636 = vmatmul.bf16.gmra.mxu0 %v1146
      %v1637 = vpop.f32.mrf.mxu0
      %v1638 = vadd.f32 %v1602, %v1637
      %v1639 = vpop.f32.mrf.mxu0
      %1640 = vdwg.mxu0
      %s1641 = scalar_lea.vmem %s7, 192
      %v1642 = vld [vmem:[%s1641] sm:$0xf]
      %v1643 = vld [vmem:[%s1641 + $0x4] sm:$0xf]
      %v1644 = vld [vmem:[%s1641 + $0x8] sm:$0xf]
      %v1645 = vld [vmem:[%s1641 + $0xc] sm:$0xf]
      %v1646 = vld [vmem:[%s1641 + $0x10] sm:$0xf]
      %v1647 = vld [vmem:[%s1641 + $0x14] sm:$0xf]
      %v1648 = vld [vmem:[%s1641 + $0x18] sm:$0xf]
      %v1649 = vld [vmem:[%s1641 + $0x1c] sm:$0xf]
      %s1650 = scalar_lea.vmem %s8, 6
      %v1651 = vld [vmem:[%s1650] sm:$0x1]
      %v1653 = vperm.slane %v1651, 0
      %v1663 = vunpack.c.l.b16 %v1642
      %v1664 = vunpack.c.l.b16 %v1643
      %v1665 = vunpack.c.l.b16 %v1644
      %v1666 = vunpack.c.l.b16 %v1645
      %v1667 = vunpack.c.l.b16 %v1646
      %v1668 = vunpack.c.l.b16 %v1647
      %v1669 = vunpack.c.l.b16 %v1648
      %v1670 = vunpack.c.l.b16 %v1649
      %v1671 = vpack.c.b16 %v1664, %v1663
      %v1672 = vpack.c.b16 %v1666, %v1665
      %v1673 = vpack.c.b16 %v1668, %v1667
      %v1674 = vpack.c.b16 %v1670, %v1669
      %1679 = vmatpush.bf16.msra.mxu0 0
      %1680 = vmatpush.bf16.msra.mxu0 0
      %1681 = vmatpush.bf16.msra.mxu0 0
      %1682 = vmatpush.bf16.msra.mxu0 0
      %1683 = vmatpush.bf16.msra.mxu0 %v1674
      %1684 = vmatpush.bf16.msra.mxu0 %v1673
      %1685 = vmatpush.bf16.msra.mxu0 %v1672
      %1686 = vmatpush.bf16.msra.mxu0 %v1671
      %1687 = vmatmul.bf16.gmra.mxu0 %v1146
      %v1688 = vpop.f32.mrf.mxu0
      %v1689 = vadd.f32 %v1653, %v1688
      %v1690 = vpop.f32.mrf.mxu0
      %1691 = vdwg.mxu0
      %s1692 = scalar_lea.vmem %s7, 320
      %v1693 = vld [vmem:[%s1692] sm:$0xf]
      %v1694 = vld [vmem:[%s1692 + $0x4] sm:$0xf]
      %v1695 = vld [vmem:[%s1692 + $0x8] sm:$0xf]
      %v1696 = vld [vmem:[%s1692 + $0xc] sm:$0xf]
      %v1697 = vld [vmem:[%s1692 + $0x10] sm:$0xf]
      %v1698 = vld [vmem:[%s1692 + $0x14] sm:$0xf]
      %v1699 = vld [vmem:[%s1692 + $0x18] sm:$0xf]
      %v1700 = vld [vmem:[%s1692 + $0x1c] sm:$0xf]
      %s1701 = scalar_lea.vmem %s8, 10
      %v1702 = vld [vmem:[%s1701] sm:$0x1]
      %v1704 = vperm.slane %v1702, 0
      %v1714 = vunpack.c.l.b16 %v1693
      %v1715 = vunpack.c.l.b16 %v1694
      %v1716 = vunpack.c.l.b16 %v1695
      %v1717 = vunpack.c.l.b16 %v1696
      %v1718 = vunpack.c.l.b16 %v1697
      %v1719 = vunpack.c.l.b16 %v1698
      %v1720 = vunpack.c.l.b16 %v1699
      %v1721 = vunpack.c.l.b16 %v1700
      %v1722 = vpack.c.b16 %v1715, %v1714
      %v1723 = vpack.c.b16 %v1717, %v1716
      %v1724 = vpack.c.b16 %v1719, %v1718
      %v1725 = vpack.c.b16 %v1721, %v1720
      %1730 = vmatpush.bf16.msra.mxu0 0
      %1731 = vmatpush.bf16.msra.mxu0 0
      %1732 = vmatpush.bf16.msra.mxu0 0
      %1733 = vmatpush.bf16.msra.mxu0 0
      %1734 = vmatpush.bf16.msra.mxu0 %v1725
      %1735 = vmatpush.bf16.msra.mxu0 %v1724
      %1736 = vmatpush.bf16.msra.mxu0 %v1723
      %1737 = vmatpush.bf16.msra.mxu0 %v1722
      %1738 = vmatmul.bf16.gmra.mxu0 %v1146
      %v1739 = vpop.f32.mrf.mxu0
      %v1740 = vadd.f32 %v1704, %v1739
      %v1741 = vpop.f32.mrf.mxu0
      %1742 = vdwg.mxu0
      %v1744 = vsel %vm1035, %v1638, 0
      %v1747 = vsel %vm1035, %v1689, 0
      %1749 = vmatpush.xpose.msra.mxu0 0.0
      %1750 = vmatpush.xpose.msra.mxu0 0.0
      %1751 = vmatpush.xpose.msra.mxu0 0.0
      %1752 = vmatpush.xpose.msra.mxu0 0.0
      %1753 = vmatpush.xpose.msra.mxu0 0.0
      %1754 = vmatpush.xpose.msra.mxu0 0.0
      %1755 = vmatpush.xpose.msra.mxu0 0.0
      %1756 = vmatpush.xpose.msra.mxu0 0.0
      %1757 = vmatpush.xpose.msra.mxu0 0.0
      %1758 = vmatpush.xpose.msra.mxu0 0.0
      %1759 = vmatpush.xpose.msra.mxu0 0.0
      %1760 = vmatpush.xpose.msra.mxu0 0.0
      %1761 = vmatpush.xpose.msra.mxu0 0.0
      %1762 = vmatpush.xpose.msra.mxu0 0.0
      %1763 = vmatpush.xpose.msra.mxu0 0.0
      %1764 = vmatpush.xpose.msra.mxu0 %v1747
      %1765 = vmatmul.f32.gmra.mxu0 %v1744
      %v1766 = vpop.f32.mrf.mxu0
      %v1767 = vadd.f32 0.0, %v1766
      %1768 = vdwg.mxu0
      %v1769 = vmul.f32 %v1767, 0.25
      %v1770 = vsel %vm1290, %v1769, -inf
      %1771 = vmax.xlane.f32.xlu0 %v1770
      %v1772 = vpop.xlane.xlu0 %1771
      %v1773 = vsub.f32 %v1769, %v1772
      %v1774 = vmul.f32 %v1773, 1.442695
      %v1775 = vpow.pop %v1774
      %v1776 = vsel %vm1290, %v1775, 0.0
      %1777 = vadd.xlane.f32.xlu0 %v1776
      %v1778 = vpop.xlane.xlu0 %1777
      %v1779 = vrcp.pop %v1778
      %v1780 = vmul.f32 %v1775, %v1779
      %v1781 = vpack.c.bf16 %v1780, %v1780
      %v1782 = vpack.c.bf16 %v1740, %v1740
      %v1784 = vsel %vm1304, %v1781, 0
      %v1787 = vand.u32 %v1782, %v1310
      %1789 = vmatpush.bf16.msra.mxu0 0
      %1790 = vmatpush.bf16.msra.mxu0 0
      %1791 = vmatpush.bf16.msra.mxu0 0
      %1792 = vmatpush.bf16.msra.mxu0 0
      %1793 = vmatpush.bf16.msra.mxu0 0
      %1794 = vmatpush.bf16.msra.mxu0 0
      %1795 = vmatpush.bf16.msra.mxu0 0
      %1796 = vmatpush.bf16.msra.mxu0 %v1787
      %1797 = vmatmul.bf16.gmra.mxu0 %v1784
      %v1798 = vpop.f32.mrf.mxu0
      %v1799 = vadd.f32 0.0, %v1798
      %v1800 = vpop.f32.mrf.mxu0
      %1801 = vdwg.mxu0
      %v1802 = vpack.c.bf16 %v1799, %v1799
      %s1803 = scalar_lea.vmem %s9, 16
      %v1804 = vld [vmem:[%s1803] sm:$0xf]
      %v1805 = vld [vmem:[%s1803 + $0x4] sm:$0xf]
      %v1808 = vunpack.c.l.b16 %v1804
      %v1809 = vunpack.c.l.b16 %v1805
      %v1810 = vpack.c.b16 %v1809, %v1808
      %v1813 = vsel %vm1035, %v1802, 0
      %1815 = vmatpush.bf16.msra.mxu0 0
      %1816 = vmatpush.bf16.msra.mxu0 0
      %1817 = vmatpush.bf16.msra.mxu0 0
      %1818 = vmatpush.bf16.msra.mxu0 0
      %1819 = vmatpush.bf16.msra.mxu0 0
      %1820 = vmatpush.bf16.msra.mxu0 0
      %1821 = vmatpush.bf16.msra.mxu0 0
      %1822 = vmatpush.bf16.msra.mxu0 %v1810
      %1823 = vmatmul.bf16.gmra.mxu0 %v1813
      %v1824 = vpop.f32.mrf.mxu0
      %v1825 = vadd.f32 0.0, %v1824
      %v1826 = vpop.f32.mrf.mxu0
      %1827 = vdwg.mxu0
      %v1828 = vadd.f32 %v1587, %v1825
      %s1829 = scalar_lea.vmem %s7, 96
      %v1830 = vld [vmem:[%s1829] sm:$0xf]
      %v1831 = vld [vmem:[%s1829 + $0x4] sm:$0xf]
      %v1832 = vld [vmem:[%s1829 + $0x8] sm:$0xf]
      %v1833 = vld [vmem:[%s1829 + $0xc] sm:$0xf]
      %v1834 = vld [vmem:[%s1829 + $0x10] sm:$0xf]
      %v1835 = vld [vmem:[%s1829 + $0x14] sm:$0xf]
      %v1836 = vld [vmem:[%s1829 + $0x18] sm:$0xf]
      %v1837 = vld [vmem:[%s1829 + $0x1c] sm:$0xf]
      %s1838 = scalar_lea.vmem %s8, 3
      %v1839 = vld [vmem:[%s1838] sm:$0x1]
      %v1841 = vperm.slane %v1839, 0
      %v1851 = vunpack.c.l.b16 %v1830
      %v1852 = vunpack.c.l.b16 %v1831
      %v1853 = vunpack.c.l.b16 %v1832
      %v1854 = vunpack.c.l.b16 %v1833
      %v1855 = vunpack.c.l.b16 %v1834
      %v1856 = vunpack.c.l.b16 %v1835
      %v1857 = vunpack.c.l.b16 %v1836
      %v1858 = vunpack.c.l.b16 %v1837
      %v1859 = vpack.c.b16 %v1852, %v1851
      %v1860 = vpack.c.b16 %v1854, %v1853
      %v1861 = vpack.c.b16 %v1856, %v1855
      %v1862 = vpack.c.b16 %v1858, %v1857
      %1867 = vmatpush.bf16.msra.mxu0 0
      %1868 = vmatpush.bf16.msra.mxu0 0
      %1869 = vmatpush.bf16.msra.mxu0 0
      %1870 = vmatpush.bf16.msra.mxu0 0
      %1871 = vmatpush.bf16.msra.mxu0 %v1862
      %1872 = vmatpush.bf16.msra.mxu0 %v1861
      %1873 = vmatpush.bf16.msra.mxu0 %v1860
      %1874 = vmatpush.bf16.msra.mxu0 %v1859
      %1875 = vmatmul.bf16.gmra.mxu0 %v1146
      %v1876 = vpop.f32.mrf.mxu0
      %v1877 = vadd.f32 %v1841, %v1876
      %v1878 = vpop.f32.mrf.mxu0
      %1879 = vdwg.mxu0
      %s1880 = scalar_lea.vmem %s7, 224
      %v1881 = vld [vmem:[%s1880] sm:$0xf]
      %v1882 = vld [vmem:[%s1880 + $0x4] sm:$0xf]
      %v1883 = vld [vmem:[%s1880 + $0x8] sm:$0xf]
      %v1884 = vld [vmem:[%s1880 + $0xc] sm:$0xf]
      %v1885 = vld [vmem:[%s1880 + $0x10] sm:$0xf]
      %v1886 = vld [vmem:[%s1880 + $0x14] sm:$0xf]
      %v1887 = vld [vmem:[%s1880 + $0x18] sm:$0xf]
      %v1888 = vld [vmem:[%s1880 + $0x1c] sm:$0xf]
      %s1889 = scalar_lea.vmem %s8, 7
      %v1890 = vld [vmem:[%s1889] sm:$0x1]
      %v1892 = vperm.slane %v1890, 0
      %v1902 = vunpack.c.l.b16 %v1881
      %v1903 = vunpack.c.l.b16 %v1882
      %v1904 = vunpack.c.l.b16 %v1883
      %v1905 = vunpack.c.l.b16 %v1884
      %v1906 = vunpack.c.l.b16 %v1885
      %v1907 = vunpack.c.l.b16 %v1886
      %v1908 = vunpack.c.l.b16 %v1887
      %v1909 = vunpack.c.l.b16 %v1888
      %v1910 = vpack.c.b16 %v1903, %v1902
      %v1911 = vpack.c.b16 %v1905, %v1904
      %v1912 = vpack.c.b16 %v1907, %v1906
      %v1913 = vpack.c.b16 %v1909, %v1908
      %1918 = vmatpush.bf16.msra.mxu0 0
      %1919 = vmatpush.bf16.msra.mxu0 0
      %1920 = vmatpush.bf16.msra.mxu0 0
      %1921 = vmatpush.bf16.msra.mxu0 0
      %1922 = vmatpush.bf16.msra.mxu0 %v1913
      %1923 = vmatpush.bf16.msra.mxu0 %v1912
      %1924 = vmatpush.bf16.msra.mxu0 %v1911
      %1925 = vmatpush.bf16.msra.mxu0 %v1910
      %1926 = vmatmul.bf16.gmra.mxu0 %v1146
      %v1927 = vpop.f32.mrf.mxu0
      %v1928 = vadd.f32 %v1892, %v1927
      %v1929 = vpop.f32.mrf.mxu0
      %1930 = vdwg.mxu0
      %s1931 = scalar_lea.vmem %s7, 352
      %v1932 = vld [vmem:[%s1931] sm:$0xf]
      %v1933 = vld [vmem:[%s1931 + $0x4] sm:$0xf]
      %v1934 = vld [vmem:[%s1931 + $0x8] sm:$0xf]
      %v1935 = vld [vmem:[%s1931 + $0xc] sm:$0xf]
      %v1936 = vld [vmem:[%s1931 + $0x10] sm:$0xf]
      %v1937 = vld [vmem:[%s1931 + $0x14] sm:$0xf]
      %v1938 = vld [vmem:[%s1931 + $0x18] sm:$0xf]
      %v1939 = vld [vmem:[%s1931 + $0x1c] sm:$0xf]
      %s1940 = scalar_lea.vmem %s8, 11
      %v1941 = vld [vmem:[%s1940] sm:$0x1]
      %v1943 = vperm.slane %v1941, 0
      %v1953 = vunpack.c.l.b16 %v1932
      %v1954 = vunpack.c.l.b16 %v1933
      %v1955 = vunpack.c.l.b16 %v1934
      %v1956 = vunpack.c.l.b16 %v1935
      %v1957 = vunpack.c.l.b16 %v1936
      %v1958 = vunpack.c.l.b16 %v1937
      %v1959 = vunpack.c.l.b16 %v1938
      %v1960 = vunpack.c.l.b16 %v1939
      %v1961 = vpack.c.b16 %v1954, %v1953
      %v1962 = vpack.c.b16 %v1956, %v1955
      %v1963 = vpack.c.b16 %v1958, %v1957
      %v1964 = vpack.c.b16 %v1960, %v1959
      %1969 = vmatpush.bf16.msra.mxu0 0
      %1970 = vmatpush.bf16.msra.mxu0 0
      %1971 = vmatpush.bf16.msra.mxu0 0
      %1972 = vmatpush.bf16.msra.mxu0 0
      %1973 = vmatpush.bf16.msra.mxu0 %v1964
      %1974 = vmatpush.bf16.msra.mxu0 %v1963
      %1975 = vmatpush.bf16.msra.mxu0 %v1962
      %1976 = vmatpush.bf16.msra.mxu0 %v1961
      %1977 = vmatmul.bf16.gmra.mxu0 %v1146
      %v1978 = vpop.f32.mrf.mxu0
      %v1979 = vadd.f32 %v1943, %v1978
      %v1980 = vpop.f32.mrf.mxu0
      %1981 = vdwg.mxu0
      %v1983 = vsel %vm1035, %v1877, 0
      %v1986 = vsel %vm1035, %v1928, 0
      %1988 = vmatpush.xpose.msra.mxu0 0.0
      %1989 = vmatpush.xpose.msra.mxu0 0.0
      %1990 = vmatpush.xpose.msra.mxu0 0.0
      %1991 = vmatpush.xpose.msra.mxu0 0.0
      %1992 = vmatpush.xpose.msra.mxu0 0.0
      %1993 = vmatpush.xpose.msra.mxu0 0.0
      %1994 = vmatpush.xpose.msra.mxu0 0.0
      %1995 = vmatpush.xpose.msra.mxu0 0.0
      %1996 = vmatpush.xpose.msra.mxu0 0.0
      %1997 = vmatpush.xpose.msra.mxu0 0.0
      %1998 = vmatpush.xpose.msra.mxu0 0.0
      %1999 = vmatpush.xpose.msra.mxu0 0.0
      %2000 = vmatpush.xpose.msra.mxu0 0.0
      %2001 = vmatpush.xpose.msra.mxu0 0.0
      %2002 = vmatpush.xpose.msra.mxu0 0.0
      %2003 = vmatpush.xpose.msra.mxu0 %v1986
      %2004 = vmatmul.f32.gmra.mxu0 %v1983
      %v2005 = vpop.f32.mrf.mxu0
      %v2006 = vadd.f32 0.0, %v2005
      %2007 = vdwg.mxu0
      %v2008 = vmul.f32 %v2006, 0.25
      %v2009 = vsel %vm1290, %v2008, -inf
      %2010 = vmax.xlane.f32.xlu0 %v2009
      %v2011 = vpop.xlane.xlu0 %2010
      %v2012 = vsub.f32 %v2008, %v2011
      %v2013 = vmul.f32 %v2012, 1.442695
      %v2014 = vpow.pop %v2013
      %v2015 = vsel %vm1290, %v2014, 0.0
      %2016 = vadd.xlane.f32.xlu0 %v2015
      %v2017 = vpop.xlane.xlu0 %2016
      %v2018 = vrcp.pop %v2017
      %v2019 = vmul.f32 %v2014, %v2018
      %v2020 = vpack.c.bf16 %v2019, %v2019
      %v2021 = vpack.c.bf16 %v1979, %v1979
      %v2023 = vsel %vm1304, %v2020, 0
      %v2026 = vand.u32 %v2021, %v1310
      %2028 = vmatpush.bf16.msra.mxu0 0
      %2029 = vmatpush.bf16.msra.mxu0 0
      %2030 = vmatpush.bf16.msra.mxu0 0
      %2031 = vmatpush.bf16.msra.mxu0 0
      %2032 = vmatpush.bf16.msra.mxu0 0
      %2033 = vmatpush.bf16.msra.mxu0 0
      %2034 = vmatpush.bf16.msra.mxu0 0
      %2035 = vmatpush.bf16.msra.mxu0 %v2026
      %2036 = vmatmul.bf16.gmra.mxu0 %v2023
      %v2037 = vpop.f32.mrf.mxu0
      %v2038 = vadd.f32 0.0, %v2037
      %v2039 = vpop.f32.mrf.mxu0
      %2040 = vdwg.mxu0
      %v2041 = vpack.c.bf16 %v2038, %v2038
      %s2042 = scalar_lea.vmem %s9, 24
      %v2043 = vld [vmem:[%s2042] sm:$0xf]
      %v2044 = vld [vmem:[%s2042 + $0x4] sm:$0xf]
      %v2047 = vunpack.c.l.b16 %v2043
      %v2048 = vunpack.c.l.b16 %v2044
      %v2049 = vpack.c.b16 %v2048, %v2047
      %v2052 = vsel %vm1035, %v2041, 0
      %2054 = vmatpush.bf16.msra.mxu0 0
      %2055 = vmatpush.bf16.msra.mxu0 0
      %2056 = vmatpush.bf16.msra.mxu0 0
      %2057 = vmatpush.bf16.msra.mxu0 0
      %2058 = vmatpush.bf16.msra.mxu0 0
      %2059 = vmatpush.bf16.msra.mxu0 0
      %2060 = vmatpush.bf16.msra.mxu0 0
      %2061 = vmatpush.bf16.msra.mxu0 %v2049
      %2062 = vmatmul.bf16.gmra.mxu0 %v2052
      %v2063 = vpop.f32.mrf.mxu0
      %v2064 = vadd.f32 0.0, %v2063
      %v2065 = vpop.f32.mrf.mxu0
      %2066 = vdwg.mxu0
      %v2067 = vadd.f32 %v1828, %v2064
      %v2068 = vadd.f32 %v1057, %v2067
      %v2070 = vperm.slane %v1067, 0
      %v2072 = vadd.f32 %v2068, %v2070
      %v2073 = vsel %vm1070, %v2072, 0.0
      %2074 = vadd.xlane.f32.xlu0 %v2073
      %v2075 = vpop.xlane.xlu0 %2074
      %v2076 = vmul.f32 %v2075, %v1080
      %v2077 = vsub.f32 %v2072, %v2076
      %v2078 = vmul.f32 %v2077, %v2077
      %v2079 = vsel %vm1070, %v2078, 0.0
      %2080 = vadd.xlane.f32.xlu0 %v2079
      %v2081 = vpop.xlane.xlu0 %2080
      %v2082 = vmul.f32 %v2081, %v1080
      %v2083 = vadd.f32 %v2082, 1e-05
      %v2084 = vrsqrt.pop %v2083
      %v2085 = vmul.f32 %v2084, %v2083
      %v2086 = vmul.f32 %v2085, %v2084
      %v2087 = vmul.f32 0.5, %v2086
      %v2088 = vsub.f32 1.5, %v2087
      %v2089 = vmul.f32 %v2084, %v2088
      %vm2090 = vweird.f32 %v2083
      %vm2091 = vweird.f32 %v2084
      %vm2092 = vmor %vm2090, %vm2091
      %v2093 = vsel %vm2092, %v2084, %v2089
      %v2094 = vmul.f32 %v2077, %v2093
      %v2096 = vperm.slane %v1063, 0
      %v2098 = vmul.f32 %v2094, %v2096
      %v2100 = vperm.slane %v1065, 0
      %v2102 = vadd.f32 %v2098, %v2100
      %v2103 = vpack.c.bf16 %v2102, %v2102
      %v2104 = vld [vmem:[%s10] sm:$0xff]
      %v2105 = vld [vmem:[%s10 + $0x8] sm:$0xff]
      %v2106 = vld [vmem:[%s10 + $0x10] sm:$0xff]
      %v2107 = vld [vmem:[%s10 + $0x18] sm:$0xff]
      %v2108 = vld [vmem:[%s10 + $0x20] sm:$0xff]
      %v2109 = vld [vmem:[%s10 + $0x28] sm:$0xff]
      %v2110 = vld [vmem:[%s10 + $0x30] sm:$0xff]
      %v2111 = vld [vmem:[%s10 + $0x38] sm:$0xff]
      %v2112 = vld [vmem:[%s11] sm:$0x3]
      %v2114 = vperm.slane %v2112, 0
      %v2115 = vperm.slane %v2112, 1
      %v2126 = vunpack.c.l.b16 %v2104
      %v2127 = vunpack.c.h.b16 %v2104
      %v2128 = vunpack.c.l.b16 %v2105
      %v2129 = vunpack.c.h.b16 %v2105
      %v2130 = vunpack.c.l.b16 %v2106
      %v2131 = vunpack.c.h.b16 %v2106
      %v2132 = vunpack.c.l.b16 %v2107
      %v2133 = vunpack.c.h.b16 %v2107
      %v2134 = vunpack.c.l.b16 %v2108
      %v2135 = vunpack.c.h.b16 %v2108
      %v2136 = vunpack.c.l.b16 %v2109
      %v2137 = vunpack.c.h.b16 %v2109
      %v2138 = vunpack.c.l.b16 %v2110
      %v2139 = vunpack.c.h.b16 %v2110
      %v2140 = vunpack.c.l.b16 %v2111
      %v2141 = vunpack.c.h.b16 %v2111
      %v2142 = vpack.c.b16 %v2128, %v2126
      %v2143 = vpack.c.b16 %v2129, %v2127
      %v2144 = vpack.c.b16 %v2132, %v2130
      %v2145 = vpack.c.b16 %v2133, %v2131
      %v2146 = vpack.c.b16 %v2136, %v2134
      %v2147 = vpack.c.b16 %v2137, %v2135
      %v2148 = vpack.c.b16 %v2140, %v2138
      %v2149 = vpack.c.b16 %v2141, %v2139
      %v2159 = vsel %vm956, %v2103, 0
      %2161 = vmatpush.bf16.msra.mxu0 0
      %2162 = vmatpush.bf16.msra.mxu0 0
      %2163 = vmatpush.bf16.msra.mxu0 0
      %2164 = vmatpush.bf16.msra.mxu0 0
      %2165 = vmatpush.bf16.msra.mxu0 %v2148
      %2166 = vmatpush.bf16.msra.mxu0 %v2146
      %2167 = vmatpush.bf16.msra.mxu0 %v2144
      %2168 = vmatpush.bf16.msra.mxu0 %v2142
      %2169 = vmatmul.bf16.gmra.mxu0 %v2159
      %v2170 = vpop.f32.mrf.mxu0
      %v2171 = vadd.f32 %v2114, %v2170
      %v2172 = vpop.f32.mrf.mxu0
      %2173 = vdwg.mxu0
      %2174 = vmatpush.bf16.msra.mxu0 0
      %2175 = vmatpush.bf16.msra.mxu0 0
      %2176 = vmatpush.bf16.msra.mxu0 0
      %2177 = vmatpush.bf16.msra.mxu0 0
      %2178 = vmatpush.bf16.msra.mxu0 %v2149
      %2179 = vmatpush.bf16.msra.mxu0 %v2147
      %2180 = vmatpush.bf16.msra.mxu0 %v2145
      %2181 = vmatpush.bf16.msra.mxu0 %v2143
      %2182 = vmatmul.bf16.gmra.mxu0 %v2159
      %v2183 = vpop.f32.mrf.mxu0
      %v2184 = vadd.f32 %v2115, %v2183
      %v2185 = vpop.f32.mrf.mxu0
      %2186 = vdwg.mxu0
      %v2187 = vmul.f32 %v2171, 0.5
      %v2188 = vmul.f32 %v2184, 0.5
      %v2189 = vmul.f32 %v2171, 0.70710677
      %v2190 = vmul.f32 %v2184, 0.70710677
      %v2191 = vmax.f32 %v2189, -4.0
      %v2192 = vmax.f32 %v2190, -4.0
      %v2193 = vmin.f32 %v2191, 4.0
      %v2194 = vmin.f32 %v2192, 4.0
      %v2195 = vmul.f32 %v2193, %v2193
      %v2196 = vmul.f32 %v2194, %v2194
      %v2197 = vmul.f32 %v2195, -2.7261424e-10
      %v2198 = vmul.f32 %v2196, -2.7261424e-10
      %v2199 = vadd.f32 %v2197, 2.7706815e-08
      %v2200 = vadd.f32 %v2198, 2.7706815e-08
      %v2201 = vmul.f32 %v2199, %v2195
      %v2202 = vmul.f32 %v2200, %v2196
      %v2203 = vadd.f32 %v2201, -2.101024e-06
      %v2204 = vadd.f32 %v2202, -2.101024e-06
      %v2205 = vmul.f32 %v2203, %v2195
      %v2206 = vmul.f32 %v2204, %v2196
      %v2207 = vadd.f32 %v2205, -5.6925062e-05
      %v2208 = vadd.f32 %v2206, -5.6925062e-05
      %v2209 = vmul.f32 %v2207, %v2195
      %v2210 = vmul.f32 %v2208, %v2196
      %v2211 = vadd.f32 %v2209, -0.00073499064
      %v2212 = vadd.f32 %v2210, -0.00073499064
      %v2213 = vmul.f32 %v2211, %v2195
      %v2214 = vmul.f32 %v2212, %v2196
      %v2215 = vadd.f32 %v2213, -0.0029546
      %v2216 = vadd.f32 %v2214, -0.0029546
      %v2217 = vmul.f32 %v2215, %v2195
      %v2218 = vmul.f32 %v2216, %v2196
      %v2219 = vadd.f32 %v2217, -0.016096033
      %v2220 = vadd.f32 %v2218, -0.016096033
      %v2221 = vmul.f32 %v2219, %v2193
      %v2222 = vmul.f32 %v2220, %v2194
      %v2223 = vmul.f32 %v2195, -1.45660715e-05
      %v2224 = vmul.f32 %v2196, -1.45660715e-05
      %v2225 = vadd.f32 %v2223, -0.00021337405
      %v2226 = vadd.f32 %v2224, -0.00021337405
      %v2227 = vmul.f32 %v2225, %v2195
      %v2228 = vmul.f32 %v2226, %v2196
      %v2229 = vadd.f32 %v2227, -0.001682827
      %v2230 = vadd.f32 %v2228, -0.001682827
      %v2231 = vmul.f32 %v2229, %v2195
      %v2232 = vmul.f32 %v2230, %v2196
      %v2233 = vadd.f32 %v2231, -0.0073733293
      %v2234 = vadd.f32 %v2232, -0.0073733293
      %v2235 = vmul.f32 %v2233, %v2195
      %v2236 = vmul.f32 %v2234, %v2196
      %v2237 = vadd.f32 %v2235, -0.014264739
      %v2238 = vadd.f32 %v2236, -0.014264739
      %v2239 = vrcp.pop %v2237
      %v2240 = vmul.f32 %v2237, %v2239
      %v2241 = vsub.f32 1.0, %v2240
      %v2242 = vmul.f32 %v2239, %v2241
      %v2243 = vadd.f32 %v2239, %v2242
      %vm2244 = vweird.f32 %v2237
      %vm2245 = vweird.f32 %v2239
      %vm2246 = vmor %vm2244, %vm2245
      %v2247 = vsel %vm2246, %v2239, %v2243
      %v2248 = vand.u32 2147483647, %v2237
      %vm2249 = vcmp.eq.f32.partialorder %v2248, 8.507059e+37
      %v2250 = vand.u32 %v2237, 2147483648
      %v2251 = vor.u32 1.1754944e-38, %v2250
      %v2252 = vsel %vm2249, %v2251, %v2247
      %v2253 = vmul.f32 %v2221, %v2252
      %v2254 = vrcp.pop %v2238
      %v2255 = vmul.f32 %v2238, %v2254
      %v2256 = vsub.f32 1.0, %v2255
      %v2257 = vmul.f32 %v2254, %v2256
      %v2258 = vadd.f32 %v2254, %v2257
      %vm2259 = vweird.f32 %v2238
      %vm2260 = vweird.f32 %v2254
      %vm2261 = vmor %vm2259, %vm2260
      %v2262 = vsel %vm2261, %v2254, %v2258
      %v2263 = vand.u32 2147483647, %v2238
      %vm2264 = vcmp.eq.f32.partialorder %v2263, 8.507059e+37
      %v2265 = vand.u32 %v2238, 2147483648
      %v2266 = vor.u32 1.1754944e-38, %v2265
      %v2267 = vsel %vm2264, %v2266, %v2262
      %v2268 = vmul.f32 %v2222, %v2267
      %v2269 = vadd.f32 %v2253, 1.0
      %v2270 = vadd.f32 %v2268, 1.0
      %v2271 = vmul.f32 %v2187, %v2269
      %v2272 = vmul.f32 %v2188, %v2270
      %v2273 = vpack.c.bf16 %v2271, %v2271
      %v2274 = vpack.c.bf16 %v2272, %v2272
      %v2275 = vld [vmem:[%s12] sm:$0xf]
      %v2276 = vld [vmem:[%s12 + $0x4] sm:$0xf]
      %v2277 = vld [vmem:[%s12 + $0x8] sm:$0xf]
      %v2278 = vld [vmem:[%s12 + $0xc] sm:$0xf]
      %v2279 = vld [vmem:[%s12 + $0x10] sm:$0xf]
      %v2280 = vld [vmem:[%s12 + $0x14] sm:$0xf]
      %v2281 = vld [vmem:[%s12 + $0x18] sm:$0xf]
      %v2282 = vld [vmem:[%s12 + $0x1c] sm:$0xf]
      %v2283 = vld [vmem:[%s12 + $0x20] sm:$0xf]
      %v2284 = vld [vmem:[%s12 + $0x24] sm:$0xf]
      %v2285 = vld [vmem:[%s12 + $0x28] sm:$0xf]
      %v2286 = vld [vmem:[%s12 + $0x2c] sm:$0xf]
      %v2287 = vld [vmem:[%s12 + $0x30] sm:$0xf]
      %v2288 = vld [vmem:[%s12 + $0x34] sm:$0xf]
      %v2289 = vld [vmem:[%s12 + $0x38] sm:$0xf]
      %v2290 = vld [vmem:[%s12 + $0x3c] sm:$0xf]
      %v2291 = vld [vmem:[%s12 + $0x40] sm:$0xf]
      %v2292 = vld [vmem:[%s12 + $0x44] sm:$0xf]
      %v2293 = vld [vmem:[%s12 + $0x48] sm:$0xf]
      %v2294 = vld [vmem:[%s12 + $0x4c] sm:$0xf]
      %v2295 = vld [vmem:[%s12 + $0x50] sm:$0xf]
      %v2296 = vld [vmem:[%s12 + $0x54] sm:$0xf]
      %v2297 = vld [vmem:[%s12 + $0x58] sm:$0xf]
      %v2298 = vld [vmem:[%s12 + $0x5c] sm:$0xf]
      %v2299 = vld [vmem:[%s12 + $0x60] sm:$0xf]
      %v2300 = vld [vmem:[%s12 + $0x64] sm:$0xf]
      %v2301 = vld [vmem:[%s12 + $0x68] sm:$0xf]
      %v2302 = vld [vmem:[%s12 + $0x6c] sm:$0xf]
      %v2303 = vld [vmem:[%s12 + $0x70] sm:$0xf]
      %v2304 = vld [vmem:[%s12 + $0x74] sm:$0xf]
      %v2305 = vld [vmem:[%s12 + $0x78] sm:$0xf]
      %v2306 = vld [vmem:[%s12 + $0x7c] sm:$0xf]
      %v2339 = vunpack.c.l.b16 %v2275
      %v2340 = vunpack.c.l.b16 %v2276
      %v2341 = vunpack.c.l.b16 %v2277
      %v2342 = vunpack.c.l.b16 %v2278
      %v2343 = vunpack.c.l.b16 %v2279
      %v2344 = vunpack.c.l.b16 %v2280
      %v2345 = vunpack.c.l.b16 %v2281
      %v2346 = vunpack.c.l.b16 %v2282
      %v2347 = vunpack.c.l.b16 %v2283
      %v2348 = vunpack.c.l.b16 %v2284
      %v2349 = vunpack.c.l.b16 %v2285
      %v2350 = vunpack.c.l.b16 %v2286
      %v2351 = vunpack.c.l.b16 %v2287
      %v2352 = vunpack.c.l.b16 %v2288
      %v2353 = vunpack.c.l.b16 %v2289
      %v2354 = vunpack.c.l.b16 %v2290
      %v2355 = vunpack.c.l.b16 %v2291
      %v2356 = vunpack.c.l.b16 %v2292
      %v2357 = vunpack.c.l.b16 %v2293
      %v2358 = vunpack.c.l.b16 %v2294
      %v2359 = vunpack.c.l.b16 %v2295
      %v2360 = vunpack.c.l.b16 %v2296
      %v2361 = vunpack.c.l.b16 %v2297
      %v2362 = vunpack.c.l.b16 %v2298
      %v2363 = vunpack.c.l.b16 %v2299
      %v2364 = vunpack.c.l.b16 %v2300
      %v2365 = vunpack.c.l.b16 %v2301
      %v2366 = vunpack.c.l.b16 %v2302
      %v2367 = vunpack.c.l.b16 %v2303
      %v2368 = vunpack.c.l.b16 %v2304
      %v2369 = vunpack.c.l.b16 %v2305
      %v2370 = vunpack.c.l.b16 %v2306
      %v2371 = vpack.c.b16 %v2340, %v2339
      %v2372 = vpack.c.b16 %v2342, %v2341
      %v2373 = vpack.c.b16 %v2344, %v2343
      %v2374 = vpack.c.b16 %v2346, %v2345
      %v2375 = vpack.c.b16 %v2348, %v2347
      %v2376 = vpack.c.b16 %v2350, %v2349
      %v2377 = vpack.c.b16 %v2352, %v2351
      %v2378 = vpack.c.b16 %v2354, %v2353
      %v2379 = vpack.c.b16 %v2356, %v2355
      %v2380 = vpack.c.b16 %v2358, %v2357
      %v2381 = vpack.c.b16 %v2360, %v2359
      %v2382 = vpack.c.b16 %v2362, %v2361
      %v2383 = vpack.c.b16 %v2364, %v2363
      %v2384 = vpack.c.b16 %v2366, %v2365
      %v2385 = vpack.c.b16 %v2368, %v2367
      %v2386 = vpack.c.b16 %v2370, %v2369
      %2403 = vmatpush.bf16.msra.mxu0 %v2378
      %2404 = vmatpush.bf16.msra.mxu0 %v2377
      %2405 = vmatpush.bf16.msra.mxu0 %v2376
      %2406 = vmatpush.bf16.msra.mxu0 %v2375
      %2407 = vmatpush.bf16.msra.mxu0 %v2374
      %2408 = vmatpush.bf16.msra.mxu0 %v2373
      %2409 = vmatpush.bf16.msra.mxu0 %v2372
      %2410 = vmatpush.bf16.msra.mxu0 %v2371
      %2411 = vmatmul.bf16.gmra.mxu0 %v2273
      %v2412 = vpop.f32.mrf.mxu0
      %v2413 = vadd.f32 0.0, %v2412
      %v2414 = vpop.f32.mrf.mxu0
      %2415 = vdwg.mxu0
      %2416 = vmatpush.bf16.msra.mxu0 %v2386
      %2417 = vmatpush.bf16.msra.mxu0 %v2385
      %2418 = vmatpush.bf16.msra.mxu0 %v2384
      %2419 = vmatpush.bf16.msra.mxu0 %v2383
      %2420 = vmatpush.bf16.msra.mxu0 %v2382
      %2421 = vmatpush.bf16.msra.mxu0 %v2381
      %2422 = vmatpush.bf16.msra.mxu0 %v2380
      %2423 = vmatpush.bf16.msra.mxu0 %v2379
      %2424 = vmatmul.bf16.gmra.mxu0 %v2274
      %v2425 = vpop.f32.mrf.mxu0
      %v2426 = vadd.f32 %v2413, %v2425
      %v2427 = vpop.f32.mrf.mxu0
      %2428 = vdwg.mxu0
      %v2429 = vadd.f32 %v2072, %v2426
      %v2431 = vperm.slane %v1069, 0
      %v2433 = vadd.f32 %v2429, %v2431
      %s2434 = scalar_lea.vmem %s6, 6
      %v2435 = vld [vmem:[%s2434] sm:$0x1]
      %s2436 = scalar_lea.vmem %s6, 7
      %v2437 = vld [vmem:[%s2436] sm:$0x1]
      %s2438 = scalar_lea.vmem %s6, 8
      %v2439 = vld [vmem:[%s2438] sm:$0x1]
      %s2440 = scalar_lea.vmem %s6, 9
      %v2441 = vld [vmem:[%s2440] sm:$0x1]
      %s2442 = scalar_lea.vmem %s6, 10
      %v2443 = vld [vmem:[%s2442] sm:$0x1]
      %s2444 = scalar_lea.vmem %s6, 11
      %v2445 = vld [vmem:[%s2444] sm:$0x1]
      %v2446 = vsel %vm1070, %v2433, 0.0
      %2447 = vadd.xlane.f32.xlu0 %v2446
      %v2448 = vpop.xlane.xlu0 %2447
      %v2449 = vmul.f32 %v2448, %v1080
      %v2450 = vsub.f32 %v2433, %v2449
      %v2451 = vmul.f32 %v2450, %v2450
      %v2452 = vsel %vm1070, %v2451, 0.0
      %2453 = vadd.xlane.f32.xlu0 %v2452
      %v2454 = vpop.xlane.xlu0 %2453
      %v2455 = vmul.f32 %v2454, %v1080
      %v2456 = vadd.f32 %v2455, 1e-05
      %v2457 = vrsqrt.pop %v2456
      %v2458 = vmul.f32 %v2457, %v2456
      %v2459 = vmul.f32 %v2458, %v2457
      %v2460 = vmul.f32 0.5, %v2459
      %v2461 = vsub.f32 1.5, %v2460
      %v2462 = vmul.f32 %v2457, %v2461
      %vm2463 = vweird.f32 %v2456
      %vm2464 = vweird.f32 %v2457
      %vm2465 = vmor %vm2463, %vm2464
      %v2466 = vsel %vm2465, %v2457, %v2462
      %v2467 = vmul.f32 %v2450, %v2466
      %v2469 = vperm.slane %v2435, 0
      %v2471 = vmul.f32 %v2467, %v2469
      %v2473 = vperm.slane %v2437, 0
      %v2475 = vadd.f32 %v2471, %v2473
      %v2476 = vpack.c.bf16 %v2475, %v2475
      %s2477 = scalar_lea.vmem %s7, 384
      %v2478 = vld [vmem:[%s2477] sm:$0xf]
      %v2479 = vld [vmem:[%s2477 + $0x4] sm:$0xf]
      %v2480 = vld [vmem:[%s2477 + $0x8] sm:$0xf]
      %v2481 = vld [vmem:[%s2477 + $0xc] sm:$0xf]
      %v2482 = vld [vmem:[%s2477 + $0x10] sm:$0xf]
      %v2483 = vld [vmem:[%s2477 + $0x14] sm:$0xf]
      %v2484 = vld [vmem:[%s2477 + $0x18] sm:$0xf]
      %v2485 = vld [vmem:[%s2477 + $0x1c] sm:$0xf]
      %s2486 = scalar_lea.vmem %s8, 12
      %v2487 = vld [vmem:[%s2486] sm:$0x1]
      %v2489 = vperm.slane %v2487, 0
      %v2499 = vunpack.c.l.b16 %v2478
      %v2500 = vunpack.c.l.b16 %v2479
      %v2501 = vunpack.c.l.b16 %v2480
      %v2502 = vunpack.c.l.b16 %v2481
      %v2503 = vunpack.c.l.b16 %v2482
      %v2504 = vunpack.c.l.b16 %v2483
      %v2505 = vunpack.c.l.b16 %v2484
      %v2506 = vunpack.c.l.b16 %v2485
      %v2507 = vpack.c.b16 %v2500, %v2499
      %v2508 = vpack.c.b16 %v2502, %v2501
      %v2509 = vpack.c.b16 %v2504, %v2503
      %v2510 = vpack.c.b16 %v2506, %v2505
      %v2516 = vsel %vm956, %v2476, 0
      %2518 = vmatpush.bf16.msra.mxu0 0
      %2519 = vmatpush.bf16.msra.mxu0 0
      %2520 = vmatpush.bf16.msra.mxu0 0
      %2521 = vmatpush.bf16.msra.mxu0 0
      %2522 = vmatpush.bf16.msra.mxu0 %v2510
      %2523 = vmatpush.bf16.msra.mxu0 %v2509
      %2524 = vmatpush.bf16.msra.mxu0 %v2508
      %2525 = vmatpush.bf16.msra.mxu0 %v2507
      %2526 = vmatmul.bf16.gmra.mxu0 %v2516
      %v2527 = vpop.f32.mrf.mxu0
      %v2528 = vadd.f32 %v2489, %v2527
      %v2529 = vpop.f32.mrf.mxu0
      %2530 = vdwg.mxu0
      %s2531 = scalar_lea.vmem %s7, 512
      %v2532 = vld [vmem:[%s2531] sm:$0xf]
      %v2533 = vld [vmem:[%s2531 + $0x4] sm:$0xf]
      %v2534 = vld [vmem:[%s2531 + $0x8] sm:$0xf]
      %v2535 = vld [vmem:[%s2531 + $0xc] sm:$0xf]
      %v2536 = vld [vmem:[%s2531 + $0x10] sm:$0xf]
      %v2537 = vld [vmem:[%s2531 + $0x14] sm:$0xf]
      %v2538 = vld [vmem:[%s2531 + $0x18] sm:$0xf]
      %v2539 = vld [vmem:[%s2531 + $0x1c] sm:$0xf]
      %s2540 = scalar_lea.vmem %s8, 16
      %v2541 = vld [vmem:[%s2540] sm:$0x1]
      %v2543 = vperm.slane %v2541, 0
      %v2553 = vunpack.c.l.b16 %v2532
      %v2554 = vunpack.c.l.b16 %v2533
      %v2555 = vunpack.c.l.b16 %v2534
      %v2556 = vunpack.c.l.b16 %v2535
      %v2557 = vunpack.c.l.b16 %v2536
      %v2558 = vunpack.c.l.b16 %v2537
      %v2559 = vunpack.c.l.b16 %v2538
      %v2560 = vunpack.c.l.b16 %v2539
      %v2561 = vpack.c.b16 %v2554, %v2553
      %v2562 = vpack.c.b16 %v2556, %v2555
      %v2563 = vpack.c.b16 %v2558, %v2557
      %v2564 = vpack.c.b16 %v2560, %v2559
      %2569 = vmatpush.bf16.msra.mxu0 0
      %2570 = vmatpush.bf16.msra.mxu0 0
      %2571 = vmatpush.bf16.msra.mxu0 0
      %2572 = vmatpush.bf16.msra.mxu0 0
      %2573 = vmatpush.bf16.msra.mxu0 %v2564
      %2574 = vmatpush.bf16.msra.mxu0 %v2563
      %2575 = vmatpush.bf16.msra.mxu0 %v2562
      %2576 = vmatpush.bf16.msra.mxu0 %v2561
      %2577 = vmatmul.bf16.gmra.mxu0 %v2516
      %v2578 = vpop.f32.mrf.mxu0
      %v2579 = vadd.f32 %v2543, %v2578
      %v2580 = vpop.f32.mrf.mxu0
      %2581 = vdwg.mxu0
      %s2582 = scalar_lea.vmem %s7, 640
      %v2583 = vld [vmem:[%s2582] sm:$0xf]
      %v2584 = vld [vmem:[%s2582 + $0x4] sm:$0xf]
      %v2585 = vld [vmem:[%s2582 + $0x8] sm:$0xf]
      %v2586 = vld [vmem:[%s2582 + $0xc] sm:$0xf]
      %v2587 = vld [vmem:[%s2582 + $0x10] sm:$0xf]
      %v2588 = vld [vmem:[%s2582 + $0x14] sm:$0xf]
      %v2589 = vld [vmem:[%s2582 + $0x18] sm:$0xf]
      %v2590 = vld [vmem:[%s2582 + $0x1c] sm:$0xf]
      %s2591 = scalar_lea.vmem %s8, 20
      %v2592 = vld [vmem:[%s2591] sm:$0x1]
      %v2594 = vperm.slane %v2592, 0
      %v2604 = vunpack.c.l.b16 %v2583
      %v2605 = vunpack.c.l.b16 %v2584
      %v2606 = vunpack.c.l.b16 %v2585
      %v2607 = vunpack.c.l.b16 %v2586
      %v2608 = vunpack.c.l.b16 %v2587
      %v2609 = vunpack.c.l.b16 %v2588
      %v2610 = vunpack.c.l.b16 %v2589
      %v2611 = vunpack.c.l.b16 %v2590
      %v2612 = vpack.c.b16 %v2605, %v2604
      %v2613 = vpack.c.b16 %v2607, %v2606
      %v2614 = vpack.c.b16 %v2609, %v2608
      %v2615 = vpack.c.b16 %v2611, %v2610
      %2620 = vmatpush.bf16.msra.mxu0 0
      %2621 = vmatpush.bf16.msra.mxu0 0
      %2622 = vmatpush.bf16.msra.mxu0 0
      %2623 = vmatpush.bf16.msra.mxu0 0
      %2624 = vmatpush.bf16.msra.mxu0 %v2615
      %2625 = vmatpush.bf16.msra.mxu0 %v2614
      %2626 = vmatpush.bf16.msra.mxu0 %v2613
      %2627 = vmatpush.bf16.msra.mxu0 %v2612
      %2628 = vmatmul.bf16.gmra.mxu0 %v2516
      %v2629 = vpop.f32.mrf.mxu0
      %v2630 = vadd.f32 %v2594, %v2629
      %v2631 = vpop.f32.mrf.mxu0
      %2632 = vdwg.mxu0
      %v2634 = vsel %vm1035, %v2528, 0
      %v2637 = vsel %vm1035, %v2579, 0
      %2639 = vmatpush.xpose.msra.mxu0 0.0
      %2640 = vmatpush.xpose.msra.mxu0 0.0
      %2641 = vmatpush.xpose.msra.mxu0 0.0
      %2642 = vmatpush.xpose.msra.mxu0 0.0
      %2643 = vmatpush.xpose.msra.mxu0 0.0
      %2644 = vmatpush.xpose.msra.mxu0 0.0
      %2645 = vmatpush.xpose.msra.mxu0 0.0
      %2646 = vmatpush.xpose.msra.mxu0 0.0
      %2647 = vmatpush.xpose.msra.mxu0 0.0
      %2648 = vmatpush.xpose.msra.mxu0 0.0
      %2649 = vmatpush.xpose.msra.mxu0 0.0
      %2650 = vmatpush.xpose.msra.mxu0 0.0
      %2651 = vmatpush.xpose.msra.mxu0 0.0
      %2652 = vmatpush.xpose.msra.mxu0 0.0
      %2653 = vmatpush.xpose.msra.mxu0 0.0
      %2654 = vmatpush.xpose.msra.mxu0 %v2637
      %2655 = vmatmul.f32.gmra.mxu0 %v2634
      %v2656 = vpop.f32.mrf.mxu0
      %v2657 = vadd.f32 0.0, %v2656
      %2658 = vdwg.mxu0
      %v2659 = vmul.f32 %v2657, 0.25
      %v2660 = vsel %vm1290, %v2659, -inf
      %2661 = vmax.xlane.f32.xlu0 %v2660
      %v2662 = vpop.xlane.xlu0 %2661
      %v2663 = vsub.f32 %v2659, %v2662
      %v2664 = vmul.f32 %v2663, 1.442695
      %v2665 = vpow.pop %v2664
      %v2666 = vsel %vm1290, %v2665, 0.0
      %2667 = vadd.xlane.f32.xlu0 %v2666
      %v2668 = vpop.xlane.xlu0 %2667
      %v2669 = vrcp.pop %v2668
      %v2670 = vmul.f32 %v2665, %v2669
      %v2671 = vpack.c.bf16 %v2670, %v2670
      %v2672 = vpack.c.bf16 %v2630, %v2630
      %v2674 = vsel %vm1304, %v2671, 0
      %v2677 = vand.u32 %v2672, %v1310
      %2679 = vmatpush.bf16.msra.mxu0 0
      %2680 = vmatpush.bf16.msra.mxu0 0
      %2681 = vmatpush.bf16.msra.mxu0 0
      %2682 = vmatpush.bf16.msra.mxu0 0
      %2683 = vmatpush.bf16.msra.mxu0 0
      %2684 = vmatpush.bf16.msra.mxu0 0
      %2685 = vmatpush.bf16.msra.mxu0 0
      %2686 = vmatpush.bf16.msra.mxu0 %v2677
      %2687 = vmatmul.bf16.gmra.mxu0 %v2674
      %v2688 = vpop.f32.mrf.mxu0
      %v2689 = vadd.f32 0.0, %v2688
      %v2690 = vpop.f32.mrf.mxu0
      %2691 = vdwg.mxu0
      %v2692 = vpack.c.bf16 %v2689, %v2689
      %s2693 = scalar_lea.vmem %s9, 32
      %v2694 = vld [vmem:[%s2693] sm:$0xf]
      %v2695 = vld [vmem:[%s2693 + $0x4] sm:$0xf]
      %s2696 = scalar_lea.vmem %s7, 416
      %v2697 = vld [vmem:[%s2696] sm:$0xf]
      %v2698 = vld [vmem:[%s2696 + $0x4] sm:$0xf]
      %v2699 = vld [vmem:[%s2696 + $0x8] sm:$0xf]
      %v2700 = vld [vmem:[%s2696 + $0xc] sm:$0xf]
      %v2701 = vld [vmem:[%s2696 + $0x10] sm:$0xf]
      %v2702 = vld [vmem:[%s2696 + $0x14] sm:$0xf]
      %v2703 = vld [vmem:[%s2696 + $0x18] sm:$0xf]
      %v2704 = vld [vmem:[%s2696 + $0x1c] sm:$0xf]
      %s2705 = scalar_lea.vmem %s8, 13
      %v2706 = vld [vmem:[%s2705] sm:$0x1]
      %v2708 = vperm.slane %v2706, 0
      %v2718 = vunpack.c.l.b16 %v2697
      %v2719 = vunpack.c.l.b16 %v2698
      %v2720 = vunpack.c.l.b16 %v2699
      %v2721 = vunpack.c.l.b16 %v2700
      %v2722 = vunpack.c.l.b16 %v2701
      %v2723 = vunpack.c.l.b16 %v2702
      %v2724 = vunpack.c.l.b16 %v2703
      %v2725 = vunpack.c.l.b16 %v2704
      %v2726 = vpack.c.b16 %v2719, %v2718
      %v2727 = vpack.c.b16 %v2721, %v2720
      %v2728 = vpack.c.b16 %v2723, %v2722
      %v2729 = vpack.c.b16 %v2725, %v2724
      %2734 = vmatpush.bf16.msra.mxu0 0
      %2735 = vmatpush.bf16.msra.mxu0 0
      %2736 = vmatpush.bf16.msra.mxu0 0
      %2737 = vmatpush.bf16.msra.mxu0 0
      %2738 = vmatpush.bf16.msra.mxu0 %v2729
      %2739 = vmatpush.bf16.msra.mxu0 %v2728
      %2740 = vmatpush.bf16.msra.mxu0 %v2727
      %2741 = vmatpush.bf16.msra.mxu0 %v2726
      %2742 = vmatmul.bf16.gmra.mxu0 %v2516
      %v2743 = vpop.f32.mrf.mxu0
      %v2744 = vadd.f32 %v2708, %v2743
      %v2745 = vpop.f32.mrf.mxu0
      %2746 = vdwg.mxu0
      %s2747 = scalar_lea.vmem %s7, 544
      %v2748 = vld [vmem:[%s2747] sm:$0xf]
      %v2749 = vld [vmem:[%s2747 + $0x4] sm:$0xf]
      %v2750 = vld [vmem:[%s2747 + $0x8] sm:$0xf]
      %v2751 = vld [vmem:[%s2747 + $0xc] sm:$0xf]
      %v2752 = vld [vmem:[%s2747 + $0x10] sm:$0xf]
      %v2753 = vld [vmem:[%s2747 + $0x14] sm:$0xf]
      %v2754 = vld [vmem:[%s2747 + $0x18] sm:$0xf]
      %v2755 = vld [vmem:[%s2747 + $0x1c] sm:$0xf]
      %s2756 = scalar_lea.vmem %s8, 17
      %v2757 = vld [vmem:[%s2756] sm:$0x1]
      %v2759 = vperm.slane %v2757, 0
      %v2769 = vunpack.c.l.b16 %v2748
      %v2770 = vunpack.c.l.b16 %v2749
      %v2771 = vunpack.c.l.b16 %v2750
      %v2772 = vunpack.c.l.b16 %v2751
      %v2773 = vunpack.c.l.b16 %v2752
      %v2774 = vunpack.c.l.b16 %v2753
      %v2775 = vunpack.c.l.b16 %v2754
      %v2776 = vunpack.c.l.b16 %v2755
      %v2777 = vpack.c.b16 %v2770, %v2769
      %v2778 = vpack.c.b16 %v2772, %v2771
      %v2779 = vpack.c.b16 %v2774, %v2773
      %v2780 = vpack.c.b16 %v2776, %v2775
      %2785 = vmatpush.bf16.msra.mxu0 0
      %2786 = vmatpush.bf16.msra.mxu0 0
      %2787 = vmatpush.bf16.msra.mxu0 0
      %2788 = vmatpush.bf16.msra.mxu0 0
      %2789 = vmatpush.bf16.msra.mxu0 %v2780
      %2790 = vmatpush.bf16.msra.mxu0 %v2779
      %2791 = vmatpush.bf16.msra.mxu0 %v2778
      %2792 = vmatpush.bf16.msra.mxu0 %v2777
      %2793 = vmatmul.bf16.gmra.mxu0 %v2516
      %v2794 = vpop.f32.mrf.mxu0
      %v2795 = vadd.f32 %v2759, %v2794
      %v2796 = vpop.f32.mrf.mxu0
      %2797 = vdwg.mxu0
      %s2798 = scalar_lea.vmem %s7, 672
      %v2799 = vld [vmem:[%s2798] sm:$0xf]
      %v2800 = vld [vmem:[%s2798 + $0x4] sm:$0xf]
      %v2801 = vld [vmem:[%s2798 + $0x8] sm:$0xf]
      %v2802 = vld [vmem:[%s2798 + $0xc] sm:$0xf]
      %v2803 = vld [vmem:[%s2798 + $0x10] sm:$0xf]
      %v2804 = vld [vmem:[%s2798 + $0x14] sm:$0xf]
      %v2805 = vld [vmem:[%s2798 + $0x18] sm:$0xf]
      %v2806 = vld [vmem:[%s2798 + $0x1c] sm:$0xf]
      %s2807 = scalar_lea.vmem %s8, 21
      %v2808 = vld [vmem:[%s2807] sm:$0x1]
      %v2810 = vperm.slane %v2808, 0
      %v2820 = vunpack.c.l.b16 %v2799
      %v2821 = vunpack.c.l.b16 %v2800
      %v2822 = vunpack.c.l.b16 %v2801
      %v2823 = vunpack.c.l.b16 %v2802
      %v2824 = vunpack.c.l.b16 %v2803
      %v2825 = vunpack.c.l.b16 %v2804
      %v2826 = vunpack.c.l.b16 %v2805
      %v2827 = vunpack.c.l.b16 %v2806
      %v2828 = vpack.c.b16 %v2821, %v2820
      %v2829 = vpack.c.b16 %v2823, %v2822
      %v2830 = vpack.c.b16 %v2825, %v2824
      %v2831 = vpack.c.b16 %v2827, %v2826
      %2836 = vmatpush.bf16.msra.mxu0 0
      %2837 = vmatpush.bf16.msra.mxu0 0
      %2838 = vmatpush.bf16.msra.mxu0 0
      %2839 = vmatpush.bf16.msra.mxu0 0
      %2840 = vmatpush.bf16.msra.mxu0 %v2831
      %2841 = vmatpush.bf16.msra.mxu0 %v2830
      %2842 = vmatpush.bf16.msra.mxu0 %v2829
      %2843 = vmatpush.bf16.msra.mxu0 %v2828
      %2844 = vmatmul.bf16.gmra.mxu0 %v2516
      %v2845 = vpop.f32.mrf.mxu0
      %v2846 = vadd.f32 %v2810, %v2845
      %v2847 = vpop.f32.mrf.mxu0
      %2848 = vdwg.mxu0
      %v2850 = vsel %vm1035, %v2744, 0
      %v2853 = vsel %vm1035, %v2795, 0
      %2855 = vmatpush.xpose.msra.mxu0 0.0
      %2856 = vmatpush.xpose.msra.mxu0 0.0
      %2857 = vmatpush.xpose.msra.mxu0 0.0
      %2858 = vmatpush.xpose.msra.mxu0 0.0
      %2859 = vmatpush.xpose.msra.mxu0 0.0
      %2860 = vmatpush.xpose.msra.mxu0 0.0
      %2861 = vmatpush.xpose.msra.mxu0 0.0
      %2862 = vmatpush.xpose.msra.mxu0 0.0
      %2863 = vmatpush.xpose.msra.mxu0 0.0
      %2864 = vmatpush.xpose.msra.mxu0 0.0
      %2865 = vmatpush.xpose.msra.mxu0 0.0
      %2866 = vmatpush.xpose.msra.mxu0 0.0
      %2867 = vmatpush.xpose.msra.mxu0 0.0
      %2868 = vmatpush.xpose.msra.mxu0 0.0
      %2869 = vmatpush.xpose.msra.mxu0 0.0
      %2870 = vmatpush.xpose.msra.mxu0 %v2853
      %2871 = vmatmul.f32.gmra.mxu0 %v2850
      %v2872 = vpop.f32.mrf.mxu0
      %v2873 = vadd.f32 0.0, %v2872
      %2874 = vdwg.mxu0
      %v2875 = vmul.f32 %v2873, 0.25
      %v2876 = vsel %vm1290, %v2875, -inf
      %2877 = vmax.xlane.f32.xlu0 %v2876
      %v2878 = vpop.xlane.xlu0 %2877
      %v2879 = vsub.f32 %v2875, %v2878
      %v2880 = vmul.f32 %v2879, 1.442695
      %v2881 = vpow.pop %v2880
      %v2882 = vsel %vm1290, %v2881, 0.0
      %2883 = vadd.xlane.f32.xlu0 %v2882
      %v2884 = vpop.xlane.xlu0 %2883
      %v2885 = vrcp.pop %v2884
      %v2886 = vmul.f32 %v2881, %v2885
      %v2887 = vpack.c.bf16 %v2886, %v2886
      %v2888 = vpack.c.bf16 %v2846, %v2846
      %v2890 = vsel %vm1304, %v2887, 0
      %v2893 = vand.u32 %v2888, %v1310
      %2895 = vmatpush.bf16.msra.mxu0 0
      %2896 = vmatpush.bf16.msra.mxu0 0
      %2897 = vmatpush.bf16.msra.mxu0 0
      %2898 = vmatpush.bf16.msra.mxu0 0
      %2899 = vmatpush.bf16.msra.mxu0 0
      %2900 = vmatpush.bf16.msra.mxu0 0
      %2901 = vmatpush.bf16.msra.mxu0 0
      %2902 = vmatpush.bf16.msra.mxu0 %v2893
      %2903 = vmatmul.bf16.gmra.mxu0 %v2890
      %v2904 = vpop.f32.mrf.mxu0
      %v2905 = vadd.f32 0.0, %v2904
      %v2906 = vpop.f32.mrf.mxu0
      %2907 = vdwg.mxu0
      %v2908 = vpack.c.bf16 %v2905, %v2905
      %s2909 = scalar_lea.vmem %s9, 40
      %v2910 = vld [vmem:[%s2909] sm:$0xf]
      %v2911 = vld [vmem:[%s2909 + $0x4] sm:$0xf]
      %v2914 = vunpack.c.l.b16 %v2910
      %v2915 = vunpack.c.l.b16 %v2911
      %v2916 = vpack.c.b16 %v2915, %v2914
      %v2919 = vsel %vm1035, %v2908, 0
      %2921 = vmatpush.bf16.msra.mxu0 0
      %2922 = vmatpush.bf16.msra.mxu0 0
      %2923 = vmatpush.bf16.msra.mxu0 0
      %2924 = vmatpush.bf16.msra.mxu0 0
      %2925 = vmatpush.bf16.msra.mxu0 0
      %2926 = vmatpush.bf16.msra.mxu0 0
      %2927 = vmatpush.bf16.msra.mxu0 0
      %2928 = vmatpush.bf16.msra.mxu0 %v2916
      %2929 = vmatmul.bf16.gmra.mxu0 %v2919
      %v2930 = vpop.f32.mrf.mxu0
      %v2931 = vadd.f32 0.0, %v2930
      %v2932 = vpop.f32.mrf.mxu0
      %2933 = vdwg.mxu0
      %v2936 = vunpack.c.l.b16 %v2694
      %v2937 = vunpack.c.l.b16 %v2695
      %v2938 = vpack.c.b16 %v2937, %v2936
      %v2941 = vsel %vm1035, %v2692, 0
      %2943 = vmatpush.bf16.msra.mxu0 0
      %2944 = vmatpush.bf16.msra.mxu0 0
      %2945 = vmatpush.bf16.msra.mxu0 0
      %2946 = vmatpush.bf16.msra.mxu0 0
      %2947 = vmatpush.bf16.msra.mxu0 0
      %2948 = vmatpush.bf16.msra.mxu0 0
      %2949 = vmatpush.bf16.msra.mxu0 0
      %2950 = vmatpush.bf16.msra.mxu0 %v2938
      %2951 = vmatmul.bf16.gmra.mxu0 %v2941
      %v2952 = vpop.f32.mrf.mxu0
      %v2953 = vadd.f32 %v2931, %v2952
      %v2954 = vpop.f32.mrf.mxu0
      %2955 = vdwg.mxu0
      %s2956 = scalar_lea.vmem %s7, 448
      %v2957 = vld [vmem:[%s2956] sm:$0xf]
      %v2958 = vld [vmem:[%s2956 + $0x4] sm:$0xf]
      %v2959 = vld [vmem:[%s2956 + $0x8] sm:$0xf]
      %v2960 = vld [vmem:[%s2956 + $0xc] sm:$0xf]
      %v2961 = vld [vmem:[%s2956 + $0x10] sm:$0xf]
      %v2962 = vld [vmem:[%s2956 + $0x14] sm:$0xf]
      %v2963 = vld [vmem:[%s2956 + $0x18] sm:$0xf]
      %v2964 = vld [vmem:[%s2956 + $0x1c] sm:$0xf]
      %s2965 = scalar_lea.vmem %s8, 14
      %v2966 = vld [vmem:[%s2965] sm:$0x1]
      %v2968 = vperm.slane %v2966, 0
      %v2978 = vunpack.c.l.b16 %v2957
      %v2979 = vunpack.c.l.b16 %v2958
      %v2980 = vunpack.c.l.b16 %v2959
      %v2981 = vunpack.c.l.b16 %v2960
      %v2982 = vunpack.c.l.b16 %v2961
      %v2983 = vunpack.c.l.b16 %v2962
      %v2984 = vunpack.c.l.b16 %v2963
      %v2985 = vunpack.c.l.b16 %v2964
      %v2986 = vpack.c.b16 %v2979, %v2978
      %v2987 = vpack.c.b16 %v2981, %v2980
      %v2988 = vpack.c.b16 %v2983, %v2982
      %v2989 = vpack.c.b16 %v2985, %v2984
      %2994 = vmatpush.bf16.msra.mxu0 0
      %2995 = vmatpush.bf16.msra.mxu0 0
      %2996 = vmatpush.bf16.msra.mxu0 0
      %2997 = vmatpush.bf16.msra.mxu0 0
      %2998 = vmatpush.bf16.msra.mxu0 %v2989
      %2999 = vmatpush.bf16.msra.mxu0 %v2988
      %3000 = vmatpush.bf16.msra.mxu0 %v2987
      %3001 = vmatpush.bf16.msra.mxu0 %v2986
      %3002 = vmatmul.bf16.gmra.mxu0 %v2516
      %v3003 = vpop.f32.mrf.mxu0
      %v3004 = vadd.f32 %v2968, %v3003
      %v3005 = vpop.f32.mrf.mxu0
      %3006 = vdwg.mxu0
      %s3007 = scalar_lea.vmem %s7, 576
      %v3008 = vld [vmem:[%s3007] sm:$0xf]
      %v3009 = vld [vmem:[%s3007 + $0x4] sm:$0xf]
      %v3010 = vld [vmem:[%s3007 + $0x8] sm:$0xf]
      %v3011 = vld [vmem:[%s3007 + $0xc] sm:$0xf]
      %v3012 = vld [vmem:[%s3007 + $0x10] sm:$0xf]
      %v3013 = vld [vmem:[%s3007 + $0x14] sm:$0xf]
      %v3014 = vld [vmem:[%s3007 + $0x18] sm:$0xf]
      %v3015 = vld [vmem:[%s3007 + $0x1c] sm:$0xf]
      %s3016 = scalar_lea.vmem %s8, 18
      %v3017 = vld [vmem:[%s3016] sm:$0x1]
      %v3019 = vperm.slane %v3017, 0
      %v3029 = vunpack.c.l.b16 %v3008
      %v3030 = vunpack.c.l.b16 %v3009
      %v3031 = vunpack.c.l.b16 %v3010
      %v3032 = vunpack.c.l.b16 %v3011
      %v3033 = vunpack.c.l.b16 %v3012
      %v3034 = vunpack.c.l.b16 %v3013
      %v3035 = vunpack.c.l.b16 %v3014
      %v3036 = vunpack.c.l.b16 %v3015
      %v3037 = vpack.c.b16 %v3030, %v3029
      %v3038 = vpack.c.b16 %v3032, %v3031
      %v3039 = vpack.c.b16 %v3034, %v3033
      %v3040 = vpack.c.b16 %v3036, %v3035
      %3045 = vmatpush.bf16.msra.mxu0 0
      %3046 = vmatpush.bf16.msra.mxu0 0
      %3047 = vmatpush.bf16.msra.mxu0 0
      %3048 = vmatpush.bf16.msra.mxu0 0
      %3049 = vmatpush.bf16.msra.mxu0 %v3040
      %3050 = vmatpush.bf16.msra.mxu0 %v3039
      %3051 = vmatpush.bf16.msra.mxu0 %v3038
      %3052 = vmatpush.bf16.msra.mxu0 %v3037
      %3053 = vmatmul.bf16.gmra.mxu0 %v2516
      %v3054 = vpop.f32.mrf.mxu0
      %v3055 = vadd.f32 %v3019, %v3054
      %v3056 = vpop.f32.mrf.mxu0
      %3057 = vdwg.mxu0
      %s3058 = scalar_lea.vmem %s7, 704
      %v3059 = vld [vmem:[%s3058] sm:$0xf]
      %v3060 = vld [vmem:[%s3058 + $0x4] sm:$0xf]
      %v3061 = vld [vmem:[%s3058 + $0x8] sm:$0xf]
      %v3062 = vld [vmem:[%s3058 + $0xc] sm:$0xf]
      %v3063 = vld [vmem:[%s3058 + $0x10] sm:$0xf]
      %v3064 = vld [vmem:[%s3058 + $0x14] sm:$0xf]
      %v3065 = vld [vmem:[%s3058 + $0x18] sm:$0xf]
      %v3066 = vld [vmem:[%s3058 + $0x1c] sm:$0xf]
      %s3067 = scalar_lea.vmem %s8, 22
      %v3068 = vld [vmem:[%s3067] sm:$0x1]
      %v3070 = vperm.slane %v3068, 0
      %v3080 = vunpack.c.l.b16 %v3059
      %v3081 = vunpack.c.l.b16 %v3060
      %v3082 = vunpack.c.l.b16 %v3061
      %v3083 = vunpack.c.l.b16 %v3062
      %v3084 = vunpack.c.l.b16 %v3063
      %v3085 = vunpack.c.l.b16 %v3064
      %v3086 = vunpack.c.l.b16 %v3065
      %v3087 = vunpack.c.l.b16 %v3066
      %v3088 = vpack.c.b16 %v3081, %v3080
      %v3089 = vpack.c.b16 %v3083, %v3082
      %v3090 = vpack.c.b16 %v3085, %v3084
      %v3091 = vpack.c.b16 %v3087, %v3086
      %3096 = vmatpush.bf16.msra.mxu0 0
      %3097 = vmatpush.bf16.msra.mxu0 0
      %3098 = vmatpush.bf16.msra.mxu0 0
      %3099 = vmatpush.bf16.msra.mxu0 0
      %3100 = vmatpush.bf16.msra.mxu0 %v3091
      %3101 = vmatpush.bf16.msra.mxu0 %v3090
      %3102 = vmatpush.bf16.msra.mxu0 %v3089
      %3103 = vmatpush.bf16.msra.mxu0 %v3088
      %3104 = vmatmul.bf16.gmra.mxu0 %v2516
      %v3105 = vpop.f32.mrf.mxu0
      %v3106 = vadd.f32 %v3070, %v3105
      %v3107 = vpop.f32.mrf.mxu0
      %3108 = vdwg.mxu0
      %v3110 = vsel %vm1035, %v3004, 0
      %v3113 = vsel %vm1035, %v3055, 0
      %3115 = vmatpush.xpose.msra.mxu0 0.0
      %3116 = vmatpush.xpose.msra.mxu0 0.0
      %3117 = vmatpush.xpose.msra.mxu0 0.0
      %3118 = vmatpush.xpose.msra.mxu0 0.0
      %3119 = vmatpush.xpose.msra.mxu0 0.0
      %3120 = vmatpush.xpose.msra.mxu0 0.0
      %3121 = vmatpush.xpose.msra.mxu0 0.0
      %3122 = vmatpush.xpose.msra.mxu0 0.0
      %3123 = vmatpush.xpose.msra.mxu0 0.0
      %3124 = vmatpush.xpose.msra.mxu0 0.0
      %3125 = vmatpush.xpose.msra.mxu0 0.0
      %3126 = vmatpush.xpose.msra.mxu0 0.0
      %3127 = vmatpush.xpose.msra.mxu0 0.0
      %3128 = vmatpush.xpose.msra.mxu0 0.0
      %3129 = vmatpush.xpose.msra.mxu0 0.0
      %3130 = vmatpush.xpose.msra.mxu0 %v3113
      %3131 = vmatmul.f32.gmra.mxu0 %v3110
      %v3132 = vpop.f32.mrf.mxu0
      %v3133 = vadd.f32 0.0, %v3132
      %3134 = vdwg.mxu0
      %v3135 = vmul.f32 %v3133, 0.25
      %v3136 = vsel %vm1290, %v3135, -inf
      %3137 = vmax.xlane.f32.xlu0 %v3136
      %v3138 = vpop.xlane.xlu0 %3137
      %v3139 = vsub.f32 %v3135, %v3138
      %v3140 = vmul.f32 %v3139, 1.442695
      %v3141 = vpow.pop %v3140
      %v3142 = vsel %vm1290, %v3141, 0.0
      %3143 = vadd.xlane.f32.xlu0 %v3142
      %v3144 = vpop.xlane.xlu0 %3143
      %v3145 = vrcp.pop %v3144
      %v3146 = vmul.f32 %v3141, %v3145
      %v3147 = vpack.c.bf16 %v3146, %v3146
      %v3148 = vpack.c.bf16 %v3106, %v3106
      %v3150 = vsel %vm1304, %v3147, 0
      %v3153 = vand.u32 %v3148, %v1310
      %3155 = vmatpush.bf16.msra.mxu0 0
      %3156 = vmatpush.bf16.msra.mxu0 0
      %3157 = vmatpush.bf16.msra.mxu0 0
      %3158 = vmatpush.bf16.msra.mxu0 0
      %3159 = vmatpush.bf16.msra.mxu0 0
      %3160 = vmatpush.bf16.msra.mxu0 0
      %3161 = vmatpush.bf16.msra.mxu0 0
      %3162 = vmatpush.bf16.msra.mxu0 %v3153
      %3163 = vmatmul.bf16.gmra.mxu0 %v3150
      %v3164 = vpop.f32.mrf.mxu0
      %v3165 = vadd.f32 0.0, %v3164
      %v3166 = vpop.f32.mrf.mxu0
      %3167 = vdwg.mxu0
      %v3168 = vpack.c.bf16 %v3165, %v3165
      %s3169 = scalar_lea.vmem %s9, 48
      %v3170 = vld [vmem:[%s3169] sm:$0xf]
      %v3171 = vld [vmem:[%s3169 + $0x4] sm:$0xf]
      %v3174 = vunpack.c.l.b16 %v3170
      %v3175 = vunpack.c.l.b16 %v3171
      %v3176 = vpack.c.b16 %v3175, %v3174
      %v3179 = vsel %vm1035, %v3168, 0
      %3181 = vmatpush.bf16.msra.mxu0 0
      %3182 = vmatpush.bf16.msra.mxu0 0
      %3183 = vmatpush.bf16.msra.mxu0 0
      %3184 = vmatpush.bf16.msra.mxu0 0
      %3185 = vmatpush.bf16.msra.mxu0 0
      %3186 = vmatpush.bf16.msra.mxu0 0
      %3187 = vmatpush.bf16.msra.mxu0 0
      %3188 = vmatpush.bf16.msra.mxu0 %v3176
      %3189 = vmatmul.bf16.gmra.mxu0 %v3179
      %v3190 = vpop.f32.mrf.mxu0
      %v3191 = vadd.f32 0.0, %v3190
      %v3192 = vpop.f32.mrf.mxu0
      %3193 = vdwg.mxu0
      %v3194 = vadd.f32 %v2953, %v3191
      %s3195 = scalar_lea.vmem %s7, 480
      %v3196 = vld [vmem:[%s3195] sm:$0xf]
      %v3197 = vld [vmem:[%s3195 + $0x4] sm:$0xf]
      %v3198 = vld [vmem:[%s3195 + $0x8] sm:$0xf]
      %v3199 = vld [vmem:[%s3195 + $0xc] sm:$0xf]
      %v3200 = vld [vmem:[%s3195 + $0x10] sm:$0xf]
      %v3201 = vld [vmem:[%s3195 + $0x14] sm:$0xf]
      %v3202 = vld [vmem:[%s3195 + $0x18] sm:$0xf]
      %v3203 = vld [vmem:[%s3195 + $0x1c] sm:$0xf]
      %s3204 = scalar_lea.vmem %s8, 15
      %v3205 = vld [vmem:[%s3204] sm:$0x1]
      %v3207 = vperm.slane %v3205, 0
      %v3217 = vunpack.c.l.b16 %v3196
      %v3218 = vunpack.c.l.b16 %v3197
      %v3219 = vunpack.c.l.b16 %v3198
      %v3220 = vunpack.c.l.b16 %v3199
      %v3221 = vunpack.c.l.b16 %v3200
      %v3222 = vunpack.c.l.b16 %v3201
      %v3223 = vunpack.c.l.b16 %v3202
      %v3224 = vunpack.c.l.b16 %v3203
      %v3225 = vpack.c.b16 %v3218, %v3217
      %v3226 = vpack.c.b16 %v3220, %v3219
      %v3227 = vpack.c.b16 %v3222, %v3221
      %v3228 = vpack.c.b16 %v3224, %v3223
      %3233 = vmatpush.bf16.msra.mxu0 0
      %3234 = vmatpush.bf16.msra.mxu0 0
      %3235 = vmatpush.bf16.msra.mxu0 0
      %3236 = vmatpush.bf16.msra.mxu0 0
      %3237 = vmatpush.bf16.msra.mxu0 %v3228
      %3238 = vmatpush.bf16.msra.mxu0 %v3227
      %3239 = vmatpush.bf16.msra.mxu0 %v3226
      %3240 = vmatpush.bf16.msra.mxu0 %v3225
      %3241 = vmatmul.bf16.gmra.mxu0 %v2516
      %v3242 = vpop.f32.mrf.mxu0
      %v3243 = vadd.f32 %v3207, %v3242
      %v3244 = vpop.f32.mrf.mxu0
      %3245 = vdwg.mxu0
      %s3246 = scalar_lea.vmem %s7, 608
      %v3247 = vld [vmem:[%s3246] sm:$0xf]
      %v3248 = vld [vmem:[%s3246 + $0x4] sm:$0xf]
      %v3249 = vld [vmem:[%s3246 + $0x8] sm:$0xf]
      %v3250 = vld [vmem:[%s3246 + $0xc] sm:$0xf]
      %v3251 = vld [vmem:[%s3246 + $0x10] sm:$0xf]
      %v3252 = vld [vmem:[%s3246 + $0x14] sm:$0xf]
      %v3253 = vld [vmem:[%s3246 + $0x18] sm:$0xf]
      %v3254 = vld [vmem:[%s3246 + $0x1c] sm:$0xf]
      %s3255 = scalar_lea.vmem %s8, 19
      %v3256 = vld [vmem:[%s3255] sm:$0x1]
      %v3258 = vperm.slane %v3256, 0
      %v3268 = vunpack.c.l.b16 %v3247
      %v3269 = vunpack.c.l.b16 %v3248
      %v3270 = vunpack.c.l.b16 %v3249
      %v3271 = vunpack.c.l.b16 %v3250
      %v3272 = vunpack.c.l.b16 %v3251
      %v3273 = vunpack.c.l.b16 %v3252
      %v3274 = vunpack.c.l.b16 %v3253
      %v3275 = vunpack.c.l.b16 %v3254
      %v3276 = vpack.c.b16 %v3269, %v3268
      %v3277 = vpack.c.b16 %v3271, %v3270
      %v3278 = vpack.c.b16 %v3273, %v3272
      %v3279 = vpack.c.b16 %v3275, %v3274
      %3284 = vmatpush.bf16.msra.mxu0 0
      %3285 = vmatpush.bf16.msra.mxu0 0
      %3286 = vmatpush.bf16.msra.mxu0 0
      %3287 = vmatpush.bf16.msra.mxu0 0
      %3288 = vmatpush.bf16.msra.mxu0 %v3279
      %3289 = vmatpush.bf16.msra.mxu0 %v3278
      %3290 = vmatpush.bf16.msra.mxu0 %v3277
      %3291 = vmatpush.bf16.msra.mxu0 %v3276
      %3292 = vmatmul.bf16.gmra.mxu0 %v2516
      %v3293 = vpop.f32.mrf.mxu0
      %v3294 = vadd.f32 %v3258, %v3293
      %v3295 = vpop.f32.mrf.mxu0
      %3296 = vdwg.mxu0
      %s3297 = scalar_lea.vmem %s7, 736
      %v3298 = vld [vmem:[%s3297] sm:$0xf]
      %v3299 = vld [vmem:[%s3297 + $0x4] sm:$0xf]
      %v3300 = vld [vmem:[%s3297 + $0x8] sm:$0xf]
      %v3301 = vld [vmem:[%s3297 + $0xc] sm:$0xf]
      %v3302 = vld [vmem:[%s3297 + $0x10] sm:$0xf]
      %v3303 = vld [vmem:[%s3297 + $0x14] sm:$0xf]
      %v3304 = vld [vmem:[%s3297 + $0x18] sm:$0xf]
      %v3305 = vld [vmem:[%s3297 + $0x1c] sm:$0xf]
      %s3306 = scalar_lea.vmem %s8, 23
      %v3307 = vld [vmem:[%s3306] sm:$0x1]
      %v3309 = vperm.slane %v3307, 0
      %v3319 = vunpack.c.l.b16 %v3298
      %v3320 = vunpack.c.l.b16 %v3299
      %v3321 = vunpack.c.l.b16 %v3300
      %v3322 = vunpack.c.l.b16 %v3301
      %v3323 = vunpack.c.l.b16 %v3302
      %v3324 = vunpack.c.l.b16 %v3303
      %v3325 = vunpack.c.l.b16 %v3304
      %v3326 = vunpack.c.l.b16 %v3305
      %v3327 = vpack.c.b16 %v3320, %v3319
      %v3328 = vpack.c.b16 %v3322, %v3321
      %v3329 = vpack.c.b16 %v3324, %v3323
      %v3330 = vpack.c.b16 %v3326, %v3325
      %3335 = vmatpush.bf16.msra.mxu0 0
      %3336 = vmatpush.bf16.msra.mxu0 0
      %3337 = vmatpush.bf16.msra.mxu0 0
      %3338 = vmatpush.bf16.msra.mxu0 0
      %3339 = vmatpush.bf16.msra.mxu0 %v3330
      %3340 = vmatpush.bf16.msra.mxu0 %v3329
      %3341 = vmatpush.bf16.msra.mxu0 %v3328
      %3342 = vmatpush.bf16.msra.mxu0 %v3327
      %3343 = vmatmul.bf16.gmra.mxu0 %v2516
      %v3344 = vpop.f32.mrf.mxu0
      %v3345 = vadd.f32 %v3309, %v3344
      %v3346 = vpop.f32.mrf.mxu0
      %3347 = vdwg.mxu0
      %v3349 = vsel %vm1035, %v3243, 0
      %v3352 = vsel %vm1035, %v3294, 0
      %3354 = vmatpush.xpose.msra.mxu0 0.0
      %3355 = vmatpush.xpose.msra.mxu0 0.0
      %3356 = vmatpush.xpose.msra.mxu0 0.0
      %3357 = vmatpush.xpose.msra.mxu0 0.0
      %3358 = vmatpush.xpose.msra.mxu0 0.0
      %3359 = vmatpush.xpose.msra.mxu0 0.0
      %3360 = vmatpush.xpose.msra.mxu0 0.0
      %3361 = vmatpush.xpose.msra.mxu0 0.0
      %3362 = vmatpush.xpose.msra.mxu0 0.0
      %3363 = vmatpush.xpose.msra.mxu0 0.0
      %3364 = vmatpush.xpose.msra.mxu0 0.0
      %3365 = vmatpush.xpose.msra.mxu0 0.0
      %3366 = vmatpush.xpose.msra.mxu0 0.0
      %3367 = vmatpush.xpose.msra.mxu0 0.0
      %3368 = vmatpush.xpose.msra.mxu0 0.0
      %3369 = vmatpush.xpose.msra.mxu0 %v3352
      %3370 = vmatmul.f32.gmra.mxu0 %v3349
      %v3371 = vpop.f32.mrf.mxu0
      %v3372 = vadd.f32 0.0, %v3371
      %3373 = vdwg.mxu0
      %v3374 = vmul.f32 %v3372, 0.25
      %v3375 = vsel %vm1290, %v3374, -inf
      %3376 = vmax.xlane.f32.xlu0 %v3375
      %v3377 = vpop.xlane.xlu0 %3376
      %v3378 = vsub.f32 %v3374, %v3377
      %v3379 = vmul.f32 %v3378, 1.442695
      %v3380 = vpow.pop %v3379
      %v3381 = vsel %vm1290, %v3380, 0.0
      %3382 = vadd.xlane.f32.xlu0 %v3381
      %v3383 = vpop.xlane.xlu0 %3382
      %v3384 = vrcp.pop %v3383
      %v3385 = vmul.f32 %v3380, %v3384
      %v3386 = vpack.c.bf16 %v3385, %v3385
      %v3387 = vpack.c.bf16 %v3345, %v3345
      %v3389 = vsel %vm1304, %v3386, 0
      %v3392 = vand.u32 %v3387, %v1310
      %3394 = vmatpush.bf16.msra.mxu0 0
      %3395 = vmatpush.bf16.msra.mxu0 0
      %3396 = vmatpush.bf16.msra.mxu0 0
      %3397 = vmatpush.bf16.msra.mxu0 0
      %3398 = vmatpush.bf16.msra.mxu0 0
      %3399 = vmatpush.bf16.msra.mxu0 0
      %3400 = vmatpush.bf16.msra.mxu0 0
      %3401 = vmatpush.bf16.msra.mxu0 %v3392
      %3402 = vmatmul.bf16.gmra.mxu0 %v3389
      %v3403 = vpop.f32.mrf.mxu0
      %v3404 = vadd.f32 0.0, %v3403
      %v3405 = vpop.f32.mrf.mxu0
      %3406 = vdwg.mxu0
      %v3407 = vpack.c.bf16 %v3404, %v3404
      %s3408 = scalar_lea.vmem %s9, 56
      %v3409 = vld [vmem:[%s3408] sm:$0xf]
      %v3410 = vld [vmem:[%s3408 + $0x4] sm:$0xf]
      %v3413 = vunpack.c.l.b16 %v3409
      %v3414 = vunpack.c.l.b16 %v3410
      %v3415 = vpack.c.b16 %v3414, %v3413
      %v3418 = vsel %vm1035, %v3407, 0
      %3420 = vmatpush.bf16.msra.mxu0 0
      %3421 = vmatpush.bf16.msra.mxu0 0
      %3422 = vmatpush.bf16.msra.mxu0 0
      %3423 = vmatpush.bf16.msra.mxu0 0
      %3424 = vmatpush.bf16.msra.mxu0 0
      %3425 = vmatpush.bf16.msra.mxu0 0
      %3426 = vmatpush.bf16.msra.mxu0 0
      %3427 = vmatpush.bf16.msra.mxu0 %v3415
      %3428 = vmatmul.bf16.gmra.mxu0 %v3418
      %v3429 = vpop.f32.mrf.mxu0
      %v3430 = vadd.f32 0.0, %v3429
      %v3431 = vpop.f32.mrf.mxu0
      %3432 = vdwg.mxu0
      %v3433 = vadd.f32 %v3194, %v3430
      %v3434 = vadd.f32 %v2433, %v3433
      %v3436 = vperm.slane %v2443, 0
      %v3438 = vadd.f32 %v3434, %v3436
      %v3439 = vsel %vm1070, %v3438, 0.0
      %3440 = vadd.xlane.f32.xlu0 %v3439
      %v3441 = vpop.xlane.xlu0 %3440
      %v3442 = vmul.f32 %v3441, %v1080
      %v3443 = vsub.f32 %v3438, %v3442
      %v3444 = vmul.f32 %v3443, %v3443
      %v3445 = vsel %vm1070, %v3444, 0.0
      %3446 = vadd.xlane.f32.xlu0 %v3445
      %v3447 = vpop.xlane.xlu0 %3446
      %v3448 = vmul.f32 %v3447, %v1080
      %v3449 = vadd.f32 %v3448, 1e-05
      %v3450 = vrsqrt.pop %v3449
      %v3451 = vmul.f32 %v3450, %v3449
      %v3452 = vmul.f32 %v3451, %v3450
      %v3453 = vmul.f32 0.5, %v3452
      %v3454 = vsub.f32 1.5, %v3453
      %v3455 = vmul.f32 %v3450, %v3454
      %vm3456 = vweird.f32 %v3449
      %vm3457 = vweird.f32 %v3450
      %vm3458 = vmor %vm3456, %vm3457
      %v3459 = vsel %vm3458, %v3450, %v3455
      %v3460 = vmul.f32 %v3443, %v3459
      %v3462 = vperm.slane %v2439, 0
      %v3464 = vmul.f32 %v3460, %v3462
      %v3466 = vperm.slane %v2441, 0
      %v3468 = vadd.f32 %v3464, %v3466
      %v3469 = vpack.c.bf16 %v3468, %v3468
      %s3470 = scalar_lea.vmem %s10, 64
      %v3471 = vld [vmem:[%s3470] sm:$0xff]
      %v3472 = vld [vmem:[%s3470 + $0x8] sm:$0xff]
      %v3473 = vld [vmem:[%s3470 + $0x10] sm:$0xff]
      %v3474 = vld [vmem:[%s3470 + $0x18] sm:$0xff]
      %v3475 = vld [vmem:[%s3470 + $0x20] sm:$0xff]
      %v3476 = vld [vmem:[%s3470 + $0x28] sm:$0xff]
      %v3477 = vld [vmem:[%s3470 + $0x30] sm:$0xff]
      %v3478 = vld [vmem:[%s3470 + $0x38] sm:$0xff]
      %s3479 = scalar_lea.vmem %s11, 2
      %v3480 = vld [vmem:[%s3479] sm:$0x3]
      %v3482 = vperm.slane %v3480, 0
      %v3483 = vperm.slane %v3480, 1
      %v3494 = vunpack.c.l.b16 %v3471
      %v3495 = vunpack.c.h.b16 %v3471
      %v3496 = vunpack.c.l.b16 %v3472
      %v3497 = vunpack.c.h.b16 %v3472
      %v3498 = vunpack.c.l.b16 %v3473
      %v3499 = vunpack.c.h.b16 %v3473
      %v3500 = vunpack.c.l.b16 %v3474
      %v3501 = vunpack.c.h.b16 %v3474
      %v3502 = vunpack.c.l.b16 %v3475
      %v3503 = vunpack.c.h.b16 %v3475
      %v3504 = vunpack.c.l.b16 %v3476
      %v3505 = vunpack.c.h.b16 %v3476
      %v3506 = vunpack.c.l.b16 %v3477
      %v3507 = vunpack.c.h.b16 %v3477
      %v3508 = vunpack.c.l.b16 %v3478
      %v3509 = vunpack.c.h.b16 %v3478
      %v3510 = vpack.c.b16 %v3496, %v3494
      %v3511 = vpack.c.b16 %v3497, %v3495
      %v3512 = vpack.c.b16 %v3500, %v3498
      %v3513 = vpack.c.b16 %v3501, %v3499
      %v3514 = vpack.c.b16 %v3504, %v3502
      %v3515 = vpack.c.b16 %v3505, %v3503
      %v3516 = vpack.c.b16 %v3508, %v3506
      %v3517 = vpack.c.b16 %v3509, %v3507
      %v3527 = vsel %vm956, %v3469, 0
      %3529 = vmatpush.bf16.msra.mxu0 0
      %3530 = vmatpush.bf16.msra.mxu0 0
      %3531 = vmatpush.bf16.msra.mxu0 0
      %3532 = vmatpush.bf16.msra.mxu0 0
      %3533 = vmatpush.bf16.msra.mxu0 %v3516
      %3534 = vmatpush.bf16.msra.mxu0 %v3514
      %3535 = vmatpush.bf16.msra.mxu0 %v3512
      %3536 = vmatpush.bf16.msra.mxu0 %v3510
      %3537 = vmatmul.bf16.gmra.mxu0 %v3527
      %v3538 = vpop.f32.mrf.mxu0
      %v3539 = vadd.f32 %v3482, %v3538
      %v3540 = vpop.f32.mrf.mxu0
      %3541 = vdwg.mxu0
      %3542 = vmatpush.bf16.msra.mxu0 0
      %3543 = vmatpush.bf16.msra.mxu0 0
      %3544 = vmatpush.bf16.msra.mxu0 0
      %3545 = vmatpush.bf16.msra.mxu0 0
      %3546 = vmatpush.bf16.msra.mxu0 %v3517
      %3547 = vmatpush.bf16.msra.mxu0 %v3515
      %3548 = vmatpush.bf16.msra.mxu0 %v3513
      %3549 = vmatpush.bf16.msra.mxu0 %v3511
      %3550 = vmatmul.bf16.gmra.mxu0 %v3527
      %v3551 = vpop.f32.mrf.mxu0
      %v3552 = vadd.f32 %v3483, %v3551
      %v3553 = vpop.f32.mrf.mxu0
      %3554 = vdwg.mxu0
      %v3555 = vmul.f32 %v3539, 0.5
      %v3556 = vmul.f32 %v3552, 0.5
      %v3557 = vmul.f32 %v3539, 0.70710677
      %v3558 = vmul.f32 %v3552, 0.70710677
      %v3559 = vmax.f32 %v3557, -4.0
      %v3560 = vmax.f32 %v3558, -4.0
      %v3561 = vmin.f32 %v3559, 4.0
      %v3562 = vmin.f32 %v3560, 4.0
      %v3563 = vmul.f32 %v3561, %v3561
      %v3564 = vmul.f32 %v3562, %v3562
      %v3565 = vmul.f32 %v3563, -2.7261424e-10
      %v3566 = vmul.f32 %v3564, -2.7261424e-10
      %v3567 = vadd.f32 %v3565, 2.7706815e-08
      %v3568 = vadd.f32 %v3566, 2.7706815e-08
      %v3569 = vmul.f32 %v3567, %v3563
      %v3570 = vmul.f32 %v3568, %v3564
      %v3571 = vadd.f32 %v3569, -2.101024e-06
      %v3572 = vadd.f32 %v3570, -2.101024e-06
      %v3573 = vmul.f32 %v3571, %v3563
      %v3574 = vmul.f32 %v3572, %v3564
      %v3575 = vadd.f32 %v3573, -5.6925062e-05
      %v3576 = vadd.f32 %v3574, -5.6925062e-05
      %v3577 = vmul.f32 %v3575, %v3563
      %v3578 = vmul.f32 %v3576, %v3564
      %v3579 = vadd.f32 %v3577, -0.00073499064
      %v3580 = vadd.f32 %v3578, -0.00073499064
      %v3581 = vmul.f32 %v3579, %v3563
      %v3582 = vmul.f32 %v3580, %v3564
      %v3583 = vadd.f32 %v3581, -0.0029546
      %v3584 = vadd.f32 %v3582, -0.0029546
      %v3585 = vmul.f32 %v3583, %v3563
      %v3586 = vmul.f32 %v3584, %v3564
      %v3587 = vadd.f32 %v3585, -0.016096033
      %v3588 = vadd.f32 %v3586, -0.016096033
      %v3589 = vmul.f32 %v3587, %v3561
      %v3590 = vmul.f32 %v3588, %v3562
      %v3591 = vmul.f32 %v3563, -1.45660715e-05
      %v3592 = vmul.f32 %v3564, -1.45660715e-05
      %v3593 = vadd.f32 %v3591, -0.00021337405
      %v3594 = vadd.f32 %v3592, -0.00021337405
      %v3595 = vmul.f32 %v3593, %v3563
      %v3596 = vmul.f32 %v3594, %v3564
      %v3597 = vadd.f32 %v3595, -0.001682827
      %v3598 = vadd.f32 %v3596, -0.001682827
      %v3599 = vmul.f32 %v3597, %v3563
      %v3600 = vmul.f32 %v3598, %v3564
      %v3601 = vadd.f32 %v3599, -0.0073733293
      %v3602 = vadd.f32 %v3600, -0.0073733293
      %v3603 = vmul.f32 %v3601, %v3563
      %v3604 = vmul.f32 %v3602, %v3564
      %v3605 = vadd.f32 %v3603, -0.014264739
      %v3606 = vadd.f32 %v3604, -0.014264739
      %v3607 = vrcp.pop %v3605
      %v3608 = vmul.f32 %v3605, %v3607
      %v3609 = vsub.f32 1.0, %v3608
      %v3610 = vmul.f32 %v3607, %v3609
      %v3611 = vadd.f32 %v3607, %v3610
      %vm3612 = vweird.f32 %v3605
      %vm3613 = vweird.f32 %v3607
      %vm3614 = vmor %vm3612, %vm3613
      %v3615 = vsel %vm3614, %v3607, %v3611
      %v3616 = vand.u32 2147483647, %v3605
      %vm3617 = vcmp.eq.f32.partialorder %v3616, 8.507059e+37
      %v3618 = vand.u32 %v3605, 2147483648
      %v3619 = vor.u32 1.1754944e-38, %v3618
      %v3620 = vsel %vm3617, %v3619, %v3615
      %v3621 = vmul.f32 %v3589, %v3620
      %v3622 = vrcp.pop %v3606
      %v3623 = vmul.f32 %v3606, %v3622
      %v3624 = vsub.f32 1.0, %v3623
      %v3625 = vmul.f32 %v3622, %v3624
      %v3626 = vadd.f32 %v3622, %v3625
      %vm3627 = vweird.f32 %v3606
      %vm3628 = vweird.f32 %v3622
      %vm3629 = vmor %vm3627, %vm3628
      %v3630 = vsel %vm3629, %v3622, %v3626
      %v3631 = vand.u32 2147483647, %v3606
      %vm3632 = vcmp.eq.f32.partialorder %v3631, 8.507059e+37
      %v3633 = vand.u32 %v3606, 2147483648
      %v3634 = vor.u32 1.1754944e-38, %v3633
      %v3635 = vsel %vm3632, %v3634, %v3630
      %v3636 = vmul.f32 %v3590, %v3635
      %v3637 = vadd.f32 %v3621, 1.0
      %v3638 = vadd.f32 %v3636, 1.0
      %v3639 = vmul.f32 %v3555, %v3637
      %v3640 = vmul.f32 %v3556, %v3638
      %v3641 = vpack.c.bf16 %v3639, %v3639
      %v3642 = vpack.c.bf16 %v3640, %v3640
      %s3643 = scalar_lea.vmem %s12, 128
      %v3644 = vld [vmem:[%s3643] sm:$0xf]
      %v3645 = vld [vmem:[%s3643 + $0x4] sm:$0xf]
      %v3646 = vld [vmem:[%s3643 + $0x8] sm:$0xf]
      %v3647 = vld [vmem:[%s3643 + $0xc] sm:$0xf]
      %v3648 = vld [vmem:[%s3643 + $0x10] sm:$0xf]
      %v3649 = vld [vmem:[%s3643 + $0x14] sm:$0xf]
      %v3650 = vld [vmem:[%s3643 + $0x18] sm:$0xf]
      %v3651 = vld [vmem:[%s3643 + $0x1c] sm:$0xf]
      %v3652 = vld [vmem:[%s3643 + $0x20] sm:$0xf]
      %v3653 = vld [vmem:[%s3643 + $0x24] sm:$0xf]
      %v3654 = vld [vmem:[%s3643 + $0x28] sm:$0xf]
      %v3655 = vld [vmem:[%s3643 + $0x2c] sm:$0xf]
      %v3656 = vld [vmem:[%s3643 + $0x30] sm:$0xf]
      %v3657 = vld [vmem:[%s3643 + $0x34] sm:$0xf]
      %v3658 = vld [vmem:[%s3643 + $0x38] sm:$0xf]
      %v3659 = vld [vmem:[%s3643 + $0x3c] sm:$0xf]
      %v3660 = vld [vmem:[%s3643 + $0x40] sm:$0xf]
      %v3661 = vld [vmem:[%s3643 + $0x44] sm:$0xf]
      %v3662 = vld [vmem:[%s3643 + $0x48] sm:$0xf]
      %v3663 = vld [vmem:[%s3643 + $0x4c] sm:$0xf]
      %v3664 = vld [vmem:[%s3643 + $0x50] sm:$0xf]
      %v3665 = vld [vmem:[%s3643 + $0x54] sm:$0xf]
      %v3666 = vld [vmem:[%s3643 + $0x58] sm:$0xf]
      %v3667 = vld [vmem:[%s3643 + $0x5c] sm:$0xf]
      %v3668 = vld [vmem:[%s3643 + $0x60] sm:$0xf]
      %v3669 = vld [vmem:[%s3643 + $0x64] sm:$0xf]
      %v3670 = vld [vmem:[%s3643 + $0x68] sm:$0xf]
      %v3671 = vld [vmem:[%s3643 + $0x6c] sm:$0xf]
      %v3672 = vld [vmem:[%s3643 + $0x70] sm:$0xf]
      %v3673 = vld [vmem:[%s3643 + $0x74] sm:$0xf]
      %v3674 = vld [vmem:[%s3643 + $0x78] sm:$0xf]
      %v3675 = vld [vmem:[%s3643 + $0x7c] sm:$0xf]
      %v3708 = vunpack.c.l.b16 %v3644
      %v3709 = vunpack.c.l.b16 %v3645
      %v3710 = vunpack.c.l.b16 %v3646
      %v3711 = vunpack.c.l.b16 %v3647
      %v3712 = vunpack.c.l.b16 %v3648
      %v3713 = vunpack.c.l.b16 %v3649
      %v3714 = vunpack.c.l.b16 %v3650
      %v3715 = vunpack.c.l.b16 %v3651
      %v3716 = vunpack.c.l.b16 %v3652
      %v3717 = vunpack.c.l.b16 %v3653
      %v3718 = vunpack.c.l.b16 %v3654
      %v3719 = vunpack.c.l.b16 %v3655
      %v3720 = vunpack.c.l.b16 %v3656
      %v3721 = vunpack.c.l.b16 %v3657
      %v3722 = vunpack.c.l.b16 %v3658
      %v3723 = vunpack.c.l.b16 %v3659
      %v3724 = vunpack.c.l.b16 %v3660
      %v3725 = vunpack.c.l.b16 %v3661
      %v3726 = vunpack.c.l.b16 %v3662
      %v3727 = vunpack.c.l.b16 %v3663
      %v3728 = vunpack.c.l.b16 %v3664
      %v3729 = vunpack.c.l.b16 %v3665
      %v3730 = vunpack.c.l.b16 %v3666
      %v3731 = vunpack.c.l.b16 %v3667
      %v3732 = vunpack.c.l.b16 %v3668
      %v3733 = vunpack.c.l.b16 %v3669
      %v3734 = vunpack.c.l.b16 %v3670
      %v3735 = vunpack.c.l.b16 %v3671
      %v3736 = vunpack.c.l.b16 %v3672
      %v3737 = vunpack.c.l.b16 %v3673
      %v3738 = vunpack.c.l.b16 %v3674
      %v3739 = vunpack.c.l.b16 %v3675
      %v3740 = vpack.c.b16 %v3709, %v3708
      %v3741 = vpack.c.b16 %v3711, %v3710
      %v3742 = vpack.c.b16 %v3713, %v3712
      %v3743 = vpack.c.b16 %v3715, %v3714
      %v3744 = vpack.c.b16 %v3717, %v3716
      %v3745 = vpack.c.b16 %v3719, %v3718
      %v3746 = vpack.c.b16 %v3721, %v3720
      %v3747 = vpack.c.b16 %v3723, %v3722
      %v3748 = vpack.c.b16 %v3725, %v3724
      %v3749 = vpack.c.b16 %v3727, %v3726
      %v3750 = vpack.c.b16 %v3729, %v3728
      %v3751 = vpack.c.b16 %v3731, %v3730
      %v3752 = vpack.c.b16 %v3733, %v3732
      %v3753 = vpack.c.b16 %v3735, %v3734
      %v3754 = vpack.c.b16 %v3737, %v3736
      %v3755 = vpack.c.b16 %v3739, %v3738
      %3772 = vmatpush.bf16.msra.mxu0 %v3747
      %3773 = vmatpush.bf16.msra.mxu0 %v3746
      %3774 = vmatpush.bf16.msra.mxu0 %v3745
      %3775 = vmatpush.bf16.msra.mxu0 %v3744
      %3776 = vmatpush.bf16.msra.mxu0 %v3743
      %3777 = vmatpush.bf16.msra.mxu0 %v3742
      %3778 = vmatpush.bf16.msra.mxu0 %v3741
      %3779 = vmatpush.bf16.msra.mxu0 %v3740
      %3780 = vmatmul.bf16.gmra.mxu0 %v3641
      %v3781 = vpop.f32.mrf.mxu0
      %v3782 = vadd.f32 0.0, %v3781
      %v3783 = vpop.f32.mrf.mxu0
      %3784 = vdwg.mxu0
      %3785 = vmatpush.bf16.msra.mxu0 %v3755
      %3786 = vmatpush.bf16.msra.mxu0 %v3754
      %3787 = vmatpush.bf16.msra.mxu0 %v3753
      %3788 = vmatpush.bf16.msra.mxu0 %v3752
      %3789 = vmatpush.bf16.msra.mxu0 %v3751
      %3790 = vmatpush.bf16.msra.mxu0 %v3750
      %3791 = vmatpush.bf16.msra.mxu0 %v3749
      %3792 = vmatpush.bf16.msra.mxu0 %v3748
      %3793 = vmatmul.bf16.gmra.mxu0 %v3642
      %v3794 = vpop.f32.mrf.mxu0
      %v3795 = vadd.f32 %v3782, %v3794
      %v3796 = vpop.f32.mrf.mxu0
      %3797 = vdwg.mxu0
      %v3798 = vadd.f32 %v3438, %v3795
      %v3800 = vperm.slane %v2445, 0
      %v3802 = vadd.f32 %v3798, %v3800
      %v3803 = vld [vmem:[%s13] sm:$0x1]
      %s3804 = scalar_lea.vmem %s13, 1
      %v3805 = vld [vmem:[%s3804] sm:$0x1]
      %v3806 = vsel %vm1070, %v3802, 0.0
      %3807 = vadd.xlane.f32.xlu0 %v3806
      %v3808 = vpop.xlane.xlu0 %3807
      %v3809 = vmul.f32 %v3808, %v1080
      %v3810 = vsub.f32 %v3802, %v3809
      %v3811 = vmul.f32 %v3810, %v3810
      %v3812 = vsel %vm1070, %v3811, 0.0
      %3813 = vadd.xlane.f32.xlu0 %v3812
      %v3814 = vpop.xlane.xlu0 %3813
      %v3815 = vmul.f32 %v3814, %v1080
      %v3816 = vadd.f32 %v3815, 1e-05
      %v3817 = vrsqrt.pop %v3816
      %v3818 = vmul.f32 %v3817, %v3816
      %v3819 = vmul.f32 %v3818, %v3817
      %v3820 = vmul.f32 0.5, %v3819
      %v3821 = vsub.f32 1.5, %v3820
      %v3822 = vmul.f32 %v3817, %v3821
      %vm3823 = vweird.f32 %v3816
      %vm3824 = vweird.f32 %v3817
      %vm3825 = vmor %vm3823, %vm3824
      %v3826 = vsel %vm3825, %v3817, %v3822
      %v3827 = vmul.f32 %v3810, %v3826
      %v3829 = vperm.slane %v3803, 0
      %v3831 = vmul.f32 %v3827, %v3829
      %v3833 = vperm.slane %v3805, 0
      %v3835 = vadd.f32 %v3831, %v3833
      %v3836 = vpack.c.bf16 %v3835, %v3835
      %v3837 = vld [vmem:[%s14] sm:$0xf]
      %v3838 = vld [vmem:[%s14 + $0x4] sm:$0xf]
      %v3839 = vld [vmem:[%s14 + $0x8] sm:$0xf]
      %v3840 = vld [vmem:[%s14 + $0xc] sm:$0xf]
      %v3841 = vld [vmem:[%s14 + $0x10] sm:$0xf]
      %v3842 = vld [vmem:[%s14 + $0x14] sm:$0xf]
      %v3843 = vld [vmem:[%s14 + $0x18] sm:$0xf]
      %v3844 = vld [vmem:[%s14 + $0x1c] sm:$0xf]
      %v3845 = vld [vmem:[%s15] sm:$0x1]
      %v3847 = vperm.slane %v3845, 0
      %v3857 = vunpack.c.l.b16 %v3837
      %v3858 = vunpack.c.l.b16 %v3838
      %v3859 = vunpack.c.l.b16 %v3839
      %v3860 = vunpack.c.l.b16 %v3840
      %v3861 = vunpack.c.l.b16 %v3841
      %v3862 = vunpack.c.l.b16 %v3842
      %v3863 = vunpack.c.l.b16 %v3843
      %v3864 = vunpack.c.l.b16 %v3844
      %v3865 = vpack.c.b16 %v3858, %v3857
      %v3866 = vpack.c.b16 %v3860, %v3859
      %v3867 = vpack.c.b16 %v3862, %v3861
      %v3868 = vpack.c.b16 %v3864, %v3863
      %v3874 = vsel %vm956, %v3836, 0
      %3876 = vmatpush.bf16.msra.mxu0 0
      %3877 = vmatpush.bf16.msra.mxu0 0
      %3878 = vmatpush.bf16.msra.mxu0 0
      %3879 = vmatpush.bf16.msra.mxu0 0
      %3880 = vmatpush.bf16.msra.mxu0 %v3868
      %3881 = vmatpush.bf16.msra.mxu0 %v3867
      %3882 = vmatpush.bf16.msra.mxu0 %v3866
      %3883 = vmatpush.bf16.msra.mxu0 %v3865
      %3884 = vmatmul.bf16.gmra.mxu0 %v3874
      %v3885 = vpop.f32.mrf.mxu0
      %v3886 = vadd.f32 %v3847, %v3885
      %v3887 = vpop.f32.mrf.mxu0
      %3888 = vdwg.mxu0
      %v3889 = vld [vmem:[%s16] sm:$0x1]
      %s3890 = scalar_lea.vmem %s16, 1
      %v3891 = vld [vmem:[%s3890] sm:$0x1]
      %s3892 = scalar_lea.vmem %s16, 2
      %v3893 = vld [vmem:[%s3892] sm:$0x1]
      %s3894 = scalar_lea.vmem %s16, 3
      %v3895 = vld [vmem:[%s3894] sm:$0x1]
      %s3896 = scalar_lea.vmem %s16, 4
      %v3897 = vld [vmem:[%s3896] sm:$0x1]
      %s3898 = scalar_lea.vmem %s16, 5
      %v3899 = vld [vmem:[%s3898] sm:$0x1]
      %vm3900 = vcmask 258048
      %v3901 = vsel %vm3900, %v3886, 0.0
      %3902 = vadd.xlane.f32.xlu0 %v3901
      %v3903 = vpop.xlane.xlu0 %3902
      %v3904 = vrcp.pop 32.0
      %v3905 = vmul.f32 32.0, %v3904
      %v3906 = vsub.f32 1.0, %v3905
      %v3907 = vmul.f32 %v3904, %v3906
      %v3908 = vadd.f32 %v3904, %v3907
      %vm3909 = vweird.f32 %v3904
      %v3910 = vsel %vm3909, %v3904, %v3908
      %v3911 = vmul.f32 %v3903, %v3910
      %v3912 = vsub.f32 %v3886, %v3911
      %v3913 = vmul.f32 %v3912, %v3912
      %v3914 = vsel %vm3900, %v3913, 0.0
      %3915 = vadd.xlane.f32.xlu0 %v3914
      %v3916 = vpop.xlane.xlu0 %3915
      %v3917 = vmul.f32 %v3916, %v3910
      %v3918 = vadd.f32 %v3917, 1e-05
      %v3919 = vrsqrt.pop %v3918
      %v3920 = vmul.f32 %v3919, %v3918
      %v3921 = vmul.f32 %v3920, %v3919
      %v3922 = vmul.f32 0.5, %v3921
      %v3923 = vsub.f32 1.5, %v3922
      %v3924 = vmul.f32 %v3919, %v3923
      %vm3925 = vweird.f32 %v3918
      %vm3926 = vweird.f32 %v3919
      %vm3927 = vmor %vm3925, %vm3926
      %v3928 = vsel %vm3927, %v3919, %v3924
      %v3929 = vmul.f32 %v3912, %v3928
      %v3931 = vperm.slane %v3889, 0
      %v3933 = vmul.f32 %v3929, %v3931
      %v3935 = vperm.slane %v3891, 0
      %v3937 = vadd.f32 %v3933, %v3935
      %v3938 = vpack.c.bf16 %v3937, %v3937
      %v3939 = vld [vmem:[%s17] sm:$0xf]
      %v3940 = vld [vmem:[%s17 + $0x4] sm:$0xf]
      %v3941 = vld [vmem:[%s17 + $0x8] sm:$0xf]
      %v3942 = vld [vmem:[%s17 + $0xc] sm:$0xf]
      %v3943 = vld [vmem:[%s18] sm:$0x1]
      %v3945 = vperm.slane %v3943, 0
      %v3951 = vunpack.c.l.b16 %v3939
      %v3952 = vunpack.c.l.b16 %v3940
      %v3953 = vunpack.c.l.b16 %v3941
      %v3954 = vunpack.c.l.b16 %v3942
      %v3955 = vpack.c.b16 %v3952, %v3951
      %v3956 = vpack.c.b16 %v3954, %v3953
      %vm3959 = vcmask 261120
      %v3961 = vsel %vm3959, %v3938, 0
      %3963 = vmatpush.bf16.msra.mxu0 0
      %3964 = vmatpush.bf16.msra.mxu0 0
      %3965 = vmatpush.bf16.msra.mxu0 0
      %3966 = vmatpush.bf16.msra.mxu0 0
      %3967 = vmatpush.bf16.msra.mxu0 0
      %3968 = vmatpush.bf16.msra.mxu0 0
      %3969 = vmatpush.bf16.msra.mxu0 %v3956
      %3970 = vmatpush.bf16.msra.mxu0 %v3955
      %3971 = vmatmul.bf16.gmra.mxu0 %v3961
      %v3972 = vpop.f32.mrf.mxu0
      %v3973 = vadd.f32 %v3945, %v3972
      %v3974 = vpop.f32.mrf.mxu0
      %3975 = vdwg.mxu0
      %s3976 = scalar_lea.vmem %s17, 64
      %v3977 = vld [vmem:[%s3976] sm:$0xf]
      %v3978 = vld [vmem:[%s3976 + $0x4] sm:$0xf]
      %v3979 = vld [vmem:[%s3976 + $0x8] sm:$0xf]
      %v3980 = vld [vmem:[%s3976 + $0xc] sm:$0xf]
      %s3981 = scalar_lea.vmem %s18, 4
      %v3982 = vld [vmem:[%s3981] sm:$0x1]
      %v3984 = vperm.slane %v3982, 0
      %v3990 = vunpack.c.l.b16 %v3977
      %v3991 = vunpack.c.l.b16 %v3978
      %v3992 = vunpack.c.l.b16 %v3979
      %v3993 = vunpack.c.l.b16 %v3980
      %v3994 = vpack.c.b16 %v3991, %v3990
      %v3995 = vpack.c.b16 %v3993, %v3992
      %3998 = vmatpush.bf16.msra.mxu0 0
      %3999 = vmatpush.bf16.msra.mxu0 0
      %4000 = vmatpush.bf16.msra.mxu0 0
      %4001 = vmatpush.bf16.msra.mxu0 0
      %4002 = vmatpush.bf16.msra.mxu0 0
      %4003 = vmatpush.bf16.msra.mxu0 0
      %4004 = vmatpush.bf16.msra.mxu0 %v3995
      %4005 = vmatpush.bf16.msra.mxu0 %v3994
      %4006 = vmatmul.bf16.gmra.mxu0 %v3961
      %v4007 = vpop.f32.mrf.mxu0
      %v4008 = vadd.f32 %v3984, %v4007
      %v4009 = vpop.f32.mrf.mxu0
      %4010 = vdwg.mxu0
      %s4011 = scalar_lea.vmem %s17, 128
      %v4012 = vld [vmem:[%s4011] sm:$0xf]
      %v4013 = vld [vmem:[%s4011 + $0x4] sm:$0xf]
      %v4014 = vld [vmem:[%s4011 + $0x8] sm:$0xf]
      %v4015 = vld [vmem:[%s4011 + $0xc] sm:$0xf]
      %s4016 = scalar_lea.vmem %s18, 8
      %v4017 = vld [vmem:[%s4016] sm:$0x1]
      %v4019 = vperm.slane %v4017, 0
      %v4025 = vunpack.c.l.b16 %v4012
      %v4026 = vunpack.c.l.b16 %v4013
      %v4027 = vunpack.c.l.b16 %v4014
      %v4028 = vunpack.c.l.b16 %v4015
      %v4029 = vpack.c.b16 %v4026, %v4025
      %v4030 = vpack.c.b16 %v4028, %v4027
      %4033 = vmatpush.bf16.msra.mxu0 0
      %4034 = vmatpush.bf16.msra.mxu0 0
      %4035 = vmatpush.bf16.msra.mxu0 0
      %4036 = vmatpush.bf16.msra.mxu0 0
      %4037 = vmatpush.bf16.msra.mxu0 0
      %4038 = vmatpush.bf16.msra.mxu0 0
      %4039 = vmatpush.bf16.msra.mxu0 %v4030
      %4040 = vmatpush.bf16.msra.mxu0 %v4029
      %4041 = vmatmul.bf16.gmra.mxu0 %v3961
      %v4042 = vpop.f32.mrf.mxu0
      %v4043 = vadd.f32 %v4019, %v4042
      %v4044 = vpop.f32.mrf.mxu0
      %4045 = vdwg.mxu0
      %vm4046 = vcmask 64512
      %v4048 = vsel %vm4046, %v3973, 0
      %v4051 = vsel %vm4046, %v4008, 0
      %4053 = vmatpush.xpose.msra.mxu0 0.0
      %4054 = vmatpush.xpose.msra.mxu0 0.0
      %4055 = vmatpush.xpose.msra.mxu0 0.0
      %4056 = vmatpush.xpose.msra.mxu0 0.0
      %4057 = vmatpush.xpose.msra.mxu0 0.0
      %4058 = vmatpush.xpose.msra.mxu0 0.0
      %4059 = vmatpush.xpose.msra.mxu0 0.0
      %4060 = vmatpush.xpose.msra.mxu0 0.0
      %4061 = vmatpush.xpose.msra.mxu0 0.0
      %4062 = vmatpush.xpose.msra.mxu0 0.0
      %4063 = vmatpush.xpose.msra.mxu0 0.0
      %4064 = vmatpush.xpose.msra.mxu0 0.0
      %4065 = vmatpush.xpose.msra.mxu0 0.0
      %4066 = vmatpush.xpose.msra.mxu0 0.0
      %4067 = vmatpush.xpose.msra.mxu0 0.0
      %4068 = vmatpush.xpose.msra.mxu0 %v4051
      %4069 = vmatmul.f32.gmra.mxu0 %v4048
      %v4070 = vpop.f32.mrf.mxu0
      %v4071 = vadd.f32 0.0, %v4070
      %4072 = vdwg.mxu0
      %v4073 = vmul.f32 %v4071, 0.35355338
      %v4074 = vsel %vm1290, %v4073, -inf
      %4075 = vmax.xlane.f32.xlu0 %v4074
      %v4076 = vpop.xlane.xlu0 %4075
      %v4077 = vsub.f32 %v4073, %v4076
      %v4078 = vmul.f32 %v4077, 1.442695
      %v4079 = vpow.pop %v4078
      %v4080 = vsel %vm1290, %v4079, 0.0
      %4081 = vadd.xlane.f32.xlu0 %v4080
      %v4082 = vpop.xlane.xlu0 %4081
      %v4083 = vrcp.pop %v4082
      %v4084 = vmul.f32 %v4079, %v4083
      %v4085 = vpack.c.bf16 %v4084, %v4084
      %v4086 = vpack.c.bf16 %v4043, %v4043
      %v4088 = vsel %vm1304, %v4085, 0
      %v4091 = vand.u32 %v4086, %v1310
      %4093 = vmatpush.bf16.msra.mxu0 0
      %4094 = vmatpush.bf16.msra.mxu0 0
      %4095 = vmatpush.bf16.msra.mxu0 0
      %4096 = vmatpush.bf16.msra.mxu0 0
      %4097 = vmatpush.bf16.msra.mxu0 0
      %4098 = vmatpush.bf16.msra.mxu0 0
      %4099 = vmatpush.bf16.msra.mxu0 0
      %4100 = vmatpush.bf16.msra.mxu0 %v4091
      %4101 = vmatmul.bf16.gmra.mxu0 %v4088
      %v4102 = vpop.f32.mrf.mxu0
      %v4103 = vadd.f32 0.0, %v4102
      %v4104 = vpop.f32.mrf.mxu0
      %4105 = vdwg.mxu0
      %v4106 = vpack.c.bf16 %v4103, %v4103
      %v4107 = vld [vmem:[%s19] sm:$0xf]
      %s4108 = scalar_lea.vmem %s17, 16
      %v4109 = vld [vmem:[%s4108] sm:$0xf]
      %v4110 = vld [vmem:[%s4108 + $0x4] sm:$0xf]
      %v4111 = vld [vmem:[%s4108 + $0x8] sm:$0xf]
      %v4112 = vld [vmem:[%s4108 + $0xc] sm:$0xf]
      %s4113 = scalar_lea.vmem %s18, 1
      %v4114 = vld [vmem:[%s4113] sm:$0x1]
      %v4116 = vperm.slane %v4114, 0
      %v4122 = vunpack.c.l.b16 %v4109
      %v4123 = vunpack.c.l.b16 %v4110
      %v4124 = vunpack.c.l.b16 %v4111
      %v4125 = vunpack.c.l.b16 %v4112
      %v4126 = vpack.c.b16 %v4123, %v4122
      %v4127 = vpack.c.b16 %v4125, %v4124
      %4130 = vmatpush.bf16.msra.mxu0 0
      %4131 = vmatpush.bf16.msra.mxu0 0
      %4132 = vmatpush.bf16.msra.mxu0 0
      %4133 = vmatpush.bf16.msra.mxu0 0
      %4134 = vmatpush.bf16.msra.mxu0 0
      %4135 = vmatpush.bf16.msra.mxu0 0
      %4136 = vmatpush.bf16.msra.mxu0 %v4127
      %4137 = vmatpush.bf16.msra.mxu0 %v4126
      %4138 = vmatmul.bf16.gmra.mxu0 %v3961
      %v4139 = vpop.f32.mrf.mxu0
      %v4140 = vadd.f32 %v4116, %v4139
      %v4141 = vpop.f32.mrf.mxu0
      %4142 = vdwg.mxu0
      %s4143 = scalar_lea.vmem %s17, 80
      %v4144 = vld [vmem:[%s4143] sm:$0xf]
      %v4145 = vld [vmem:[%s4143 + $0x4] sm:$0xf]
      %v4146 = vld [vmem:[%s4143 + $0x8] sm:$0xf]
      %v4147 = vld [vmem:[%s4143 + $0xc] sm:$0xf]
      %s4148 = scalar_lea.vmem %s18, 5
      %v4149 = vld [vmem:[%s4148] sm:$0x1]
      %v4151 = vperm.slane %v4149, 0
      %v4157 = vunpack.c.l.b16 %v4144
      %v4158 = vunpack.c.l.b16 %v4145
      %v4159 = vunpack.c.l.b16 %v4146
      %v4160 = vunpack.c.l.b16 %v4147
      %v4161 = vpack.c.b16 %v4158, %v4157
      %v4162 = vpack.c.b16 %v4160, %v4159
      %4165 = vmatpush.bf16.msra.mxu0 0
      %4166 = vmatpush.bf16.msra.mxu0 0
      %4167 = vmatpush.bf16.msra.mxu0 0
      %4168 = vmatpush.bf16.msra.mxu0 0
      %4169 = vmatpush.bf16.msra.mxu0 0
      %4170 = vmatpush.bf16.msra.mxu0 0
      %4171 = vmatpush.bf16.msra.mxu0 %v4162
      %4172 = vmatpush.bf16.msra.mxu0 %v4161
      %4173 = vmatmul.bf16.gmra.mxu0 %v3961
      %v4174 = vpop.f32.mrf.mxu0
      %v4175 = vadd.f32 %v4151, %v4174
      %v4176 = vpop.f32.mrf.mxu0
      %4177 = vdwg.mxu0
      %s4178 = scalar_lea.vmem %s17, 144
      %v4179 = vld [vmem:[%s4178] sm:$0xf]
      %v4180 = vld [vmem:[%s4178 + $0x4] sm:$0xf]
      %v4181 = vld [vmem:[%s4178 + $0x8] sm:$0xf]
      %v4182 = vld [vmem:[%s4178 + $0xc] sm:$0xf]
      %s4183 = scalar_lea.vmem %s18, 9
      %v4184 = vld [vmem:[%s4183] sm:$0x1]
      %v4186 = vperm.slane %v4184, 0
      %v4192 = vunpack.c.l.b16 %v4179
      %v4193 = vunpack.c.l.b16 %v4180
      %v4194 = vunpack.c.l.b16 %v4181
      %v4195 = vunpack.c.l.b16 %v4182
      %v4196 = vpack.c.b16 %v4193, %v4192
      %v4197 = vpack.c.b16 %v4195, %v4194
      %4200 = vmatpush.bf16.msra.mxu0 0
      %4201 = vmatpush.bf16.msra.mxu0 0
      %4202 = vmatpush.bf16.msra.mxu0 0
      %4203 = vmatpush.bf16.msra.mxu0 0
      %4204 = vmatpush.bf16.msra.mxu0 0
      %4205 = vmatpush.bf16.msra.mxu0 0
      %4206 = vmatpush.bf16.msra.mxu0 %v4197
      %4207 = vmatpush.bf16.msra.mxu0 %v4196
      %4208 = vmatmul.bf16.gmra.mxu0 %v3961
      %v4209 = vpop.f32.mrf.mxu0
      %v4210 = vadd.f32 %v4186, %v4209
      %v4211 = vpop.f32.mrf.mxu0
      %4212 = vdwg.mxu0
      %v4214 = vsel %vm4046, %v4140, 0
      %v4217 = vsel %vm4046, %v4175, 0
      %4219 = vmatpush.xpose.msra.mxu0 0.0
      %4220 = vmatpush.xpose.msra.mxu0 0.0
      %4221 = vmatpush.xpose.msra.mxu0 0.0
      %4222 = vmatpush.xpose.msra.mxu0 0.0
      %4223 = vmatpush.xpose.msra.mxu0 0.0
      %4224 = vmatpush.xpose.msra.mxu0 0.0
      %4225 = vmatpush.xpose.msra.mxu0 0.0
      %4226 = vmatpush.xpose.msra.mxu0 0.0
      %4227 = vmatpush.xpose.msra.mxu0 0.0
      %4228 = vmatpush.xpose.msra.mxu0 0.0
      %4229 = vmatpush.xpose.msra.mxu0 0.0
      %4230 = vmatpush.xpose.msra.mxu0 0.0
      %4231 = vmatpush.xpose.msra.mxu0 0.0
      %4232 = vmatpush.xpose.msra.mxu0 0.0
      %4233 = vmatpush.xpose.msra.mxu0 0.0
      %4234 = vmatpush.xpose.msra.mxu0 %v4217
      %4235 = vmatmul.f32.gmra.mxu0 %v4214
      %v4236 = vpop.f32.mrf.mxu0
      %v4237 = vadd.f32 0.0, %v4236
      %4238 = vdwg.mxu0
      %v4239 = vmul.f32 %v4237, 0.35355338
      %v4240 = vsel %vm1290, %v4239, -inf
      %4241 = vmax.xlane.f32.xlu0 %v4240
      %v4242 = vpop.xlane.xlu0 %4241
      %v4243 = vsub.f32 %v4239, %v4242
      %v4244 = vmul.f32 %v4243, 1.442695
      %v4245 = vpow.pop %v4244
      %v4246 = vsel %vm1290, %v4245, 0.0
      %4247 = vadd.xlane.f32.xlu0 %v4246
      %v4248 = vpop.xlane.xlu0 %4247
      %v4249 = vrcp.pop %v4248
      %v4250 = vmul.f32 %v4245, %v4249
      %v4251 = vpack.c.bf16 %v4250, %v4250
      %v4252 = vpack.c.bf16 %v4210, %v4210
      %v4254 = vsel %vm1304, %v4251, 0
      %v4257 = vand.u32 %v4252, %v1310
      %4259 = vmatpush.bf16.msra.mxu0 0
      %4260 = vmatpush.bf16.msra.mxu0 0
      %4261 = vmatpush.bf16.msra.mxu0 0
      %4262 = vmatpush.bf16.msra.mxu0 0
      %4263 = vmatpush.bf16.msra.mxu0 0
      %4264 = vmatpush.bf16.msra.mxu0 0
      %4265 = vmatpush.bf16.msra.mxu0 0
      %4266 = vmatpush.bf16.msra.mxu0 %v4257
      %4267 = vmatmul.bf16.gmra.mxu0 %v4254
      %v4268 = vpop.f32.mrf.mxu0
      %v4269 = vadd.f32 0.0, %v4268
      %v4270 = vpop.f32.mrf.mxu0
      %4271 = vdwg.mxu0
      %v4272 = vpack.c.bf16 %v4269, %v4269
      %s4273 = scalar_lea.vmem %s19, 4
      %v4274 = vld [vmem:[%s4273] sm:$0xf]
      %v4276 = vsel %vm4046, %v4272, 0
      %vm4278 = vcmask 1043456
      %v4280 = vsel %vm4278, %v4274, 0
      %4282 = vmatpush.bf16.msra.mxu0 0
      %4283 = vmatpush.bf16.msra.mxu0 0
      %4284 = vmatpush.bf16.msra.mxu0 0
      %4285 = vmatpush.bf16.msra.mxu0 0
      %4286 = vmatpush.bf16.msra.mxu0 0
      %4287 = vmatpush.bf16.msra.mxu0 0
      %4288 = vmatpush.bf16.msra.mxu0 0
      %4289 = vmatpush.bf16.msra.mxu0 %v4280
      %4290 = vmatmul.bf16.gmra.mxu0 %v4276
      %v4291 = vpop.f32.mrf.mxu0
      %v4292 = vadd.f32 0.0, %v4291
      %v4293 = vpop.f32.mrf.mxu0
      %4294 = vdwg.mxu0
      %v4296 = vsel %vm4046, %v4106, 0
      %v4299 = vsel %vm4278, %v4107, 0
      %4301 = vmatpush.bf16.msra.mxu0 0
      %4302 = vmatpush.bf16.msra.mxu0 0
      %4303 = vmatpush.bf16.msra.mxu0 0
      %4304 = vmatpush.bf16.msra.mxu0 0
      %4305 = vmatpush.bf16.msra.mxu0 0
      %4306 = vmatpush.bf16.msra.mxu0 0
      %4307 = vmatpush.bf16.msra.mxu0 0
      %4308 = vmatpush.bf16.msra.mxu0 %v4299
      %4309 = vmatmul.bf16.gmra.mxu0 %v4296
      %v4310 = vpop.f32.mrf.mxu0
      %v4311 = vadd.f32 %v4292, %v4310
      %v4312 = vpop.f32.mrf.mxu0
      %4313 = vdwg.mxu0
      %s4314 = scalar_lea.vmem %s17, 32
      %v4315 = vld [vmem:[%s4314] sm:$0xf]
      %v4316 = vld [vmem:[%s4314 + $0x4] sm:$0xf]
      %v4317 = vld [vmem:[%s4314 + $0x8] sm:$0xf]
      %v4318 = vld [vmem:[%s4314 + $0xc] sm:$0xf]
      %s4319 = scalar_lea.vmem %s18, 2
      %v4320 = vld [vmem:[%s4319] sm:$0x1]
      %v4322 = vperm.slane %v4320, 0
      %v4328 = vunpack.c.l.b16 %v4315
      %v4329 = vunpack.c.l.b16 %v4316
      %v4330 = vunpack.c.l.b16 %v4317
      %v4331 = vunpack.c.l.b16 %v4318
      %v4332 = vpack.c.b16 %v4329, %v4328
      %v4333 = vpack.c.b16 %v4331, %v4330
      %4336 = vmatpush.bf16.msra.mxu0 0
      %4337 = vmatpush.bf16.msra.mxu0 0
      %4338 = vmatpush.bf16.msra.mxu0 0
      %4339 = vmatpush.bf16.msra.mxu0 0
      %4340 = vmatpush.bf16.msra.mxu0 0
      %4341 = vmatpush.bf16.msra.mxu0 0
      %4342 = vmatpush.bf16.msra.mxu0 %v4333
      %4343 = vmatpush.bf16.msra.mxu0 %v4332
      %4344 = vmatmul.bf16.gmra.mxu0 %v3961
      %v4345 = vpop.f32.mrf.mxu0
      %v4346 = vadd.f32 %v4322, %v4345
      %v4347 = vpop.f32.mrf.mxu0
      %4348 = vdwg.mxu0
      %s4349 = scalar_lea.vmem %s17, 96
      %v4350 = vld [vmem:[%s4349] sm:$0xf]
      %v4351 = vld [vmem:[%s4349 + $0x4] sm:$0xf]
      %v4352 = vld [vmem:[%s4349 + $0x8] sm:$0xf]
      %v4353 = vld [vmem:[%s4349 + $0xc] sm:$0xf]
      %s4354 = scalar_lea.vmem %s18, 6
      %v4355 = vld [vmem:[%s4354] sm:$0x1]
      %v4357 = vperm.slane %v4355, 0
      %v4363 = vunpack.c.l.b16 %v4350
      %v4364 = vunpack.c.l.b16 %v4351
      %v4365 = vunpack.c.l.b16 %v4352
      %v4366 = vunpack.c.l.b16 %v4353
      %v4367 = vpack.c.b16 %v4364, %v4363
      %v4368 = vpack.c.b16 %v4366, %v4365
      %4371 = vmatpush.bf16.msra.mxu0 0
      %4372 = vmatpush.bf16.msra.mxu0 0
      %4373 = vmatpush.bf16.msra.mxu0 0
      %4374 = vmatpush.bf16.msra.mxu0 0
      %4375 = vmatpush.bf16.msra.mxu0 0
      %4376 = vmatpush.bf16.msra.mxu0 0
      %4377 = vmatpush.bf16.msra.mxu0 %v4368
      %4378 = vmatpush.bf16.msra.mxu0 %v4367
      %4379 = vmatmul.bf16.gmra.mxu0 %v3961
      %v4380 = vpop.f32.mrf.mxu0
      %v4381 = vadd.f32 %v4357, %v4380
      %v4382 = vpop.f32.mrf.mxu0
      %4383 = vdwg.mxu0
      %s4384 = scalar_lea.vmem %s17, 160
      %v4385 = vld [vmem:[%s4384] sm:$0xf]
      %v4386 = vld [vmem:[%s4384 + $0x4] sm:$0xf]
      %v4387 = vld [vmem:[%s4384 + $0x8] sm:$0xf]
      %v4388 = vld [vmem:[%s4384 + $0xc] sm:$0xf]
      %s4389 = scalar_lea.vmem %s18, 10
      %v4390 = vld [vmem:[%s4389] sm:$0x1]
      %v4392 = vperm.slane %v4390, 0
      %v4398 = vunpack.c.l.b16 %v4385
      %v4399 = vunpack.c.l.b16 %v4386
      %v4400 = vunpack.c.l.b16 %v4387
      %v4401 = vunpack.c.l.b16 %v4388
      %v4402 = vpack.c.b16 %v4399, %v4398
      %v4403 = vpack.c.b16 %v4401, %v4400
      %4406 = vmatpush.bf16.msra.mxu0 0
      %4407 = vmatpush.bf16.msra.mxu0 0
      %4408 = vmatpush.bf16.msra.mxu0 0
      %4409 = vmatpush.bf16.msra.mxu0 0
      %4410 = vmatpush.bf16.msra.mxu0 0
      %4411 = vmatpush.bf16.msra.mxu0 0
      %4412 = vmatpush.bf16.msra.mxu0 %v4403
      %4413 = vmatpush.bf16.msra.mxu0 %v4402
      %4414 = vmatmul.bf16.gmra.mxu0 %v3961
      %v4415 = vpop.f32.mrf.mxu0
      %v4416 = vadd.f32 %v4392, %v4415
      %v4417 = vpop.f32.mrf.mxu0
      %4418 = vdwg.mxu0
      %v4420 = vsel %vm4046, %v4346, 0
      %v4423 = vsel %vm4046, %v4381, 0
      %4425 = vmatpush.xpose.msra.mxu0 0.0
      %4426 = vmatpush.xpose.msra.mxu0 0.0
      %4427 = vmatpush.xpose.msra.mxu0 0.0
      %4428 = vmatpush.xpose.msra.mxu0 0.0
      %4429 = vmatpush.xpose.msra.mxu0 0.0
      %4430 = vmatpush.xpose.msra.mxu0 0.0
      %4431 = vmatpush.xpose.msra.mxu0 0.0
      %4432 = vmatpush.xpose.msra.mxu0 0.0
      %4433 = vmatpush.xpose.msra.mxu0 0.0
      %4434 = vmatpush.xpose.msra.mxu0 0.0
      %4435 = vmatpush.xpose.msra.mxu0 0.0
      %4436 = vmatpush.xpose.msra.mxu0 0.0
      %4437 = vmatpush.xpose.msra.mxu0 0.0
      %4438 = vmatpush.xpose.msra.mxu0 0.0
      %4439 = vmatpush.xpose.msra.mxu0 0.0
      %4440 = vmatpush.xpose.msra.mxu0 %v4423
      %4441 = vmatmul.f32.gmra.mxu0 %v4420
      %v4442 = vpop.f32.mrf.mxu0
      %v4443 = vadd.f32 0.0, %v4442
      %4444 = vdwg.mxu0
      %v4445 = vmul.f32 %v4443, 0.35355338
      %v4446 = vsel %vm1290, %v4445, -inf
      %4447 = vmax.xlane.f32.xlu0 %v4446
      %v4448 = vpop.xlane.xlu0 %4447
      %v4449 = vsub.f32 %v4445, %v4448
      %v4450 = vmul.f32 %v4449, 1.442695
      %v4451 = vpow.pop %v4450
      %v4452 = vsel %vm1290, %v4451, 0.0
      %4453 = vadd.xlane.f32.xlu0 %v4452
      %v4454 = vpop.xlane.xlu0 %4453
      %v4455 = vrcp.pop %v4454
      %v4456 = vmul.f32 %v4451, %v4455
      %v4457 = vpack.c.bf16 %v4456, %v4456
      %v4458 = vpack.c.bf16 %v4416, %v4416
      %v4460 = vsel %vm1304, %v4457, 0
      %v4463 = vand.u32 %v4458, %v1310
      %4465 = vmatpush.bf16.msra.mxu0 0
      %4466 = vmatpush.bf16.msra.mxu0 0
      %4467 = vmatpush.bf16.msra.mxu0 0
      %4468 = vmatpush.bf16.msra.mxu0 0
      %4469 = vmatpush.bf16.msra.mxu0 0
      %4470 = vmatpush.bf16.msra.mxu0 0
      %4471 = vmatpush.bf16.msra.mxu0 0
      %4472 = vmatpush.bf16.msra.mxu0 %v4463
      %4473 = vmatmul.bf16.gmra.mxu0 %v4460
      %v4474 = vpop.f32.mrf.mxu0
      %v4475 = vadd.f32 0.0, %v4474
      %v4476 = vpop.f32.mrf.mxu0
      %4477 = vdwg.mxu0
      %v4478 = vpack.c.bf16 %v4475, %v4475
      %s4479 = scalar_lea.vmem %s19, 8
      %v4480 = vld [vmem:[%s4479] sm:$0xf]
      %v4482 = vsel %vm4046, %v4478, 0
      %v4485 = vsel %vm4278, %v4480, 0
      %4487 = vmatpush.bf16.msra.mxu0 0
      %4488 = vmatpush.bf16.msra.mxu0 0
      %4489 = vmatpush.bf16.msra.mxu0 0
      %4490 = vmatpush.bf16.msra.mxu0 0
      %4491 = vmatpush.bf16.msra.mxu0 0
      %4492 = vmatpush.bf16.msra.mxu0 0
      %4493 = vmatpush.bf16.msra.mxu0 0
      %4494 = vmatpush.bf16.msra.mxu0 %v4485
      %4495 = vmatmul.bf16.gmra.mxu0 %v4482
      %v4496 = vpop.f32.mrf.mxu0
      %v4497 = vadd.f32 0.0, %v4496
      %v4498 = vpop.f32.mrf.mxu0
      %4499 = vdwg.mxu0
      %v4500 = vadd.f32 %v4311, %v4497
      %s4501 = scalar_lea.vmem %s17, 48
      %v4502 = vld [vmem:[%s4501] sm:$0xf]
      %v4503 = vld [vmem:[%s4501 + $0x4] sm:$0xf]
      %v4504 = vld [vmem:[%s4501 + $0x8] sm:$0xf]
      %v4505 = vld [vmem:[%s4501 + $0xc] sm:$0xf]
      %s4506 = scalar_lea.vmem %s18, 3
      %v4507 = vld [vmem:[%s4506] sm:$0x1]
      %v4509 = vperm.slane %v4507, 0
      %v4515 = vunpack.c.l.b16 %v4502
      %v4516 = vunpack.c.l.b16 %v4503
      %v4517 = vunpack.c.l.b16 %v4504
      %v4518 = vunpack.c.l.b16 %v4505
      %v4519 = vpack.c.b16 %v4516, %v4515
      %v4520 = vpack.c.b16 %v4518, %v4517
      %4523 = vmatpush.bf16.msra.mxu0 0
      %4524 = vmatpush.bf16.msra.mxu0 0
      %4525 = vmatpush.bf16.msra.mxu0 0
      %4526 = vmatpush.bf16.msra.mxu0 0
      %4527 = vmatpush.bf16.msra.mxu0 0
      %4528 = vmatpush.bf16.msra.mxu0 0
      %4529 = vmatpush.bf16.msra.mxu0 %v4520
      %4530 = vmatpush.bf16.msra.mxu0 %v4519
      %4531 = vmatmul.bf16.gmra.mxu0 %v3961
      %v4532 = vpop.f32.mrf.mxu0
      %v4533 = vadd.f32 %v4509, %v4532
      %v4534 = vpop.f32.mrf.mxu0
      %4535 = vdwg.mxu0
      %s4536 = scalar_lea.vmem %s17, 112
      %v4537 = vld [vmem:[%s4536] sm:$0xf]
      %v4538 = vld [vmem:[%s4536 + $0x4] sm:$0xf]
      %v4539 = vld [vmem:[%s4536 + $0x8] sm:$0xf]
      %v4540 = vld [vmem:[%s4536 + $0xc] sm:$0xf]
      %s4541 = scalar_lea.vmem %s18, 7
      %v4542 = vld [vmem:[%s4541] sm:$0x1]
      %v4544 = vperm.slane %v4542, 0
      %v4550 = vunpack.c.l.b16 %v4537
      %v4551 = vunpack.c.l.b16 %v4538
      %v4552 = vunpack.c.l.b16 %v4539
      %v4553 = vunpack.c.l.b16 %v4540
      %v4554 = vpack.c.b16 %v4551, %v4550
      %v4555 = vpack.c.b16 %v4553, %v4552
      %4558 = vmatpush.bf16.msra.mxu0 0
      %4559 = vmatpush.bf16.msra.mxu0 0
      %4560 = vmatpush.bf16.msra.mxu0 0
      %4561 = vmatpush.bf16.msra.mxu0 0
      %4562 = vmatpush.bf16.msra.mxu0 0
      %4563 = vmatpush.bf16.msra.mxu0 0
      %4564 = vmatpush.bf16.msra.mxu0 %v4555
      %4565 = vmatpush.bf16.msra.mxu0 %v4554
      %4566 = vmatmul.bf16.gmra.mxu0 %v3961
      %v4567 = vpop.f32.mrf.mxu0
      %v4568 = vadd.f32 %v4544, %v4567
      %v4569 = vpop.f32.mrf.mxu0
      %4570 = vdwg.mxu0
      %s4571 = scalar_lea.vmem %s17, 176
      %v4572 = vld [vmem:[%s4571] sm:$0xf]
      %v4573 = vld [vmem:[%s4571 + $0x4] sm:$0xf]
      %v4574 = vld [vmem:[%s4571 + $0x8] sm:$0xf]
      %v4575 = vld [vmem:[%s4571 + $0xc] sm:$0xf]
      %s4576 = scalar_lea.vmem %s18, 11
      %v4577 = vld [vmem:[%s4576] sm:$0x1]
      %v4579 = vperm.slane %v4577, 0
      %v4585 = vunpack.c.l.b16 %v4572
      %v4586 = vunpack.c.l.b16 %v4573
      %v4587 = vunpack.c.l.b16 %v4574
      %v4588 = vunpack.c.l.b16 %v4575
      %v4589 = vpack.c.b16 %v4586, %v4585
      %v4590 = vpack.c.b16 %v4588, %v4587
      %4593 = vmatpush.bf16.msra.mxu0 0
      %4594 = vmatpush.bf16.msra.mxu0 0
      %4595 = vmatpush.bf16.msra.mxu0 0
      %4596 = vmatpush.bf16.msra.mxu0 0
      %4597 = vmatpush.bf16.msra.mxu0 0
      %4598 = vmatpush.bf16.msra.mxu0 0
      %4599 = vmatpush.bf16.msra.mxu0 %v4590
      %4600 = vmatpush.bf16.msra.mxu0 %v4589
      %4601 = vmatmul.bf16.gmra.mxu0 %v3961
      %v4602 = vpop.f32.mrf.mxu0
      %v4603 = vadd.f32 %v4579, %v4602
      %v4604 = vpop.f32.mrf.mxu0
      %4605 = vdwg.mxu0
      %v4607 = vsel %vm4046, %v4533, 0
      %v4610 = vsel %vm4046, %v4568, 0
      %4612 = vmatpush.xpose.msra.mxu0 0.0
      %4613 = vmatpush.xpose.msra.mxu0 0.0
      %4614 = vmatpush.xpose.msra.mxu0 0.0
      %4615 = vmatpush.xpose.msra.mxu0 0.0
      %4616 = vmatpush.xpose.msra.mxu0 0.0
      %4617 = vmatpush.xpose.msra.mxu0 0.0
      %4618 = vmatpush.xpose.msra.mxu0 0.0
      %4619 = vmatpush.xpose.msra.mxu0 0.0
      %4620 = vmatpush.xpose.msra.mxu0 0.0
      %4621 = vmatpush.xpose.msra.mxu0 0.0
      %4622 = vmatpush.xpose.msra.mxu0 0.0
      %4623 = vmatpush.xpose.msra.mxu0 0.0
      %4624 = vmatpush.xpose.msra.mxu0 0.0
      %4625 = vmatpush.xpose.msra.mxu0 0.0
      %4626 = vmatpush.xpose.msra.mxu0 0.0
      %4627 = vmatpush.xpose.msra.mxu0 %v4610
      %4628 = vmatmul.f32.gmra.mxu0 %v4607
      %v4629 = vpop.f32.mrf.mxu0
      %v4630 = vadd.f32 0.0, %v4629
      %4631 = vdwg.mxu0
      %v4632 = vmul.f32 %v4630, 0.35355338
      %v4633 = vsel %vm1290, %v4632, -inf
      %4634 = vmax.xlane.f32.xlu0 %v4633
      %v4635 = vpop.xlane.xlu0 %4634
      %v4636 = vsub.f32 %v4632, %v4635
      %v4637 = vmul.f32 %v4636, 1.442695
      %v4638 = vpow.pop %v4637
      %v4639 = vsel %vm1290, %v4638, 0.0
      %4640 = vadd.xlane.f32.xlu0 %v4639
      %v4641 = vpop.xlane.xlu0 %4640
      %v4642 = vrcp.pop %v4641
      %v4643 = vmul.f32 %v4638, %v4642
      %v4644 = vpack.c.bf16 %v4643, %v4643
      %v4645 = vpack.c.bf16 %v4603, %v4603
      %v4647 = vsel %vm1304, %v4644, 0
      %v4650 = vand.u32 %v4645, %v1310
      %4652 = vmatpush.bf16.msra.mxu0 0
      %4653 = vmatpush.bf16.msra.mxu0 0
      %4654 = vmatpush.bf16.msra.mxu0 0
      %4655 = vmatpush.bf16.msra.mxu0 0
      %4656 = vmatpush.bf16.msra.mxu0 0
      %4657 = vmatpush.bf16.msra.mxu0 0
      %4658 = vmatpush.bf16.msra.mxu0 0
      %4659 = vmatpush.bf16.msra.mxu0 %v4650
      %4660 = vmatmul.bf16.gmra.mxu0 %v4647
      %v4661 = vpop.f32.mrf.mxu0
      %v4662 = vadd.f32 0.0, %v4661
      %v4663 = vpop.f32.mrf.mxu0
      %4664 = vdwg.mxu0
      %v4665 = vpack.c.bf16 %v4662, %v4662
      %s4666 = scalar_lea.vmem %s19, 12
      %v4667 = vld [vmem:[%s4666] sm:$0xf]
      %v4669 = vsel %vm4046, %v4665, 0
      %v4672 = vsel %vm4278, %v4667, 0
      %4674 = vmatpush.bf16.msra.mxu0 0
      %4675 = vmatpush.bf16.msra.mxu0 0
      %4676 = vmatpush.bf16.msra.mxu0 0
      %4677 = vmatpush.bf16.msra.mxu0 0
      %4678 = vmatpush.bf16.msra.mxu0 0
      %4679 = vmatpush.bf16.msra.mxu0 0
      %4680 = vmatpush.bf16.msra.mxu0 0
      %4681 = vmatpush.bf16.msra.mxu0 %v4672
      %4682 = vmatmul.bf16.gmra.mxu0 %v4669
      %v4683 = vpop.f32.mrf.mxu0
      %v4684 = vadd.f32 0.0, %v4683
      %v4685 = vpop.f32.mrf.mxu0
      %4686 = vdwg.mxu0
      %v4687 = vadd.f32 %v4500, %v4684
      %v4688 = vadd.f32 %v3886, %v4687
      %v4690 = vperm.slane %v3897, 0
      %v4692 = vadd.f32 %v4688, %v4690
      %v4693 = vsel %vm3900, %v4692, 0.0
      %4694 = vadd.xlane.f32.xlu0 %v4693
      %v4695 = vpop.xlane.xlu0 %4694
      %v4696 = vmul.f32 %v4695, %v3910
      %v4697 = vsub.f32 %v4692, %v4696
      %v4698 = vmul.f32 %v4697, %v4697
      %v4699 = vsel %vm3900, %v4698, 0.0
      %4700 = vadd.xlane.f32.xlu0 %v4699
      %v4701 = vpop.xlane.xlu0 %4700
      %v4702 = vmul.f32 %v4701, %v3910
      %v4703 = vadd.f32 %v4702, 1e-05
      %v4704 = vrsqrt.pop %v4703
      %v4705 = vmul.f32 %v4704, %v4703
      %v4706 = vmul.f32 %v4705, %v4704
      %v4707 = vmul.f32 0.5, %v4706
      %v4708 = vsub.f32 1.5, %v4707
      %v4709 = vmul.f32 %v4704, %v4708
      %vm4710 = vweird.f32 %v4703
      %vm4711 = vweird.f32 %v4704
      %vm4712 = vmor %vm4710, %vm4711
      %v4713 = vsel %vm4712, %v4704, %v4709
      %v4714 = vmul.f32 %v4697, %v4713
      %v4716 = vperm.slane %v3893, 0
      %v4718 = vmul.f32 %v4714, %v4716
      %v4720 = vperm.slane %v3895, 0
      %v4722 = vadd.f32 %v4718, %v4720
      %v4723 = vpack.c.bf16 %v4722, %v4722
      %v4724 = vld [vmem:[%s20] sm:$0xf]
      %v4725 = vld [vmem:[%s20 + $0x4] sm:$0xf]
      %v4726 = vld [vmem:[%s20 + $0x8] sm:$0xf]
      %v4727 = vld [vmem:[%s20 + $0xc] sm:$0xf]
      %v4728 = vld [vmem:[%s21] sm:$0x1]
      %v4730 = vperm.slane %v4728, 0
      %v4736 = vunpack.c.l.b16 %v4724
      %v4737 = vunpack.c.l.b16 %v4725
      %v4738 = vunpack.c.l.b16 %v4726
      %v4739 = vunpack.c.l.b16 %v4727
      %v4740 = vpack.c.b16 %v4737, %v4736
      %v4741 = vpack.c.b16 %v4739, %v4738
      %v4745 = vsel %vm3959, %v4723, 0
      %4747 = vmatpush.bf16.msra.mxu0 0
      %4748 = vmatpush.bf16.msra.mxu0 0
      %4749 = vmatpush.bf16.msra.mxu0 0
      %4750 = vmatpush.bf16.msra.mxu0 0
      %4751 = vmatpush.bf16.msra.mxu0 0
      %4752 = vmatpush.bf16.msra.mxu0 0
      %4753 = vmatpush.bf16.msra.mxu0 %v4741
      %4754 = vmatpush.bf16.msra.mxu0 %v4740
      %4755 = vmatmul.bf16.gmra.mxu0 %v4745
      %v4756 = vpop.f32.mrf.mxu0
      %v4757 = vadd.f32 %v4730, %v4756
      %v4758 = vpop.f32.mrf.mxu0
      %4759 = vdwg.mxu0
      %v4760 = vmul.f32 %v4757, 0.5
      %v4761 = vmul.f32 %v4757, 0.70710677
      %v4762 = vmax.f32 %v4761, -4.0
      %v4763 = vmin.f32 %v4762, 4.0
      %v4764 = vmul.f32 %v4763, %v4763
      %v4765 = vmul.f32 %v4764, -2.7261424e-10
      %v4766 = vadd.f32 %v4765, 2.7706815e-08
      %v4767 = vmul.f32 %v4766, %v4764
      %v4768 = vadd.f32 %v4767, -2.101024e-06
      %v4769 = vmul.f32 %v4768, %v4764
      %v4770 = vadd.f32 %v4769, -5.6925062e-05
      %v4771 = vmul.f32 %v4770, %v4764
      %v4772 = vadd.f32 %v4771, -0.00073499064
      %v4773 = vmul.f32 %v4772, %v4764
      %v4774 = vadd.f32 %v4773, -0.0029546
      %v4775 = vmul.f32 %v4774, %v4764
      %v4776 = vadd.f32 %v4775, -0.016096033
      %v4777 = vmul.f32 %v4776, %v4763
      %v4778 = vmul.f32 %v4764, -1.45660715e-05
      %v4779 = vadd.f32 %v4778, -0.00021337405
      %v4780 = vmul.f32 %v4779, %v4764
      %v4781 = vadd.f32 %v4780, -0.001682827
      %v4782 = vmul.f32 %v4781, %v4764
      %v4783 = vadd.f32 %v4782, -0.0073733293
      %v4784 = vmul.f32 %v4783, %v4764
      %v4785 = vadd.f32 %v4784, -0.014264739
      %v4786 = vrcp.pop %v4785
      %v4787 = vmul.f32 %v4785, %v4786
      %v4788 = vsub.f32 1.0, %v4787
      %v4789 = vmul.f32 %v4786, %v4788
      %v4790 = vadd.f32 %v4786, %v4789
      %vm4791 = vweird.f32 %v4785
      %vm4792 = vweird.f32 %v4786
      %vm4793 = vmor %vm4791, %vm4792
      %v4794 = vsel %vm4793, %v4786, %v4790
      %v4795 = vand.u32 2147483647, %v4785
      %vm4796 = vcmp.eq.f32.partialorder %v4795, 8.507059e+37
      %v4797 = vand.u32 %v4785, 2147483648
      %v4798 = vor.u32 1.1754944e-38, %v4797
      %v4799 = vsel %vm4796, %v4798, %v4794
      %v4800 = vmul.f32 %v4777, %v4799
      %v4801 = vadd.f32 %v4800, 1.0
      %v4802 = vmul.f32 %v4760, %v4801
      %v4803 = vpack.c.bf16 %v4802, %v4802
      %v4804 = vld [vmem:[%s22] sm:$0xf]
      %v4805 = vld [vmem:[%s22 + $0x4] sm:$0xf]
      %v4806 = vld [vmem:[%s22 + $0x8] sm:$0xf]
      %v4807 = vld [vmem:[%s22 + $0xc] sm:$0xf]
      %v4808 = vld [vmem:[%s22 + $0x10] sm:$0xf]
      %v4809 = vld [vmem:[%s22 + $0x14] sm:$0xf]
      %v4810 = vld [vmem:[%s22 + $0x18] sm:$0xf]
      %v4811 = vld [vmem:[%s22 + $0x1c] sm:$0xf]
      %v4812 = vld [vmem:[%s22 + $0x20] sm:$0xf]
      %v4813 = vld [vmem:[%s22 + $0x24] sm:$0xf]
      %v4814 = vld [vmem:[%s22 + $0x28] sm:$0xf]
      %v4815 = vld [vmem:[%s22 + $0x2c] sm:$0xf]
      %v4816 = vld [vmem:[%s22 + $0x30] sm:$0xf]
      %v4817 = vld [vmem:[%s22 + $0x34] sm:$0xf]
      %v4818 = vld [vmem:[%s22 + $0x38] sm:$0xf]
      %v4819 = vld [vmem:[%s22 + $0x3c] sm:$0xf]
      %v4836 = vunpack.c.l.b16 %v4804
      %v4837 = vunpack.c.l.b16 %v4805
      %v4838 = vunpack.c.l.b16 %v4806
      %v4839 = vunpack.c.l.b16 %v4807
      %v4840 = vunpack.c.l.b16 %v4808
      %v4841 = vunpack.c.l.b16 %v4809
      %v4842 = vunpack.c.l.b16 %v4810
      %v4843 = vunpack.c.l.b16 %v4811
      %v4844 = vunpack.c.l.b16 %v4812
      %v4845 = vunpack.c.l.b16 %v4813
      %v4846 = vunpack.c.l.b16 %v4814
      %v4847 = vunpack.c.l.b16 %v4815
      %v4848 = vunpack.c.l.b16 %v4816
      %v4849 = vunpack.c.l.b16 %v4817
      %v4850 = vunpack.c.l.b16 %v4818
      %v4851 = vunpack.c.l.b16 %v4819
      %v4852 = vpack.c.b16 %v4837, %v4836
      %v4853 = vpack.c.b16 %v4839, %v4838
      %v4854 = vpack.c.b16 %v4841, %v4840
      %v4855 = vpack.c.b16 %v4843, %v4842
      %v4856 = vpack.c.b16 %v4845, %v4844
      %v4857 = vpack.c.b16 %v4847, %v4846
      %v4858 = vpack.c.b16 %v4849, %v4848
      %v4859 = vpack.c.b16 %v4851, %v4850
      %4868 = vmatpush.bf16.msra.mxu0 %v4859
      %4869 = vmatpush.bf16.msra.mxu0 %v4858
      %4870 = vmatpush.bf16.msra.mxu0 %v4857
      %4871 = vmatpush.bf16.msra.mxu0 %v4856
      %4872 = vmatpush.bf16.msra.mxu0 %v4855
      %4873 = vmatpush.bf16.msra.mxu0 %v4854
      %4874 = vmatpush.bf16.msra.mxu0 %v4853
      %4875 = vmatpush.bf16.msra.mxu0 %v4852
      %4876 = vmatmul.bf16.gmra.mxu0 %v4803
      %v4877 = vpop.f32.mrf.mxu0
      %v4878 = vadd.f32 0.0, %v4877
      %v4879 = vpop.f32.mrf.mxu0
      %4880 = vdwg.mxu0
      %v4881 = vadd.f32 %v4692, %v4878
      %v4883 = vperm.slane %v3899, 0
      %v4885 = vadd.f32 %v4881, %v4883
      %v4886 = vld [vmem:[%s23] sm:$0x1]
      %s4887 = scalar_lea.vmem %s23, 1
      %v4888 = vld [vmem:[%s4887] sm:$0x1]
      %v4889 = vsel %vm3900, %v4885, 0.0
      %4890 = vadd.xlane.f32.xlu0 %v4889
      %v4891 = vpop.xlane.xlu0 %4890
      %v4892 = vmul.f32 %v4891, %v3910
      %v4893 = vsub.f32 %v4885, %v4892
      %v4894 = vmul.f32 %v4893, %v4893
      %v4895 = vsel %vm3900, %v4894, 0.0
      %4896 = vadd.xlane.f32.xlu0 %v4895
      %v4897 = vpop.xlane.xlu0 %4896
      %v4898 = vmul.f32 %v4897, %v3910
      %v4899 = vadd.f32 %v4898, 1e-05
      %v4900 = vrsqrt.pop %v4899
      %v4901 = vmul.f32 %v4900, %v4899
      %v4902 = vmul.f32 %v4901, %v4900
      %v4903 = vmul.f32 0.5, %v4902
      %v4904 = vsub.f32 1.5, %v4903
      %v4905 = vmul.f32 %v4900, %v4904
      %vm4906 = vweird.f32 %v4899
      %vm4907 = vweird.f32 %v4900
      %vm4908 = vmor %vm4906, %vm4907
      %v4909 = vsel %vm4908, %v4900, %v4905
      %v4910 = vmul.f32 %v4893, %v4909
      %v4912 = vperm.slane %v4886, 0
      %v4914 = vmul.f32 %v4910, %v4912
      %v4916 = vperm.slane %v4888, 0
      %v4918 = vadd.f32 %v4914, %v4916
      %v4919 = vpack.c.bf16 %v4918, %v4918
      %v4920 = vld [vmem:[%s24] sm:$0xf]
      %v4921 = vld [vmem:[%s24 + $0x4] sm:$0xf]
      %v4922 = vld [vmem:[%s24 + $0x8] sm:$0xf]
      %v4923 = vld [vmem:[%s24 + $0xc] sm:$0xf]
      %v4924 = vld [vmem:[%s25] sm:$0x1]
      %v4926 = vperm.slane %v4924, 0
      %v4932 = vunpack.c.l.b16 %v4920
      %v4933 = vunpack.c.l.b16 %v4921
      %v4934 = vunpack.c.l.b16 %v4922
      %v4935 = vunpack.c.l.b16 %v4923
      %v4936 = vpack.c.b16 %v4933, %v4932
      %v4937 = vpack.c.b16 %v4935, %v4934
      %v4941 = vsel %vm3959, %v4919, 0
      %4943 = vmatpush.bf16.msra.mxu0 0
      %4944 = vmatpush.bf16.msra.mxu0 0
      %4945 = vmatpush.bf16.msra.mxu0 0
      %4946 = vmatpush.bf16.msra.mxu0 0
      %4947 = vmatpush.bf16.msra.mxu0 0
      %4948 = vmatpush.bf16.msra.mxu0 0
      %4949 = vmatpush.bf16.msra.mxu0 %v4937
      %4950 = vmatpush.bf16.msra.mxu0 %v4936
      %4951 = vmatmul.bf16.gmra.mxu0 %v4941
      %v4952 = vpop.f32.mrf.mxu0
      %v4953 = vadd.f32 %v4926, %v4952
      %v4954 = vpop.f32.mrf.mxu0
      %4955 = vdwg.mxu0
      %v4956 = vld [vmem:[%s26] sm:$0xff]
      %v4957 = vld [vmem:[%s26 + $0x8] sm:$0xff]
      %4958 = vmatpush.msra.mxu0 0.0
      %4959 = vmatpush.msra.mxu0 0.0
      %4960 = vmatpush.msra.mxu0 0.0
      %4961 = vmatpush.msra.mxu0 0.0
      %4962 = vmatpush.msra.mxu0 0.0
      %4963 = vmatpush.msra.mxu0 0.0
      %4964 = vmatpush.msra.mxu0 0.0
      %4965 = vmatpush.msra.mxu0 0.0
      %4966 = vmatpush.msra.mxu0 0.0
      %4967 = vmatpush.msra.mxu0 0.0
      %4968 = vmatpush.msra.mxu0 0.0
      %4969 = vmatpush.msra.mxu0 0.0
      %4970 = vmatpush.msra.mxu0 0.0
      %4971 = vmatpush.msra.mxu0 0.0
      %4972 = vmatpush.msra.mxu0 %v4957
      %4973 = vmatpush.msra.mxu0 %v4956
      %4974 = vmatmul.f32.gmra.mxu0 %v1037
      %v4975 = vpop.f32.mrf.mxu0
      %v4976 = vadd.f32 0.0, %v4975
      %4977 = vdwg.mxu0
      %vm4978 = vcmask 126976
      %v4979 = vsel %vm4978, %v4953, -inf
      %4980 = vmax.xlane.f32.xlu0 %v4979
      %v4981 = vpop.xlane.xlu0 %4980
      %v4982 = vsub.f32 %v4953, %v4981
      %v4983 = vmul.f32 %v4982, 1.442695
      %v4984 = vpow.pop %v4983
      %v4985 = vsel %vm4978, %v4984, 0.0
      %4986 = vadd.xlane.f32.xlu0 %v4985
      %v4987 = vpop.xlane.xlu0 %4986
      %v4988 = vlog2.pop %v4987
      %v4989 = vmul.f32 %v4988, 0.6931472
      %v4990 = vadd.f32 %v4989, %v4981
      %v4991 = vsub.f32 0.0, %v4976
      %v4992 = vsub.f32 %v4953, %v4990
      %v4993 = vmul.f32 %v4991, %v4992
      %v4994 = vsel %vm4978, %v4993, 0.0
      %4995 = vadd.xlane.f32.xlu0 %v4994
      %v4996 = vpop.xlane.xlu0 %4995
      %vm4997 = vcmp.eq.s32.totalorder %v989, 17
      %v4998 = vsel %vm4997, 1, 0
      %v4999 = vcvt.s32.f32 %v4998
      %vm5000 = vcmp.eq.f32.partialorder %v4953, %v4981
      %v5001 = vsel %vm5000, %v991, 16
      %v5002 = vsel %vm4978, %v5001, 2147483647
      %v5003 = vand.u32 %v5002, 65535
      %v5004 = vshra.s32 %v5002, 16
      %v5005 = vcvt.s32.f32 %v5003
      %v5006 = vcvt.s32.f32 %v5004
      %5007 = vmin.xlane.f32.xlu0 %v5006
      %v5008 = vpop.xlane.xlu0 %5007
      %vm5009 = vcmp.eq.f32.partialorder %v5006, %v5008
      %v5010 = vsel %vm5009, %v5005, inf
      %5011 = vmin.xlane.f32.xlu0 %v5010
      %v5012 = vpop.xlane.xlu0 %5011
      %v5013 = vcvt.f32.s32 %v5012
      %v5014 = vcvt.f32.s32 %v5008
      %v5015 = vshll.u32 %v5014, 16
      %v5016 = vadd.s32 %v5015, %v5013
      %vm5017 = vcmp.eq.s32.totalorder %v5016, %v988
      %v5018 = vsel %vm5017, 1, 0
      %v5019 = vcvt.s32.f32 %v5018
      %v5020 = vmul.f32 %v4996, %v4999
      %vm5021 = vcmask 4096
      %v5022 = vsel %vm5021, %v5020, 0.0
      %v5023 = vrot.slane %v5022, 4
      %v5024 = vadd.f32 %v5022, %v5023
      %v5025 = vrot.slane %v5024, 2
      %v5026 = vadd.f32 %v5024, %v5025
      %v5027 = vrot.slane %v5026, 1
      %v5028 = vadd.f32 %v5026, %v5027
      %v5029 = vmul.f32 %v5019, %v4999
      %v5030 = vsel %vm5021, %v5029, 0.0
      %v5031 = vrot.slane %v5030, 4
      %v5032 = vadd.f32 %v5030, %v5031
      %v5033 = vrot.slane %v5032, 2
      %v5034 = vadd.f32 %v5032, %v5033
      %v5035 = vrot.slane %v5034, 1
      %v5036 = vadd.f32 %v5034, %v5035
      %v5037 = vsel %vm5021, %v4999, 0.0
      %v5038 = vrot.slane %v5037, 4
      %v5039 = vadd.f32 %v5037, %v5038
      %v5040 = vrot.slane %v5039, 2
      %v5041 = vadd.f32 %v5039, %v5040
      %v5042 = vrot.slane %v5041, 1
      %v5043 = vadd.f32 %v5041, %v5042
      %vm5044 = vcmp.eq.s32.totalorder %v991, 0
      %5046 = vset.pattern.permute.xlu0 0
      %5047 = vperm.xlu0 %5046, %v5028
      %v5048 = vpop.permute.xlu0 %5047
      %v5050 = vsel %vm5044, %v5048, 0.0
      %vm5051 = vcmp.eq.s32.totalorder %v991, 1
      %5053 = vset.pattern.permute.xlu0 0
      %5054 = vperm.xlu0 %5053, %v5036
      %v5055 = vpop.permute.xlu0 %5054
      %v5057 = vsel %vm5051, %v5055, %v5050
      %vm5058 = vcmp.eq.s32.totalorder %v991, 2
      %5060 = vset.pattern.permute.xlu0 0
      %5061 = vperm.xlu0 %5060, %v5043
      %v5062 = vpop.permute.xlu0 %5061
      %v5064 = vsel %vm5058, %v5062, %v5057
      %5065 = vst [vmem:[%s848] sm:$0x1] %v5064
      %p5066 = scmp.lt.s32.totalorder %s38, 1
      %s5067 = scalar_select %p5066, %s38, 1
      %s5068 = scalar_lea.vmem %s27, %s5067
      // Predicated region
      $region129: #{forward.3} parent=127 // pred_check
        %p5069 = pneg %p638
      $region130: #{forward.3} parent=127 // pred_check_branch
        %5071 = sbr.rel (%p5069) target = $region132
      $region131: #{forward.3} parent=127 // pred_region
        _
      $region132: #{forward.3} parent=127 // pred_fallthru
        _
    $region128: #{forward.3} parent=5 // pred_fallthru
      _
    %p5072 = scmp.le.s32.totalorder 2, %s33
    // Predicated region
    $region133: #{forward.3} parent=5 // pred_check
      %p5073 = pneg %p5072
    $region134: #{forward.3} parent=5 // pred_check_branch
      %5075 = sbr.rel (%p5073) target = $region136
    $region135: #{forward.3} parent=5 // pred_region
      %s5076 = ssub.s32 %s33, 2
      // Predicated region
      $region137: #{forward.3} parent=135 // pred_check
        %p5077 = pneg %p644
      $region138: #{forward.3} parent=135 // pred_check_branch
        %5079 = sbr.rel (%p5077) target = $region140
      $region139: #{forward.3} parent=135 // pred_region
        %p5080 = scmp.lt.s32.totalorder %s39, 1
        %s5081 = scalar_select %p5080, %s39, 1
        %s5082 = scalar_lea.vmem %s27, %s5081
      $region140: #{forward.3} parent=135 // pred_fallthru
        _
    $region136: #{forward.3} parent=5 // pred_fallthru
      _
  $region6: #{forward.3} parent=0 // loop_footer
    %s37 = sadd.s32 1, %s33
  $region7: #{forward.3} parent=0 // loop_footer_branch
    %32 = sbr.rel target = $region3
  $region8: #{forward.3} parent=0 // loop_exit
    _

</llo_original>
